<compile_context>
chip_gen: v5e
topology: v5e:2x2
jax: 0.10.0
libtpu: 0.0.40
codegen_flags: <defaults>
</compile_context>

<pallas_src>
import math

import jax
import jax.numpy as jnp
from jax.experimental import pallas as pl
from jax.experimental.pallas import tpu as pltpu


# ----------------------------------------------------------------------------
# Fused kernel: input projection + interleaved bi-GRU + masked max + TextSA.
# ----------------------------------------------------------------------------
def _fused_encoder_kernel(T, B, E, H):
    H2, H3, H6 = 2 * H, 3 * H, 6 * H
    D = H2
    NEG = -1e30

    def kernel(x_ref, wihT_ref, bias_ref, whhTf_ref, whhTb_ref, bhhn_ref,
               valid_ref, wl_ref, bl_ref, wg_ref, bg_ref, wc_ref, bc_ref,
               out_ref, gi_ref, yw_ref, lemb_ref):
        # x_ref:    (T*B, E)  bf16   word embeddings, row = t*B + b
        # wihT_ref: (E, 6H)   bf16   [fwd | bwd] input weights (transposed)
        # bias_ref: (1, 6H)   f32    b_ih (+ b_hh folded for r,z gates)
        # whhT*_ref:(H, 3H)   bf16   recurrent weights per direction
        # bhhn_ref: (1, 2H)   f32    [b_hn_fwd | b_hn_bwd]
        # valid_ref:(T*B, 1)  f32    1.0 = real token, 0.0 = pad
        # out_ref:  (B, D)    f32    pooled TextSA output
        # scratches: gi (T*B,6H) f32, yw (T*B,D) f32, lemb (T*B,D) f32

        # -- 1) Input projection for BOTH directions (one MXU pass) ----------
        gi_ref[...] = (
            jnp.dot(x_ref[...], wihT_ref[...],
                    preferred_element_type=jnp.float32) + bias_ref[...])

        # -- 2) Interleaved fwd/bwd GRU recurrence (fully unrolled, T small) --
        whhT_f = whhTf_ref[...]
        whhT_b = whhTb_ref[...]
        bhn_f = bhhn_ref[:, 0:H]
        bhn_b = bhhn_ref[:, H:H2]

        h_f = jnp.zeros((B, H), jnp.float32)
        h_b = jnp.zeros((B, H), jnp.float32)
        mx_f = jnp.full((B, H), NEG, jnp.float32)   # masked running max ("max" pool)
        mx_b = jnp.full((B, H), NEG, jnp.float32)

        for t in range(T):                           # static, unrolled
            tb = T - 1 - t
            rf, rb = t * B, tb * B

            gi_f = gi_ref[rf:rf + B, 0:H3]           # (B, 3H) fwd gates
            gi_b = gi_ref[rb:rb + B, H3:H6]          # (B, 3H) bwd gates

            gh_f = jnp.dot(h_f.astype(jnp.bfloat16), whhT_f,
                           preferred_element_type=jnp.float32)
            gh_b = jnp.dot(h_b.astype(jnp.bfloat16), whhT_b,
                           preferred_element_type=jnp.float32)

            # PyTorch GRU order r,z,n ; r and z share ONE sigmoid over 2H lanes.
            rz_f = jax.nn.sigmoid(gi_f[:, 0:H2] + gh_f[:, 0:H2])
            rz_b = jax.nn.sigmoid(gi_b[:, 0:H2] + gh_b[:, 0:H2])
            n_f = jnp.tanh(gi_f[:, H2:H3] + rz_f[:, 0:H] * (gh_f[:, H2:H3] + bhn_f))
            n_b = jnp.tanh(gi_b[:, H2:H3] + rz_b[:, 0:H] * (gh_b[:, H2:H3] + bhn_b))
            # h = (1-z)*n + z*h  ==  n + z*(h - n)
            h_f = n_f + rz_f[:, H:H2] * (h_f - n_f)
            h_b = n_b + rz_b[:, H:H2] * (h_b - n_b)

            yw_ref[rf:rf + B, 0:H] = h_f
            yw_ref[rb:rb + B, H:H2] = h_b

            v_f = valid_ref[rf:rf + B, :]            # (B, 1)
            v_b = valid_ref[rb:rb + B, :]
            mx_f = jnp.maximum(mx_f, jnp.where(v_f > 0.0, h_f, NEG))
            mx_b = jnp.maximum(mx_b, jnp.where(v_b > 0.0, h_b, NEG))

        # -- 3) TextSA head (dropout = identity at inference) -----------------
        y_glob = jnp.concatenate([mx_f, mx_b], axis=-1)            # (B, D)

        # Batched local embedding: ONE (T*B, D) @ (D, D) matmul (single push).
        lemb_ref[...] = jnp.tanh(
            jnp.dot(yw_ref[...].astype(jnp.bfloat16), wl_ref[...],
                    preferred_element_type=jnp.float32) + bl_ref[...])
        g_emb = jnp.tanh(
            jnp.dot(y_glob.astype(jnp.bfloat16), wg_ref[...],
                    preferred_element_type=jnp.float32) + bg_ref[...])   # (B, D)
        gwc = g_emb * wc_ref[...]                    # fold wc into g_emb once

        # Online softmax over ALL T token positions (matches the reference).
        m = jnp.full((B, 1), NEG, jnp.float32)
        s = jnp.zeros((B, 1), jnp.float32)
        acc = jnp.zeros((B, D), jnp.float32)
        for t in range(T):                           # static, unrolled
            r0 = t * B
            yw_t = yw_ref[r0:r0 + B, :]              # (B, D)
            l_t = lemb_ref[r0:r0 + B, :]             # (B, D)
            logit = jnp.sum(l_t * gwc, axis=-1, keepdims=True) + bc_ref[...]  # (B,1)
            m_new = jnp.maximum(m, logit)
            alpha = jnp.exp(m - m_new)
            p = jnp.exp(logit - m_new)
            s = alpha * s + p
            acc = alpha * acc + p * yw_t
            m = m_new

        out_ref[...] = acc * pl.reciprocal(s, approx=True)

    return kernel


def fused_text_encoder(x_flat, wihT, bias, whhT_f, whhT_b, bhhn, valid,
                       wl, bl, wg, bg, wc, bc, *, T, B):
    E = x_flat.shape[1]
    H = whhT_f.shape[0]
    D = 2 * H
    return pl.pallas_call(
        _fused_encoder_kernel(T, B, E, H),
        out_shape=jax.ShapeDtypeStruct((B, D), jnp.float32),
        scratch_shapes=[
            pltpu.VMEM((T * B, 6 * H), jnp.float32),   # gi  (hoisted projection)
            pltpu.VMEM((T * B, D), jnp.float32),       # y_word (never leaves VMEM)
            pltpu.VMEM((T * B, D), jnp.float32),       # l_emb
        ],
    )(x_flat, wihT, bias, whhT_f, whhT_b, bhhn, valid, wl, bl, wg, bg, wc, bc)


# ----------------------------------------------------------------------------
# Full forward pass (LSTM module, output_type='max').
# ----------------------------------------------------------------------------
def lstm_forward(params, ref_expr_inds):
    B, T = ref_expr_inds.shape
    H = params["whhT_f"].shape[0]

    # TODO(synk): the nn.Embedding vocabulary gather stays as XLA glue — a
    # data-dependent vocab gather has no clean small-shape Pallas equivalent.
    y_mask = jnp.abs(ref_expr_inds) == 0
    emb = jnp.take(params["word_emb"], ref_expr_inds, axis=0)          # (B, T, E)
    x_flat = (jnp.transpose(emb, (1, 0, 2))
              .reshape(T * B, emb.shape[-1]).astype(jnp.bfloat16))     # (T*B, E)

    def folded_bias(bih, bhh):      # b_ih + b_hh for r,z gates; b_ih only for n
        return bih + jnp.concatenate(
            [bhh[:, :2 * H], jnp.zeros((1, H), jnp.float32)], axis=1)

    wihT = jnp.concatenate([params["wihT_f"], params["wihT_b"]],
                           axis=1).astype(jnp.bfloat16)                # (E, 6H)
    bias = jnp.concatenate([folded_bias(params["bih_f"], params["bhh_f"]),
                            folded_bias(params["bih_b"], params["bhh_b"])],
                           axis=1)                                     # (1, 6H)
    bhhn = jnp.concatenate([params["bhh_f"][:, 2 * H:],
                            params["bhh_b"][:, 2 * H:]], axis=1)       # (1, 2H)
    valid = jnp.transpose(~y_mask).astype(jnp.float32).reshape(T * B, 1)

    y = fused_text_encoder(
        x_flat, wihT, bias,
        params["whhT_f"].astype(jnp.bfloat16),
        params["whhT_b"].astype(jnp.bfloat16),
        bhhn, valid,
        params["wl"].astype(jnp.bfloat16), params["bl"],
        params["wg"].astype(jnp.bfloat16), params["bg"],
        params["wc"], params["bc"], T=T, B=B)                          # (B, 2H)
    return y[:, None, :]                                               # (B, 1, 2H)


# ----------------------------------------------------------------------------
# Deterministic parameter construction + driver.
# ----------------------------------------------------------------------------
def make_params(key, vocab, E, H):
    D = 2 * H
    ks = jax.random.split(key, 16)

    def u(k, shape, r):
        return jax.random.uniform(k, shape, jnp.float32, -r, r)

    r_gru = 1.0 / math.sqrt(H)
    r_sa = math.sqrt(6.0) / math.sqrt(D + D)
    r_sac = math.sqrt(6.0) / math.sqrt(D + 1)

    return {
        "word_emb": jax.random.normal(ks[0], (vocab, E), jnp.float32),
        # forward-direction GRU (weights stored already transposed: x @ W^T)
        "wihT_f": u(ks[1], (E, 3 * H), r_gru),
        "whhT_f": u(ks[2], (H, 3 * H), r_gru),
        "bih_f": u(ks[3], (1, 3 * H), r_gru),
        "bhh_f": u(ks[4], (1, 3 * H), r_gru),
        # backward-direction GRU
        "wihT_b": u(ks[5], (E, 3 * H), r_gru),
        "whhT_b": u(ks[6], (H, 3 * H), r_gru),
        "bih_b": u(ks[7], (1, 3 * H), r_gru),
        "bhh_b": u(ks[8], (1, 3 * H), r_gru),
        # TextSA (biases zero per init_weights)
        "wl": u(ks[9], (D, D), r_sa),
        "bl": jnp.zeros((1, D), jnp.float32),
        "wg": u(ks[10], (D, D), r_sa),
        "bg": jnp.zeros((1, D), jnp.float32),
        "wc": u(ks[11], (1, D), r_sac),
        "bc": jnp.zeros((1, 1), jnp.float32),
    }


if __name__ == "__main__":
    B, T = 2, 15                 # batch, max_token
    VOCAB, E, H = 32, 128, 128   # vocab, word-emb dim, GRU hidden (bi-GRU -> 2H=256)

    key = jax.random.PRNGKey(0)
    k_tok, k_params = jax.random.split(key)

    params = make_params(k_params, VOCAB, E, H)

    # deterministic token ids, zero-padded at the end (lengths 9 and 6)
    tok = jax.random.randint(k_tok, (B, T), 1, VOCAB, dtype=jnp.int32)
    lengths = jnp.array([9, 6], dtype=jnp.int32)
    pos = jnp.arange(T, dtype=jnp.int32)[None, :]
    ref_expr_inds = jnp.where(pos < lengths[:, None], tok, 0)

    out = jax.jit(lstm_forward)(params, ref_expr_inds)
    out = jax.block_until_ready(out)

    assert out.shape == (B, 1, 2 * H), out.shape
    assert out.dtype == jnp.float32
    assert bool(jnp.all(jnp.isfinite(out)))
    print("KERNEL_OK")
</pallas_src>

<mosaic_0001>
module attributes {stable_mosaic.version = 11 : i64} {
  func.func @kernel(%arg0: memref<30x128xbf16, #tpu.memory_space<vmem>>, %arg1: memref<128x768xbf16, #tpu.memory_space<vmem>>, %arg2: memref<1x768xf32, #tpu.memory_space<vmem>>, %arg3: memref<128x384xbf16, #tpu.memory_space<vmem>>, %arg4: memref<128x384xbf16, #tpu.memory_space<vmem>>, %arg5: memref<1x256xf32, #tpu.memory_space<vmem>>, %arg6: memref<30x1xf32, #tpu.memory_space<vmem>>, %arg7: memref<256x256xbf16, #tpu.memory_space<vmem>>, %arg8: memref<1x256xf32, #tpu.memory_space<vmem>>, %arg9: memref<256x256xbf16, #tpu.memory_space<vmem>>, %arg10: memref<1x256xf32, #tpu.memory_space<vmem>>, %arg11: memref<1x256xf32, #tpu.memory_space<vmem>>, %arg12: memref<1x1xf32, #tpu.memory_space<vmem>>, %arg13: memref<2x256xf32, #tpu.memory_space<vmem>>, %arg14: memref<30x768xf32, #tpu.memory_space<vmem>>, %arg15: memref<30x256xf32, #tpu.memory_space<vmem>>, %arg16: memref<30x256xf32, #tpu.memory_space<vmem>>) attributes {dimension_semantics = [], scalar_prefetch = 0 : i64, scratch_operands = 3 : i64, tpu.core_type = #tpu.core_type<tc>} {
    %c0 = arith.constant 0 : index
    %c0_0 = arith.constant 0 : index
    %0 = vector.load %arg0[%c0, %c0_0] : memref<30x128xbf16, #tpu.memory_space<vmem>>, vector<30x128xbf16>
    %c0_1 = arith.constant 0 : index
    %c0_2 = arith.constant 0 : index
    %1 = vector.load %arg1[%c0_1, %c0_2] : memref<128x768xbf16, #tpu.memory_space<vmem>>, vector<128x768xbf16>
    %cst = arith.constant dense<0.000000e+00> : vector<30x768xf32>
    %2 = tpu.matmul %0, %1, %cst {dimension_numbers = #tpu.dot_dimension_numbers<[1], [0], [0], [1], [0, 0, 1, 1], [], []>} : vector<30x128xbf16>, vector<128x768xbf16>, vector<30x768xf32> -> vector<30x768xf32>
    %c0_3 = arith.constant 0 : index
    %c0_4 = arith.constant 0 : index
    %3 = vector.load %arg2[%c0_3, %c0_4] : memref<1x768xf32, #tpu.memory_space<vmem>>, vector<1x768xf32>
    %4 = vector.broadcast %3 : vector<1x768xf32> to vector<30x768xf32>
    %5 = arith.addf %2, %4 : vector<30x768xf32>
    %c0_5 = arith.constant 0 : index
    %c0_6 = arith.constant 0 : index
    %6 = vector.load %arg14[%c0_5, %c0_6] : memref<30x768xf32, #tpu.memory_space<vmem>>, vector<30x768xf32>
    tpu.vector_store %arg14[%c0_5, %c0_6], %5 {strides = array<i32>} : memref<30x768xf32, #tpu.memory_space<vmem>>, vector<30x768xf32>,
    %c0_7 = arith.constant 0 : index
    %c0_8 = arith.constant 0 : index
    %7 = vector.load %arg3[%c0_7, %c0_8] : memref<128x384xbf16, #tpu.memory_space<vmem>>, vector<128x384xbf16>
    %c0_9 = arith.constant 0 : index
    %c0_10 = arith.constant 0 : index
    %8 = vector.load %arg4[%c0_9, %c0_10] : memref<128x384xbf16, #tpu.memory_space<vmem>>, vector<128x384xbf16>
    %c0_11 = arith.constant 0 : index
    %c0_12 = arith.constant 0 : index
    %9 = vector.load %arg5[%c0_11, %c0_12] : memref<1x256xf32, #tpu.memory_space<vmem>>, vector<1x128xf32>
    %c0_13 = arith.constant 0 : index
    %c128 = arith.constant 128 : index
    %10 = vector.load %arg5[%c0_13, %c128] : memref<1x256xf32, #tpu.memory_space<vmem>>, vector<1x128xf32>
    %cst_14 = arith.constant 0.000000e+00 : f32
    %11 = vector.broadcast %cst_14 : f32 to vector<2x128xf32>
    %cst_15 = arith.constant 0.000000e+00 : f32
    %12 = vector.broadcast %cst_15 : f32 to vector<2x128xf32>
    %cst_16 = arith.constant -1.000000e+30 : f32
    %13 = vector.broadcast %cst_16 : f32 to vector<2x128xf32>
    %cst_17 = arith.constant -1.000000e+30 : f32
    %14 = vector.broadcast %cst_17 : f32 to vector<2x128xf32>
    %c0_18 = arith.constant 0 : index
    %c0_19 = arith.constant 0 : index
    %15 = vector.load %arg14[%c0_18, %c0_19] : memref<30x768xf32, #tpu.memory_space<vmem>>, vector<2x384xf32>
    %c28 = arith.constant 28 : index
    %c384 = arith.constant 384 : index
    %16 = vector.load %arg14[%c28, %c384] : memref<30x768xf32, #tpu.memory_space<vmem>>, vector<2x384xf32>
    %17 = arith.truncf %11 : vector<2x128xf32> to vector<2x128xbf16>
    %cst_20 = arith.constant dense<0.000000e+00> : vector<2x384xf32>
    %18 = tpu.matmul %17, %7, %cst_20 {dimension_numbers = #tpu.dot_dimension_numbers<[1], [0], [0], [1], [0, 0, 1, 1], [], []>} : vector<2x128xbf16>, vector<128x384xbf16>, vector<2x384xf32> -> vector<2x384xf32>
    %19 = arith.truncf %12 : vector<2x128xf32> to vector<2x128xbf16>
    %cst_21 = arith.constant dense<0.000000e+00> : vector<2x384xf32>
    %20 = tpu.matmul %19, %8, %cst_21 {dimension_numbers = #tpu.dot_dimension_numbers<[1], [0], [0], [1], [0, 0, 1, 1], [], []>} : vector<2x128xbf16>, vector<128x384xbf16>, vector<2x384xf32> -> vector<2x384xf32>
    %21 = vector.extract_strided_slice %15 {offsets = [0, 0], sizes = [2, 256], strides = [1, 1]} : vector<2x384xf32> to vector<2x256xf32>
    %22 = vector.extract_strided_slice %18 {offsets = [0, 0], sizes = [2, 256], strides = [1, 1]} : vector<2x384xf32> to vector<2x256xf32>
    %23 = arith.addf %21, %22 : vector<2x256xf32>
    %24 = arith.negf %23 : vector<2x256xf32>
    %25 = math.exp %24 : vector<2x256xf32>
    %cst_22 = arith.constant 1.000000e+00 : f32
    %26 = vector.broadcast %cst_22 : f32 to vector<2x256xf32>
    %27 = arith.addf %26, %25 : vector<2x256xf32>
    %28 = arith.divf %26, %27 : vector<2x256xf32>
    %29 = vector.extract_strided_slice %16 {offsets = [0, 0], sizes = [2, 256], strides = [1, 1]} : vector<2x384xf32> to vector<2x256xf32>
    %30 = vector.extract_strided_slice %20 {offsets = [0, 0], sizes = [2, 256], strides = [1, 1]} : vector<2x384xf32> to vector<2x256xf32>
    %31 = arith.addf %29, %30 : vector<2x256xf32>
    %32 = arith.negf %31 : vector<2x256xf32>
    %33 = math.exp %32 : vector<2x256xf32>
    %cst_23 = arith.constant 1.000000e+00 : f32
    %34 = vector.broadcast %cst_23 : f32 to vector<2x256xf32>
    %35 = arith.addf %34, %33 : vector<2x256xf32>
    %36 = arith.divf %34, %35 : vector<2x256xf32>
    %37 = vector.extract_strided_slice %15 {offsets = [0, 256], sizes = [2, 128], strides = [1, 1]} : vector<2x384xf32> to vector<2x128xf32>
    %38 = vector.extract_strided_slice %28 {offsets = [0, 0], sizes = [2, 128], strides = [1, 1]} : vector<2x256xf32> to vector<2x128xf32>
    %39 = vector.extract_strided_slice %18 {offsets = [0, 256], sizes = [2, 128], strides = [1, 1]} : vector<2x384xf32> to vector<2x128xf32>
    %40 = vector.broadcast %9 : vector<1x128xf32> to vector<2x128xf32>
    %41 = arith.addf %39, %40 : vector<2x128xf32>
    %42 = arith.mulf %38, %41 : vector<2x128xf32>
    %43 = arith.addf %37, %42 : vector<2x128xf32>
    %44 = math.tanh %43 : vector<2x128xf32>
    %45 = vector.extract_strided_slice %16 {offsets = [0, 256], sizes = [2, 128], strides = [1, 1]} : vector<2x384xf32> to vector<2x128xf32>
    %46 = vector.extract_strided_slice %36 {offsets = [0, 0], sizes = [2, 128], strides = [1, 1]} : vector<2x256xf32> to vector<2x128xf32>
    %47 = vector.extract_strided_slice %20 {offsets = [0, 256], sizes = [2, 128], strides = [1, 1]} : vector<2x384xf32> to vector<2x128xf32>
    %48 = vector.broadcast %10 : vector<1x128xf32> to vector<2x128xf32>
    %49 = arith.addf %47, %48 : vector<2x128xf32>
    %50 = arith.mulf %46, %49 : vector<2x128xf32>
    %51 = arith.addf %45, %50 : vector<2x128xf32>
    %52 = math.tanh %51 : vector<2x128xf32>
    %53 = vector.extract_strided_slice %28 {offsets = [0, 128], sizes = [2, 128], strides = [1, 1]} : vector<2x256xf32> to vector<2x128xf32>
    %54 = arith.subf %11, %44 : vector<2x128xf32>
    %55 = arith.mulf %53, %54 : vector<2x128xf32>
    %56 = arith.addf %44, %55 : vector<2x128xf32>
    %57 = vector.extract_strided_slice %36 {offsets = [0, 128], sizes = [2, 128], strides = [1, 1]} : vector<2x256xf32> to vector<2x128xf32>
    %58 = arith.subf %12, %52 : vector<2x128xf32>
    %59 = arith.mulf %57, %58 : vector<2x128xf32>
    %60 = arith.addf %52, %59 : vector<2x128xf32>
    %c0_24 = arith.constant 0 : index
    %c0_25 = arith.constant 0 : index
    %61 = vector.load %arg15[%c0_24, %c0_25] : memref<30x256xf32, #tpu.memory_space<vmem>>, vector<2x128xf32>
    tpu.vector_store %arg15[%c0_24, %c0_25], %56 {strides = array<i32>} : memref<30x256xf32, #tpu.memory_space<vmem>>, vector<2x128xf32>,
    %c28_26 = arith.constant 28 : index
    %c128_27 = arith.constant 128 : index
    %62 = vector.load %arg15[%c28_26, %c128_27] : memref<30x256xf32, #tpu.memory_space<vmem>>, vector<2x128xf32>
    tpu.vector_store %arg15[%c28_26, %c128_27], %60 {strides = array<i32>} : memref<30x256xf32, #tpu.memory_space<vmem>>, vector<2x128xf32>,
    %c0_28 = arith.constant 0 : index
    %c0_29 = arith.constant 0 : index
    %63 = vector.load %arg6[%c0_28, %c0_29] : memref<30x1xf32, #tpu.memory_space<vmem>>, vector<2x1xf32>
    %c28_30 = arith.constant 28 : index
    %c0_31 = arith.constant 0 : index
    %64 = vector.load %arg6[%c28_30, %c0_31] : memref<30x1xf32, #tpu.memory_space<vmem>>, vector<2x1xf32>
    %cst_32 = arith.constant 0.000000e+00 : f32
    %65 = vector.broadcast %cst_32 : f32 to vector<2x1xf32>
    %66 = arith.cmpf ogt, %63, %65 : vector<2x1xf32>
    %cst_33 = arith.constant -1.000000e+30 : f32
    %67 = vector.shape_cast %66 : vector<2x1xi1> to vector<2x1xi1>
    %68 = vector.broadcast %67 : vector<2x1xi1> to vector<2x128xi1>
    %69 = vector.broadcast %cst_33 : f32 to vector<2x128xf32>
    %70 = arith.select %68, %56, %69 : vector<2x128xi1>, vector<2x128xf32>
    %71 = arith.maximumf %13, %70 : vector<2x128xf32>
    %cst_34 = arith.constant 0.000000e+00 : f32
    %72 = vector.broadcast %cst_34 : f32 to vector<2x1xf32>
    %73 = arith.cmpf ogt, %64, %72 : vector<2x1xf32>
    %cst_35 = arith.constant -1.000000e+30 : f32
    %74 = vector.shape_cast %73 : vector<2x1xi1> to vector<2x1xi1>
    %75 = vector.broadcast %74 : vector<2x1xi1> to vector<2x128xi1>
    %76 = vector.broadcast %cst_35 : f32 to vector<2x128xf32>
    %77 = arith.select %75, %60, %76 : vector<2x128xi1>, vector<2x128xf32>
    %78 = arith.maximumf %14, %77 : vector<2x128xf32>
    %c2 = arith.constant 2 : index
    %c0_36 = arith.constant 0 : index
    %79 = vector.load %arg14[%c2, %c0_36] : memref<30x768xf32, #tpu.memory_space<vmem>>, vector<2x384xf32>
    %c26 = arith.constant 26 : index
    %c384_37 = arith.constant 384 : index
    %80 = vector.load %arg14[%c26, %c384_37] : memref<30x768xf32, #tpu.memory_space<vmem>>, vector<2x384xf32>
    %81 = arith.truncf %56 : vector<2x128xf32> to vector<2x128xbf16>
    %cst_38 = arith.constant dense<0.000000e+00> : vector<2x384xf32>
    %82 = tpu.matmul %81, %7, %cst_38 {dimension_numbers = #tpu.dot_dimension_numbers<[1], [0], [0], [1], [0, 0, 1, 1], [], []>} : vector<2x128xbf16>, vector<128x384xbf16>, vector<2x384xf32> -> vector<2x384xf32>
    %83 = arith.truncf %60 : vector<2x128xf32> to vector<2x128xbf16>
    %cst_39 = arith.constant dense<0.000000e+00> : vector<2x384xf32>
    %84 = tpu.matmul %83, %8, %cst_39 {dimension_numbers = #tpu.dot_dimension_numbers<[1], [0], [0], [1], [0, 0, 1, 1], [], []>} : vector<2x128xbf16>, vector<128x384xbf16>, vector<2x384xf32> -> vector<2x384xf32>
    %85 = vector.extract_strided_slice %79 {offsets = [0, 0], sizes = [2, 256], strides = [1, 1]} : vector<2x384xf32> to vector<2x256xf32>
    %86 = vector.extract_strided_slice %82 {offsets = [0, 0], sizes = [2, 256], strides = [1, 1]} : vector<2x384xf32> to vector<2x256xf32>
    %87 = arith.addf %85, %86 : vector<2x256xf32>
    %88 = arith.negf %87 : vector<2x256xf32>
    %89 = math.exp %88 : vector<2x256xf32>
    %cst_40 = arith.constant 1.000000e+00 : f32
    %90 = vector.broadcast %cst_40 : f32 to vector<2x256xf32>
    %91 = arith.addf %90, %89 : vector<2x256xf32>
    %92 = arith.divf %90, %91 : vector<2x256xf32>
    %93 = vector.extract_strided_slice %80 {offsets = [0, 0], sizes = [2, 256], strides = [1, 1]} : vector<2x384xf32> to vector<2x256xf32>
    %94 = vector.extract_strided_slice %84 {offsets = [0, 0], sizes = [2, 256], strides = [1, 1]} : vector<2x384xf32> to vector<2x256xf32>
    %95 = arith.addf %93, %94 : vector<2x256xf32>
    %96 = arith.negf %95 : vector<2x256xf32>
    %97 = math.exp %96 : vector<2x256xf32>
    %cst_41 = arith.constant 1.000000e+00 : f32
    %98 = vector.broadcast %cst_41 : f32 to vector<2x256xf32>
    %99 = arith.addf %98, %97 : vector<2x256xf32>
    %100 = arith.divf %98, %99 : vector<2x256xf32>
    %101 = vector.extract_strided_slice %79 {offsets = [0, 256], sizes = [2, 128], strides = [1, 1]} : vector<2x384xf32> to vector<2x128xf32>
    %102 = vector.extract_strided_slice %92 {offsets = [0, 0], sizes = [2, 128], strides = [1, 1]} : vector<2x256xf32> to vector<2x128xf32>
    %103 = vector.extract_strided_slice %82 {offsets = [0, 256], sizes = [2, 128], strides = [1, 1]} : vector<2x384xf32> to vector<2x128xf32>
    %104 = vector.broadcast %9 : vector<1x128xf32> to vector<2x128xf32>
    %105 = arith.addf %103, %104 : vector<2x128xf32>
    %106 = arith.mulf %102, %105 : vector<2x128xf32>
    %107 = arith.addf %101, %106 : vector<2x128xf32>
    %108 = math.tanh %107 : vector<2x128xf32>
    %109 = vector.extract_strided_slice %80 {offsets = [0, 256], sizes = [2, 128], strides = [1, 1]} : vector<2x384xf32> to vector<2x128xf32>
    %110 = vector.extract_strided_slice %100 {offsets = [0, 0], sizes = [2, 128], strides = [1, 1]} : vector<2x256xf32> to vector<2x128xf32>
    %111 = vector.extract_strided_slice %84 {offsets = [0, 256], sizes = [2, 128], strides = [1, 1]} : vector<2x384xf32> to vector<2x128xf32>
    %112 = vector.broadcast %10 : vector<1x128xf32> to vector<2x128xf32>
    %113 = arith.addf %111, %112 : vector<2x128xf32>
    %114 = arith.mulf %110, %113 : vector<2x128xf32>
    %115 = arith.addf %109, %114 : vector<2x128xf32>
    %116 = math.tanh %115 : vector<2x128xf32>
    %117 = vector.extract_strided_slice %92 {offsets = [0, 128], sizes = [2, 128], strides = [1, 1]} : vector<2x256xf32> to vector<2x128xf32>
    %118 = arith.subf %56, %108 : vector<2x128xf32>
    %119 = arith.mulf %117, %118 : vector<2x128xf32>
    %120 = arith.addf %108, %119 : vector<2x128xf32>
    %121 = vector.extract_strided_slice %100 {offsets = [0, 128], sizes = [2, 128], strides = [1, 1]} : vector<2x256xf32> to vector<2x128xf32>
    %122 = arith.subf %60, %116 : vector<2x128xf32>
    %123 = arith.mulf %121, %122 : vector<2x128xf32>
    %124 = arith.addf %116, %123 : vector<2x128xf32>
    %c2_42 = arith.constant 2 : index
    %c0_43 = arith.constant 0 : index
    %125 = vector.load %arg15[%c2_42, %c0_43] : memref<30x256xf32, #tpu.memory_space<vmem>>, vector<2x128xf32>
    tpu.vector_store %arg15[%c2_42, %c0_43], %120 {strides = array<i32>} : memref<30x256xf32, #tpu.memory_space<vmem>>, vector<2x128xf32>,
    %c26_44 = arith.constant 26 : index
    %c128_45 = arith.constant 128 : index
    %126 = vector.load %arg15[%c26_44, %c128_45] : memref<30x256xf32, #tpu.memory_space<vmem>>, vector<2x128xf32>
    tpu.vector_store %arg15[%c26_44, %c128_45], %124 {strides = array<i32>} : memref<30x256xf32, #tpu.memory_space<vmem>>, vector<2x128xf32>,
    %c2_46 = arith.constant 2 : index
    %c0_47 = arith.constant 0 : index
    %127 = vector.load %arg6[%c2_46, %c0_47] : memref<30x1xf32, #tpu.memory_space<vmem>>, vector<2x1xf32>
    %c26_48 = arith.constant 26 : index
    %c0_49 = arith.constant 0 : index
    %128 = vector.load %arg6[%c26_48, %c0_49] : memref<30x1xf32, #tpu.memory_space<vmem>>, vector<2x1xf32>
    %cst_50 = arith.constant 0.000000e+00 : f32
    %129 = vector.broadcast %cst_50 : f32 to vector<2x1xf32>
    %130 = arith.cmpf ogt, %127, %129 : vector<2x1xf32>
    %cst_51 = arith.constant -1.000000e+30 : f32
    %131 = vector.shape_cast %130 : vector<2x1xi1> to vector<2x1xi1>
    %132 = vector.broadcast %131 : vector<2x1xi1> to vector<2x128xi1>
    %133 = vector.broadcast %cst_51 : f32 to vector<2x128xf32>
    %134 = arith.select %132, %120, %133 : vector<2x128xi1>, vector<2x128xf32>
    %135 = arith.maximumf %71, %134 : vector<2x128xf32>
    %cst_52 = arith.constant 0.000000e+00 : f32
    %136 = vector.broadcast %cst_52 : f32 to vector<2x1xf32>
    %137 = arith.cmpf ogt, %128, %136 : vector<2x1xf32>
    %cst_53 = arith.constant -1.000000e+30 : f32
    %138 = vector.shape_cast %137 : vector<2x1xi1> to vector<2x1xi1>
    %139 = vector.broadcast %138 : vector<2x1xi1> to vector<2x128xi1>
    %140 = vector.broadcast %cst_53 : f32 to vector<2x128xf32>
    %141 = arith.select %139, %124, %140 : vector<2x128xi1>, vector<2x128xf32>
    %142 = arith.maximumf %78, %141 : vector<2x128xf32>
    %c4 = arith.constant 4 : index
    %c0_54 = arith.constant 0 : index
    %143 = vector.load %arg14[%c4, %c0_54] : memref<30x768xf32, #tpu.memory_space<vmem>>, vector<2x384xf32>
    %c24 = arith.constant 24 : index
    %c384_55 = arith.constant 384 : index
    %144 = vector.load %arg14[%c24, %c384_55] : memref<30x768xf32, #tpu.memory_space<vmem>>, vector<2x384xf32>
    %145 = arith.truncf %120 : vector<2x128xf32> to vector<2x128xbf16>
    %cst_56 = arith.constant dense<0.000000e+00> : vector<2x384xf32>
    %146 = tpu.matmul %145, %7, %cst_56 {dimension_numbers = #tpu.dot_dimension_numbers<[1], [0], [0], [1], [0, 0, 1, 1], [], []>} : vector<2x128xbf16>, vector<128x384xbf16>, vector<2x384xf32> -> vector<2x384xf32>
    %147 = arith.truncf %124 : vector<2x128xf32> to vector<2x128xbf16>
    %cst_57 = arith.constant dense<0.000000e+00> : vector<2x384xf32>
    %148 = tpu.matmul %147, %8, %cst_57 {dimension_numbers = #tpu.dot_dimension_numbers<[1], [0], [0], [1], [0, 0, 1, 1], [], []>} : vector<2x128xbf16>, vector<128x384xbf16>, vector<2x384xf32> -> vector<2x384xf32>
    %149 = vector.extract_strided_slice %143 {offsets = [0, 0], sizes = [2, 256], strides = [1, 1]} : vector<2x384xf32> to vector<2x256xf32>
    %150 = vector.extract_strided_slice %146 {offsets = [0, 0], sizes = [2, 256], strides = [1, 1]} : vector<2x384xf32> to vector<2x256xf32>
    %151 = arith.addf %149, %150 : vector<2x256xf32>
    %152 = arith.negf %151 : vector<2x256xf32>
    %153 = math.exp %152 : vector<2x256xf32>
    %cst_58 = arith.constant 1.000000e+00 : f32
    %154 = vector.broadcast %cst_58 : f32 to vector<2x256xf32>
    %155 = arith.addf %154, %153 : vector<2x256xf32>
    %156 = arith.divf %154, %155 : vector<2x256xf32>
    %157 = vector.extract_strided_slice %144 {offsets = [0, 0], sizes = [2, 256], strides = [1, 1]} : vector<2x384xf32> to vector<2x256xf32>
    %158 = vector.extract_strided_slice %148 {offsets = [0, 0], sizes = [2, 256], strides = [1, 1]} : vector<2x384xf32> to vector<2x256xf32>
    %159 = arith.addf %157, %158 : vector<2x256xf32>
    %160 = arith.negf %159 : vector<2x256xf32>
    %161 = math.exp %160 : vector<2x256xf32>
    %cst_59 = arith.constant 1.000000e+00 : f32
    %162 = vector.broadcast %cst_59 : f32 to vector<2x256xf32>
    %163 = arith.addf %162, %161 : vector<2x256xf32>
    %164 = arith.divf %162, %163 : vector<2x256xf32>
    %165 = vector.extract_strided_slice %143 {offsets = [0, 256], sizes = [2, 128], strides = [1, 1]} : vector<2x384xf32> to vector<2x128xf32>
    %166 = vector.extract_strided_slice %156 {offsets = [0, 0], sizes = [2, 128], strides = [1, 1]} : vector<2x256xf32> to vector<2x128xf32>
    %167 = vector.extract_strided_slice %146 {offsets = [0, 256], sizes = [2, 128], strides = [1, 1]} : vector<2x384xf32> to vector<2x128xf32>
    %168 = vector.broadcast %9 : vector<1x128xf32> to vector<2x128xf32>
    %169 = arith.addf %167, %168 : vector<2x128xf32>
    %170 = arith.mulf %166, %169 : vector<2x128xf32>
    %171 = arith.addf %165, %170 : vector<2x128xf32>
    %172 = math.tanh %171 : vector<2x128xf32>
    %173 = vector.extract_strided_slice %144 {offsets = [0, 256], sizes = [2, 128], strides = [1, 1]} : vector<2x384xf32> to vector<2x128xf32>
    %174 = vector.extract_strided_slice %164 {offsets = [0, 0], sizes = [2, 128], strides = [1, 1]} : vector<2x256xf32> to vector<2x128xf32>
    %175 = vector.extract_strided_slice %148 {offsets = [0, 256], sizes = [2, 128], strides = [1, 1]} : vector<2x384xf32> to vector<2x128xf32>
    %176 = vector.broadcast %10 : vector<1x128xf32> to vector<2x128xf32>
    %177 = arith.addf %175, %176 : vector<2x128xf32>
    %178 = arith.mulf %174, %177 : vector<2x128xf32>
    %179 = arith.addf %173, %178 : vector<2x128xf32>
    %180 = math.tanh %179 : vector<2x128xf32>
    %181 = vector.extract_strided_slice %156 {offsets = [0, 128], sizes = [2, 128], strides = [1, 1]} : vector<2x256xf32> to vector<2x128xf32>
    %182 = arith.subf %120, %172 : vector<2x128xf32>
    %183 = arith.mulf %181, %182 : vector<2x128xf32>
    %184 = arith.addf %172, %183 : vector<2x128xf32>
    %185 = vector.extract_strided_slice %164 {offsets = [0, 128], sizes = [2, 128], strides = [1, 1]} : vector<2x256xf32> to vector<2x128xf32>
    %186 = arith.subf %124, %180 : vector<2x128xf32>
    %187 = arith.mulf %185, %186 : vector<2x128xf32>
    %188 = arith.addf %180, %187 : vector<2x128xf32>
    %c4_60 = arith.constant 4 : index
    %c0_61 = arith.constant 0 : index
    %189 = vector.load %arg15[%c4_60, %c0_61] : memref<30x256xf32, #tpu.memory_space<vmem>>, vector<2x128xf32>
    tpu.vector_store %arg15[%c4_60, %c0_61], %184 {strides = array<i32>} : memref<30x256xf32, #tpu.memory_space<vmem>>, vector<2x128xf32>,
    %c24_62 = arith.constant 24 : index
    %c128_63 = arith.constant 128 : index
    %190 = vector.load %arg15[%c24_62, %c128_63] : memref<30x256xf32, #tpu.memory_space<vmem>>, vector<2x128xf32>
    tpu.vector_store %arg15[%c24_62, %c128_63], %188 {strides = array<i32>} : memref<30x256xf32, #tpu.memory_space<vmem>>, vector<2x128xf32>,
    %c4_64 = arith.constant 4 : index
    %c0_65 = arith.constant 0 : index
    %191 = vector.load %arg6[%c4_64, %c0_65] : memref<30x1xf32, #tpu.memory_space<vmem>>, vector<2x1xf32>
    %c24_66 = arith.constant 24 : index
    %c0_67 = arith.constant 0 : index
    %192 = vector.load %arg6[%c24_66, %c0_67] : memref<30x1xf32, #tpu.memory_space<vmem>>, vector<2x1xf32>
    %cst_68 = arith.constant 0.000000e+00 : f32
    %193 = vector.broadcast %cst_68 : f32 to vector<2x1xf32>
    %194 = arith.cmpf ogt, %191, %193 : vector<2x1xf32>
    %cst_69 = arith.constant -1.000000e+30 : f32
    %195 = vector.shape_cast %194 : vector<2x1xi1> to vector<2x1xi1>
    %196 = vector.broadcast %195 : vector<2x1xi1> to vector<2x128xi1>
    %197 = vector.broadcast %cst_69 : f32 to vector<2x128xf32>
    %198 = arith.select %196, %184, %197 : vector<2x128xi1>, vector<2x128xf32>
    %199 = arith.maximumf %135, %198 : vector<2x128xf32>
    %cst_70 = arith.constant 0.000000e+00 : f32
    %200 = vector.broadcast %cst_70 : f32 to vector<2x1xf32>
    %201 = arith.cmpf ogt, %192, %200 : vector<2x1xf32>
    %cst_71 = arith.constant -1.000000e+30 : f32
    %202 = vector.shape_cast %201 : vector<2x1xi1> to vector<2x1xi1>
    %203 = vector.broadcast %202 : vector<2x1xi1> to vector<2x128xi1>
    %204 = vector.broadcast %cst_71 : f32 to vector<2x128xf32>
    %205 = arith.select %203, %188, %204 : vector<2x128xi1>, vector<2x128xf32>
    %206 = arith.maximumf %142, %205 : vector<2x128xf32>
    %c6 = arith.constant 6 : index
    %c0_72 = arith.constant 0 : index
    %207 = vector.load %arg14[%c6, %c0_72] : memref<30x768xf32, #tpu.memory_space<vmem>>, vector<2x384xf32>
    %c22 = arith.constant 22 : index
    %c384_73 = arith.constant 384 : index
    %208 = vector.load %arg14[%c22, %c384_73] : memref<30x768xf32, #tpu.memory_space<vmem>>, vector<2x384xf32>
    %209 = arith.truncf %184 : vector<2x128xf32> to vector<2x128xbf16>
    %cst_74 = arith.constant dense<0.000000e+00> : vector<2x384xf32>
    %210 = tpu.matmul %209, %7, %cst_74 {dimension_numbers = #tpu.dot_dimension_numbers<[1], [0], [0], [1], [0, 0, 1, 1], [], []>} : vector<2x128xbf16>, vector<128x384xbf16>, vector<2x384xf32> -> vector<2x384xf32>
    %211 = arith.truncf %188 : vector<2x128xf32> to vector<2x128xbf16>
    %cst_75 = arith.constant dense<0.000000e+00> : vector<2x384xf32>
    %212 = tpu.matmul %211, %8, %cst_75 {dimension_numbers = #tpu.dot_dimension_numbers<[1], [0], [0], [1], [0, 0, 1, 1], [], []>} : vector<2x128xbf16>, vector<128x384xbf16>, vector<2x384xf32> -> vector<2x384xf32>
    %213 = vector.extract_strided_slice %207 {offsets = [0, 0], sizes = [2, 256], strides = [1, 1]} : vector<2x384xf32> to vector<2x256xf32>
    %214 = vector.extract_strided_slice %210 {offsets = [0, 0], sizes = [2, 256], strides = [1, 1]} : vector<2x384xf32> to vector<2x256xf32>
    %215 = arith.addf %213, %214 : vector<2x256xf32>
    %216 = arith.negf %215 : vector<2x256xf32>
    %217 = math.exp %216 : vector<2x256xf32>
    %cst_76 = arith.constant 1.000000e+00 : f32
    %218 = vector.broadcast %cst_76 : f32 to vector<2x256xf32>
    %219 = arith.addf %218, %217 : vector<2x256xf32>
    %220 = arith.divf %218, %219 : vector<2x256xf32>
    %221 = vector.extract_strided_slice %208 {offsets = [0, 0], sizes = [2, 256], strides = [1, 1]} : vector<2x384xf32> to vector<2x256xf32>
    %222 = vector.extract_strided_slice %212 {offsets = [0, 0], sizes = [2, 256], strides = [1, 1]} : vector<2x384xf32> to vector<2x256xf32>
    %223 = arith.addf %221, %222 : vector<2x256xf32>
    %224 = arith.negf %223 : vector<2x256xf32>
    %225 = math.exp %224 : vector<2x256xf32>
    %cst_77 = arith.constant 1.000000e+00 : f32
    %226 = vector.broadcast %cst_77 : f32 to vector<2x256xf32>
    %227 = arith.addf %226, %225 : vector<2x256xf32>
    %228 = arith.divf %226, %227 : vector<2x256xf32>
    %229 = vector.extract_strided_slice %207 {offsets = [0, 256], sizes = [2, 128], strides = [1, 1]} : vector<2x384xf32> to vector<2x128xf32>
    %230 = vector.extract_strided_slice %220 {offsets = [0, 0], sizes = [2, 128], strides = [1, 1]} : vector<2x256xf32> to vector<2x128xf32>
    %231 = vector.extract_strided_slice %210 {offsets = [0, 256], sizes = [2, 128], strides = [1, 1]} : vector<2x384xf32> to vector<2x128xf32>
    %232 = vector.broadcast %9 : vector<1x128xf32> to vector<2x128xf32>
    %233 = arith.addf %231, %232 : vector<2x128xf32>
    %234 = arith.mulf %230, %233 : vector<2x128xf32>
    %235 = arith.addf %229, %234 : vector<2x128xf32>
    %236 = math.tanh %235 : vector<2x128xf32>
    %237 = vector.extract_strided_slice %208 {offsets = [0, 256], sizes = [2, 128], strides = [1, 1]} : vector<2x384xf32> to vector<2x128xf32>
    %238 = vector.extract_strided_slice %228 {offsets = [0, 0], sizes = [2, 128], strides = [1, 1]} : vector<2x256xf32> to vector<2x128xf32>
    %239 = vector.extract_strided_slice %212 {offsets = [0, 256], sizes = [2, 128], strides = [1, 1]} : vector<2x384xf32> to vector<2x128xf32>
    %240 = vector.broadcast %10 : vector<1x128xf32> to vector<2x128xf32>
    %241 = arith.addf %239, %240 : vector<2x128xf32>
    %242 = arith.mulf %238, %241 : vector<2x128xf32>
    %243 = arith.addf %237, %242 : vector<2x128xf32>
    %244 = math.tanh %243 : vector<2x128xf32>
    %245 = vector.extract_strided_slice %220 {offsets = [0, 128], sizes = [2, 128], strides = [1, 1]} : vector<2x256xf32> to vector<2x128xf32>
    %246 = arith.subf %184, %236 : vector<2x128xf32>
    %247 = arith.mulf %245, %246 : vector<2x128xf32>
    %248 = arith.addf %236, %247 : vector<2x128xf32>
    %249 = vector.extract_strided_slice %228 {offsets = [0, 128], sizes = [2, 128], strides = [1, 1]} : vector<2x256xf32> to vector<2x128xf32>
    %250 = arith.subf %188, %244 : vector<2x128xf32>
    %251 = arith.mulf %249, %250 : vector<2x128xf32>
    %252 = arith.addf %244, %251 : vector<2x128xf32>
    %c6_78 = arith.constant 6 : index
    %c0_79 = arith.constant 0 : index
    %253 = vector.load %arg15[%c6_78, %c0_79] : memref<30x256xf32, #tpu.memory_space<vmem>>, vector<2x128xf32>
    tpu.vector_store %arg15[%c6_78, %c0_79], %248 {strides = array<i32>} : memref<30x256xf32, #tpu.memory_space<vmem>>, vector<2x128xf32>,
    %c22_80 = arith.constant 22 : index
    %c128_81 = arith.constant 128 : index
    %254 = vector.load %arg15[%c22_80, %c128_81] : memref<30x256xf32, #tpu.memory_space<vmem>>, vector<2x128xf32>
    tpu.vector_store %arg15[%c22_80, %c128_81], %252 {strides = array<i32>} : memref<30x256xf32, #tpu.memory_space<vmem>>, vector<2x128xf32>,
    %c6_82 = arith.constant 6 : index
    %c0_83 = arith.constant 0 : index
    %255 = vector.load %arg6[%c6_82, %c0_83] : memref<30x1xf32, #tpu.memory_space<vmem>>, vector<2x1xf32>
    %c22_84 = arith.constant 22 : index
    %c0_85 = arith.constant 0 : index
    %256 = vector.load %arg6[%c22_84, %c0_85] : memref<30x1xf32, #tpu.memory_space<vmem>>, vector<2x1xf32>
    %cst_86 = arith.constant 0.000000e+00 : f32
    %257 = vector.broadcast %cst_86 : f32 to vector<2x1xf32>
    %258 = arith.cmpf ogt, %255, %257 : vector<2x1xf32>
    %cst_87 = arith.constant -1.000000e+30 : f32
    %259 = vector.shape_cast %258 : vector<2x1xi1> to vector<2x1xi1>
    %260 = vector.broadcast %259 : vector<2x1xi1> to vector<2x128xi1>
    %261 = vector.broadcast %cst_87 : f32 to vector<2x128xf32>
    %262 = arith.select %260, %248, %261 : vector<2x128xi1>, vector<2x128xf32>
    %263 = arith.maximumf %199, %262 : vector<2x128xf32>
    %cst_88 = arith.constant 0.000000e+00 : f32
    %264 = vector.broadcast %cst_88 : f32 to vector<2x1xf32>
    %265 = arith.cmpf ogt, %256, %264 : vector<2x1xf32>
    %cst_89 = arith.constant -1.000000e+30 : f32
    %266 = vector.shape_cast %265 : vector<2x1xi1> to vector<2x1xi1>
    %267 = vector.broadcast %266 : vector<2x1xi1> to vector<2x128xi1>
    %268 = vector.broadcast %cst_89 : f32 to vector<2x128xf32>
    %269 = arith.select %267, %252, %268 : vector<2x128xi1>, vector<2x128xf32>
    %270 = arith.maximumf %206, %269 : vector<2x128xf32>
    %c8 = arith.constant 8 : index
    %c0_90 = arith.constant 0 : index
    %271 = vector.load %arg14[%c8, %c0_90] : memref<30x768xf32, #tpu.memory_space<vmem>>, vector<2x384xf32>
    %c20 = arith.constant 20 : index
    %c384_91 = arith.constant 384 : index
    %272 = vector.load %arg14[%c20, %c384_91] : memref<30x768xf32, #tpu.memory_space<vmem>>, vector<2x384xf32>
    %273 = arith.truncf %248 : vector<2x128xf32> to vector<2x128xbf16>
    %cst_92 = arith.constant dense<0.000000e+00> : vector<2x384xf32>
    %274 = tpu.matmul %273, %7, %cst_92 {dimension_numbers = #tpu.dot_dimension_numbers<[1], [0], [0], [1], [0, 0, 1, 1], [], []>} : vector<2x128xbf16>, vector<128x384xbf16>, vector<2x384xf32> -> vector<2x384xf32>
    %275 = arith.truncf %252 : vector<2x128xf32> to vector<2x128xbf16>
    %cst_93 = arith.constant dense<0.000000e+00> : vector<2x384xf32>
    %276 = tpu.matmul %275, %8, %cst_93 {dimension_numbers = #tpu.dot_dimension_numbers<[1], [0], [0], [1], [0, 0, 1, 1], [], []>} : vector<2x128xbf16>, vector<128x384xbf16>, vector<2x384xf32> -> vector<2x384xf32>
    %277 = vector.extract_strided_slice %271 {offsets = [0, 0], sizes = [2, 256], strides = [1, 1]} : vector<2x384xf32> to vector<2x256xf32>
    %278 = vector.extract_strided_slice %274 {offsets = [0, 0], sizes = [2, 256], strides = [1, 1]} : vector<2x384xf32> to vector<2x256xf32>
    %279 = arith.addf %277, %278 : vector<2x256xf32>
    %280 = arith.negf %279 : vector<2x256xf32>
    %281 = math.exp %280 : vector<2x256xf32>
    %cst_94 = arith.constant 1.000000e+00 : f32
    %282 = vector.broadcast %cst_94 : f32 to vector<2x256xf32>
    %283 = arith.addf %282, %281 : vector<2x256xf32>
    %284 = arith.divf %282, %283 : vector<2x256xf32>
    %285 = vector.extract_strided_slice %272 {offsets = [0, 0], sizes = [2, 256], strides = [1, 1]} : vector<2x384xf32> to vector<2x256xf32>
    %286 = vector.extract_strided_slice %276 {offsets = [0, 0], sizes = [2, 256], strides = [1, 1]} : vector<2x384xf32> to vector<2x256xf32>
    %287 = arith.addf %285, %286 : vector<2x256xf32>
    %288 = arith.negf %287 : vector<2x256xf32>
    %289 = math.exp %288 : vector<2x256xf32>
    %cst_95 = arith.constant 1.000000e+00 : f32
    %290 = vector.broadcast %cst_95 : f32 to vector<2x256xf32>
    %291 = arith.addf %290, %289 : vector<2x256xf32>
    %292 = arith.divf %290, %291 : vector<2x256xf32>
    %293 = vector.extract_strided_slice %271 {offsets = [0, 256], sizes = [2, 128], strides = [1, 1]} : vector<2x384xf32> to vector<2x128xf32>
    %294 = vector.extract_strided_slice %284 {offsets = [0, 0], sizes = [2, 128], strides = [1, 1]} : vector<2x256xf32> to vector<2x128xf32>
    %295 = vector.extract_strided_slice %274 {offsets = [0, 256], sizes = [2, 128], strides = [1, 1]} : vector<2x384xf32> to vector<2x128xf32>
    %296 = vector.broadcast %9 : vector<1x128xf32> to vector<2x128xf32>
    %297 = arith.addf %295, %296 : vector<2x128xf32>
    %298 = arith.mulf %294, %297 : vector<2x128xf32>
    %299 = arith.addf %293, %298 : vector<2x128xf32>
    %300 = math.tanh %299 : vector<2x128xf32>
    %301 = vector.extract_strided_slice %272 {offsets = [0, 256], sizes = [2, 128], strides = [1, 1]} : vector<2x384xf32> to vector<2x128xf32>
    %302 = vector.extract_strided_slice %292 {offsets = [0, 0], sizes = [2, 128], strides = [1, 1]} : vector<2x256xf32> to vector<2x128xf32>
    %303 = vector.extract_strided_slice %276 {offsets = [0, 256], sizes = [2, 128], strides = [1, 1]} : vector<2x384xf32> to vector<2x128xf32>
    %304 = vector.broadcast %10 : vector<1x128xf32> to vector<2x128xf32>
    %305 = arith.addf %303, %304 : vector<2x128xf32>
    %306 = arith.mulf %302, %305 : vector<2x128xf32>
    %307 = arith.addf %301, %306 : vector<2x128xf32>
    %308 = math.tanh %307 : vector<2x128xf32>
    %309 = vector.extract_strided_slice %284 {offsets = [0, 128], sizes = [2, 128], strides = [1, 1]} : vector<2x256xf32> to vector<2x128xf32>
    %310 = arith.subf %248, %300 : vector<2x128xf32>
    %311 = arith.mulf %309, %310 : vector<2x128xf32>
    %312 = arith.addf %300, %311 : vector<2x128xf32>
    %313 = vector.extract_strided_slice %292 {offsets = [0, 128], sizes = [2, 128], strides = [1, 1]} : vector<2x256xf32> to vector<2x128xf32>
    %314 = arith.subf %252, %308 : vector<2x128xf32>
    %315 = arith.mulf %313, %314 : vector<2x128xf32>
    %316 = arith.addf %308, %315 : vector<2x128xf32>
    %c8_96 = arith.constant 8 : index
    %c0_97 = arith.constant 0 : index
    %317 = vector.load %arg15[%c8_96, %c0_97] : memref<30x256xf32, #tpu.memory_space<vmem>>, vector<2x128xf32>
    tpu.vector_store %arg15[%c8_96, %c0_97], %312 {strides = array<i32>} : memref<30x256xf32, #tpu.memory_space<vmem>>, vector<2x128xf32>,
    %c20_98 = arith.constant 20 : index
    %c128_99 = arith.constant 128 : index
    %318 = vector.load %arg15[%c20_98, %c128_99] : memref<30x256xf32, #tpu.memory_space<vmem>>, vector<2x128xf32>
    tpu.vector_store %arg15[%c20_98, %c128_99], %316 {strides = array<i32>} : memref<30x256xf32, #tpu.memory_space<vmem>>, vector<2x128xf32>,
    %c8_100 = arith.constant 8 : index
    %c0_101 = arith.constant 0 : index
    %319 = vector.load %arg6[%c8_100, %c0_101] : memref<30x1xf32, #tpu.memory_space<vmem>>, vector<2x1xf32>
    %c20_102 = arith.constant 20 : index
    %c0_103 = arith.constant 0 : index
    %320 = vector.load %arg6[%c20_102, %c0_103] : memref<30x1xf32, #tpu.memory_space<vmem>>, vector<2x1xf32>
    %cst_104 = arith.constant 0.000000e+00 : f32
    %321 = vector.broadcast %cst_104 : f32 to vector<2x1xf32>
    %322 = arith.cmpf ogt, %319, %321 : vector<2x1xf32>
    %cst_105 = arith.constant -1.000000e+30 : f32
    %323 = vector.shape_cast %322 : vector<2x1xi1> to vector<2x1xi1>
    %324 = vector.broadcast %323 : vector<2x1xi1> to vector<2x128xi1>
    %325 = vector.broadcast %cst_105 : f32 to vector<2x128xf32>
    %326 = arith.select %324, %312, %325 : vector<2x128xi1>, vector<2x128xf32>
    %327 = arith.maximumf %263, %326 : vector<2x128xf32>
    %cst_106 = arith.constant 0.000000e+00 : f32
    %328 = vector.broadcast %cst_106 : f32 to vector<2x1xf32>
    %329 = arith.cmpf ogt, %320, %328 : vector<2x1xf32>
    %cst_107 = arith.constant -1.000000e+30 : f32
    %330 = vector.shape_cast %329 : vector<2x1xi1> to vector<2x1xi1>
    %331 = vector.broadcast %330 : vector<2x1xi1> to vector<2x128xi1>
    %332 = vector.broadcast %cst_107 : f32 to vector<2x128xf32>
    %333 = arith.select %331, %316, %332 : vector<2x128xi1>, vector<2x128xf32>
    %334 = arith.maximumf %270, %333 : vector<2x128xf32>
    %c10 = arith.constant 10 : index
    %c0_108 = arith.constant 0 : index
    %335 = vector.load %arg14[%c10, %c0_108] : memref<30x768xf32, #tpu.memory_space<vmem>>, vector<2x384xf32>
    %c18 = arith.constant 18 : index
    %c384_109 = arith.constant 384 : index
    %336 = vector.load %arg14[%c18, %c384_109] : memref<30x768xf32, #tpu.memory_space<vmem>>, vector<2x384xf32>
    %337 = arith.truncf %312 : vector<2x128xf32> to vector<2x128xbf16>
    %cst_110 = arith.constant dense<0.000000e+00> : vector<2x384xf32>
    %338 = tpu.matmul %337, %7, %cst_110 {dimension_numbers = #tpu.dot_dimension_numbers<[1], [0], [0], [1], [0, 0, 1, 1], [], []>} : vector<2x128xbf16>, vector<128x384xbf16>, vector<2x384xf32> -> vector<2x384xf32>
    %339 = arith.truncf %316 : vector<2x128xf32> to vector<2x128xbf16>
    %cst_111 = arith.constant dense<0.000000e+00> : vector<2x384xf32>
    %340 = tpu.matmul %339, %8, %cst_111 {dimension_numbers = #tpu.dot_dimension_numbers<[1], [0], [0], [1], [0, 0, 1, 1], [], []>} : vector<2x128xbf16>, vector<128x384xbf16>, vector<2x384xf32> -> vector<2x384xf32>
    %341 = vector.extract_strided_slice %335 {offsets = [0, 0], sizes = [2, 256], strides = [1, 1]} : vector<2x384xf32> to vector<2x256xf32>
    %342 = vector.extract_strided_slice %338 {offsets = [0, 0], sizes = [2, 256], strides = [1, 1]} : vector<2x384xf32> to vector<2x256xf32>
    %343 = arith.addf %341, %342 : vector<2x256xf32>
    %344 = arith.negf %343 : vector<2x256xf32>
    %345 = math.exp %344 : vector<2x256xf32>
    %cst_112 = arith.constant 1.000000e+00 : f32
    %346 = vector.broadcast %cst_112 : f32 to vector<2x256xf32>
    %347 = arith.addf %346, %345 : vector<2x256xf32>
    %348 = arith.divf %346, %347 : vector<2x256xf32>
    %349 = vector.extract_strided_slice %336 {offsets = [0, 0], sizes = [2, 256], strides = [1, 1]} : vector<2x384xf32> to vector<2x256xf32>
    %350 = vector.extract_strided_slice %340 {offsets = [0, 0], sizes = [2, 256], strides = [1, 1]} : vector<2x384xf32> to vector<2x256xf32>
    %351 = arith.addf %349, %350 : vector<2x256xf32>
    %352 = arith.negf %351 : vector<2x256xf32>
    %353 = math.exp %352 : vector<2x256xf32>
    %cst_113 = arith.constant 1.000000e+00 : f32
    %354 = vector.broadcast %cst_113 : f32 to vector<2x256xf32>
    %355 = arith.addf %354, %353 : vector<2x256xf32>
    %356 = arith.divf %354, %355 : vector<2x256xf32>
    %357 = vector.extract_strided_slice %335 {offsets = [0, 256], sizes = [2, 128], strides = [1, 1]} : vector<2x384xf32> to vector<2x128xf32>
    %358 = vector.extract_strided_slice %348 {offsets = [0, 0], sizes = [2, 128], strides = [1, 1]} : vector<2x256xf32> to vector<2x128xf32>
    %359 = vector.extract_strided_slice %338 {offsets = [0, 256], sizes = [2, 128], strides = [1, 1]} : vector<2x384xf32> to vector<2x128xf32>
    %360 = vector.broadcast %9 : vector<1x128xf32> to vector<2x128xf32>
    %361 = arith.addf %359, %360 : vector<2x128xf32>
    %362 = arith.mulf %358, %361 : vector<2x128xf32>
    %363 = arith.addf %357, %362 : vector<2x128xf32>
    %364 = math.tanh %363 : vector<2x128xf32>
    %365 = vector.extract_strided_slice %336 {offsets = [0, 256], sizes = [2, 128], strides = [1, 1]} : vector<2x384xf32> to vector<2x128xf32>
    %366 = vector.extract_strided_slice %356 {offsets = [0, 0], sizes = [2, 128], strides = [1, 1]} : vector<2x256xf32> to vector<2x128xf32>
    %367 = vector.extract_strided_slice %340 {offsets = [0, 256], sizes = [2, 128], strides = [1, 1]} : vector<2x384xf32> to vector<2x128xf32>
    %368 = vector.broadcast %10 : vector<1x128xf32> to vector<2x128xf32>
    %369 = arith.addf %367, %368 : vector<2x128xf32>
    %370 = arith.mulf %366, %369 : vector<2x128xf32>
    %371 = arith.addf %365, %370 : vector<2x128xf32>
    %372 = math.tanh %371 : vector<2x128xf32>
    %373 = vector.extract_strided_slice %348 {offsets = [0, 128], sizes = [2, 128], strides = [1, 1]} : vector<2x256xf32> to vector<2x128xf32>
    %374 = arith.subf %312, %364 : vector<2x128xf32>
    %375 = arith.mulf %373, %374 : vector<2x128xf32>
    %376 = arith.addf %364, %375 : vector<2x128xf32>
    %377 = vector.extract_strided_slice %356 {offsets = [0, 128], sizes = [2, 128], strides = [1, 1]} : vector<2x256xf32> to vector<2x128xf32>
    %378 = arith.subf %316, %372 : vector<2x128xf32>
    %379 = arith.mulf %377, %378 : vector<2x128xf32>
    %380 = arith.addf %372, %379 : vector<2x128xf32>
    %c10_114 = arith.constant 10 : index
    %c0_115 = arith.constant 0 : index
    %381 = vector.load %arg15[%c10_114, %c0_115] : memref<30x256xf32, #tpu.memory_space<vmem>>, vector<2x128xf32>
    tpu.vector_store %arg15[%c10_114, %c0_115], %376 {strides = array<i32>} : memref<30x256xf32, #tpu.memory_space<vmem>>, vector<2x128xf32>,
    %c18_116 = arith.constant 18 : index
    %c128_117 = arith.constant 128 : index
    %382 = vector.load %arg15[%c18_116, %c128_117] : memref<30x256xf32, #tpu.memory_space<vmem>>, vector<2x128xf32>
    tpu.vector_store %arg15[%c18_116, %c128_117], %380 {strides = array<i32>} : memref<30x256xf32, #tpu.memory_space<vmem>>, vector<2x128xf32>,
    %c10_118 = arith.constant 10 : index
    %c0_119 = arith.constant 0 : index
    %383 = vector.load %arg6[%c10_118, %c0_119] : memref<30x1xf32, #tpu.memory_space<vmem>>, vector<2x1xf32>
    %c18_120 = arith.constant 18 : index
    %c0_121 = arith.constant 0 : index
    %384 = vector.load %arg6[%c18_120, %c0_121] : memref<30x1xf32, #tpu.memory_space<vmem>>, vector<2x1xf32>
    %cst_122 = arith.constant 0.000000e+00 : f32
    %385 = vector.broadcast %cst_122 : f32 to vector<2x1xf32>
    %386 = arith.cmpf ogt, %383, %385 : vector<2x1xf32>
    %cst_123 = arith.constant -1.000000e+30 : f32
    %387 = vector.shape_cast %386 : vector<2x1xi1> to vector<2x1xi1>
    %388 = vector.broadcast %387 : vector<2x1xi1> to vector<2x128xi1>
    %389 = vector.broadcast %cst_123 : f32 to vector<2x128xf32>
    %390 = arith.select %388, %376, %389 : vector<2x128xi1>, vector<2x128xf32>
    %391 = arith.maximumf %327, %390 : vector<2x128xf32>
    %cst_124 = arith.constant 0.000000e+00 : f32
    %392 = vector.broadcast %cst_124 : f32 to vector<2x1xf32>
    %393 = arith.cmpf ogt, %384, %392 : vector<2x1xf32>
    %cst_125 = arith.constant -1.000000e+30 : f32
    %394 = vector.shape_cast %393 : vector<2x1xi1> to vector<2x1xi1>
    %395 = vector.broadcast %394 : vector<2x1xi1> to vector<2x128xi1>
    %396 = vector.broadcast %cst_125 : f32 to vector<2x128xf32>
    %397 = arith.select %395, %380, %396 : vector<2x128xi1>, vector<2x128xf32>
    %398 = arith.maximumf %334, %397 : vector<2x128xf32>
    %c12 = arith.constant 12 : index
    %c0_126 = arith.constant 0 : index
    %399 = vector.load %arg14[%c12, %c0_126] : memref<30x768xf32, #tpu.memory_space<vmem>>, vector<2x384xf32>
    %c16 = arith.constant 16 : index
    %c384_127 = arith.constant 384 : index
    %400 = vector.load %arg14[%c16, %c384_127] : memref<30x768xf32, #tpu.memory_space<vmem>>, vector<2x384xf32>
    %401 = arith.truncf %376 : vector<2x128xf32> to vector<2x128xbf16>
    %cst_128 = arith.constant dense<0.000000e+00> : vector<2x384xf32>
    %402 = tpu.matmul %401, %7, %cst_128 {dimension_numbers = #tpu.dot_dimension_numbers<[1], [0], [0], [1], [0, 0, 1, 1], [], []>} : vector<2x128xbf16>, vector<128x384xbf16>, vector<2x384xf32> -> vector<2x384xf32>
    %403 = arith.truncf %380 : vector<2x128xf32> to vector<2x128xbf16>
    %cst_129 = arith.constant dense<0.000000e+00> : vector<2x384xf32>
    %404 = tpu.matmul %403, %8, %cst_129 {dimension_numbers = #tpu.dot_dimension_numbers<[1], [0], [0], [1], [0, 0, 1, 1], [], []>} : vector<2x128xbf16>, vector<128x384xbf16>, vector<2x384xf32> -> vector<2x384xf32>
    %405 = vector.extract_strided_slice %399 {offsets = [0, 0], sizes = [2, 256], strides = [1, 1]} : vector<2x384xf32> to vector<2x256xf32>
    %406 = vector.extract_strided_slice %402 {offsets = [0, 0], sizes = [2, 256], strides = [1, 1]} : vector<2x384xf32> to vector<2x256xf32>
    %407 = arith.addf %405, %406 : vector<2x256xf32>
    %408 = arith.negf %407 : vector<2x256xf32>
    %409 = math.exp %408 : vector<2x256xf32>
    %cst_130 = arith.constant 1.000000e+00 : f32
    %410 = vector.broadcast %cst_130 : f32 to vector<2x256xf32>
    %411 = arith.addf %410, %409 : vector<2x256xf32>
    %412 = arith.divf %410, %411 : vector<2x256xf32>
    %413 = vector.extract_strided_slice %400 {offsets = [0, 0], sizes = [2, 256], strides = [1, 1]} : vector<2x384xf32> to vector<2x256xf32>
    %414 = vector.extract_strided_slice %404 {offsets = [0, 0], sizes = [2, 256], strides = [1, 1]} : vector<2x384xf32> to vector<2x256xf32>
    %415 = arith.addf %413, %414 : vector<2x256xf32>
    %416 = arith.negf %415 : vector<2x256xf32>
    %417 = math.exp %416 : vector<2x256xf32>
    %cst_131 = arith.constant 1.000000e+00 : f32
    %418 = vector.broadcast %cst_131 : f32 to vector<2x256xf32>
    %419 = arith.addf %418, %417 : vector<2x256xf32>
    %420 = arith.divf %418, %419 : vector<2x256xf32>
    %421 = vector.extract_strided_slice %399 {offsets = [0, 256], sizes = [2, 128], strides = [1, 1]} : vector<2x384xf32> to vector<2x128xf32>
    %422 = vector.extract_strided_slice %412 {offsets = [0, 0], sizes = [2, 128], strides = [1, 1]} : vector<2x256xf32> to vector<2x128xf32>
    %423 = vector.extract_strided_slice %402 {offsets = [0, 256], sizes = [2, 128], strides = [1, 1]} : vector<2x384xf32> to vector<2x128xf32>
    %424 = vector.broadcast %9 : vector<1x128xf32> to vector<2x128xf32>
    %425 = arith.addf %423, %424 : vector<2x128xf32>
    %426 = arith.mulf %422, %425 : vector<2x128xf32>
    %427 = arith.addf %421, %426 : vector<2x128xf32>
    %428 = math.tanh %427 : vector<2x128xf32>
    %429 = vector.extract_strided_slice %400 {offsets = [0, 256], sizes = [2, 128], strides = [1, 1]} : vector<2x384xf32> to vector<2x128xf32>
    %430 = vector.extract_strided_slice %420 {offsets = [0, 0], sizes = [2, 128], strides = [1, 1]} : vector<2x256xf32> to vector<2x128xf32>
    %431 = vector.extract_strided_slice %404 {offsets = [0, 256], sizes = [2, 128], strides = [1, 1]} : vector<2x384xf32> to vector<2x128xf32>
    %432 = vector.broadcast %10 : vector<1x128xf32> to vector<2x128xf32>
    %433 = arith.addf %431, %432 : vector<2x128xf32>
    %434 = arith.mulf %430, %433 : vector<2x128xf32>
    %435 = arith.addf %429, %434 : vector<2x128xf32>
    %436 = math.tanh %435 : vector<2x128xf32>
    %437 = vector.extract_strided_slice %412 {offsets = [0, 128], sizes = [2, 128], strides = [1, 1]} : vector<2x256xf32> to vector<2x128xf32>
    %438 = arith.subf %376, %428 : vector<2x128xf32>
    %439 = arith.mulf %437, %438 : vector<2x128xf32>
    %440 = arith.addf %428, %439 : vector<2x128xf32>
    %441 = vector.extract_strided_slice %420 {offsets = [0, 128], sizes = [2, 128], strides = [1, 1]} : vector<2x256xf32> to vector<2x128xf32>
    %442 = arith.subf %380, %436 : vector<2x128xf32>
    %443 = arith.mulf %441, %442 : vector<2x128xf32>
    %444 = arith.addf %436, %443 : vector<2x128xf32>
    %c12_132 = arith.constant 12 : index
    %c0_133 = arith.constant 0 : index
    %445 = vector.load %arg15[%c12_132, %c0_133] : memref<30x256xf32, #tpu.memory_space<vmem>>, vector<2x128xf32>
    tpu.vector_store %arg15[%c12_132, %c0_133], %440 {strides = array<i32>} : memref<30x256xf32, #tpu.memory_space<vmem>>, vector<2x128xf32>,
    %c16_134 = arith.constant 16 : index
    %c128_135 = arith.constant 128 : index
    %446 = vector.load %arg15[%c16_134, %c128_135] : memref<30x256xf32, #tpu.memory_space<vmem>>, vector<2x128xf32>
    tpu.vector_store %arg15[%c16_134, %c128_135], %444 {strides = array<i32>} : memref<30x256xf32, #tpu.memory_space<vmem>>, vector<2x128xf32>,
    %c12_136 = arith.constant 12 : index
    %c0_137 = arith.constant 0 : index
    %447 = vector.load %arg6[%c12_136, %c0_137] : memref<30x1xf32, #tpu.memory_space<vmem>>, vector<2x1xf32>
    %c16_138 = arith.constant 16 : index
    %c0_139 = arith.constant 0 : index
    %448 = vector.load %arg6[%c16_138, %c0_139] : memref<30x1xf32, #tpu.memory_space<vmem>>, vector<2x1xf32>
    %cst_140 = arith.constant 0.000000e+00 : f32
    %449 = vector.broadcast %cst_140 : f32 to vector<2x1xf32>
    %450 = arith.cmpf ogt, %447, %449 : vector<2x1xf32>
    %cst_141 = arith.constant -1.000000e+30 : f32
    %451 = vector.shape_cast %450 : vector<2x1xi1> to vector<2x1xi1>
    %452 = vector.broadcast %451 : vector<2x1xi1> to vector<2x128xi1>
    %453 = vector.broadcast %cst_141 : f32 to vector<2x128xf32>
    %454 = arith.select %452, %440, %453 : vector<2x128xi1>, vector<2x128xf32>
    %455 = arith.maximumf %391, %454 : vector<2x128xf32>
    %cst_142 = arith.constant 0.000000e+00 : f32
    %456 = vector.broadcast %cst_142 : f32 to vector<2x1xf32>
    %457 = arith.cmpf ogt, %448, %456 : vector<2x1xf32>
    %cst_143 = arith.constant -1.000000e+30 : f32
    %458 = vector.shape_cast %457 : vector<2x1xi1> to vector<2x1xi1>
    %459 = vector.broadcast %458 : vector<2x1xi1> to vector<2x128xi1>
    %460 = vector.broadcast %cst_143 : f32 to vector<2x128xf32>
    %461 = arith.select %459, %444, %460 : vector<2x128xi1>, vector<2x128xf32>
    %462 = arith.maximumf %398, %461 : vector<2x128xf32>
    %c14 = arith.constant 14 : index
    %c0_144 = arith.constant 0 : index
    %463 = vector.load %arg14[%c14, %c0_144] : memref<30x768xf32, #tpu.memory_space<vmem>>, vector<2x384xf32>
    %c14_145 = arith.constant 14 : index
    %c384_146 = arith.constant 384 : index
    %464 = vector.load %arg14[%c14_145, %c384_146] : memref<30x768xf32, #tpu.memory_space<vmem>>, vector<2x384xf32>
    %465 = arith.truncf %440 : vector<2x128xf32> to vector<2x128xbf16>
    %cst_147 = arith.constant dense<0.000000e+00> : vector<2x384xf32>
    %466 = tpu.matmul %465, %7, %cst_147 {dimension_numbers = #tpu.dot_dimension_numbers<[1], [0], [0], [1], [0, 0, 1, 1], [], []>} : vector<2x128xbf16>, vector<128x384xbf16>, vector<2x384xf32> -> vector<2x384xf32>
    %467 = arith.truncf %444 : vector<2x128xf32> to vector<2x128xbf16>
    %cst_148 = arith.constant dense<0.000000e+00> : vector<2x384xf32>
    %468 = tpu.matmul %467, %8, %cst_148 {dimension_numbers = #tpu.dot_dimension_numbers<[1], [0], [0], [1], [0, 0, 1, 1], [], []>} : vector<2x128xbf16>, vector<128x384xbf16>, vector<2x384xf32> -> vector<2x384xf32>
    %469 = vector.extract_strided_slice %463 {offsets = [0, 0], sizes = [2, 256], strides = [1, 1]} : vector<2x384xf32> to vector<2x256xf32>
    %470 = vector.extract_strided_slice %466 {offsets = [0, 0], sizes = [2, 256], strides = [1, 1]} : vector<2x384xf32> to vector<2x256xf32>
    %471 = arith.addf %469, %470 : vector<2x256xf32>
    %472 = arith.negf %471 : vector<2x256xf32>
    %473 = math.exp %472 : vector<2x256xf32>
    %cst_149 = arith.constant 1.000000e+00 : f32
    %474 = vector.broadcast %cst_149 : f32 to vector<2x256xf32>
    %475 = arith.addf %474, %473 : vector<2x256xf32>
    %476 = arith.divf %474, %475 : vector<2x256xf32>
    %477 = vector.extract_strided_slice %464 {offsets = [0, 0], sizes = [2, 256], strides = [1, 1]} : vector<2x384xf32> to vector<2x256xf32>
    %478 = vector.extract_strided_slice %468 {offsets = [0, 0], sizes = [2, 256], strides = [1, 1]} : vector<2x384xf32> to vector<2x256xf32>
    %479 = arith.addf %477, %478 : vector<2x256xf32>
    %480 = arith.negf %479 : vector<2x256xf32>
    %481 = math.exp %480 : vector<2x256xf32>
    %cst_150 = arith.constant 1.000000e+00 : f32
    %482 = vector.broadcast %cst_150 : f32 to vector<2x256xf32>
    %483 = arith.addf %482, %481 : vector<2x256xf32>
    %484 = arith.divf %482, %483 : vector<2x256xf32>
    %485 = vector.extract_strided_slice %463 {offsets = [0, 256], sizes = [2, 128], strides = [1, 1]} : vector<2x384xf32> to vector<2x128xf32>
    %486 = vector.extract_strided_slice %476 {offsets = [0, 0], sizes = [2, 128], strides = [1, 1]} : vector<2x256xf32> to vector<2x128xf32>
    %487 = vector.extract_strided_slice %466 {offsets = [0, 256], sizes = [2, 128], strides = [1, 1]} : vector<2x384xf32> to vector<2x128xf32>
    %488 = vector.broadcast %9 : vector<1x128xf32> to vector<2x128xf32>
    %489 = arith.addf %487, %488 : vector<2x128xf32>
    %490 = arith.mulf %486, %489 : vector<2x128xf32>
    %491 = arith.addf %485, %490 : vector<2x128xf32>
    %492 = math.tanh %491 : vector<2x128xf32>
    %493 = vector.extract_strided_slice %464 {offsets = [0, 256], sizes = [2, 128], strides = [1, 1]} : vector<2x384xf32> to vector<2x128xf32>
    %494 = vector.extract_strided_slice %484 {offsets = [0, 0], sizes = [2, 128], strides = [1, 1]} : vector<2x256xf32> to vector<2x128xf32>
    %495 = vector.extract_strided_slice %468 {offsets = [0, 256], sizes = [2, 128], strides = [1, 1]} : vector<2x384xf32> to vector<2x128xf32>
    %496 = vector.broadcast %10 : vector<1x128xf32> to vector<2x128xf32>
    %497 = arith.addf %495, %496 : vector<2x128xf32>
    %498 = arith.mulf %494, %497 : vector<2x128xf32>
    %499 = arith.addf %493, %498 : vector<2x128xf32>
    %500 = math.tanh %499 : vector<2x128xf32>
    %501 = vector.extract_strided_slice %476 {offsets = [0, 128], sizes = [2, 128], strides = [1, 1]} : vector<2x256xf32> to vector<2x128xf32>
    %502 = arith.subf %440, %492 : vector<2x128xf32>
    %503 = arith.mulf %501, %502 : vector<2x128xf32>
    %504 = arith.addf %492, %503 : vector<2x128xf32>
    %505 = vector.extract_strided_slice %484 {offsets = [0, 128], sizes = [2, 128], strides = [1, 1]} : vector<2x256xf32> to vector<2x128xf32>
    %506 = arith.subf %444, %500 : vector<2x128xf32>
    %507 = arith.mulf %505, %506 : vector<2x128xf32>
    %508 = arith.addf %500, %507 : vector<2x128xf32>
    %c14_151 = arith.constant 14 : index
    %c0_152 = arith.constant 0 : index
    %509 = vector.load %arg15[%c14_151, %c0_152] : memref<30x256xf32, #tpu.memory_space<vmem>>, vector<2x128xf32>
    tpu.vector_store %arg15[%c14_151, %c0_152], %504 {strides = array<i32>} : memref<30x256xf32, #tpu.memory_space<vmem>>, vector<2x128xf32>,
    %c14_153 = arith.constant 14 : index
    %c128_154 = arith.constant 128 : index
    %510 = vector.load %arg15[%c14_153, %c128_154] : memref<30x256xf32, #tpu.memory_space<vmem>>, vector<2x128xf32>
    tpu.vector_store %arg15[%c14_153, %c128_154], %508 {strides = array<i32>} : memref<30x256xf32, #tpu.memory_space<vmem>>, vector<2x128xf32>,
    %c14_155 = arith.constant 14 : index
    %c0_156 = arith.constant 0 : index
    %511 = vector.load %arg6[%c14_155, %c0_156] : memref<30x1xf32, #tpu.memory_space<vmem>>, vector<2x1xf32>
    %c14_157 = arith.constant 14 : index
    %c0_158 = arith.constant 0 : index
    %512 = vector.load %arg6[%c14_157, %c0_158] : memref<30x1xf32, #tpu.memory_space<vmem>>, vector<2x1xf32>
    %cst_159 = arith.constant 0.000000e+00 : f32
    %513 = vector.broadcast %cst_159 : f32 to vector<2x1xf32>
    %514 = arith.cmpf ogt, %511, %513 : vector<2x1xf32>
    %cst_160 = arith.constant -1.000000e+30 : f32
    %515 = vector.shape_cast %514 : vector<2x1xi1> to vector<2x1xi1>
    %516 = vector.broadcast %515 : vector<2x1xi1> to vector<2x128xi1>
    %517 = vector.broadcast %cst_160 : f32 to vector<2x128xf32>
    %518 = arith.select %516, %504, %517 : vector<2x128xi1>, vector<2x128xf32>
    %519 = arith.maximumf %455, %518 : vector<2x128xf32>
    %cst_161 = arith.constant 0.000000e+00 : f32
    %520 = vector.broadcast %cst_161 : f32 to vector<2x1xf32>
    %521 = arith.cmpf ogt, %512, %520 : vector<2x1xf32>
    %cst_162 = arith.constant -1.000000e+30 : f32
    %522 = vector.shape_cast %521 : vector<2x1xi1> to vector<2x1xi1>
    %523 = vector.broadcast %522 : vector<2x1xi1> to vector<2x128xi1>
    %524 = vector.broadcast %cst_162 : f32 to vector<2x128xf32>
    %525 = arith.select %523, %508, %524 : vector<2x128xi1>, vector<2x128xf32>
    %526 = arith.maximumf %462, %525 : vector<2x128xf32>
    %c16_163 = arith.constant 16 : index
    %c0_164 = arith.constant 0 : index
    %527 = vector.load %arg14[%c16_163, %c0_164] : memref<30x768xf32, #tpu.memory_space<vmem>>, vector<2x384xf32>
    %c12_165 = arith.constant 12 : index
    %c384_166 = arith.constant 384 : index
    %528 = vector.load %arg14[%c12_165, %c384_166] : memref<30x768xf32, #tpu.memory_space<vmem>>, vector<2x384xf32>
    %529 = arith.truncf %504 : vector<2x128xf32> to vector<2x128xbf16>
    %cst_167 = arith.constant dense<0.000000e+00> : vector<2x384xf32>
    %530 = tpu.matmul %529, %7, %cst_167 {dimension_numbers = #tpu.dot_dimension_numbers<[1], [0], [0], [1], [0, 0, 1, 1], [], []>} : vector<2x128xbf16>, vector<128x384xbf16>, vector<2x384xf32> -> vector<2x384xf32>
    %531 = arith.truncf %508 : vector<2x128xf32> to vector<2x128xbf16>
    %cst_168 = arith.constant dense<0.000000e+00> : vector<2x384xf32>
    %532 = tpu.matmul %531, %8, %cst_168 {dimension_numbers = #tpu.dot_dimension_numbers<[1], [0], [0], [1], [0, 0, 1, 1], [], []>} : vector<2x128xbf16>, vector<128x384xbf16>, vector<2x384xf32> -> vector<2x384xf32>
    %533 = vector.extract_strided_slice %527 {offsets = [0, 0], sizes = [2, 256], strides = [1, 1]} : vector<2x384xf32> to vector<2x256xf32>
    %534 = vector.extract_strided_slice %530 {offsets = [0, 0], sizes = [2, 256], strides = [1, 1]} : vector<2x384xf32> to vector<2x256xf32>
    %535 = arith.addf %533, %534 : vector<2x256xf32>
    %536 = arith.negf %535 : vector<2x256xf32>
    %537 = math.exp %536 : vector<2x256xf32>
    %cst_169 = arith.constant 1.000000e+00 : f32
    %538 = vector.broadcast %cst_169 : f32 to vector<2x256xf32>
    %539 = arith.addf %538, %537 : vector<2x256xf32>
    %540 = arith.divf %538, %539 : vector<2x256xf32>
    %541 = vector.extract_strided_slice %528 {offsets = [0, 0], sizes = [2, 256], strides = [1, 1]} : vector<2x384xf32> to vector<2x256xf32>
    %542 = vector.extract_strided_slice %532 {offsets = [0, 0], sizes = [2, 256], strides = [1, 1]} : vector<2x384xf32> to vector<2x256xf32>
    %543 = arith.addf %541, %542 : vector<2x256xf32>
    %544 = arith.negf %543 : vector<2x256xf32>
    %545 = math.exp %544 : vector<2x256xf32>
    %cst_170 = arith.constant 1.000000e+00 : f32
    %546 = vector.broadcast %cst_170 : f32 to vector<2x256xf32>
    %547 = arith.addf %546, %545 : vector<2x256xf32>
    %548 = arith.divf %546, %547 : vector<2x256xf32>
    %549 = vector.extract_strided_slice %527 {offsets = [0, 256], sizes = [2, 128], strides = [1, 1]} : vector<2x384xf32> to vector<2x128xf32>
    %550 = vector.extract_strided_slice %540 {offsets = [0, 0], sizes = [2, 128], strides = [1, 1]} : vector<2x256xf32> to vector<2x128xf32>
    %551 = vector.extract_strided_slice %530 {offsets = [0, 256], sizes = [2, 128], strides = [1, 1]} : vector<2x384xf32> to vector<2x128xf32>
    %552 = vector.broadcast %9 : vector<1x128xf32> to vector<2x128xf32>
    %553 = arith.addf %551, %552 : vector<2x128xf32>
    %554 = arith.mulf %550, %553 : vector<2x128xf32>
    %555 = arith.addf %549, %554 : vector<2x128xf32>
    %556 = math.tanh %555 : vector<2x128xf32>
    %557 = vector.extract_strided_slice %528 {offsets = [0, 256], sizes = [2, 128], strides = [1, 1]} : vector<2x384xf32> to vector<2x128xf32>
    %558 = vector.extract_strided_slice %548 {offsets = [0, 0], sizes = [2, 128], strides = [1, 1]} : vector<2x256xf32> to vector<2x128xf32>
    %559 = vector.extract_strided_slice %532 {offsets = [0, 256], sizes = [2, 128], strides = [1, 1]} : vector<2x384xf32> to vector<2x128xf32>
    %560 = vector.broadcast %10 : vector<1x128xf32> to vector<2x128xf32>
    %561 = arith.addf %559, %560 : vector<2x128xf32>
    %562 = arith.mulf %558, %561 : vector<2x128xf32>
    %563 = arith.addf %557, %562 : vector<2x128xf32>
    %564 = math.tanh %563 : vector<2x128xf32>
    %565 = vector.extract_strided_slice %540 {offsets = [0, 128], sizes = [2, 128], strides = [1, 1]} : vector<2x256xf32> to vector<2x128xf32>
    %566 = arith.subf %504, %556 : vector<2x128xf32>
    %567 = arith.mulf %565, %566 : vector<2x128xf32>
    %568 = arith.addf %556, %567 : vector<2x128xf32>
    %569 = vector.extract_strided_slice %548 {offsets = [0, 128], sizes = [2, 128], strides = [1, 1]} : vector<2x256xf32> to vector<2x128xf32>
    %570 = arith.subf %508, %564 : vector<2x128xf32>
    %571 = arith.mulf %569, %570 : vector<2x128xf32>
    %572 = arith.addf %564, %571 : vector<2x128xf32>
    %c16_171 = arith.constant 16 : index
    %c0_172 = arith.constant 0 : index
    %573 = vector.load %arg15[%c16_171, %c0_172] : memref<30x256xf32, #tpu.memory_space<vmem>>, vector<2x128xf32>
    tpu.vector_store %arg15[%c16_171, %c0_172], %568 {strides = array<i32>} : memref<30x256xf32, #tpu.memory_space<vmem>>, vector<2x128xf32>,
    %c12_173 = arith.constant 12 : index
    %c128_174 = arith.constant 128 : index
    %574 = vector.load %arg15[%c12_173, %c128_174] : memref<30x256xf32, #tpu.memory_space<vmem>>, vector<2x128xf32>
    tpu.vector_store %arg15[%c12_173, %c128_174], %572 {strides = array<i32>} : memref<30x256xf32, #tpu.memory_space<vmem>>, vector<2x128xf32>,
    %c16_175 = arith.constant 16 : index
    %c0_176 = arith.constant 0 : index
    %575 = vector.load %arg6[%c16_175, %c0_176] : memref<30x1xf32, #tpu.memory_space<vmem>>, vector<2x1xf32>
    %c12_177 = arith.constant 12 : index
    %c0_178 = arith.constant 0 : index
    %576 = vector.load %arg6[%c12_177, %c0_178] : memref<30x1xf32, #tpu.memory_space<vmem>>, vector<2x1xf32>
    %cst_179 = arith.constant 0.000000e+00 : f32
    %577 = vector.broadcast %cst_179 : f32 to vector<2x1xf32>
    %578 = arith.cmpf ogt, %575, %577 : vector<2x1xf32>
    %cst_180 = arith.constant -1.000000e+30 : f32
    %579 = vector.shape_cast %578 : vector<2x1xi1> to vector<2x1xi1>
    %580 = vector.broadcast %579 : vector<2x1xi1> to vector<2x128xi1>
    %581 = vector.broadcast %cst_180 : f32 to vector<2x128xf32>
    %582 = arith.select %580, %568, %581 : vector<2x128xi1>, vector<2x128xf32>
    %583 = arith.maximumf %519, %582 : vector<2x128xf32>
    %cst_181 = arith.constant 0.000000e+00 : f32
    %584 = vector.broadcast %cst_181 : f32 to vector<2x1xf32>
    %585 = arith.cmpf ogt, %576, %584 : vector<2x1xf32>
    %cst_182 = arith.constant -1.000000e+30 : f32
    %586 = vector.shape_cast %585 : vector<2x1xi1> to vector<2x1xi1>
    %587 = vector.broadcast %586 : vector<2x1xi1> to vector<2x128xi1>
    %588 = vector.broadcast %cst_182 : f32 to vector<2x128xf32>
    %589 = arith.select %587, %572, %588 : vector<2x128xi1>, vector<2x128xf32>
    %590 = arith.maximumf %526, %589 : vector<2x128xf32>
    %c18_183 = arith.constant 18 : index
    %c0_184 = arith.constant 0 : index
    %591 = vector.load %arg14[%c18_183, %c0_184] : memref<30x768xf32, #tpu.memory_space<vmem>>, vector<2x384xf32>
    %c10_185 = arith.constant 10 : index
    %c384_186 = arith.constant 384 : index
    %592 = vector.load %arg14[%c10_185, %c384_186] : memref<30x768xf32, #tpu.memory_space<vmem>>, vector<2x384xf32>
    %593 = arith.truncf %568 : vector<2x128xf32> to vector<2x128xbf16>
    %cst_187 = arith.constant dense<0.000000e+00> : vector<2x384xf32>
    %594 = tpu.matmul %593, %7, %cst_187 {dimension_numbers = #tpu.dot_dimension_numbers<[1], [0], [0], [1], [0, 0, 1, 1], [], []>} : vector<2x128xbf16>, vector<128x384xbf16>, vector<2x384xf32> -> vector<2x384xf32>
    %595 = arith.truncf %572 : vector<2x128xf32> to vector<2x128xbf16>
    %cst_188 = arith.constant dense<0.000000e+00> : vector<2x384xf32>
    %596 = tpu.matmul %595, %8, %cst_188 {dimension_numbers = #tpu.dot_dimension_numbers<[1], [0], [0], [1], [0, 0, 1, 1], [], []>} : vector<2x128xbf16>, vector<128x384xbf16>, vector<2x384xf32> -> vector<2x384xf32>
    %597 = vector.extract_strided_slice %591 {offsets = [0, 0], sizes = [2, 256], strides = [1, 1]} : vector<2x384xf32> to vector<2x256xf32>
    %598 = vector.extract_strided_slice %594 {offsets = [0, 0], sizes = [2, 256], strides = [1, 1]} : vector<2x384xf32> to vector<2x256xf32>
    %599 = arith.addf %597, %598 : vector<2x256xf32>
    %600 = arith.negf %599 : vector<2x256xf32>
    %601 = math.exp %600 : vector<2x256xf32>
    %cst_189 = arith.constant 1.000000e+00 : f32
    %602 = vector.broadcast %cst_189 : f32 to vector<2x256xf32>
    %603 = arith.addf %602, %601 : vector<2x256xf32>
    %604 = arith.divf %602, %603 : vector<2x256xf32>
    %605 = vector.extract_strided_slice %592 {offsets = [0, 0], sizes = [2, 256], strides = [1, 1]} : vector<2x384xf32> to vector<2x256xf32>
    %606 = vector.extract_strided_slice %596 {offsets = [0, 0], sizes = [2, 256], strides = [1, 1]} : vector<2x384xf32> to vector<2x256xf32>
    %607 = arith.addf %605, %606 : vector<2x256xf32>
    %608 = arith.negf %607 : vector<2x256xf32>
    %609 = math.exp %608 : vector<2x256xf32>
    %cst_190 = arith.constant 1.000000e+00 : f32
    %610 = vector.broadcast %cst_190 : f32 to vector<2x256xf32>
    %611 = arith.addf %610, %609 : vector<2x256xf32>
    %612 = arith.divf %610, %611 : vector<2x256xf32>
    %613 = vector.extract_strided_slice %591 {offsets = [0, 256], sizes = [2, 128], strides = [1, 1]} : vector<2x384xf32> to vector<2x128xf32>
    %614 = vector.extract_strided_slice %604 {offsets = [0, 0], sizes = [2, 128], strides = [1, 1]} : vector<2x256xf32> to vector<2x128xf32>
    %615 = vector.extract_strided_slice %594 {offsets = [0, 256], sizes = [2, 128], strides = [1, 1]} : vector<2x384xf32> to vector<2x128xf32>
    %616 = vector.broadcast %9 : vector<1x128xf32> to vector<2x128xf32>
    %617 = arith.addf %615, %616 : vector<2x128xf32>
    %618 = arith.mulf %614, %617 : vector<2x128xf32>
    %619 = arith.addf %613, %618 : vector<2x128xf32>
    %620 = math.tanh %619 : vector<2x128xf32>
    %621 = vector.extract_strided_slice %592 {offsets = [0, 256], sizes = [2, 128], strides = [1, 1]} : vector<2x384xf32> to vector<2x128xf32>
    %622 = vector.extract_strided_slice %612 {offsets = [0, 0], sizes = [2, 128], strides = [1, 1]} : vector<2x256xf32> to vector<2x128xf32>
    %623 = vector.extract_strided_slice %596 {offsets = [0, 256], sizes = [2, 128], strides = [1, 1]} : vector<2x384xf32> to vector<2x128xf32>
    %624 = vector.broadcast %10 : vector<1x128xf32> to vector<2x128xf32>
    %625 = arith.addf %623, %624 : vector<2x128xf32>
    %626 = arith.mulf %622, %625 : vector<2x128xf32>
    %627 = arith.addf %621, %626 : vector<2x128xf32>
    %628 = math.tanh %627 : vector<2x128xf32>
    %629 = vector.extract_strided_slice %604 {offsets = [0, 128], sizes = [2, 128], strides = [1, 1]} : vector<2x256xf32> to vector<2x128xf32>
    %630 = arith.subf %568, %620 : vector<2x128xf32>
    %631 = arith.mulf %629, %630 : vector<2x128xf32>
    %632 = arith.addf %620, %631 : vector<2x128xf32>
    %633 = vector.extract_strided_slice %612 {offsets = [0, 128], sizes = [2, 128], strides = [1, 1]} : vector<2x256xf32> to vector<2x128xf32>
    %634 = arith.subf %572, %628 : vector<2x128xf32>
    %635 = arith.mulf %633, %634 : vector<2x128xf32>
    %636 = arith.addf %628, %635 : vector<2x128xf32>
    %c18_191 = arith.constant 18 : index
    %c0_192 = arith.constant 0 : index
    %637 = vector.load %arg15[%c18_191, %c0_192] : memref<30x256xf32, #tpu.memory_space<vmem>>, vector<2x128xf32>
    tpu.vector_store %arg15[%c18_191, %c0_192], %632 {strides = array<i32>} : memref<30x256xf32, #tpu.memory_space<vmem>>, vector<2x128xf32>,
    %c10_193 = arith.constant 10 : index
    %c128_194 = arith.constant 128 : index
    %638 = vector.load %arg15[%c10_193, %c128_194] : memref<30x256xf32, #tpu.memory_space<vmem>>, vector<2x128xf32>
    tpu.vector_store %arg15[%c10_193, %c128_194], %636 {strides = array<i32>} : memref<30x256xf32, #tpu.memory_space<vmem>>, vector<2x128xf32>,
    %c18_195 = arith.constant 18 : index
    %c0_196 = arith.constant 0 : index
    %639 = vector.load %arg6[%c18_195, %c0_196] : memref<30x1xf32, #tpu.memory_space<vmem>>, vector<2x1xf32>
    %c10_197 = arith.constant 10 : index
    %c0_198 = arith.constant 0 : index
    %640 = vector.load %arg6[%c10_197, %c0_198] : memref<30x1xf32, #tpu.memory_space<vmem>>, vector<2x1xf32>
    %cst_199 = arith.constant 0.000000e+00 : f32
    %641 = vector.broadcast %cst_199 : f32 to vector<2x1xf32>
    %642 = arith.cmpf ogt, %639, %641 : vector<2x1xf32>
    %cst_200 = arith.constant -1.000000e+30 : f32
    %643 = vector.shape_cast %642 : vector<2x1xi1> to vector<2x1xi1>
    %644 = vector.broadcast %643 : vector<2x1xi1> to vector<2x128xi1>
    %645 = vector.broadcast %cst_200 : f32 to vector<2x128xf32>
    %646 = arith.select %644, %632, %645 : vector<2x128xi1>, vector<2x128xf32>
    %647 = arith.maximumf %583, %646 : vector<2x128xf32>
    %cst_201 = arith.constant 0.000000e+00 : f32
    %648 = vector.broadcast %cst_201 : f32 to vector<2x1xf32>
    %649 = arith.cmpf ogt, %640, %648 : vector<2x1xf32>
    %cst_202 = arith.constant -1.000000e+30 : f32
    %650 = vector.shape_cast %649 : vector<2x1xi1> to vector<2x1xi1>
    %651 = vector.broadcast %650 : vector<2x1xi1> to vector<2x128xi1>
    %652 = vector.broadcast %cst_202 : f32 to vector<2x128xf32>
    %653 = arith.select %651, %636, %652 : vector<2x128xi1>, vector<2x128xf32>
    %654 = arith.maximumf %590, %653 : vector<2x128xf32>
    %c20_203 = arith.constant 20 : index
    %c0_204 = arith.constant 0 : index
    %655 = vector.load %arg14[%c20_203, %c0_204] : memref<30x768xf32, #tpu.memory_space<vmem>>, vector<2x384xf32>
    %c8_205 = arith.constant 8 : index
    %c384_206 = arith.constant 384 : index
    %656 = vector.load %arg14[%c8_205, %c384_206] : memref<30x768xf32, #tpu.memory_space<vmem>>, vector<2x384xf32>
    %657 = arith.truncf %632 : vector<2x128xf32> to vector<2x128xbf16>
    %cst_207 = arith.constant dense<0.000000e+00> : vector<2x384xf32>
    %658 = tpu.matmul %657, %7, %cst_207 {dimension_numbers = #tpu.dot_dimension_numbers<[1], [0], [0], [1], [0, 0, 1, 1], [], []>} : vector<2x128xbf16>, vector<128x384xbf16>, vector<2x384xf32> -> vector<2x384xf32>
    %659 = arith.truncf %636 : vector<2x128xf32> to vector<2x128xbf16>
    %cst_208 = arith.constant dense<0.000000e+00> : vector<2x384xf32>
    %660 = tpu.matmul %659, %8, %cst_208 {dimension_numbers = #tpu.dot_dimension_numbers<[1], [0], [0], [1], [0, 0, 1, 1], [], []>} : vector<2x128xbf16>, vector<128x384xbf16>, vector<2x384xf32> -> vector<2x384xf32>
    %661 = vector.extract_strided_slice %655 {offsets = [0, 0], sizes = [2, 256], strides = [1, 1]} : vector<2x384xf32> to vector<2x256xf32>
    %662 = vector.extract_strided_slice %658 {offsets = [0, 0], sizes = [2, 256], strides = [1, 1]} : vector<2x384xf32> to vector<2x256xf32>
    %663 = arith.addf %661, %662 : vector<2x256xf32>
    %664 = arith.negf %663 : vector<2x256xf32>
    %665 = math.exp %664 : vector<2x256xf32>
    %cst_209 = arith.constant 1.000000e+00 : f32
    %666 = vector.broadcast %cst_209 : f32 to vector<2x256xf32>
    %667 = arith.addf %666, %665 : vector<2x256xf32>
    %668 = arith.divf %666, %667 : vector<2x256xf32>
    %669 = vector.extract_strided_slice %656 {offsets = [0, 0], sizes = [2, 256], strides = [1, 1]} : vector<2x384xf32> to vector<2x256xf32>
    %670 = vector.extract_strided_slice %660 {offsets = [0, 0], sizes = [2, 256], strides = [1, 1]} : vector<2x384xf32> to vector<2x256xf32>
    %671 = arith.addf %669, %670 : vector<2x256xf32>
    %672 = arith.negf %671 : vector<2x256xf32>
    %673 = math.exp %672 : vector<2x256xf32>
    %cst_210 = arith.constant 1.000000e+00 : f32
    %674 = vector.broadcast %cst_210 : f32 to vector<2x256xf32>
    %675 = arith.addf %674, %673 : vector<2x256xf32>
    %676 = arith.divf %674, %675 : vector<2x256xf32>
    %677 = vector.extract_strided_slice %655 {offsets = [0, 256], sizes = [2, 128], strides = [1, 1]} : vector<2x384xf32> to vector<2x128xf32>
    %678 = vector.extract_strided_slice %668 {offsets = [0, 0], sizes = [2, 128], strides = [1, 1]} : vector<2x256xf32> to vector<2x128xf32>
    %679 = vector.extract_strided_slice %658 {offsets = [0, 256], sizes = [2, 128], strides = [1, 1]} : vector<2x384xf32> to vector<2x128xf32>
    %680 = vector.broadcast %9 : vector<1x128xf32> to vector<2x128xf32>
    %681 = arith.addf %679, %680 : vector<2x128xf32>
    %682 = arith.mulf %678, %681 : vector<2x128xf32>
    %683 = arith.addf %677, %682 : vector<2x128xf32>
    %684 = math.tanh %683 : vector<2x128xf32>
    %685 = vector.extract_strided_slice %656 {offsets = [0, 256], sizes = [2, 128], strides = [1, 1]} : vector<2x384xf32> to vector<2x128xf32>
    %686 = vector.extract_strided_slice %676 {offsets = [0, 0], sizes = [2, 128], strides = [1, 1]} : vector<2x256xf32> to vector<2x128xf32>
    %687 = vector.extract_strided_slice %660 {offsets = [0, 256], sizes = [2, 128], strides = [1, 1]} : vector<2x384xf32> to vector<2x128xf32>
    %688 = vector.broadcast %10 : vector<1x128xf32> to vector<2x128xf32>
    %689 = arith.addf %687, %688 : vector<2x128xf32>
    %690 = arith.mulf %686, %689 : vector<2x128xf32>
    %691 = arith.addf %685, %690 : vector<2x128xf32>
    %692 = math.tanh %691 : vector<2x128xf32>
    %693 = vector.extract_strided_slice %668 {offsets = [0, 128], sizes = [2, 128], strides = [1, 1]} : vector<2x256xf32> to vector<2x128xf32>
    %694 = arith.subf %632, %684 : vector<2x128xf32>
    %695 = arith.mulf %693, %694 : vector<2x128xf32>
    %696 = arith.addf %684, %695 : vector<2x128xf32>
    %697 = vector.extract_strided_slice %676 {offsets = [0, 128], sizes = [2, 128], strides = [1, 1]} : vector<2x256xf32> to vector<2x128xf32>
    %698 = arith.subf %636, %692 : vector<2x128xf32>
    %699 = arith.mulf %697, %698 : vector<2x128xf32>
    %700 = arith.addf %692, %699 : vector<2x128xf32>
    %c20_211 = arith.constant 20 : index
    %c0_212 = arith.constant 0 : index
    %701 = vector.load %arg15[%c20_211, %c0_212] : memref<30x256xf32, #tpu.memory_space<vmem>>, vector<2x128xf32>
    tpu.vector_store %arg15[%c20_211, %c0_212], %696 {strides = array<i32>} : memref<30x256xf32, #tpu.memory_space<vmem>>, vector<2x128xf32>,
    %c8_213 = arith.constant 8 : index
    %c128_214 = arith.constant 128 : index
    %702 = vector.load %arg15[%c8_213, %c128_214] : memref<30x256xf32, #tpu.memory_space<vmem>>, vector<2x128xf32>
    tpu.vector_store %arg15[%c8_213, %c128_214], %700 {strides = array<i32>} : memref<30x256xf32, #tpu.memory_space<vmem>>, vector<2x128xf32>,
    %c20_215 = arith.constant 20 : index
    %c0_216 = arith.constant 0 : index
    %703 = vector.load %arg6[%c20_215, %c0_216] : memref<30x1xf32, #tpu.memory_space<vmem>>, vector<2x1xf32>
    %c8_217 = arith.constant 8 : index
    %c0_218 = arith.constant 0 : index
    %704 = vector.load %arg6[%c8_217, %c0_218] : memref<30x1xf32, #tpu.memory_space<vmem>>, vector<2x1xf32>
    %cst_219 = arith.constant 0.000000e+00 : f32
    %705 = vector.broadcast %cst_219 : f32 to vector<2x1xf32>
    %706 = arith.cmpf ogt, %703, %705 : vector<2x1xf32>
    %cst_220 = arith.constant -1.000000e+30 : f32
    %707 = vector.shape_cast %706 : vector<2x1xi1> to vector<2x1xi1>
    %708 = vector.broadcast %707 : vector<2x1xi1> to vector<2x128xi1>
    %709 = vector.broadcast %cst_220 : f32 to vector<2x128xf32>
    %710 = arith.select %708, %696, %709 : vector<2x128xi1>, vector<2x128xf32>
    %711 = arith.maximumf %647, %710 : vector<2x128xf32>
    %cst_221 = arith.constant 0.000000e+00 : f32
    %712 = vector.broadcast %cst_221 : f32 to vector<2x1xf32>
    %713 = arith.cmpf ogt, %704, %712 : vector<2x1xf32>
    %cst_222 = arith.constant -1.000000e+30 : f32
    %714 = vector.shape_cast %713 : vector<2x1xi1> to vector<2x1xi1>
    %715 = vector.broadcast %714 : vector<2x1xi1> to vector<2x128xi1>
    %716 = vector.broadcast %cst_222 : f32 to vector<2x128xf32>
    %717 = arith.select %715, %700, %716 : vector<2x128xi1>, vector<2x128xf32>
    %718 = arith.maximumf %654, %717 : vector<2x128xf32>
    %c22_223 = arith.constant 22 : index
    %c0_224 = arith.constant 0 : index
    %719 = vector.load %arg14[%c22_223, %c0_224] : memref<30x768xf32, #tpu.memory_space<vmem>>, vector<2x384xf32>
    %c6_225 = arith.constant 6 : index
    %c384_226 = arith.constant 384 : index
    %720 = vector.load %arg14[%c6_225, %c384_226] : memref<30x768xf32, #tpu.memory_space<vmem>>, vector<2x384xf32>
    %721 = arith.truncf %696 : vector<2x128xf32> to vector<2x128xbf16>
    %cst_227 = arith.constant dense<0.000000e+00> : vector<2x384xf32>
    %722 = tpu.matmul %721, %7, %cst_227 {dimension_numbers = #tpu.dot_dimension_numbers<[1], [0], [0], [1], [0, 0, 1, 1], [], []>} : vector<2x128xbf16>, vector<128x384xbf16>, vector<2x384xf32> -> vector<2x384xf32>
    %723 = arith.truncf %700 : vector<2x128xf32> to vector<2x128xbf16>
    %cst_228 = arith.constant dense<0.000000e+00> : vector<2x384xf32>
    %724 = tpu.matmul %723, %8, %cst_228 {dimension_numbers = #tpu.dot_dimension_numbers<[1], [0], [0], [1], [0, 0, 1, 1], [], []>} : vector<2x128xbf16>, vector<128x384xbf16>, vector<2x384xf32> -> vector<2x384xf32>
    %725 = vector.extract_strided_slice %719 {offsets = [0, 0], sizes = [2, 256], strides = [1, 1]} : vector<2x384xf32> to vector<2x256xf32>
    %726 = vector.extract_strided_slice %722 {offsets = [0, 0], sizes = [2, 256], strides = [1, 1]} : vector<2x384xf32> to vector<2x256xf32>
    %727 = arith.addf %725, %726 : vector<2x256xf32>
    %728 = arith.negf %727 : vector<2x256xf32>
    %729 = math.exp %728 : vector<2x256xf32>
    %cst_229 = arith.constant 1.000000e+00 : f32
    %730 = vector.broadcast %cst_229 : f32 to vector<2x256xf32>
    %731 = arith.addf %730, %729 : vector<2x256xf32>
    %732 = arith.divf %730, %731 : vector<2x256xf32>
    %733 = vector.extract_strided_slice %720 {offsets = [0, 0], sizes = [2, 256], strides = [1, 1]} : vector<2x384xf32> to vector<2x256xf32>
    %734 = vector.extract_strided_slice %724 {offsets = [0, 0], sizes = [2, 256], strides = [1, 1]} : vector<2x384xf32> to vector<2x256xf32>
    %735 = arith.addf %733, %734 : vector<2x256xf32>
    %736 = arith.negf %735 : vector<2x256xf32>
    %737 = math.exp %736 : vector<2x256xf32>
    %cst_230 = arith.constant 1.000000e+00 : f32
    %738 = vector.broadcast %cst_230 : f32 to vector<2x256xf32>
    %739 = arith.addf %738, %737 : vector<2x256xf32>
    %740 = arith.divf %738, %739 : vector<2x256xf32>
    %741 = vector.extract_strided_slice %719 {offsets = [0, 256], sizes = [2, 128], strides = [1, 1]} : vector<2x384xf32> to vector<2x128xf32>
    %742 = vector.extract_strided_slice %732 {offsets = [0, 0], sizes = [2, 128], strides = [1, 1]} : vector<2x256xf32> to vector<2x128xf32>
    %743 = vector.extract_strided_slice %722 {offsets = [0, 256], sizes = [2, 128], strides = [1, 1]} : vector<2x384xf32> to vector<2x128xf32>
    %744 = vector.broadcast %9 : vector<1x128xf32> to vector<2x128xf32>
    %745 = arith.addf %743, %744 : vector<2x128xf32>
    %746 = arith.mulf %742, %745 : vector<2x128xf32>
    %747 = arith.addf %741, %746 : vector<2x128xf32>
    %748 = math.tanh %747 : vector<2x128xf32>
    %749 = vector.extract_strided_slice %720 {offsets = [0, 256], sizes = [2, 128], strides = [1, 1]} : vector<2x384xf32> to vector<2x128xf32>
    %750 = vector.extract_strided_slice %740 {offsets = [0, 0], sizes = [2, 128], strides = [1, 1]} : vector<2x256xf32> to vector<2x128xf32>
    %751 = vector.extract_strided_slice %724 {offsets = [0, 256], sizes = [2, 128], strides = [1, 1]} : vector<2x384xf32> to vector<2x128xf32>
    %752 = vector.broadcast %10 : vector<1x128xf32> to vector<2x128xf32>
    %753 = arith.addf %751, %752 : vector<2x128xf32>
    %754 = arith.mulf %750, %753 : vector<2x128xf32>
    %755 = arith.addf %749, %754 : vector<2x128xf32>
    %756 = math.tanh %755 : vector<2x128xf32>
    %757 = vector.extract_strided_slice %732 {offsets = [0, 128], sizes = [2, 128], strides = [1, 1]} : vector<2x256xf32> to vector<2x128xf32>
    %758 = arith.subf %696, %748 : vector<2x128xf32>
    %759 = arith.mulf %757, %758 : vector<2x128xf32>
    %760 = arith.addf %748, %759 : vector<2x128xf32>
    %761 = vector.extract_strided_slice %740 {offsets = [0, 128], sizes = [2, 128], strides = [1, 1]} : vector<2x256xf32> to vector<2x128xf32>
    %762 = arith.subf %700, %756 : vector<2x128xf32>
    %763 = arith.mulf %761, %762 : vector<2x128xf32>
    %764 = arith.addf %756, %763 : vector<2x128xf32>
    %c22_231 = arith.constant 22 : index
    %c0_232 = arith.constant 0 : index
    %765 = vector.load %arg15[%c22_231, %c0_232] : memref<30x256xf32, #tpu.memory_space<vmem>>, vector<2x128xf32>
    tpu.vector_store %arg15[%c22_231, %c0_232], %760 {strides = array<i32>} : memref<30x256xf32, #tpu.memory_space<vmem>>, vector<2x128xf32>,
    %c6_233 = arith.constant 6 : index
    %c128_234 = arith.constant 128 : index
    %766 = vector.load %arg15[%c6_233, %c128_234] : memref<30x256xf32, #tpu.memory_space<vmem>>, vector<2x128xf32>
    tpu.vector_store %arg15[%c6_233, %c128_234], %764 {strides = array<i32>} : memref<30x256xf32, #tpu.memory_space<vmem>>, vector<2x128xf32>,
    %c22_235 = arith.constant 22 : index
    %c0_236 = arith.constant 0 : index
    %767 = vector.load %arg6[%c22_235, %c0_236] : memref<30x1xf32, #tpu.memory_space<vmem>>, vector<2x1xf32>
    %c6_237 = arith.constant 6 : index
    %c0_238 = arith.constant 0 : index
    %768 = vector.load %arg6[%c6_237, %c0_238] : memref<30x1xf32, #tpu.memory_space<vmem>>, vector<2x1xf32>
    %cst_239 = arith.constant 0.000000e+00 : f32
    %769 = vector.broadcast %cst_239 : f32 to vector<2x1xf32>
    %770 = arith.cmpf ogt, %767, %769 : vector<2x1xf32>
    %cst_240 = arith.constant -1.000000e+30 : f32
    %771 = vector.shape_cast %770 : vector<2x1xi1> to vector<2x1xi1>
    %772 = vector.broadcast %771 : vector<2x1xi1> to vector<2x128xi1>
    %773 = vector.broadcast %cst_240 : f32 to vector<2x128xf32>
    %774 = arith.select %772, %760, %773 : vector<2x128xi1>, vector<2x128xf32>
    %775 = arith.maximumf %711, %774 : vector<2x128xf32>
    %cst_241 = arith.constant 0.000000e+00 : f32
    %776 = vector.broadcast %cst_241 : f32 to vector<2x1xf32>
    %777 = arith.cmpf ogt, %768, %776 : vector<2x1xf32>
    %cst_242 = arith.constant -1.000000e+30 : f32
    %778 = vector.shape_cast %777 : vector<2x1xi1> to vector<2x1xi1>
    %779 = vector.broadcast %778 : vector<2x1xi1> to vector<2x128xi1>
    %780 = vector.broadcast %cst_242 : f32 to vector<2x128xf32>
    %781 = arith.select %779, %764, %780 : vector<2x128xi1>, vector<2x128xf32>
    %782 = arith.maximumf %718, %781 : vector<2x128xf32>
    %c24_243 = arith.constant 24 : index
    %c0_244 = arith.constant 0 : index
    %783 = vector.load %arg14[%c24_243, %c0_244] : memref<30x768xf32, #tpu.memory_space<vmem>>, vector<2x384xf32>
    %c4_245 = arith.constant 4 : index
    %c384_246 = arith.constant 384 : index
    %784 = vector.load %arg14[%c4_245, %c384_246] : memref<30x768xf32, #tpu.memory_space<vmem>>, vector<2x384xf32>
    %785 = arith.truncf %760 : vector<2x128xf32> to vector<2x128xbf16>
    %cst_247 = arith.constant dense<0.000000e+00> : vector<2x384xf32>
    %786 = tpu.matmul %785, %7, %cst_247 {dimension_numbers = #tpu.dot_dimension_numbers<[1], [0], [0], [1], [0, 0, 1, 1], [], []>} : vector<2x128xbf16>, vector<128x384xbf16>, vector<2x384xf32> -> vector<2x384xf32>
    %787 = arith.truncf %764 : vector<2x128xf32> to vector<2x128xbf16>
    %cst_248 = arith.constant dense<0.000000e+00> : vector<2x384xf32>
    %788 = tpu.matmul %787, %8, %cst_248 {dimension_numbers = #tpu.dot_dimension_numbers<[1], [0], [0], [1], [0, 0, 1, 1], [], []>} : vector<2x128xbf16>, vector<128x384xbf16>, vector<2x384xf32> -> vector<2x384xf32>
    %789 = vector.extract_strided_slice %783 {offsets = [0, 0], sizes = [2, 256], strides = [1, 1]} : vector<2x384xf32> to vector<2x256xf32>
    %790 = vector.extract_strided_slice %786 {offsets = [0, 0], sizes = [2, 256], strides = [1, 1]} : vector<2x384xf32> to vector<2x256xf32>
    %791 = arith.addf %789, %790 : vector<2x256xf32>
    %792 = arith.negf %791 : vector<2x256xf32>
    %793 = math.exp %792 : vector<2x256xf32>
    %cst_249 = arith.constant 1.000000e+00 : f32
    %794 = vector.broadcast %cst_249 : f32 to vector<2x256xf32>
    %795 = arith.addf %794, %793 : vector<2x256xf32>
    %796 = arith.divf %794, %795 : vector<2x256xf32>
    %797 = vector.extract_strided_slice %784 {offsets = [0, 0], sizes = [2, 256], strides = [1, 1]} : vector<2x384xf32> to vector<2x256xf32>
    %798 = vector.extract_strided_slice %788 {offsets = [0, 0], sizes = [2, 256], strides = [1, 1]} : vector<2x384xf32> to vector<2x256xf32>
    %799 = arith.addf %797, %798 : vector<2x256xf32>
    %800 = arith.negf %799 : vector<2x256xf32>
    %801 = math.exp %800 : vector<2x256xf32>
    %cst_250 = arith.constant 1.000000e+00 : f32
    %802 = vector.broadcast %cst_250 : f32 to vector<2x256xf32>
    %803 = arith.addf %802, %801 : vector<2x256xf32>
    %804 = arith.divf %802, %803 : vector<2x256xf32>
    %805 = vector.extract_strided_slice %783 {offsets = [0, 256], sizes = [2, 128], strides = [1, 1]} : vector<2x384xf32> to vector<2x128xf32>
    %806 = vector.extract_strided_slice %796 {offsets = [0, 0], sizes = [2, 128], strides = [1, 1]} : vector<2x256xf32> to vector<2x128xf32>
    %807 = vector.extract_strided_slice %786 {offsets = [0, 256], sizes = [2, 128], strides = [1, 1]} : vector<2x384xf32> to vector<2x128xf32>
    %808 = vector.broadcast %9 : vector<1x128xf32> to vector<2x128xf32>
    %809 = arith.addf %807, %808 : vector<2x128xf32>
    %810 = arith.mulf %806, %809 : vector<2x128xf32>
    %811 = arith.addf %805, %810 : vector<2x128xf32>
    %812 = math.tanh %811 : vector<2x128xf32>
    %813 = vector.extract_strided_slice %784 {offsets = [0, 256], sizes = [2, 128], strides = [1, 1]} : vector<2x384xf32> to vector<2x128xf32>
    %814 = vector.extract_strided_slice %804 {offsets = [0, 0], sizes = [2, 128], strides = [1, 1]} : vector<2x256xf32> to vector<2x128xf32>
    %815 = vector.extract_strided_slice %788 {offsets = [0, 256], sizes = [2, 128], strides = [1, 1]} : vector<2x384xf32> to vector<2x128xf32>
    %816 = vector.broadcast %10 : vector<1x128xf32> to vector<2x128xf32>
    %817 = arith.addf %815, %816 : vector<2x128xf32>
    %818 = arith.mulf %814, %817 : vector<2x128xf32>
    %819 = arith.addf %813, %818 : vector<2x128xf32>
    %820 = math.tanh %819 : vector<2x128xf32>
    %821 = vector.extract_strided_slice %796 {offsets = [0, 128], sizes = [2, 128], strides = [1, 1]} : vector<2x256xf32> to vector<2x128xf32>
    %822 = arith.subf %760, %812 : vector<2x128xf32>
    %823 = arith.mulf %821, %822 : vector<2x128xf32>
    %824 = arith.addf %812, %823 : vector<2x128xf32>
    %825 = vector.extract_strided_slice %804 {offsets = [0, 128], sizes = [2, 128], strides = [1, 1]} : vector<2x256xf32> to vector<2x128xf32>
    %826 = arith.subf %764, %820 : vector<2x128xf32>
    %827 = arith.mulf %825, %826 : vector<2x128xf32>
    %828 = arith.addf %820, %827 : vector<2x128xf32>
    %c24_251 = arith.constant 24 : index
    %c0_252 = arith.constant 0 : index
    %829 = vector.load %arg15[%c24_251, %c0_252] : memref<30x256xf32, #tpu.memory_space<vmem>>, vector<2x128xf32>
    tpu.vector_store %arg15[%c24_251, %c0_252], %824 {strides = array<i32>} : memref<30x256xf32, #tpu.memory_space<vmem>>, vector<2x128xf32>,
    %c4_253 = arith.constant 4 : index
    %c128_254 = arith.constant 128 : index
    %830 = vector.load %arg15[%c4_253, %c128_254] : memref<30x256xf32, #tpu.memory_space<vmem>>, vector<2x128xf32>
    tpu.vector_store %arg15[%c4_253, %c128_254], %828 {strides = array<i32>} : memref<30x256xf32, #tpu.memory_space<vmem>>, vector<2x128xf32>,
    %c24_255 = arith.constant 24 : index
    %c0_256 = arith.constant 0 : index
    %831 = vector.load %arg6[%c24_255, %c0_256] : memref<30x1xf32, #tpu.memory_space<vmem>>, vector<2x1xf32>
    %c4_257 = arith.constant 4 : index
    %c0_258 = arith.constant 0 : index
    %832 = vector.load %arg6[%c4_257, %c0_258] : memref<30x1xf32, #tpu.memory_space<vmem>>, vector<2x1xf32>
    %cst_259 = arith.constant 0.000000e+00 : f32
    %833 = vector.broadcast %cst_259 : f32 to vector<2x1xf32>
    %834 = arith.cmpf ogt, %831, %833 : vector<2x1xf32>
    %cst_260 = arith.constant -1.000000e+30 : f32
    %835 = vector.shape_cast %834 : vector<2x1xi1> to vector<2x1xi1>
    %836 = vector.broadcast %835 : vector<2x1xi1> to vector<2x128xi1>
    %837 = vector.broadcast %cst_260 : f32 to vector<2x128xf32>
    %838 = arith.select %836, %824, %837 : vector<2x128xi1>, vector<2x128xf32>
    %839 = arith.maximumf %775, %838 : vector<2x128xf32>
    %cst_261 = arith.constant 0.000000e+00 : f32
    %840 = vector.broadcast %cst_261 : f32 to vector<2x1xf32>
    %841 = arith.cmpf ogt, %832, %840 : vector<2x1xf32>
    %cst_262 = arith.constant -1.000000e+30 : f32
    %842 = vector.shape_cast %841 : vector<2x1xi1> to vector<2x1xi1>
    %843 = vector.broadcast %842 : vector<2x1xi1> to vector<2x128xi1>
    %844 = vector.broadcast %cst_262 : f32 to vector<2x128xf32>
    %845 = arith.select %843, %828, %844 : vector<2x128xi1>, vector<2x128xf32>
    %846 = arith.maximumf %782, %845 : vector<2x128xf32>
    %c26_263 = arith.constant 26 : index
    %c0_264 = arith.constant 0 : index
    %847 = vector.load %arg14[%c26_263, %c0_264] : memref<30x768xf32, #tpu.memory_space<vmem>>, vector<2x384xf32>
    %c2_265 = arith.constant 2 : index
    %c384_266 = arith.constant 384 : index
    %848 = vector.load %arg14[%c2_265, %c384_266] : memref<30x768xf32, #tpu.memory_space<vmem>>, vector<2x384xf32>
    %849 = arith.truncf %824 : vector<2x128xf32> to vector<2x128xbf16>
    %cst_267 = arith.constant dense<0.000000e+00> : vector<2x384xf32>
    %850 = tpu.matmul %849, %7, %cst_267 {dimension_numbers = #tpu.dot_dimension_numbers<[1], [0], [0], [1], [0, 0, 1, 1], [], []>} : vector<2x128xbf16>, vector<128x384xbf16>, vector<2x384xf32> -> vector<2x384xf32>
    %851 = arith.truncf %828 : vector<2x128xf32> to vector<2x128xbf16>
    %cst_268 = arith.constant dense<0.000000e+00> : vector<2x384xf32>
    %852 = tpu.matmul %851, %8, %cst_268 {dimension_numbers = #tpu.dot_dimension_numbers<[1], [0], [0], [1], [0, 0, 1, 1], [], []>} : vector<2x128xbf16>, vector<128x384xbf16>, vector<2x384xf32> -> vector<2x384xf32>
    %853 = vector.extract_strided_slice %847 {offsets = [0, 0], sizes = [2, 256], strides = [1, 1]} : vector<2x384xf32> to vector<2x256xf32>
    %854 = vector.extract_strided_slice %850 {offsets = [0, 0], sizes = [2, 256], strides = [1, 1]} : vector<2x384xf32> to vector<2x256xf32>
    %855 = arith.addf %853, %854 : vector<2x256xf32>
    %856 = arith.negf %855 : vector<2x256xf32>
    %857 = math.exp %856 : vector<2x256xf32>
    %cst_269 = arith.constant 1.000000e+00 : f32
    %858 = vector.broadcast %cst_269 : f32 to vector<2x256xf32>
    %859 = arith.addf %858, %857 : vector<2x256xf32>
    %860 = arith.divf %858, %859 : vector<2x256xf32>
    %861 = vector.extract_strided_slice %848 {offsets = [0, 0], sizes = [2, 256], strides = [1, 1]} : vector<2x384xf32> to vector<2x256xf32>
    %862 = vector.extract_strided_slice %852 {offsets = [0, 0], sizes = [2, 256], strides = [1, 1]} : vector<2x384xf32> to vector<2x256xf32>
    %863 = arith.addf %861, %862 : vector<2x256xf32>
    %864 = arith.negf %863 : vector<2x256xf32>
    %865 = math.exp %864 : vector<2x256xf32>
    %cst_270 = arith.constant 1.000000e+00 : f32
    %866 = vector.broadcast %cst_270 : f32 to vector<2x256xf32>
    %867 = arith.addf %866, %865 : vector<2x256xf32>
    %868 = arith.divf %866, %867 : vector<2x256xf32>
    %869 = vector.extract_strided_slice %847 {offsets = [0, 256], sizes = [2, 128], strides = [1, 1]} : vector<2x384xf32> to vector<2x128xf32>
    %870 = vector.extract_strided_slice %860 {offsets = [0, 0], sizes = [2, 128], strides = [1, 1]} : vector<2x256xf32> to vector<2x128xf32>
    %871 = vector.extract_strided_slice %850 {offsets = [0, 256], sizes = [2, 128], strides = [1, 1]} : vector<2x384xf32> to vector<2x128xf32>
    %872 = vector.broadcast %9 : vector<1x128xf32> to vector<2x128xf32>
    %873 = arith.addf %871, %872 : vector<2x128xf32>
    %874 = arith.mulf %870, %873 : vector<2x128xf32>
    %875 = arith.addf %869, %874 : vector<2x128xf32>
    %876 = math.tanh %875 : vector<2x128xf32>
    %877 = vector.extract_strided_slice %848 {offsets = [0, 256], sizes = [2, 128], strides = [1, 1]} : vector<2x384xf32> to vector<2x128xf32>
    %878 = vector.extract_strided_slice %868 {offsets = [0, 0], sizes = [2, 128], strides = [1, 1]} : vector<2x256xf32> to vector<2x128xf32>
    %879 = vector.extract_strided_slice %852 {offsets = [0, 256], sizes = [2, 128], strides = [1, 1]} : vector<2x384xf32> to vector<2x128xf32>
    %880 = vector.broadcast %10 : vector<1x128xf32> to vector<2x128xf32>
    %881 = arith.addf %879, %880 : vector<2x128xf32>
    %882 = arith.mulf %878, %881 : vector<2x128xf32>
    %883 = arith.addf %877, %882 : vector<2x128xf32>
    %884 = math.tanh %883 : vector<2x128xf32>
    %885 = vector.extract_strided_slice %860 {offsets = [0, 128], sizes = [2, 128], strides = [1, 1]} : vector<2x256xf32> to vector<2x128xf32>
    %886 = arith.subf %824, %876 : vector<2x128xf32>
    %887 = arith.mulf %885, %886 : vector<2x128xf32>
    %888 = arith.addf %876, %887 : vector<2x128xf32>
    %889 = vector.extract_strided_slice %868 {offsets = [0, 128], sizes = [2, 128], strides = [1, 1]} : vector<2x256xf32> to vector<2x128xf32>
    %890 = arith.subf %828, %884 : vector<2x128xf32>
    %891 = arith.mulf %889, %890 : vector<2x128xf32>
    %892 = arith.addf %884, %891 : vector<2x128xf32>
    %c26_271 = arith.constant 26 : index
    %c0_272 = arith.constant 0 : index
    %893 = vector.load %arg15[%c26_271, %c0_272] : memref<30x256xf32, #tpu.memory_space<vmem>>, vector<2x128xf32>
    tpu.vector_store %arg15[%c26_271, %c0_272], %888 {strides = array<i32>} : memref<30x256xf32, #tpu.memory_space<vmem>>, vector<2x128xf32>,
    %c2_273 = arith.constant 2 : index
    %c128_274 = arith.constant 128 : index
    %894 = vector.load %arg15[%c2_273, %c128_274] : memref<30x256xf32, #tpu.memory_space<vmem>>, vector<2x128xf32>
    tpu.vector_store %arg15[%c2_273, %c128_274], %892 {strides = array<i32>} : memref<30x256xf32, #tpu.memory_space<vmem>>, vector<2x128xf32>,
    %c26_275 = arith.constant 26 : index
    %c0_276 = arith.constant 0 : index
    %895 = vector.load %arg6[%c26_275, %c0_276] : memref<30x1xf32, #tpu.memory_space<vmem>>, vector<2x1xf32>
    %c2_277 = arith.constant 2 : index
    %c0_278 = arith.constant 0 : index
    %896 = vector.load %arg6[%c2_277, %c0_278] : memref<30x1xf32, #tpu.memory_space<vmem>>, vector<2x1xf32>
    %cst_279 = arith.constant 0.000000e+00 : f32
    %897 = vector.broadcast %cst_279 : f32 to vector<2x1xf32>
    %898 = arith.cmpf ogt, %895, %897 : vector<2x1xf32>
    %cst_280 = arith.constant -1.000000e+30 : f32
    %899 = vector.shape_cast %898 : vector<2x1xi1> to vector<2x1xi1>
    %900 = vector.broadcast %899 : vector<2x1xi1> to vector<2x128xi1>
    %901 = vector.broadcast %cst_280 : f32 to vector<2x128xf32>
    %902 = arith.select %900, %888, %901 : vector<2x128xi1>, vector<2x128xf32>
    %903 = arith.maximumf %839, %902 : vector<2x128xf32>
    %cst_281 = arith.constant 0.000000e+00 : f32
    %904 = vector.broadcast %cst_281 : f32 to vector<2x1xf32>
    %905 = arith.cmpf ogt, %896, %904 : vector<2x1xf32>
    %cst_282 = arith.constant -1.000000e+30 : f32
    %906 = vector.shape_cast %905 : vector<2x1xi1> to vector<2x1xi1>
    %907 = vector.broadcast %906 : vector<2x1xi1> to vector<2x128xi1>
    %908 = vector.broadcast %cst_282 : f32 to vector<2x128xf32>
    %909 = arith.select %907, %892, %908 : vector<2x128xi1>, vector<2x128xf32>
    %910 = arith.maximumf %846, %909 : vector<2x128xf32>
    %c28_283 = arith.constant 28 : index
    %c0_284 = arith.constant 0 : index
    %911 = vector.load %arg14[%c28_283, %c0_284] : memref<30x768xf32, #tpu.memory_space<vmem>>, vector<2x384xf32>
    %c0_285 = arith.constant 0 : index
    %c384_286 = arith.constant 384 : index
    %912 = vector.load %arg14[%c0_285, %c384_286] : memref<30x768xf32, #tpu.memory_space<vmem>>, vector<2x384xf32>
    %913 = arith.truncf %888 : vector<2x128xf32> to vector<2x128xbf16>
    %cst_287 = arith.constant dense<0.000000e+00> : vector<2x384xf32>
    %914 = tpu.matmul %913, %7, %cst_287 {dimension_numbers = #tpu.dot_dimension_numbers<[1], [0], [0], [1], [0, 0, 1, 1], [], []>} : vector<2x128xbf16>, vector<128x384xbf16>, vector<2x384xf32> -> vector<2x384xf32>
    %915 = arith.truncf %892 : vector<2x128xf32> to vector<2x128xbf16>
    %cst_288 = arith.constant dense<0.000000e+00> : vector<2x384xf32>
    %916 = tpu.matmul %915, %8, %cst_288 {dimension_numbers = #tpu.dot_dimension_numbers<[1], [0], [0], [1], [0, 0, 1, 1], [], []>} : vector<2x128xbf16>, vector<128x384xbf16>, vector<2x384xf32> -> vector<2x384xf32>
    %917 = vector.extract_strided_slice %911 {offsets = [0, 0], sizes = [2, 256], strides = [1, 1]} : vector<2x384xf32> to vector<2x256xf32>
    %918 = vector.extract_strided_slice %914 {offsets = [0, 0], sizes = [2, 256], strides = [1, 1]} : vector<2x384xf32> to vector<2x256xf32>
    %919 = arith.addf %917, %918 : vector<2x256xf32>
    %920 = arith.negf %919 : vector<2x256xf32>
    %921 = math.exp %920 : vector<2x256xf32>
    %cst_289 = arith.constant 1.000000e+00 : f32
    %922 = vector.broadcast %cst_289 : f32 to vector<2x256xf32>
    %923 = arith.addf %922, %921 : vector<2x256xf32>
    %924 = arith.divf %922, %923 : vector<2x256xf32>
    %925 = vector.extract_strided_slice %912 {offsets = [0, 0], sizes = [2, 256], strides = [1, 1]} : vector<2x384xf32> to vector<2x256xf32>
    %926 = vector.extract_strided_slice %916 {offsets = [0, 0], sizes = [2, 256], strides = [1, 1]} : vector<2x384xf32> to vector<2x256xf32>
    %927 = arith.addf %925, %926 : vector<2x256xf32>
    %928 = arith.negf %927 : vector<2x256xf32>
    %929 = math.exp %928 : vector<2x256xf32>
    %cst_290 = arith.constant 1.000000e+00 : f32
    %930 = vector.broadcast %cst_290 : f32 to vector<2x256xf32>
    %931 = arith.addf %930, %929 : vector<2x256xf32>
    %932 = arith.divf %930, %931 : vector<2x256xf32>
    %933 = vector.extract_strided_slice %911 {offsets = [0, 256], sizes = [2, 128], strides = [1, 1]} : vector<2x384xf32> to vector<2x128xf32>
    %934 = vector.extract_strided_slice %924 {offsets = [0, 0], sizes = [2, 128], strides = [1, 1]} : vector<2x256xf32> to vector<2x128xf32>
    %935 = vector.extract_strided_slice %914 {offsets = [0, 256], sizes = [2, 128], strides = [1, 1]} : vector<2x384xf32> to vector<2x128xf32>
    %936 = vector.broadcast %9 : vector<1x128xf32> to vector<2x128xf32>
    %937 = arith.addf %935, %936 : vector<2x128xf32>
    %938 = arith.mulf %934, %937 : vector<2x128xf32>
    %939 = arith.addf %933, %938 : vector<2x128xf32>
    %940 = math.tanh %939 : vector<2x128xf32>
    %941 = vector.extract_strided_slice %912 {offsets = [0, 256], sizes = [2, 128], strides = [1, 1]} : vector<2x384xf32> to vector<2x128xf32>
    %942 = vector.extract_strided_slice %932 {offsets = [0, 0], sizes = [2, 128], strides = [1, 1]} : vector<2x256xf32> to vector<2x128xf32>
    %943 = vector.extract_strided_slice %916 {offsets = [0, 256], sizes = [2, 128], strides = [1, 1]} : vector<2x384xf32> to vector<2x128xf32>
    %944 = vector.broadcast %10 : vector<1x128xf32> to vector<2x128xf32>
    %945 = arith.addf %943, %944 : vector<2x128xf32>
    %946 = arith.mulf %942, %945 : vector<2x128xf32>
    %947 = arith.addf %941, %946 : vector<2x128xf32>
    %948 = math.tanh %947 : vector<2x128xf32>
    %949 = vector.extract_strided_slice %924 {offsets = [0, 128], sizes = [2, 128], strides = [1, 1]} : vector<2x256xf32> to vector<2x128xf32>
    %950 = arith.subf %888, %940 : vector<2x128xf32>
    %951 = arith.mulf %949, %950 : vector<2x128xf32>
    %952 = arith.addf %940, %951 : vector<2x128xf32>
    %953 = vector.extract_strided_slice %932 {offsets = [0, 128], sizes = [2, 128], strides = [1, 1]} : vector<2x256xf32> to vector<2x128xf32>
    %954 = arith.subf %892, %948 : vector<2x128xf32>
    %955 = arith.mulf %953, %954 : vector<2x128xf32>
    %956 = arith.addf %948, %955 : vector<2x128xf32>
    %c28_291 = arith.constant 28 : index
    %c0_292 = arith.constant 0 : index
    %957 = vector.load %arg15[%c28_291, %c0_292] : memref<30x256xf32, #tpu.memory_space<vmem>>, vector<2x128xf32>
    tpu.vector_store %arg15[%c28_291, %c0_292], %952 {strides = array<i32>} : memref<30x256xf32, #tpu.memory_space<vmem>>, vector<2x128xf32>,
    %c0_293 = arith.constant 0 : index
    %c128_294 = arith.constant 128 : index
    %958 = vector.load %arg15[%c0_293, %c128_294] : memref<30x256xf32, #tpu.memory_space<vmem>>, vector<2x128xf32>
    tpu.vector_store %arg15[%c0_293, %c128_294], %956 {strides = array<i32>} : memref<30x256xf32, #tpu.memory_space<vmem>>, vector<2x128xf32>,
    %c28_295 = arith.constant 28 : index
    %c0_296 = arith.constant 0 : index
    %959 = vector.load %arg6[%c28_295, %c0_296] : memref<30x1xf32, #tpu.memory_space<vmem>>, vector<2x1xf32>
    %c0_297 = arith.constant 0 : index
    %c0_298 = arith.constant 0 : index
    %960 = vector.load %arg6[%c0_297, %c0_298] : memref<30x1xf32, #tpu.memory_space<vmem>>, vector<2x1xf32>
    %cst_299 = arith.constant 0.000000e+00 : f32
    %961 = vector.broadcast %cst_299 : f32 to vector<2x1xf32>
    %962 = arith.cmpf ogt, %959, %961 : vector<2x1xf32>
    %cst_300 = arith.constant -1.000000e+30 : f32
    %963 = vector.shape_cast %962 : vector<2x1xi1> to vector<2x1xi1>
    %964 = vector.broadcast %963 : vector<2x1xi1> to vector<2x128xi1>
    %965 = vector.broadcast %cst_300 : f32 to vector<2x128xf32>
    %966 = arith.select %964, %952, %965 : vector<2x128xi1>, vector<2x128xf32>
    %967 = arith.maximumf %903, %966 : vector<2x128xf32>
    %cst_301 = arith.constant 0.000000e+00 : f32
    %968 = vector.broadcast %cst_301 : f32 to vector<2x1xf32>
    %969 = arith.cmpf ogt, %960, %968 : vector<2x1xf32>
    %cst_302 = arith.constant -1.000000e+30 : f32
    %970 = vector.shape_cast %969 : vector<2x1xi1> to vector<2x1xi1>
    %971 = vector.broadcast %970 : vector<2x1xi1> to vector<2x128xi1>
    %972 = vector.broadcast %cst_302 : f32 to vector<2x128xf32>
    %973 = arith.select %971, %956, %972 : vector<2x128xi1>, vector<2x128xf32>
    %974 = arith.maximumf %910, %973 : vector<2x128xf32>
    %975 = tpu.concatenate %967, %974 in 1 : vector<2x128xf32>, vector<2x128xf32> -> vector<2x256xf32>
    %c0_303 = arith.constant 0 : index
    %c0_304 = arith.constant 0 : index
    %976 = vector.load %arg15[%c0_303, %c0_304] : memref<30x256xf32, #tpu.memory_space<vmem>>, vector<30x256xf32>
    %977 = arith.truncf %976 : vector<30x256xf32> to vector<30x256xbf16>
    %c0_305 = arith.constant 0 : index
    %c0_306 = arith.constant 0 : index
    %978 = vector.load %arg7[%c0_305, %c0_306] : memref<256x256xbf16, #tpu.memory_space<vmem>>, vector<256x256xbf16>
    %cst_307 = arith.constant dense<0.000000e+00> : vector<30x256xf32>
    %979 = tpu.matmul %977, %978, %cst_307 {dimension_numbers = #tpu.dot_dimension_numbers<[1], [0], [0], [1], [0, 0, 1, 1], [], []>} : vector<30x256xbf16>, vector<256x256xbf16>, vector<30x256xf32> -> vector<30x256xf32>
    %c0_308 = arith.constant 0 : index
    %c0_309 = arith.constant 0 : index
    %980 = vector.load %arg8[%c0_308, %c0_309] : memref<1x256xf32, #tpu.memory_space<vmem>>, vector<1x256xf32>
    %981 = vector.broadcast %980 : vector<1x256xf32> to vector<30x256xf32>
    %982 = arith.addf %979, %981 : vector<30x256xf32>
    %983 = math.tanh %982 : vector<30x256xf32>
    %c0_310 = arith.constant 0 : index
    %c0_311 = arith.constant 0 : index
    %984 = vector.load %arg16[%c0_310, %c0_311] : memref<30x256xf32, #tpu.memory_space<vmem>>, vector<30x256xf32>
    tpu.vector_store %arg16[%c0_310, %c0_311], %983 {strides = array<i32>} : memref<30x256xf32, #tpu.memory_space<vmem>>, vector<30x256xf32>,
    %985 = arith.truncf %975 : vector<2x256xf32> to vector<2x256xbf16>
    %c0_312 = arith.constant 0 : index
    %c0_313 = arith.constant 0 : index
    %986 = vector.load %arg9[%c0_312, %c0_313] : memref<256x256xbf16, #tpu.memory_space<vmem>>, vector<256x256xbf16>
    %cst_314 = arith.constant dense<0.000000e+00> : vector<2x256xf32>
    %987 = tpu.matmul %985, %986, %cst_314 {dimension_numbers = #tpu.dot_dimension_numbers<[1], [0], [0], [1], [0, 0, 1, 1], [], []>} : vector<2x256xbf16>, vector<256x256xbf16>, vector<2x256xf32> -> vector<2x256xf32>
    %c0_315 = arith.constant 0 : index
    %c0_316 = arith.constant 0 : index
    %988 = vector.load %arg10[%c0_315, %c0_316] : memref<1x256xf32, #tpu.memory_space<vmem>>, vector<1x256xf32>
    %989 = vector.broadcast %988 : vector<1x256xf32> to vector<2x256xf32>
    %990 = arith.addf %987, %989 : vector<2x256xf32>
    %991 = math.tanh %990 : vector<2x256xf32>
    %c0_317 = arith.constant 0 : index
    %c0_318 = arith.constant 0 : index
    %992 = vector.load %arg11[%c0_317, %c0_318] : memref<1x256xf32, #tpu.memory_space<vmem>>, vector<1x256xf32>
    %993 = vector.broadcast %992 : vector<1x256xf32> to vector<2x256xf32>
    %994 = arith.mulf %991, %993 : vector<2x256xf32>
    %cst_319 = arith.constant -1.000000e+30 : f32
    %995 = vector.broadcast %cst_319 : f32 to vector<2x1xf32>
    %cst_320 = arith.constant 0.000000e+00 : f32
    %996 = vector.broadcast %cst_320 : f32 to vector<2x1xf32>
    %cst_321 = arith.constant 0.000000e+00 : f32
    %997 = vector.broadcast %cst_321 : f32 to vector<2x256xf32>
    %c0_322 = arith.constant 0 : index
    %c0_323 = arith.constant 0 : index
    %998 = vector.load %arg15[%c0_322, %c0_323] : memref<30x256xf32, #tpu.memory_space<vmem>>, vector<2x256xf32>
    %c0_324 = arith.constant 0 : index
    %c0_325 = arith.constant 0 : index
    %999 = vector.load %arg16[%c0_324, %c0_325] : memref<30x256xf32, #tpu.memory_space<vmem>>, vector<2x256xf32>
    %1000 = arith.mulf %999, %994 : vector<2x256xf32>
    %cst_326 = arith.constant dense<0.000000e+00> : vector<2xf32>
    %1001 = vector.multi_reduction <add>, %1000, %cst_326 [1] : vector<2x256xf32> to vector<2xf32>
    %1002 = vector.shape_cast %1001 : vector<2xf32> to vector<2x1xf32>
    %c0_327 = arith.constant 0 : index
    %c0_328 = arith.constant 0 : index
    %1003 = vector.load %arg12[%c0_327, %c0_328] : memref<1x1xf32, #tpu.memory_space<vmem>>, vector<1x1xf32>
    %1004 = vector.broadcast %1003 : vector<1x1xf32> to vector<2x1xf32>
    %1005 = arith.addf %1002, %1004 : vector<2x1xf32>
    %1006 = arith.maximumf %995, %1005 : vector<2x1xf32>
    %1007 = arith.subf %995, %1006 : vector<2x1xf32>
    %1008 = math.exp %1007 : vector<2x1xf32>
    %1009 = arith.subf %1005, %1006 : vector<2x1xf32>
    %1010 = math.exp %1009 : vector<2x1xf32>
    %1011 = arith.mulf %1008, %996 : vector<2x1xf32>
    %1012 = arith.addf %1011, %1010 : vector<2x1xf32>
    %1013 = vector.broadcast %1008 : vector<2x1xf32> to vector<2x256xf32>
    %1014 = arith.mulf %1013, %997 : vector<2x256xf32>
    %1015 = vector.broadcast %1010 : vector<2x1xf32> to vector<2x256xf32>
    %1016 = arith.mulf %1015, %998 : vector<2x256xf32>
    %1017 = arith.addf %1014, %1016 : vector<2x256xf32>
    %c2_329 = arith.constant 2 : index
    %c0_330 = arith.constant 0 : index
    %1018 = vector.load %arg15[%c2_329, %c0_330] : memref<30x256xf32, #tpu.memory_space<vmem>>, vector<2x256xf32>
    %c2_331 = arith.constant 2 : index
    %c0_332 = arith.constant 0 : index
    %1019 = vector.load %arg16[%c2_331, %c0_332] : memref<30x256xf32, #tpu.memory_space<vmem>>, vector<2x256xf32>
    %1020 = arith.mulf %1019, %994 : vector<2x256xf32>
    %cst_333 = arith.constant dense<0.000000e+00> : vector<2xf32>
    %1021 = vector.multi_reduction <add>, %1020, %cst_333 [1] : vector<2x256xf32> to vector<2xf32>
    %1022 = vector.shape_cast %1021 : vector<2xf32> to vector<2x1xf32>
    %c0_334 = arith.constant 0 : index
    %c0_335 = arith.constant 0 : index
    %1023 = vector.load %arg12[%c0_334, %c0_335] : memref<1x1xf32, #tpu.memory_space<vmem>>, vector<1x1xf32>
    %1024 = vector.broadcast %1023 : vector<1x1xf32> to vector<2x1xf32>
    %1025 = arith.addf %1022, %1024 : vector<2x1xf32>
    %1026 = arith.maximumf %1006, %1025 : vector<2x1xf32>
    %1027 = arith.subf %1006, %1026 : vector<2x1xf32>
    %1028 = math.exp %1027 : vector<2x1xf32>
    %1029 = arith.subf %1025, %1026 : vector<2x1xf32>
    %1030 = math.exp %1029 : vector<2x1xf32>
    %1031 = arith.mulf %1028, %1012 : vector<2x1xf32>
    %1032 = arith.addf %1031, %1030 : vector<2x1xf32>
    %1033 = vector.broadcast %1028 : vector<2x1xf32> to vector<2x256xf32>
    %1034 = arith.mulf %1033, %1017 : vector<2x256xf32>
    %1035 = vector.broadcast %1030 : vector<2x1xf32> to vector<2x256xf32>
    %1036 = arith.mulf %1035, %1018 : vector<2x256xf32>
    %1037 = arith.addf %1034, %1036 : vector<2x256xf32>
    %c4_336 = arith.constant 4 : index
    %c0_337 = arith.constant 0 : index
    %1038 = vector.load %arg15[%c4_336, %c0_337] : memref<30x256xf32, #tpu.memory_space<vmem>>, vector<2x256xf32>
    %c4_338 = arith.constant 4 : index
    %c0_339 = arith.constant 0 : index
    %1039 = vector.load %arg16[%c4_338, %c0_339] : memref<30x256xf32, #tpu.memory_space<vmem>>, vector<2x256xf32>
    %1040 = arith.mulf %1039, %994 : vector<2x256xf32>
    %cst_340 = arith.constant dense<0.000000e+00> : vector<2xf32>
    %1041 = vector.multi_reduction <add>, %1040, %cst_340 [1] : vector<2x256xf32> to vector<2xf32>
    %1042 = vector.shape_cast %1041 : vector<2xf32> to vector<2x1xf32>
    %c0_341 = arith.constant 0 : index
    %c0_342 = arith.constant 0 : index
    %1043 = vector.load %arg12[%c0_341, %c0_342] : memref<1x1xf32, #tpu.memory_space<vmem>>, vector<1x1xf32>
    %1044 = vector.broadcast %1043 : vector<1x1xf32> to vector<2x1xf32>
    %1045 = arith.addf %1042, %1044 : vector<2x1xf32>
    %1046 = arith.maximumf %1026, %1045 : vector<2x1xf32>
    %1047 = arith.subf %1026, %1046 : vector<2x1xf32>
    %1048 = math.exp %1047 : vector<2x1xf32>
    %1049 = arith.subf %1045, %1046 : vector<2x1xf32>
    %1050 = math.exp %1049 : vector<2x1xf32>
    %1051 = arith.mulf %1048, %1032 : vector<2x1xf32>
    %1052 = arith.addf %1051, %1050 : vector<2x1xf32>
    %1053 = vector.broadcast %1048 : vector<2x1xf32> to vector<2x256xf32>
    %1054 = arith.mulf %1053, %1037 : vector<2x256xf32>
    %1055 = vector.broadcast %1050 : vector<2x1xf32> to vector<2x256xf32>
    %1056 = arith.mulf %1055, %1038 : vector<2x256xf32>
    %1057 = arith.addf %1054, %1056 : vector<2x256xf32>
    %c6_343 = arith.constant 6 : index
    %c0_344 = arith.constant 0 : index
    %1058 = vector.load %arg15[%c6_343, %c0_344] : memref<30x256xf32, #tpu.memory_space<vmem>>, vector<2x256xf32>
    %c6_345 = arith.constant 6 : index
    %c0_346 = arith.constant 0 : index
    %1059 = vector.load %arg16[%c6_345, %c0_346] : memref<30x256xf32, #tpu.memory_space<vmem>>, vector<2x256xf32>
    %1060 = arith.mulf %1059, %994 : vector<2x256xf32>
    %cst_347 = arith.constant dense<0.000000e+00> : vector<2xf32>
    %1061 = vector.multi_reduction <add>, %1060, %cst_347 [1] : vector<2x256xf32> to vector<2xf32>
    %1062 = vector.shape_cast %1061 : vector<2xf32> to vector<2x1xf32>
    %c0_348 = arith.constant 0 : index
    %c0_349 = arith.constant 0 : index
    %1063 = vector.load %arg12[%c0_348, %c0_349] : memref<1x1xf32, #tpu.memory_space<vmem>>, vector<1x1xf32>
    %1064 = vector.broadcast %1063 : vector<1x1xf32> to vector<2x1xf32>
    %1065 = arith.addf %1062, %1064 : vector<2x1xf32>
    %1066 = arith.maximumf %1046, %1065 : vector<2x1xf32>
    %1067 = arith.subf %1046, %1066 : vector<2x1xf32>
    %1068 = math.exp %1067 : vector<2x1xf32>
    %1069 = arith.subf %1065, %1066 : vector<2x1xf32>
    %1070 = math.exp %1069 : vector<2x1xf32>
    %1071 = arith.mulf %1068, %1052 : vector<2x1xf32>
    %1072 = arith.addf %1071, %1070 : vector<2x1xf32>
    %1073 = vector.broadcast %1068 : vector<2x1xf32> to vector<2x256xf32>
    %1074 = arith.mulf %1073, %1057 : vector<2x256xf32>
    %1075 = vector.broadcast %1070 : vector<2x1xf32> to vector<2x256xf32>
    %1076 = arith.mulf %1075, %1058 : vector<2x256xf32>
    %1077 = arith.addf %1074, %1076 : vector<2x256xf32>
    %c8_350 = arith.constant 8 : index
    %c0_351 = arith.constant 0 : index
    %1078 = vector.load %arg15[%c8_350, %c0_351] : memref<30x256xf32, #tpu.memory_space<vmem>>, vector<2x256xf32>
    %c8_352 = arith.constant 8 : index
    %c0_353 = arith.constant 0 : index
    %1079 = vector.load %arg16[%c8_352, %c0_353] : memref<30x256xf32, #tpu.memory_space<vmem>>, vector<2x256xf32>
    %1080 = arith.mulf %1079, %994 : vector<2x256xf32>
    %cst_354 = arith.constant dense<0.000000e+00> : vector<2xf32>
    %1081 = vector.multi_reduction <add>, %1080, %cst_354 [1] : vector<2x256xf32> to vector<2xf32>
    %1082 = vector.shape_cast %1081 : vector<2xf32> to vector<2x1xf32>
    %c0_355 = arith.constant 0 : index
    %c0_356 = arith.constant 0 : index
    %1083 = vector.load %arg12[%c0_355, %c0_356] : memref<1x1xf32, #tpu.memory_space<vmem>>, vector<1x1xf32>
    %1084 = vector.broadcast %1083 : vector<1x1xf32> to vector<2x1xf32>
    %1085 = arith.addf %1082, %1084 : vector<2x1xf32>
    %1086 = arith.maximumf %1066, %1085 : vector<2x1xf32>
    %1087 = arith.subf %1066, %1086 : vector<2x1xf32>
    %1088 = math.exp %1087 : vector<2x1xf32>
    %1089 = arith.subf %1085, %1086 : vector<2x1xf32>
    %1090 = math.exp %1089 : vector<2x1xf32>
    %1091 = arith.mulf %1088, %1072 : vector<2x1xf32>
    %1092 = arith.addf %1091, %1090 : vector<2x1xf32>
    %1093 = vector.broadcast %1088 : vector<2x1xf32> to vector<2x256xf32>
    %1094 = arith.mulf %1093, %1077 : vector<2x256xf32>
    %1095 = vector.broadcast %1090 : vector<2x1xf32> to vector<2x256xf32>
    %1096 = arith.mulf %1095, %1078 : vector<2x256xf32>
    %1097 = arith.addf %1094, %1096 : vector<2x256xf32>
    %c10_357 = arith.constant 10 : index
    %c0_358 = arith.constant 0 : index
    %1098 = vector.load %arg15[%c10_357, %c0_358] : memref<30x256xf32, #tpu.memory_space<vmem>>, vector<2x256xf32>
    %c10_359 = arith.constant 10 : index
    %c0_360 = arith.constant 0 : index
    %1099 = vector.load %arg16[%c10_359, %c0_360] : memref<30x256xf32, #tpu.memory_space<vmem>>, vector<2x256xf32>
    %1100 = arith.mulf %1099, %994 : vector<2x256xf32>
    %cst_361 = arith.constant dense<0.000000e+00> : vector<2xf32>
    %1101 = vector.multi_reduction <add>, %1100, %cst_361 [1] : vector<2x256xf32> to vector<2xf32>
    %1102 = vector.shape_cast %1101 : vector<2xf32> to vector<2x1xf32>
    %c0_362 = arith.constant 0 : index
    %c0_363 = arith.constant 0 : index
    %1103 = vector.load %arg12[%c0_362, %c0_363] : memref<1x1xf32, #tpu.memory_space<vmem>>, vector<1x1xf32>
    %1104 = vector.broadcast %1103 : vector<1x1xf32> to vector<2x1xf32>
    %1105 = arith.addf %1102, %1104 : vector<2x1xf32>
    %1106 = arith.maximumf %1086, %1105 : vector<2x1xf32>
    %1107 = arith.subf %1086, %1106 : vector<2x1xf32>
    %1108 = math.exp %1107 : vector<2x1xf32>
    %1109 = arith.subf %1105, %1106 : vector<2x1xf32>
    %1110 = math.exp %1109 : vector<2x1xf32>
    %1111 = arith.mulf %1108, %1092 : vector<2x1xf32>
    %1112 = arith.addf %1111, %1110 : vector<2x1xf32>
    %1113 = vector.broadcast %1108 : vector<2x1xf32> to vector<2x256xf32>
    %1114 = arith.mulf %1113, %1097 : vector<2x256xf32>
    %1115 = vector.broadcast %1110 : vector<2x1xf32> to vector<2x256xf32>
    %1116 = arith.mulf %1115, %1098 : vector<2x256xf32>
    %1117 = arith.addf %1114, %1116 : vector<2x256xf32>
    %c12_364 = arith.constant 12 : index
    %c0_365 = arith.constant 0 : index
    %1118 = vector.load %arg15[%c12_364, %c0_365] : memref<30x256xf32, #tpu.memory_space<vmem>>, vector<2x256xf32>
    %c12_366 = arith.constant 12 : index
    %c0_367 = arith.constant 0 : index
    %1119 = vector.load %arg16[%c12_366, %c0_367] : memref<30x256xf32, #tpu.memory_space<vmem>>, vector<2x256xf32>
    %1120 = arith.mulf %1119, %994 : vector<2x256xf32>
    %cst_368 = arith.constant dense<0.000000e+00> : vector<2xf32>
    %1121 = vector.multi_reduction <add>, %1120, %cst_368 [1] : vector<2x256xf32> to vector<2xf32>
    %1122 = vector.shape_cast %1121 : vector<2xf32> to vector<2x1xf32>
    %c0_369 = arith.constant 0 : index
    %c0_370 = arith.constant 0 : index
    %1123 = vector.load %arg12[%c0_369, %c0_370] : memref<1x1xf32, #tpu.memory_space<vmem>>, vector<1x1xf32>
    %1124 = vector.broadcast %1123 : vector<1x1xf32> to vector<2x1xf32>
    %1125 = arith.addf %1122, %1124 : vector<2x1xf32>
    %1126 = arith.maximumf %1106, %1125 : vector<2x1xf32>
    %1127 = arith.subf %1106, %1126 : vector<2x1xf32>
    %1128 = math.exp %1127 : vector<2x1xf32>
    %1129 = arith.subf %1125, %1126 : vector<2x1xf32>
    %1130 = math.exp %1129 : vector<2x1xf32>
    %1131 = arith.mulf %1128, %1112 : vector<2x1xf32>
    %1132 = arith.addf %1131, %1130 : vector<2x1xf32>
    %1133 = vector.broadcast %1128 : vector<2x1xf32> to vector<2x256xf32>
    %1134 = arith.mulf %1133, %1117 : vector<2x256xf32>
    %1135 = vector.broadcast %1130 : vector<2x1xf32> to vector<2x256xf32>
    %1136 = arith.mulf %1135, %1118 : vector<2x256xf32>
    %1137 = arith.addf %1134, %1136 : vector<2x256xf32>
    %c14_371 = arith.constant 14 : index
    %c0_372 = arith.constant 0 : index
    %1138 = vector.load %arg15[%c14_371, %c0_372] : memref<30x256xf32, #tpu.memory_space<vmem>>, vector<2x256xf32>
    %c14_373 = arith.constant 14 : index
    %c0_374 = arith.constant 0 : index
    %1139 = vector.load %arg16[%c14_373, %c0_374] : memref<30x256xf32, #tpu.memory_space<vmem>>, vector<2x256xf32>
    %1140 = arith.mulf %1139, %994 : vector<2x256xf32>
    %cst_375 = arith.constant dense<0.000000e+00> : vector<2xf32>
    %1141 = vector.multi_reduction <add>, %1140, %cst_375 [1] : vector<2x256xf32> to vector<2xf32>
    %1142 = vector.shape_cast %1141 : vector<2xf32> to vector<2x1xf32>
    %c0_376 = arith.constant 0 : index
    %c0_377 = arith.constant 0 : index
    %1143 = vector.load %arg12[%c0_376, %c0_377] : memref<1x1xf32, #tpu.memory_space<vmem>>, vector<1x1xf32>
    %1144 = vector.broadcast %1143 : vector<1x1xf32> to vector<2x1xf32>
    %1145 = arith.addf %1142, %1144 : vector<2x1xf32>
    %1146 = arith.maximumf %1126, %1145 : vector<2x1xf32>
    %1147 = arith.subf %1126, %1146 : vector<2x1xf32>
    %1148 = math.exp %1147 : vector<2x1xf32>
    %1149 = arith.subf %1145, %1146 : vector<2x1xf32>
    %1150 = math.exp %1149 : vector<2x1xf32>
    %1151 = arith.mulf %1148, %1132 : vector<2x1xf32>
    %1152 = arith.addf %1151, %1150 : vector<2x1xf32>
    %1153 = vector.broadcast %1148 : vector<2x1xf32> to vector<2x256xf32>
    %1154 = arith.mulf %1153, %1137 : vector<2x256xf32>
    %1155 = vector.broadcast %1150 : vector<2x1xf32> to vector<2x256xf32>
    %1156 = arith.mulf %1155, %1138 : vector<2x256xf32>
    %1157 = arith.addf %1154, %1156 : vector<2x256xf32>
    %c16_378 = arith.constant 16 : index
    %c0_379 = arith.constant 0 : index
    %1158 = vector.load %arg15[%c16_378, %c0_379] : memref<30x256xf32, #tpu.memory_space<vmem>>, vector<2x256xf32>
    %c16_380 = arith.constant 16 : index
    %c0_381 = arith.constant 0 : index
    %1159 = vector.load %arg16[%c16_380, %c0_381] : memref<30x256xf32, #tpu.memory_space<vmem>>, vector<2x256xf32>
    %1160 = arith.mulf %1159, %994 : vector<2x256xf32>
    %cst_382 = arith.constant dense<0.000000e+00> : vector<2xf32>
    %1161 = vector.multi_reduction <add>, %1160, %cst_382 [1] : vector<2x256xf32> to vector<2xf32>
    %1162 = vector.shape_cast %1161 : vector<2xf32> to vector<2x1xf32>
    %c0_383 = arith.constant 0 : index
    %c0_384 = arith.constant 0 : index
    %1163 = vector.load %arg12[%c0_383, %c0_384] : memref<1x1xf32, #tpu.memory_space<vmem>>, vector<1x1xf32>
    %1164 = vector.broadcast %1163 : vector<1x1xf32> to vector<2x1xf32>
    %1165 = arith.addf %1162, %1164 : vector<2x1xf32>
    %1166 = arith.maximumf %1146, %1165 : vector<2x1xf32>
    %1167 = arith.subf %1146, %1166 : vector<2x1xf32>
    %1168 = math.exp %1167 : vector<2x1xf32>
    %1169 = arith.subf %1165, %1166 : vector<2x1xf32>
    %1170 = math.exp %1169 : vector<2x1xf32>
    %1171 = arith.mulf %1168, %1152 : vector<2x1xf32>
    %1172 = arith.addf %1171, %1170 : vector<2x1xf32>
    %1173 = vector.broadcast %1168 : vector<2x1xf32> to vector<2x256xf32>
    %1174 = arith.mulf %1173, %1157 : vector<2x256xf32>
    %1175 = vector.broadcast %1170 : vector<2x1xf32> to vector<2x256xf32>
    %1176 = arith.mulf %1175, %1158 : vector<2x256xf32>
    %1177 = arith.addf %1174, %1176 : vector<2x256xf32>
    %c18_385 = arith.constant 18 : index
    %c0_386 = arith.constant 0 : index
    %1178 = vector.load %arg15[%c18_385, %c0_386] : memref<30x256xf32, #tpu.memory_space<vmem>>, vector<2x256xf32>
    %c18_387 = arith.constant 18 : index
    %c0_388 = arith.constant 0 : index
    %1179 = vector.load %arg16[%c18_387, %c0_388] : memref<30x256xf32, #tpu.memory_space<vmem>>, vector<2x256xf32>
    %1180 = arith.mulf %1179, %994 : vector<2x256xf32>
    %cst_389 = arith.constant dense<0.000000e+00> : vector<2xf32>
    %1181 = vector.multi_reduction <add>, %1180, %cst_389 [1] : vector<2x256xf32> to vector<2xf32>
    %1182 = vector.shape_cast %1181 : vector<2xf32> to vector<2x1xf32>
    %c0_390 = arith.constant 0 : index
    %c0_391 = arith.constant 0 : index
    %1183 = vector.load %arg12[%c0_390, %c0_391] : memref<1x1xf32, #tpu.memory_space<vmem>>, vector<1x1xf32>
    %1184 = vector.broadcast %1183 : vector<1x1xf32> to vector<2x1xf32>
    %1185 = arith.addf %1182, %1184 : vector<2x1xf32>
    %1186 = arith.maximumf %1166, %1185 : vector<2x1xf32>
    %1187 = arith.subf %1166, %1186 : vector<2x1xf32>
    %1188 = math.exp %1187 : vector<2x1xf32>
    %1189 = arith.subf %1185, %1186 : vector<2x1xf32>
    %1190 = math.exp %1189 : vector<2x1xf32>
    %1191 = arith.mulf %1188, %1172 : vector<2x1xf32>
    %1192 = arith.addf %1191, %1190 : vector<2x1xf32>
    %1193 = vector.broadcast %1188 : vector<2x1xf32> to vector<2x256xf32>
    %1194 = arith.mulf %1193, %1177 : vector<2x256xf32>
    %1195 = vector.broadcast %1190 : vector<2x1xf32> to vector<2x256xf32>
    %1196 = arith.mulf %1195, %1178 : vector<2x256xf32>
    %1197 = arith.addf %1194, %1196 : vector<2x256xf32>
    %c20_392 = arith.constant 20 : index
    %c0_393 = arith.constant 0 : index
    %1198 = vector.load %arg15[%c20_392, %c0_393] : memref<30x256xf32, #tpu.memory_space<vmem>>, vector<2x256xf32>
    %c20_394 = arith.constant 20 : index
    %c0_395 = arith.constant 0 : index
    %1199 = vector.load %arg16[%c20_394, %c0_395] : memref<30x256xf32, #tpu.memory_space<vmem>>, vector<2x256xf32>
    %1200 = arith.mulf %1199, %994 : vector<2x256xf32>
    %cst_396 = arith.constant dense<0.000000e+00> : vector<2xf32>
    %1201 = vector.multi_reduction <add>, %1200, %cst_396 [1] : vector<2x256xf32> to vector<2xf32>
    %1202 = vector.shape_cast %1201 : vector<2xf32> to vector<2x1xf32>
    %c0_397 = arith.constant 0 : index
    %c0_398 = arith.constant 0 : index
    %1203 = vector.load %arg12[%c0_397, %c0_398] : memref<1x1xf32, #tpu.memory_space<vmem>>, vector<1x1xf32>
    %1204 = vector.broadcast %1203 : vector<1x1xf32> to vector<2x1xf32>
    %1205 = arith.addf %1202, %1204 : vector<2x1xf32>
    %1206 = arith.maximumf %1186, %1205 : vector<2x1xf32>
    %1207 = arith.subf %1186, %1206 : vector<2x1xf32>
    %1208 = math.exp %1207 : vector<2x1xf32>
    %1209 = arith.subf %1205, %1206 : vector<2x1xf32>
    %1210 = math.exp %1209 : vector<2x1xf32>
    %1211 = arith.mulf %1208, %1192 : vector<2x1xf32>
    %1212 = arith.addf %1211, %1210 : vector<2x1xf32>
    %1213 = vector.broadcast %1208 : vector<2x1xf32> to vector<2x256xf32>
    %1214 = arith.mulf %1213, %1197 : vector<2x256xf32>
    %1215 = vector.broadcast %1210 : vector<2x1xf32> to vector<2x256xf32>
    %1216 = arith.mulf %1215, %1198 : vector<2x256xf32>
    %1217 = arith.addf %1214, %1216 : vector<2x256xf32>
    %c22_399 = arith.constant 22 : index
    %c0_400 = arith.constant 0 : index
    %1218 = vector.load %arg15[%c22_399, %c0_400] : memref<30x256xf32, #tpu.memory_space<vmem>>, vector<2x256xf32>
    %c22_401 = arith.constant 22 : index
    %c0_402 = arith.constant 0 : index
    %1219 = vector.load %arg16[%c22_401, %c0_402] : memref<30x256xf32, #tpu.memory_space<vmem>>, vector<2x256xf32>
    %1220 = arith.mulf %1219, %994 : vector<2x256xf32>
    %cst_403 = arith.constant dense<0.000000e+00> : vector<2xf32>
    %1221 = vector.multi_reduction <add>, %1220, %cst_403 [1] : vector<2x256xf32> to vector<2xf32>
    %1222 = vector.shape_cast %1221 : vector<2xf32> to vector<2x1xf32>
    %c0_404 = arith.constant 0 : index
    %c0_405 = arith.constant 0 : index
    %1223 = vector.load %arg12[%c0_404, %c0_405] : memref<1x1xf32, #tpu.memory_space<vmem>>, vector<1x1xf32>
    %1224 = vector.broadcast %1223 : vector<1x1xf32> to vector<2x1xf32>
    %1225 = arith.addf %1222, %1224 : vector<2x1xf32>
    %1226 = arith.maximumf %1206, %1225 : vector<2x1xf32>
    %1227 = arith.subf %1206, %1226 : vector<2x1xf32>
    %1228 = math.exp %1227 : vector<2x1xf32>
    %1229 = arith.subf %1225, %1226 : vector<2x1xf32>
    %1230 = math.exp %1229 : vector<2x1xf32>
    %1231 = arith.mulf %1228, %1212 : vector<2x1xf32>
    %1232 = arith.addf %1231, %1230 : vector<2x1xf32>
    %1233 = vector.broadcast %1228 : vector<2x1xf32> to vector<2x256xf32>
    %1234 = arith.mulf %1233, %1217 : vector<2x256xf32>
    %1235 = vector.broadcast %1230 : vector<2x1xf32> to vector<2x256xf32>
    %1236 = arith.mulf %1235, %1218 : vector<2x256xf32>
    %1237 = arith.addf %1234, %1236 : vector<2x256xf32>
    %c24_406 = arith.constant 24 : index
    %c0_407 = arith.constant 0 : index
    %1238 = vector.load %arg15[%c24_406, %c0_407] : memref<30x256xf32, #tpu.memory_space<vmem>>, vector<2x256xf32>
    %c24_408 = arith.constant 24 : index
    %c0_409 = arith.constant 0 : index
    %1239 = vector.load %arg16[%c24_408, %c0_409] : memref<30x256xf32, #tpu.memory_space<vmem>>, vector<2x256xf32>
    %1240 = arith.mulf %1239, %994 : vector<2x256xf32>
    %cst_410 = arith.constant dense<0.000000e+00> : vector<2xf32>
    %1241 = vector.multi_reduction <add>, %1240, %cst_410 [1] : vector<2x256xf32> to vector<2xf32>
    %1242 = vector.shape_cast %1241 : vector<2xf32> to vector<2x1xf32>
    %c0_411 = arith.constant 0 : index
    %c0_412 = arith.constant 0 : index
    %1243 = vector.load %arg12[%c0_411, %c0_412] : memref<1x1xf32, #tpu.memory_space<vmem>>, vector<1x1xf32>
    %1244 = vector.broadcast %1243 : vector<1x1xf32> to vector<2x1xf32>
    %1245 = arith.addf %1242, %1244 : vector<2x1xf32>
    %1246 = arith.maximumf %1226, %1245 : vector<2x1xf32>
    %1247 = arith.subf %1226, %1246 : vector<2x1xf32>
    %1248 = math.exp %1247 : vector<2x1xf32>
    %1249 = arith.subf %1245, %1246 : vector<2x1xf32>
    %1250 = math.exp %1249 : vector<2x1xf32>
    %1251 = arith.mulf %1248, %1232 : vector<2x1xf32>
    %1252 = arith.addf %1251, %1250 : vector<2x1xf32>
    %1253 = vector.broadcast %1248 : vector<2x1xf32> to vector<2x256xf32>
    %1254 = arith.mulf %1253, %1237 : vector<2x256xf32>
    %1255 = vector.broadcast %1250 : vector<2x1xf32> to vector<2x256xf32>
    %1256 = arith.mulf %1255, %1238 : vector<2x256xf32>
    %1257 = arith.addf %1254, %1256 : vector<2x256xf32>
    %c26_413 = arith.constant 26 : index
    %c0_414 = arith.constant 0 : index
    %1258 = vector.load %arg15[%c26_413, %c0_414] : memref<30x256xf32, #tpu.memory_space<vmem>>, vector<2x256xf32>
    %c26_415 = arith.constant 26 : index
    %c0_416 = arith.constant 0 : index
    %1259 = vector.load %arg16[%c26_415, %c0_416] : memref<30x256xf32, #tpu.memory_space<vmem>>, vector<2x256xf32>
    %1260 = arith.mulf %1259, %994 : vector<2x256xf32>
    %cst_417 = arith.constant dense<0.000000e+00> : vector<2xf32>
    %1261 = vector.multi_reduction <add>, %1260, %cst_417 [1] : vector<2x256xf32> to vector<2xf32>
    %1262 = vector.shape_cast %1261 : vector<2xf32> to vector<2x1xf32>
    %c0_418 = arith.constant 0 : index
    %c0_419 = arith.constant 0 : index
    %1263 = vector.load %arg12[%c0_418, %c0_419] : memref<1x1xf32, #tpu.memory_space<vmem>>, vector<1x1xf32>
    %1264 = vector.broadcast %1263 : vector<1x1xf32> to vector<2x1xf32>
    %1265 = arith.addf %1262, %1264 : vector<2x1xf32>
    %1266 = arith.maximumf %1246, %1265 : vector<2x1xf32>
    %1267 = arith.subf %1246, %1266 : vector<2x1xf32>
    %1268 = math.exp %1267 : vector<2x1xf32>
    %1269 = arith.subf %1265, %1266 : vector<2x1xf32>
    %1270 = math.exp %1269 : vector<2x1xf32>
    %1271 = arith.mulf %1268, %1252 : vector<2x1xf32>
    %1272 = arith.addf %1271, %1270 : vector<2x1xf32>
    %1273 = vector.broadcast %1268 : vector<2x1xf32> to vector<2x256xf32>
    %1274 = arith.mulf %1273, %1257 : vector<2x256xf32>
    %1275 = vector.broadcast %1270 : vector<2x1xf32> to vector<2x256xf32>
    %1276 = arith.mulf %1275, %1258 : vector<2x256xf32>
    %1277 = arith.addf %1274, %1276 : vector<2x256xf32>
    %c28_420 = arith.constant 28 : index
    %c0_421 = arith.constant 0 : index
    %1278 = vector.load %arg15[%c28_420, %c0_421] : memref<30x256xf32, #tpu.memory_space<vmem>>, vector<2x256xf32>
    %c28_422 = arith.constant 28 : index
    %c0_423 = arith.constant 0 : index
    %1279 = vector.load %arg16[%c28_422, %c0_423] : memref<30x256xf32, #tpu.memory_space<vmem>>, vector<2x256xf32>
    %1280 = arith.mulf %1279, %994 : vector<2x256xf32>
    %cst_424 = arith.constant dense<0.000000e+00> : vector<2xf32>
    %1281 = vector.multi_reduction <add>, %1280, %cst_424 [1] : vector<2x256xf32> to vector<2xf32>
    %1282 = vector.shape_cast %1281 : vector<2xf32> to vector<2x1xf32>
    %c0_425 = arith.constant 0 : index
    %c0_426 = arith.constant 0 : index
    %1283 = vector.load %arg12[%c0_425, %c0_426] : memref<1x1xf32, #tpu.memory_space<vmem>>, vector<1x1xf32>
    %1284 = vector.broadcast %1283 : vector<1x1xf32> to vector<2x1xf32>
    %1285 = arith.addf %1282, %1284 : vector<2x1xf32>
    %1286 = arith.maximumf %1266, %1285 : vector<2x1xf32>
    %1287 = arith.subf %1266, %1286 : vector<2x1xf32>
    %1288 = math.exp %1287 : vector<2x1xf32>
    %1289 = arith.subf %1285, %1286 : vector<2x1xf32>
    %1290 = math.exp %1289 : vector<2x1xf32>
    %1291 = arith.mulf %1288, %1272 : vector<2x1xf32>
    %1292 = arith.addf %1291, %1290 : vector<2x1xf32>
    %1293 = vector.broadcast %1288 : vector<2x1xf32> to vector<2x256xf32>
    %1294 = arith.mulf %1293, %1277 : vector<2x256xf32>
    %1295 = vector.broadcast %1290 : vector<2x1xf32> to vector<2x256xf32>
    %1296 = arith.mulf %1295, %1278 : vector<2x256xf32>
    %1297 = arith.addf %1294, %1296 : vector<2x256xf32>
    %1298 = tpu.reciprocal %1292 {approx = true} : vector<2x1xf32> -> vector<2x1xf32>
    %1299 = vector.broadcast %1298 : vector<2x1xf32> to vector<2x256xf32>
    %1300 = arith.mulf %1297, %1299 : vector<2x256xf32>
    %c0_427 = arith.constant 0 : index
    %c0_428 = arith.constant 0 : index
    %1301 = vector.load %arg13[%c0_427, %c0_428] : memref<2x256xf32, #tpu.memory_space<vmem>>, vector<2x256xf32>
    tpu.vector_store %arg13[%c0_427, %c0_428], %1300 {strides = array<i32>} : memref<2x256xf32, #tpu.memory_space<vmem>>, vector<2x256xf32>,
    return
  }
}

</mosaic_0001>

<llo_original>
// kernel: lstm_forward.1
$region0: #{lstm_forward.1}
  #allocation0 [shape = 'u32[]', space=smem, size = 0x4, offset = 0x4, fixed_abs, tag = 'smem constant byte address 0x4 - core index']
  #allocation1 [shape = 'u32[72,128]{1,0:T(1,128)}', space=vmem, size = 0x9000, scoped, tag = 'internal scratch']
  #allocation2 [shape = 'f32[30,768]{1,0:T(8,128)}', space=vmem, size = 0x18000, scoped, tag = 'scratch operand']
  #allocation3 [shape = 'f32[30,256]{1,0:T(8,128)}', space=vmem, size = 0x8000, scoped, tag = 'scratch operand']
  #allocation4 [shape = 'f32[30,256]{1,0:T(8,128)}', space=vmem, size = 0x8000, scoped, tag = 'scratch operand']
  #allocation5 [shape = 'f32[1,1]{1,0:T(1,128)S(1)}', space=vmem, size = 0x200, scoped, tag = 'scoped memory for lstm_forward.1']
  %s0 = inlined_call_operand.vmem [shape: bf16[30,128], index: 0, kind: input, shape index: {}]
  %s1 = inlined_call_operand.vmem [shape: bf16[128,768], index: 1, kind: input, shape index: {}]
  %s2 = inlined_call_operand.vmem [shape: f32[1,768], index: 2, kind: input, shape index: {}]
  %s3 = inlined_call_operand.vmem [shape: bf16[128,384], index: 3, kind: input, shape index: {}]
  %s4 = inlined_call_operand.vmem [shape: bf16[128,384], index: 4, kind: input, shape index: {}]
  %s5 = inlined_call_operand.vmem [shape: f32[1,256], index: 5, kind: input, shape index: {}]
  %s6 = inlined_call_operand.vmem [shape: f32[30,1], index: 6, kind: input, shape index: {}]
  %s7 = inlined_call_operand.vmem [shape: bf16[256,256], index: 7, kind: input, shape index: {}]
  %s8 = inlined_call_operand.vmem [shape: f32[1,256], index: 8, kind: input, shape index: {}]
  %s9 = inlined_call_operand.vmem [shape: bf16[256,256], index: 9, kind: input, shape index: {}]
  %s10 = inlined_call_operand.vmem [shape: f32[1,256], index: 10, kind: input, shape index: {}]
  %s11 = inlined_call_operand.vmem [shape: f32[1,256], index: 11, kind: input, shape index: {}]
  %s12 = inlined_call_operand.<no memory space> [shape: f32[1,1], index: 12, kind: input, shape index: {}]
  %s13 = inlined_call_operand.vmem [shape: f32[2,256], index: 13, kind: output, shape index: {}]
  %s14 = sld [smem:[#allocation0]]
  $region62: #{lstm_forward.1} parent=0
    _
  %s16 = ssub.s32 1, %s14
  %s17 = scalar_select 0, %s16, %s14
  %v18 = vstv %s12
  %19 = vst [vmem:[#allocation5] sm:$0x1] %v18
  // Predicated region
  $region2: #{lstm_forward.1} parent=0 // pred_check
    _
  $region3: #{lstm_forward.1} parent=0 // pred_check_branch
    %21 = sbr.rel (0) target = $region5
  $region4: #{lstm_forward.1} parent=0 // pred_region
    _
  $region5: #{lstm_forward.1} parent=0 // pred_fallthru
    _
  // Predicated region
  $region6: #{lstm_forward.1} parent=0 // pred_check
    _
  $region7: #{lstm_forward.1} parent=0 // pred_check_branch
    %23 = sbr.rel (0) target = $region9
  $region8: #{lstm_forward.1} parent=0 // pred_region
    _
  $region9: #{lstm_forward.1} parent=0 // pred_fallthru
    _
  // Predicated region
  $region10: #{lstm_forward.1} parent=0 // pred_check
    _
  $region11: #{lstm_forward.1} parent=0 // pred_check_branch
    %25 = sbr.rel (0) target = $region13
  $region12: #{lstm_forward.1} parent=0 // pred_region
    _
  $region13: #{lstm_forward.1} parent=0 // pred_fallthru
    _
  // Predicated region
  $region14: #{lstm_forward.1} parent=0 // pred_check
    _
  $region15: #{lstm_forward.1} parent=0 // pred_check_branch
    %27 = sbr.rel (0) target = $region17
  $region16: #{lstm_forward.1} parent=0 // pred_region
    _
  $region17: #{lstm_forward.1} parent=0 // pred_fallthru
    _
  // Predicated region
  $region18: #{lstm_forward.1} parent=0 // pred_check
    _
  $region19: #{lstm_forward.1} parent=0 // pred_check_branch
    %29 = sbr.rel (0) target = $region21
  $region20: #{lstm_forward.1} parent=0 // pred_region
    _
  $region21: #{lstm_forward.1} parent=0 // pred_fallthru
    _
  // Predicated region
  $region22: #{lstm_forward.1} parent=0 // pred_check
    _
  $region23: #{lstm_forward.1} parent=0 // pred_check_branch
    %31 = sbr.rel (0) target = $region25
  $region24: #{lstm_forward.1} parent=0 // pred_region
    _
  $region25: #{lstm_forward.1} parent=0 // pred_fallthru
    _
  // Predicated region
  $region26: #{lstm_forward.1} parent=0 // pred_check
    _
  $region27: #{lstm_forward.1} parent=0 // pred_check_branch
    %33 = sbr.rel (0) target = $region29
  $region28: #{lstm_forward.1} parent=0 // pred_region
    _
  $region29: #{lstm_forward.1} parent=0 // pred_fallthru
    _
  // Predicated region
  $region30: #{lstm_forward.1} parent=0 // pred_check
    _
  $region31: #{lstm_forward.1} parent=0 // pred_check_branch
    %35 = sbr.rel (0) target = $region33
  $region32: #{lstm_forward.1} parent=0 // pred_region
    _
  $region33: #{lstm_forward.1} parent=0 // pred_fallthru
    _
  // Predicated region
  $region34: #{lstm_forward.1} parent=0 // pred_check
    _
  $region35: #{lstm_forward.1} parent=0 // pred_check_branch
    %37 = sbr.rel (0) target = $region37
  $region36: #{lstm_forward.1} parent=0 // pred_region
    _
  $region37: #{lstm_forward.1} parent=0 // pred_fallthru
    _
  // Predicated region
  $region38: #{lstm_forward.1} parent=0 // pred_check
    _
  $region39: #{lstm_forward.1} parent=0 // pred_check_branch
    %39 = sbr.rel (0) target = $region41
  $region40: #{lstm_forward.1} parent=0 // pred_region
    _
  $region41: #{lstm_forward.1} parent=0 // pred_fallthru
    _
  // Predicated region
  $region42: #{lstm_forward.1} parent=0 // pred_check
    _
  $region43: #{lstm_forward.1} parent=0 // pred_check_branch
    %41 = sbr.rel (0) target = $region45
  $region44: #{lstm_forward.1} parent=0 // pred_region
    _
  $region45: #{lstm_forward.1} parent=0 // pred_fallthru
    _
  // Predicated region
  $region46: #{lstm_forward.1} parent=0 // pred_check
    _
  $region47: #{lstm_forward.1} parent=0 // pred_check_branch
    %43 = sbr.rel (0) target = $region49
  $region48: #{lstm_forward.1} parent=0 // pred_region
    _
  $region49: #{lstm_forward.1} parent=0 // pred_fallthru
    _
  // Predicated region
  $region50: #{lstm_forward.1} parent=0 // pred_check
    _
  $region51: #{lstm_forward.1} parent=0 // pred_check_branch
    %45 = sbr.rel (0) target = $region53
  $region52: #{lstm_forward.1} parent=0 // pred_region
    _
  $region53: #{lstm_forward.1} parent=0 // pred_fallthru
    _
  %v47 = vld [vmem:[%s0] sm:$0xf]
  %v48 = vld [vmem:[%s0 + $0x4] sm:$0xf]
  %v49 = vld [vmem:[%s0 + $0x8] sm:$0xf]
  %v50 = vld [vmem:[%s0 + $0xc] sm:$0x7]
  %v51 = vld [vmem:[%s1] sm:$0xff]
  %v52 = vld [vmem:[%s1 + $0x8] sm:$0xff]
  %v53 = vld [vmem:[%s1 + $0x10] sm:$0xff]
  %v54 = vld [vmem:[%s1 + $0x18] sm:$0xff]
  %v55 = vld [vmem:[%s1 + $0x20] sm:$0xff]
  %v56 = vld [vmem:[%s1 + $0x28] sm:$0xff]
  %v57 = vld [vmem:[%s1 + $0x30] sm:$0xff]
  %v58 = vld [vmem:[%s1 + $0x38] sm:$0xff]
  %v59 = vld [vmem:[%s1 + $0x40] sm:$0xff]
  %v60 = vld [vmem:[%s1 + $0x48] sm:$0xff]
  %v61 = vld [vmem:[%s1 + $0x50] sm:$0xff]
  %v62 = vld [vmem:[%s1 + $0x58] sm:$0xff]
  %v63 = vld [vmem:[%s1 + $0x60] sm:$0xff]
  %v64 = vld [vmem:[%s1 + $0x68] sm:$0xff]
  %v65 = vld [vmem:[%s1 + $0x70] sm:$0xff]
  %v66 = vld [vmem:[%s1 + $0x78] sm:$0xff]
  %v67 = vld [vmem:[%s1 + $0x80] sm:$0xff]
  %v68 = vld [vmem:[%s1 + $0x88] sm:$0xff]
  %v69 = vld [vmem:[%s1 + $0x90] sm:$0xff]
  %v70 = vld [vmem:[%s1 + $0x98] sm:$0xff]
  %v71 = vld [vmem:[%s1 + $0xa0] sm:$0xff]
  %v72 = vld [vmem:[%s1 + $0xa8] sm:$0xff]
  %v73 = vld [vmem:[%s1 + $0xb0] sm:$0xff]
  %v74 = vld [vmem:[%s1 + $0xb8] sm:$0xff]
  %v75 = vld [vmem:[%s1 + $0xc0] sm:$0xff]
  %v76 = vld [vmem:[%s1 + $0xc8] sm:$0xff]
  %v77 = vld [vmem:[%s1 + $0xd0] sm:$0xff]
  %v78 = vld [vmem:[%s1 + $0xd8] sm:$0xff]
  %v79 = vld [vmem:[%s1 + $0xe0] sm:$0xff]
  %v80 = vld [vmem:[%s1 + $0xe8] sm:$0xff]
  %v81 = vld [vmem:[%s1 + $0xf0] sm:$0xff]
  %v82 = vld [vmem:[%s1 + $0xf8] sm:$0xff]
  %v83 = vld [vmem:[%s1 + $0x100] sm:$0xff]
  %v84 = vld [vmem:[%s1 + $0x108] sm:$0xff]
  %v85 = vld [vmem:[%s1 + $0x110] sm:$0xff]
  %v86 = vld [vmem:[%s1 + $0x118] sm:$0xff]
  %v87 = vld [vmem:[%s1 + $0x120] sm:$0xff]
  %v88 = vld [vmem:[%s1 + $0x128] sm:$0xff]
  %v89 = vld [vmem:[%s1 + $0x130] sm:$0xff]
  %v90 = vld [vmem:[%s1 + $0x138] sm:$0xff]
  %v91 = vld [vmem:[%s1 + $0x140] sm:$0xff]
  %v92 = vld [vmem:[%s1 + $0x148] sm:$0xff]
  %v93 = vld [vmem:[%s1 + $0x150] sm:$0xff]
  %v94 = vld [vmem:[%s1 + $0x158] sm:$0xff]
  %v95 = vld [vmem:[%s1 + $0x160] sm:$0xff]
  %v96 = vld [vmem:[%s1 + $0x168] sm:$0xff]
  %v97 = vld [vmem:[%s1 + $0x170] sm:$0xff]
  %v98 = vld [vmem:[%s1 + $0x178] sm:$0xff]
  %v99 = vld [vmem:[%s2] sm:$0x3f]
  %v101 = vperm.slane %v99, 0
  %v102 = vperm.slane %v99, 1
  %v103 = vperm.slane %v99, 2
  %v104 = vperm.slane %v99, 3
  %v105 = vperm.slane %v99, 4
  %v106 = vperm.slane %v99, 5
  %v117 = vunpack.c.l.b16 %v47
  %v118 = vunpack.c.l.b16 %v48
  %v119 = vunpack.c.l.b16 %v49
  %v120 = vunpack.c.l.b16 %v50
  %v121 = vpack.c.b16 %v118, %v117
  %v122 = vpack.c.b16 %v120, %v119
  %v173 = vunpack.c.l.b16 %v51
  %v174 = vunpack.c.h.b16 %v51
  %v175 = vunpack.c.l.b16 %v52
  %v176 = vunpack.c.h.b16 %v52
  %v177 = vunpack.c.l.b16 %v53
  %v178 = vunpack.c.h.b16 %v53
  %v179 = vunpack.c.l.b16 %v54
  %v180 = vunpack.c.h.b16 %v54
  %v181 = vunpack.c.l.b16 %v55
  %v182 = vunpack.c.h.b16 %v55
  %v183 = vunpack.c.l.b16 %v56
  %v184 = vunpack.c.h.b16 %v56
  %v185 = vunpack.c.l.b16 %v57
  %v186 = vunpack.c.h.b16 %v57
  %v187 = vunpack.c.l.b16 %v58
  %v188 = vunpack.c.h.b16 %v58
  %v189 = vunpack.c.l.b16 %v59
  %v190 = vunpack.c.h.b16 %v59
  %v191 = vunpack.c.l.b16 %v60
  %v192 = vunpack.c.h.b16 %v60
  %v193 = vunpack.c.l.b16 %v61
  %v194 = vunpack.c.h.b16 %v61
  %v195 = vunpack.c.l.b16 %v62
  %v196 = vunpack.c.h.b16 %v62
  %v197 = vunpack.c.l.b16 %v63
  %v198 = vunpack.c.h.b16 %v63
  %v199 = vunpack.c.l.b16 %v64
  %v200 = vunpack.c.h.b16 %v64
  %v201 = vunpack.c.l.b16 %v65
  %v202 = vunpack.c.h.b16 %v65
  %v203 = vunpack.c.l.b16 %v66
  %v204 = vunpack.c.h.b16 %v66
  %v205 = vunpack.c.l.b16 %v67
  %v206 = vunpack.c.h.b16 %v67
  %v207 = vunpack.c.l.b16 %v68
  %v208 = vunpack.c.h.b16 %v68
  %v209 = vunpack.c.l.b16 %v69
  %v210 = vunpack.c.h.b16 %v69
  %v211 = vunpack.c.l.b16 %v70
  %v212 = vunpack.c.h.b16 %v70
  %v213 = vunpack.c.l.b16 %v71
  %v214 = vunpack.c.h.b16 %v71
  %v215 = vunpack.c.l.b16 %v72
  %v216 = vunpack.c.h.b16 %v72
  %v217 = vunpack.c.l.b16 %v73
  %v218 = vunpack.c.h.b16 %v73
  %v219 = vunpack.c.l.b16 %v74
  %v220 = vunpack.c.h.b16 %v74
  %v221 = vunpack.c.l.b16 %v75
  %v222 = vunpack.c.h.b16 %v75
  %v223 = vunpack.c.l.b16 %v76
  %v224 = vunpack.c.h.b16 %v76
  %v225 = vunpack.c.l.b16 %v77
  %v226 = vunpack.c.h.b16 %v77
  %v227 = vunpack.c.l.b16 %v78
  %v228 = vunpack.c.h.b16 %v78
  %v229 = vunpack.c.l.b16 %v79
  %v230 = vunpack.c.h.b16 %v79
  %v231 = vunpack.c.l.b16 %v80
  %v232 = vunpack.c.h.b16 %v80
  %v233 = vunpack.c.l.b16 %v81
  %v234 = vunpack.c.h.b16 %v81
  %v235 = vunpack.c.l.b16 %v82
  %v236 = vunpack.c.h.b16 %v82
  %v237 = vunpack.c.l.b16 %v83
  %v238 = vunpack.c.h.b16 %v83
  %v239 = vunpack.c.l.b16 %v84
  %v240 = vunpack.c.h.b16 %v84
  %v241 = vunpack.c.l.b16 %v85
  %v242 = vunpack.c.h.b16 %v85
  %v243 = vunpack.c.l.b16 %v86
  %v244 = vunpack.c.h.b16 %v86
  %v245 = vunpack.c.l.b16 %v87
  %v246 = vunpack.c.h.b16 %v87
  %v247 = vunpack.c.l.b16 %v88
  %v248 = vunpack.c.h.b16 %v88
  %v249 = vunpack.c.l.b16 %v89
  %v250 = vunpack.c.h.b16 %v89
  %v251 = vunpack.c.l.b16 %v90
  %v252 = vunpack.c.h.b16 %v90
  %v253 = vunpack.c.l.b16 %v91
  %v254 = vunpack.c.h.b16 %v91
  %v255 = vunpack.c.l.b16 %v92
  %v256 = vunpack.c.h.b16 %v92
  %v257 = vunpack.c.l.b16 %v93
  %v258 = vunpack.c.h.b16 %v93
  %v259 = vunpack.c.l.b16 %v94
  %v260 = vunpack.c.h.b16 %v94
  %v261 = vunpack.c.l.b16 %v95
  %v262 = vunpack.c.h.b16 %v95
  %v263 = vunpack.c.l.b16 %v96
  %v264 = vunpack.c.h.b16 %v96
  %v265 = vunpack.c.l.b16 %v97
  %v266 = vunpack.c.h.b16 %v97
  %v267 = vunpack.c.l.b16 %v98
  %v268 = vunpack.c.h.b16 %v98
  %v269 = vpack.c.b16 %v179, %v173
  %v270 = vpack.c.b16 %v180, %v174
  %v271 = vpack.c.b16 %v181, %v175
  %v272 = vpack.c.b16 %v182, %v176
  %v273 = vpack.c.b16 %v183, %v177
  %v274 = vpack.c.b16 %v184, %v178
  %v275 = vpack.c.b16 %v191, %v185
  %v276 = vpack.c.b16 %v192, %v186
  %v277 = vpack.c.b16 %v193, %v187
  %v278 = vpack.c.b16 %v194, %v188
  %v279 = vpack.c.b16 %v195, %v189
  %v280 = vpack.c.b16 %v196, %v190
  %v281 = vpack.c.b16 %v203, %v197
  %v282 = vpack.c.b16 %v204, %v198
  %v283 = vpack.c.b16 %v205, %v199
  %v284 = vpack.c.b16 %v206, %v200
  %v285 = vpack.c.b16 %v207, %v201
  %v286 = vpack.c.b16 %v208, %v202
  %v287 = vpack.c.b16 %v215, %v209
  %v288 = vpack.c.b16 %v216, %v210
  %v289 = vpack.c.b16 %v217, %v211
  %v290 = vpack.c.b16 %v218, %v212
  %v291 = vpack.c.b16 %v219, %v213
  %v292 = vpack.c.b16 %v220, %v214
  %v293 = vpack.c.b16 %v227, %v221
  %v294 = vpack.c.b16 %v228, %v222
  %v295 = vpack.c.b16 %v229, %v223
  %v296 = vpack.c.b16 %v230, %v224
  %v297 = vpack.c.b16 %v231, %v225
  %v298 = vpack.c.b16 %v232, %v226
  %v299 = vpack.c.b16 %v239, %v233
  %v300 = vpack.c.b16 %v240, %v234
  %v301 = vpack.c.b16 %v241, %v235
  %v302 = vpack.c.b16 %v242, %v236
  %v303 = vpack.c.b16 %v243, %v237
  %v304 = vpack.c.b16 %v244, %v238
  %v305 = vpack.c.b16 %v251, %v245
  %v306 = vpack.c.b16 %v252, %v246
  %v307 = vpack.c.b16 %v253, %v247
  %v308 = vpack.c.b16 %v254, %v248
  %v309 = vpack.c.b16 %v255, %v249
  %v310 = vpack.c.b16 %v256, %v250
  %v311 = vpack.c.b16 %v263, %v257
  %v312 = vpack.c.b16 %v264, %v258
  %v313 = vpack.c.b16 %v265, %v259
  %v314 = vpack.c.b16 %v266, %v260
  %v315 = vpack.c.b16 %v267, %v261
  %v316 = vpack.c.b16 %v268, %v262
  %365 = vmatpush.bf16.msra.mxu0 %v311
  %366 = vmatpush.bf16.msra.mxu0 %v305
  %367 = vmatpush.bf16.msra.mxu0 %v299
  %368 = vmatpush.bf16.msra.mxu0 %v293
  %369 = vmatpush.bf16.msra.mxu0 %v287
  %370 = vmatpush.bf16.msra.mxu0 %v281
  %371 = vmatpush.bf16.msra.mxu0 %v275
  %372 = vmatpush.bf16.msra.mxu0 %v269
  %373 = vmatmul.bf16.gmra.mxu0 %v121
  %v374 = vpop.f32.mrf.mxu0
  %v375 = vadd.f32 %v101, %v374
  %v376 = vpop.f32.mrf.mxu0
  %v377 = vadd.f32 %v101, %v376
  %378 = vmatmul.bf16.gmra.mxu0 %v122
  %v379 = vpop.f32.mrf.mxu0
  %v380 = vadd.f32 %v101, %v379
  %v381 = vpop.f32.mrf.mxu0
  %v382 = vadd.f32 %v101, %v381
  %383 = vdwg.mxu0
  %384 = vmatpush.bf16.msra.mxu0 %v312
  %385 = vmatpush.bf16.msra.mxu0 %v306
  %386 = vmatpush.bf16.msra.mxu0 %v300
  %387 = vmatpush.bf16.msra.mxu0 %v294
  %388 = vmatpush.bf16.msra.mxu0 %v288
  %389 = vmatpush.bf16.msra.mxu0 %v282
  %390 = vmatpush.bf16.msra.mxu0 %v276
  %391 = vmatpush.bf16.msra.mxu0 %v270
  %392 = vmatmul.bf16.gmra.mxu0 %v121
  %v393 = vpop.f32.mrf.mxu0
  %v394 = vadd.f32 %v102, %v393
  %v395 = vpop.f32.mrf.mxu0
  %v396 = vadd.f32 %v102, %v395
  %397 = vmatmul.bf16.gmra.mxu0 %v122
  %v398 = vpop.f32.mrf.mxu0
  %v399 = vadd.f32 %v102, %v398
  %v400 = vpop.f32.mrf.mxu0
  %v401 = vadd.f32 %v102, %v400
  %402 = vdwg.mxu0
  %403 = vmatpush.bf16.msra.mxu0 %v313
  %404 = vmatpush.bf16.msra.mxu0 %v307
  %405 = vmatpush.bf16.msra.mxu0 %v301
  %406 = vmatpush.bf16.msra.mxu0 %v295
  %407 = vmatpush.bf16.msra.mxu0 %v289
  %408 = vmatpush.bf16.msra.mxu0 %v283
  %409 = vmatpush.bf16.msra.mxu0 %v277
  %410 = vmatpush.bf16.msra.mxu0 %v271
  %411 = vmatmul.bf16.gmra.mxu0 %v121
  %v412 = vpop.f32.mrf.mxu0
  %v413 = vadd.f32 %v103, %v412
  %v414 = vpop.f32.mrf.mxu0
  %v415 = vadd.f32 %v103, %v414
  %416 = vmatmul.bf16.gmra.mxu0 %v122
  %v417 = vpop.f32.mrf.mxu0
  %v418 = vadd.f32 %v103, %v417
  %v419 = vpop.f32.mrf.mxu0
  %v420 = vadd.f32 %v103, %v419
  %421 = vdwg.mxu0
  %422 = vmatpush.bf16.msra.mxu0 %v314
  %423 = vmatpush.bf16.msra.mxu0 %v308
  %424 = vmatpush.bf16.msra.mxu0 %v302
  %425 = vmatpush.bf16.msra.mxu0 %v296
  %426 = vmatpush.bf16.msra.mxu0 %v290
  %427 = vmatpush.bf16.msra.mxu0 %v284
  %428 = vmatpush.bf16.msra.mxu0 %v278
  %429 = vmatpush.bf16.msra.mxu0 %v272
  %430 = vmatmul.bf16.gmra.mxu0 %v121
  %v431 = vpop.f32.mrf.mxu0
  %v432 = vadd.f32 %v104, %v431
  %v433 = vpop.f32.mrf.mxu0
  %v434 = vadd.f32 %v104, %v433
  %435 = vmatmul.bf16.gmra.mxu0 %v122
  %v436 = vpop.f32.mrf.mxu0
  %v437 = vadd.f32 %v104, %v436
  %v438 = vpop.f32.mrf.mxu0
  %v439 = vadd.f32 %v104, %v438
  %440 = vdwg.mxu0
  %441 = vmatpush.bf16.msra.mxu0 %v315
  %442 = vmatpush.bf16.msra.mxu0 %v309
  %443 = vmatpush.bf16.msra.mxu0 %v303
  %444 = vmatpush.bf16.msra.mxu0 %v297
  %445 = vmatpush.bf16.msra.mxu0 %v291
  %446 = vmatpush.bf16.msra.mxu0 %v285
  %447 = vmatpush.bf16.msra.mxu0 %v279
  %448 = vmatpush.bf16.msra.mxu0 %v273
  %449 = vmatmul.bf16.gmra.mxu0 %v121
  %v450 = vpop.f32.mrf.mxu0
  %v451 = vadd.f32 %v105, %v450
  %v452 = vpop.f32.mrf.mxu0
  %v453 = vadd.f32 %v105, %v452
  %454 = vmatmul.bf16.gmra.mxu0 %v122
  %v455 = vpop.f32.mrf.mxu0
  %v456 = vadd.f32 %v105, %v455
  %v457 = vpop.f32.mrf.mxu0
  %v458 = vadd.f32 %v105, %v457
  %459 = vdwg.mxu0
  %460 = vmatpush.bf16.msra.mxu0 %v316
  %461 = vmatpush.bf16.msra.mxu0 %v310
  %462 = vmatpush.bf16.msra.mxu0 %v304
  %463 = vmatpush.bf16.msra.mxu0 %v298
  %464 = vmatpush.bf16.msra.mxu0 %v292
  %465 = vmatpush.bf16.msra.mxu0 %v286
  %466 = vmatpush.bf16.msra.mxu0 %v280
  %467 = vmatpush.bf16.msra.mxu0 %v274
  %468 = vmatmul.bf16.gmra.mxu0 %v121
  %v469 = vpop.f32.mrf.mxu0
  %v470 = vadd.f32 %v106, %v469
  %v471 = vpop.f32.mrf.mxu0
  %v472 = vadd.f32 %v106, %v471
  %473 = vmatmul.bf16.gmra.mxu0 %v122
  %v474 = vpop.f32.mrf.mxu0
  %v475 = vadd.f32 %v106, %v474
  %v476 = vpop.f32.mrf.mxu0
  %v477 = vadd.f32 %v106, %v476
  %478 = vdwg.mxu0
  %479 = vst [vmem:[#allocation2] sm:$0xff] %v375
  %480 = vst [vmem:[#allocation2 + $0x8] sm:$0xff] %v394
  %481 = vst [vmem:[#allocation2 + $0x10] sm:$0xff] %v413
  %482 = vst [vmem:[#allocation2 + $0x18] sm:$0xff] %v432
  %483 = vst [vmem:[#allocation2 + $0x20] sm:$0xff] %v451
  %484 = vst [vmem:[#allocation2 + $0x28] sm:$0xff] %v470
  %485 = vst [vmem:[#allocation2 + $0x30] sm:$0xff] %v377
  %486 = vst [vmem:[#allocation2 + $0x38] sm:$0xff] %v396
  %487 = vst [vmem:[#allocation2 + $0x40] sm:$0xff] %v415
  %488 = vst [vmem:[#allocation2 + $0x48] sm:$0xff] %v434
  %489 = vst [vmem:[#allocation2 + $0x50] sm:$0xff] %v453
  %490 = vst [vmem:[#allocation2 + $0x58] sm:$0xff] %v472
  %491 = vst [vmem:[#allocation2 + $0x60] sm:$0xff] %v380
  %492 = vst [vmem:[#allocation2 + $0x68] sm:$0xff] %v399
  %493 = vst [vmem:[#allocation2 + $0x70] sm:$0xff] %v418
  %494 = vst [vmem:[#allocation2 + $0x78] sm:$0xff] %v437
  %495 = vst [vmem:[#allocation2 + $0x80] sm:$0xff] %v456
  %496 = vst [vmem:[#allocation2 + $0x88] sm:$0xff] %v475
  %497 = vst [vmem:[#allocation2 + $0x90] sm:$0x3f] %v382
  %498 = vst [vmem:[#allocation2 + $0x98] sm:$0x3f] %v401
  %499 = vst [vmem:[#allocation2 + $0xa0] sm:$0x3f] %v420
  %500 = vst [vmem:[#allocation2 + $0xa8] sm:$0x3f] %v439
  %501 = vst [vmem:[#allocation2 + $0xb0] sm:$0x3f] %v458
  %502 = vst [vmem:[#allocation2 + $0xb8] sm:$0x3f] %v477
  %v503 = vld [vmem:[%s3] sm:$0xff]
  %v504 = vld [vmem:[%s3 + $0x8] sm:$0xf]
  %v505 = vld [vmem:[%s3 + $0xc] sm:$0xff]
  %v506 = vld [vmem:[%s3 + $0x14] sm:$0xf]
  %v507 = vld [vmem:[%s3 + $0x18] sm:$0xff]
  %v508 = vld [vmem:[%s3 + $0x20] sm:$0xf]
  %v509 = vld [vmem:[%s3 + $0x24] sm:$0xff]
  %v510 = vld [vmem:[%s3 + $0x2c] sm:$0xf]
  %v511 = vld [vmem:[%s3 + $0x30] sm:$0xff]
  %v512 = vld [vmem:[%s3 + $0x38] sm:$0xf]
  %v513 = vld [vmem:[%s3 + $0x3c] sm:$0xff]
  %v514 = vld [vmem:[%s3 + $0x44] sm:$0xf]
  %v515 = vld [vmem:[%s3 + $0x48] sm:$0xff]
  %v516 = vld [vmem:[%s3 + $0x50] sm:$0xf]
  %v517 = vld [vmem:[%s3 + $0x54] sm:$0xff]
  %v518 = vld [vmem:[%s3 + $0x5c] sm:$0xf]
  %v519 = vld [vmem:[%s3 + $0x60] sm:$0xff]
  %v520 = vld [vmem:[%s3 + $0x68] sm:$0xf]
  %v521 = vld [vmem:[%s3 + $0x6c] sm:$0xff]
  %v522 = vld [vmem:[%s3 + $0x74] sm:$0xf]
  %v523 = vld [vmem:[%s3 + $0x78] sm:$0xff]
  %v524 = vld [vmem:[%s3 + $0x80] sm:$0xf]
  %v525 = vld [vmem:[%s3 + $0x84] sm:$0xff]
  %v526 = vld [vmem:[%s3 + $0x8c] sm:$0xf]
  %v527 = vld [vmem:[%s3 + $0x90] sm:$0xff]
  %v528 = vld [vmem:[%s3 + $0x98] sm:$0xf]
  %v529 = vld [vmem:[%s3 + $0x9c] sm:$0xff]
  %v530 = vld [vmem:[%s3 + $0xa4] sm:$0xf]
  %v531 = vld [vmem:[%s3 + $0xa8] sm:$0xff]
  %v532 = vld [vmem:[%s3 + $0xb0] sm:$0xf]
  %v533 = vld [vmem:[%s3 + $0xb4] sm:$0xff]
  %v534 = vld [vmem:[%s3 + $0xbc] sm:$0xf]
  %v535 = vld [vmem:[%s4] sm:$0xff]
  %v536 = vld [vmem:[%s4 + $0x8] sm:$0xf]
  %v537 = vld [vmem:[%s4 + $0xc] sm:$0xff]
  %v538 = vld [vmem:[%s4 + $0x14] sm:$0xf]
  %v539 = vld [vmem:[%s4 + $0x18] sm:$0xff]
  %v540 = vld [vmem:[%s4 + $0x20] sm:$0xf]
  %v541 = vld [vmem:[%s4 + $0x24] sm:$0xff]
  %v542 = vld [vmem:[%s4 + $0x2c] sm:$0xf]
  %v543 = vld [vmem:[%s4 + $0x30] sm:$0xff]
  %v544 = vld [vmem:[%s4 + $0x38] sm:$0xf]
  %v545 = vld [vmem:[%s4 + $0x3c] sm:$0xff]
  %v546 = vld [vmem:[%s4 + $0x44] sm:$0xf]
  %v547 = vld [vmem:[%s4 + $0x48] sm:$0xff]
  %v548 = vld [vmem:[%s4 + $0x50] sm:$0xf]
  %v549 = vld [vmem:[%s4 + $0x54] sm:$0xff]
  %v550 = vld [vmem:[%s4 + $0x5c] sm:$0xf]
  %v551 = vld [vmem:[%s4 + $0x60] sm:$0xff]
  %v552 = vld [vmem:[%s4 + $0x68] sm:$0xf]
  %v553 = vld [vmem:[%s4 + $0x6c] sm:$0xff]
  %v554 = vld [vmem:[%s4 + $0x74] sm:$0xf]
  %v555 = vld [vmem:[%s4 + $0x78] sm:$0xff]
  %v556 = vld [vmem:[%s4 + $0x80] sm:$0xf]
  %v557 = vld [vmem:[%s4 + $0x84] sm:$0xff]
  %v558 = vld [vmem:[%s4 + $0x8c] sm:$0xf]
  %v559 = vld [vmem:[%s4 + $0x90] sm:$0xff]
  %v560 = vld [vmem:[%s4 + $0x98] sm:$0xf]
  %v561 = vld [vmem:[%s4 + $0x9c] sm:$0xff]
  %v562 = vld [vmem:[%s4 + $0xa4] sm:$0xf]
  %v563 = vld [vmem:[%s4 + $0xa8] sm:$0xff]
  %v564 = vld [vmem:[%s4 + $0xb0] sm:$0xf]
  %v565 = vld [vmem:[%s4 + $0xb4] sm:$0xff]
  %v566 = vld [vmem:[%s4 + $0xbc] sm:$0xf]
  %v567 = vld [vmem:[%s5] sm:$0x1]
  %v568 = vld [vmem:[%s5 + $0x1] sm:$0x1]
  %v569 = vld [vmem:[#allocation2] sm:$0x3]
  %v570 = vld [vmem:[#allocation2 + $0x8] sm:$0x3]
  %v571 = vld [vmem:[#allocation2 + $0x10] sm:$0x3]
  %v572 = vld [vmem:[#allocation2 + $0xa8] sm:$0x30]
  %v573 = vld [vmem:[#allocation2 + $0xb0] sm:$0x30]
  %v574 = vld [vmem:[#allocation2 + $0xb8] sm:$0x30]
  %v607 = vunpack.c.l.b16 %v503
  %v608 = vunpack.c.h.b16 %v503
  %v609 = vunpack.c.l.b16 %v504
  %v610 = vunpack.c.l.b16 %v505
  %v611 = vunpack.c.h.b16 %v505
  %v612 = vunpack.c.l.b16 %v506
  %v613 = vunpack.c.l.b16 %v507
  %v614 = vunpack.c.h.b16 %v507
  %v615 = vunpack.c.l.b16 %v508
  %v616 = vunpack.c.l.b16 %v509
  %v617 = vunpack.c.h.b16 %v509
  %v618 = vunpack.c.l.b16 %v510
  %v619 = vunpack.c.l.b16 %v511
  %v620 = vunpack.c.h.b16 %v511
  %v621 = vunpack.c.l.b16 %v512
  %v622 = vunpack.c.l.b16 %v513
  %v623 = vunpack.c.h.b16 %v513
  %v624 = vunpack.c.l.b16 %v514
  %v625 = vunpack.c.l.b16 %v515
  %v626 = vunpack.c.h.b16 %v515
  %v627 = vunpack.c.l.b16 %v516
  %v628 = vunpack.c.l.b16 %v517
  %v629 = vunpack.c.h.b16 %v517
  %v630 = vunpack.c.l.b16 %v518
  %v631 = vunpack.c.l.b16 %v519
  %v632 = vunpack.c.h.b16 %v519
  %v633 = vunpack.c.l.b16 %v520
  %v634 = vunpack.c.l.b16 %v521
  %v635 = vunpack.c.h.b16 %v521
  %v636 = vunpack.c.l.b16 %v522
  %v637 = vunpack.c.l.b16 %v523
  %v638 = vunpack.c.h.b16 %v523
  %v639 = vunpack.c.l.b16 %v524
  %v640 = vunpack.c.l.b16 %v525
  %v641 = vunpack.c.h.b16 %v525
  %v642 = vunpack.c.l.b16 %v526
  %v643 = vunpack.c.l.b16 %v527
  %v644 = vunpack.c.h.b16 %v527
  %v645 = vunpack.c.l.b16 %v528
  %v646 = vunpack.c.l.b16 %v529
  %v647 = vunpack.c.h.b16 %v529
  %v648 = vunpack.c.l.b16 %v530
  %v649 = vunpack.c.l.b16 %v531
  %v650 = vunpack.c.h.b16 %v531
  %v651 = vunpack.c.l.b16 %v532
  %v652 = vunpack.c.l.b16 %v533
  %v653 = vunpack.c.h.b16 %v533
  %v654 = vunpack.c.l.b16 %v534
  %v655 = vpack.c.b16 %v610, %v607
  %v656 = vpack.c.b16 %v611, %v608
  %v657 = vpack.c.b16 %v612, %v609
  %v658 = vpack.c.b16 %v616, %v613
  %v659 = vpack.c.b16 %v617, %v614
  %v660 = vpack.c.b16 %v618, %v615
  %v661 = vpack.c.b16 %v622, %v619
  %v662 = vpack.c.b16 %v623, %v620
  %v663 = vpack.c.b16 %v624, %v621
  %v664 = vpack.c.b16 %v628, %v625
  %v665 = vpack.c.b16 %v629, %v626
  %v666 = vpack.c.b16 %v630, %v627
  %v667 = vpack.c.b16 %v634, %v631
  %v668 = vpack.c.b16 %v635, %v632
  %v669 = vpack.c.b16 %v636, %v633
  %v670 = vpack.c.b16 %v640, %v637
  %v671 = vpack.c.b16 %v641, %v638
  %v672 = vpack.c.b16 %v642, %v639
  %v673 = vpack.c.b16 %v646, %v643
  %v674 = vpack.c.b16 %v647, %v644
  %v675 = vpack.c.b16 %v648, %v645
  %v676 = vpack.c.b16 %v652, %v649
  %v677 = vpack.c.b16 %v653, %v650
  %v678 = vpack.c.b16 %v654, %v651
  %703 = vmatpush.bf16.msra.mxu0 %v676
  %704 = vmatpush.bf16.msra.mxu0 %v673
  %705 = vmatpush.bf16.msra.mxu0 %v670
  %706 = vmatpush.bf16.msra.mxu0 %v667
  %707 = vmatpush.bf16.msra.mxu0 %v664
  %708 = vmatpush.bf16.msra.mxu0 %v661
  %709 = vmatpush.bf16.msra.mxu0 %v658
  %710 = vmatpush.bf16.msra.mxu0 %v655
  %711 = vmatmul.bf16.gmra.mxu0 0
  %v712 = vpop.f32.mrf.mxu0
  %v713 = vadd.f32 0.0, %v712
  %v714 = vpop.f32.mrf.mxu0
  %715 = vdwg.mxu0
  %716 = vmatpush.bf16.msra.mxu0 %v677
  %717 = vmatpush.bf16.msra.mxu0 %v674
  %718 = vmatpush.bf16.msra.mxu0 %v671
  %719 = vmatpush.bf16.msra.mxu0 %v668
  %720 = vmatpush.bf16.msra.mxu0 %v665
  %721 = vmatpush.bf16.msra.mxu0 %v662
  %722 = vmatpush.bf16.msra.mxu0 %v659
  %723 = vmatpush.bf16.msra.mxu0 %v656
  %724 = vmatmul.bf16.gmra.mxu0 0
  %v725 = vpop.f32.mrf.mxu0
  %v726 = vadd.f32 0.0, %v725
  %v727 = vpop.f32.mrf.mxu0
  %728 = vdwg.mxu0
  %729 = vmatpush.bf16.msra.mxu0 %v678
  %730 = vmatpush.bf16.msra.mxu0 %v675
  %731 = vmatpush.bf16.msra.mxu0 %v672
  %732 = vmatpush.bf16.msra.mxu0 %v669
  %733 = vmatpush.bf16.msra.mxu0 %v666
  %734 = vmatpush.bf16.msra.mxu0 %v663
  %735 = vmatpush.bf16.msra.mxu0 %v660
  %736 = vmatpush.bf16.msra.mxu0 %v657
  %737 = vmatmul.bf16.gmra.mxu0 0
  %v738 = vpop.f32.mrf.mxu0
  %v739 = vadd.f32 0.0, %v738
  %v740 = vpop.f32.mrf.mxu0
  %741 = vdwg.mxu0
  %v774 = vunpack.c.l.b16 %v535
  %v775 = vunpack.c.h.b16 %v535
  %v776 = vunpack.c.l.b16 %v536
  %v777 = vunpack.c.l.b16 %v537
  %v778 = vunpack.c.h.b16 %v537
  %v779 = vunpack.c.l.b16 %v538
  %v780 = vunpack.c.l.b16 %v539
  %v781 = vunpack.c.h.b16 %v539
  %v782 = vunpack.c.l.b16 %v540
  %v783 = vunpack.c.l.b16 %v541
  %v784 = vunpack.c.h.b16 %v541
  %v785 = vunpack.c.l.b16 %v542
  %v786 = vunpack.c.l.b16 %v543
  %v787 = vunpack.c.h.b16 %v543
  %v788 = vunpack.c.l.b16 %v544
  %v789 = vunpack.c.l.b16 %v545
  %v790 = vunpack.c.h.b16 %v545
  %v791 = vunpack.c.l.b16 %v546
  %v792 = vunpack.c.l.b16 %v547
  %v793 = vunpack.c.h.b16 %v547
  %v794 = vunpack.c.l.b16 %v548
  %v795 = vunpack.c.l.b16 %v549
  %v796 = vunpack.c.h.b16 %v549
  %v797 = vunpack.c.l.b16 %v550
  %v798 = vunpack.c.l.b16 %v551
  %v799 = vunpack.c.h.b16 %v551
  %v800 = vunpack.c.l.b16 %v552
  %v801 = vunpack.c.l.b16 %v553
  %v802 = vunpack.c.h.b16 %v553
  %v803 = vunpack.c.l.b16 %v554
  %v804 = vunpack.c.l.b16 %v555
  %v805 = vunpack.c.h.b16 %v555
  %v806 = vunpack.c.l.b16 %v556
  %v807 = vunpack.c.l.b16 %v557
  %v808 = vunpack.c.h.b16 %v557
  %v809 = vunpack.c.l.b16 %v558
  %v810 = vunpack.c.l.b16 %v559
  %v811 = vunpack.c.h.b16 %v559
  %v812 = vunpack.c.l.b16 %v560
  %v813 = vunpack.c.l.b16 %v561
  %v814 = vunpack.c.h.b16 %v561
  %v815 = vunpack.c.l.b16 %v562
  %v816 = vunpack.c.l.b16 %v563
  %v817 = vunpack.c.h.b16 %v563
  %v818 = vunpack.c.l.b16 %v564
  %v819 = vunpack.c.l.b16 %v565
  %v820 = vunpack.c.h.b16 %v565
  %v821 = vunpack.c.l.b16 %v566
  %v822 = vpack.c.b16 %v777, %v774
  %v823 = vpack.c.b16 %v778, %v775
  %v824 = vpack.c.b16 %v779, %v776
  %v825 = vpack.c.b16 %v783, %v780
  %v826 = vpack.c.b16 %v784, %v781
  %v827 = vpack.c.b16 %v785, %v782
  %v828 = vpack.c.b16 %v789, %v786
  %v829 = vpack.c.b16 %v790, %v787
  %v830 = vpack.c.b16 %v791, %v788
  %v831 = vpack.c.b16 %v795, %v792
  %v832 = vpack.c.b16 %v796, %v793
  %v833 = vpack.c.b16 %v797, %v794
  %v834 = vpack.c.b16 %v801, %v798
  %v835 = vpack.c.b16 %v802, %v799
  %v836 = vpack.c.b16 %v803, %v800
  %v837 = vpack.c.b16 %v807, %v804
  %v838 = vpack.c.b16 %v808, %v805
  %v839 = vpack.c.b16 %v809, %v806
  %v840 = vpack.c.b16 %v813, %v810
  %v841 = vpack.c.b16 %v814, %v811
  %v842 = vpack.c.b16 %v815, %v812
  %v843 = vpack.c.b16 %v819, %v816
  %v844 = vpack.c.b16 %v820, %v817
  %v845 = vpack.c.b16 %v821, %v818
  %870 = vmatpush.bf16.msra.mxu0 %v843
  %871 = vmatpush.bf16.msra.mxu0 %v840
  %872 = vmatpush.bf16.msra.mxu0 %v837
  %873 = vmatpush.bf16.msra.mxu0 %v834
  %874 = vmatpush.bf16.msra.mxu0 %v831
  %875 = vmatpush.bf16.msra.mxu0 %v828
  %876 = vmatpush.bf16.msra.mxu0 %v825
  %877 = vmatpush.bf16.msra.mxu0 %v822
  %878 = vmatmul.bf16.gmra.mxu0 0
  %v879 = vpop.f32.mrf.mxu0
  %v880 = vadd.f32 0.0, %v879
  %v881 = vpop.f32.mrf.mxu0
  %882 = vdwg.mxu0
  %883 = vmatpush.bf16.msra.mxu0 %v844
  %884 = vmatpush.bf16.msra.mxu0 %v841
  %885 = vmatpush.bf16.msra.mxu0 %v838
  %886 = vmatpush.bf16.msra.mxu0 %v835
  %887 = vmatpush.bf16.msra.mxu0 %v832
  %888 = vmatpush.bf16.msra.mxu0 %v829
  %889 = vmatpush.bf16.msra.mxu0 %v826
  %890 = vmatpush.bf16.msra.mxu0 %v823
  %891 = vmatmul.bf16.gmra.mxu0 0
  %v892 = vpop.f32.mrf.mxu0
  %v893 = vadd.f32 0.0, %v892
  %v894 = vpop.f32.mrf.mxu0
  %895 = vdwg.mxu0
  %896 = vmatpush.bf16.msra.mxu0 %v845
  %897 = vmatpush.bf16.msra.mxu0 %v842
  %898 = vmatpush.bf16.msra.mxu0 %v839
  %899 = vmatpush.bf16.msra.mxu0 %v836
  %900 = vmatpush.bf16.msra.mxu0 %v833
  %901 = vmatpush.bf16.msra.mxu0 %v830
  %902 = vmatpush.bf16.msra.mxu0 %v827
  %903 = vmatpush.bf16.msra.mxu0 %v824
  %904 = vmatmul.bf16.gmra.mxu0 0
  %v905 = vpop.f32.mrf.mxu0
  %v906 = vadd.f32 0.0, %v905
  %v907 = vpop.f32.mrf.mxu0
  %908 = vdwg.mxu0
  %v909 = vadd.f32 %v569, %v713
  %v910 = vadd.f32 %v570, %v726
  %v911 = vxor.u32 %v909, 2147483648
  %v912 = vxor.u32 %v910, 2147483648
  %v913 = vmul.f32 %v911, 1.442695
  %v914 = vpow.pop %v913
  %v915 = vmul.f32 %v912, 1.442695
  %v916 = vpow.pop %v915
  %v917 = vadd.f32 %v914, 1.0
  %v918 = vadd.f32 %v916, 1.0
  %v919 = vrcp.pop %v917
  %v920 = vmul.f32 %v917, %v919
  %v921 = vsub.f32 1.0, %v920
  %v922 = vmul.f32 %v919, %v921
  %v923 = vadd.f32 %v919, %v922
  %vm924 = vweird.f32 %v917
  %vm925 = vweird.f32 %v919
  %vm926 = vmor %vm924, %vm925
  %v927 = vsel %vm926, %v919, %v923
  %v928 = vand.u32 2147483647, %v917
  %vm929 = vcmp.eq.f32.partialorder %v928, 8.507059e+37
  %v930 = vand.u32 %v917, 2147483648
  %v931 = vor.u32 1.1754944e-38, %v930
  %v932 = vsel %vm929, %v931, %v927
  %v933 = vmul.f32 1.0, %v932
  %v934 = vrcp.pop %v918
  %v935 = vmul.f32 %v918, %v934
  %v936 = vsub.f32 1.0, %v935
  %v937 = vmul.f32 %v934, %v936
  %v938 = vadd.f32 %v934, %v937
  %vm939 = vweird.f32 %v918
  %vm940 = vweird.f32 %v934
  %vm941 = vmor %vm939, %vm940
  %v942 = vsel %vm941, %v934, %v938
  %v943 = vand.u32 2147483647, %v918
  %vm944 = vcmp.eq.f32.partialorder %v943, 8.507059e+37
  %v945 = vand.u32 %v918, 2147483648
  %v946 = vor.u32 1.1754944e-38, %v945
  %v947 = vsel %vm944, %v946, %v942
  %v948 = vmul.f32 1.0, %v947
  %v951 = vrot.slane %v880, 4
  %v952 = vrot.slane %v893, 4
  %v955 = vadd.f32 %v572, %v951
  %v956 = vadd.f32 %v573, %v952
  %v957 = vxor.u32 %v955, 2147483648
  %v958 = vxor.u32 %v956, 2147483648
  %v959 = vmul.f32 %v957, 1.442695
  %v960 = vpow.pop %v959
  %v961 = vmul.f32 %v958, 1.442695
  %v962 = vpow.pop %v961
  %v963 = vadd.f32 %v960, 1.0
  %v964 = vadd.f32 %v962, 1.0
  %v965 = vrcp.pop %v963
  %v966 = vmul.f32 %v963, %v965
  %v967 = vsub.f32 1.0, %v966
  %v968 = vmul.f32 %v965, %v967
  %v969 = vadd.f32 %v965, %v968
  %vm970 = vweird.f32 %v963
  %vm971 = vweird.f32 %v965
  %vm972 = vmor %vm970, %vm971
  %v973 = vsel %vm972, %v965, %v969
  %v974 = vand.u32 2147483647, %v963
  %vm975 = vcmp.eq.f32.partialorder %v974, 8.507059e+37
  %v976 = vand.u32 %v963, 2147483648
  %v977 = vor.u32 1.1754944e-38, %v976
  %v978 = vsel %vm975, %v977, %v973
  %v979 = vmul.f32 1.0, %v978
  %v980 = vrcp.pop %v964
  %v981 = vmul.f32 %v964, %v980
  %v982 = vsub.f32 1.0, %v981
  %v983 = vmul.f32 %v980, %v982
  %v984 = vadd.f32 %v980, %v983
  %vm985 = vweird.f32 %v964
  %vm986 = vweird.f32 %v980
  %vm987 = vmor %vm985, %vm986
  %v988 = vsel %vm987, %v980, %v984
  %v989 = vand.u32 2147483647, %v964
  %vm990 = vcmp.eq.f32.partialorder %v989, 8.507059e+37
  %v991 = vand.u32 %v964, 2147483648
  %v992 = vor.u32 1.1754944e-38, %v991
  %v993 = vsel %vm990, %v992, %v988
  %v994 = vmul.f32 1.0, %v993
  %v996 = vperm.slane %v567, 0
  %v998 = vadd.f32 %v739, %v996
  %v999 = vmul.f32 %v933, %v998
  %v1000 = vadd.f32 %v571, %v999
  %v1001 = vtanh.pop %v1000
  %v1003 = vperm.slane %v568, 0
  %v1005 = vadd.f32 %v906, %v1003
  %v1007 = vrot.slane %v1005, 4
  %v1009 = vmul.f32 %v979, %v1007
  %v1010 = vadd.f32 %v574, %v1009
  %v1011 = vtanh.pop %v1010
  %v1012 = vsub.f32 0.0, %v1001
  %v1013 = vmul.f32 %v948, %v1012
  %v1014 = vadd.f32 %v1001, %v1013
  %v1015 = vsub.f32 0.0, %v1011
  %v1016 = vmul.f32 %v994, %v1015
  %v1017 = vadd.f32 %v1011, %v1016
  %1018 = vst [vmem:[#allocation3] sm:$0x3] %v1014
  %1019 = vst [vmem:[#allocation3 + $0x38] sm:$0x30] %v1017
  %v1020 = vld [vmem:[%s6] sm:$0x3]
  %v1021 = vld [vmem:[%s6 + $0x1c] sm:$0x3]
  %vm1022 = vcmp.gt.f32.partialorder %v1020, 0.0
  %v1023 = vsel %vm1022, 1, 0
  %1024 = vset.pattern.permute.xlu0 0
  %1025 = vperm.xlu0 %1024, %v1023
  %v1026 = vpop.permute.xlu0 %1025
  %vm1027 = vcmp.eq.s32.totalorder %v1026, 1
  %v1028 = vsel %vm1027, %v1014, -1e+30
  %v1029 = vmax.f32 %v1028, -1e+30
  %vm1030 = vcmp.gt.f32.partialorder %v1021, 0.0
  %v1031 = vsel %vm1030, 1, 0
  %1032 = vset.pattern.permute.xlu0 0
  %1033 = vperm.xlu0 %1032, %v1031
  %v1034 = vpop.permute.xlu0 %1033
  %vm1035 = vcmp.eq.s32.totalorder %v1034, 1
  %v1037 = vrot.slane %v1017, 4
  %v1039 = vsel %vm1035, %v1037, -1e+30
  %v1040 = vmax.f32 %v1039, -1e+30
  %v1041 = vld [vmem:[#allocation2] sm:$0xc]
  %v1042 = vld [vmem:[#allocation2 + $0x8] sm:$0xc]
  %v1043 = vld [vmem:[#allocation2 + $0x10] sm:$0xc]
  %v1044 = vld [vmem:[#allocation2 + $0xa8] sm:$0xc]
  %v1045 = vld [vmem:[#allocation2 + $0xb0] sm:$0xc]
  %v1046 = vld [vmem:[#allocation2 + $0xb8] sm:$0xc]
  %v1047 = vpack.c.bf16 %v1014, %v1014
  %1048 = vmatpush.bf16.msra.mxu0 %v676
  %1049 = vmatpush.bf16.msra.mxu0 %v673
  %1050 = vmatpush.bf16.msra.mxu0 %v670
  %1051 = vmatpush.bf16.msra.mxu0 %v667
  %1052 = vmatpush.bf16.msra.mxu0 %v664
  %1053 = vmatpush.bf16.msra.mxu0 %v661
  %1054 = vmatpush.bf16.msra.mxu0 %v658
  %1055 = vmatpush.bf16.msra.mxu0 %v655
  %1056 = vmatmul.bf16.gmra.mxu0 %v1047
  %v1057 = vpop.f32.mrf.mxu0
  %v1058 = vadd.f32 0.0, %v1057
  %v1059 = vpop.f32.mrf.mxu0
  %1060 = vdwg.mxu0
  %1061 = vmatpush.bf16.msra.mxu0 %v677
  %1062 = vmatpush.bf16.msra.mxu0 %v674
  %1063 = vmatpush.bf16.msra.mxu0 %v671
  %1064 = vmatpush.bf16.msra.mxu0 %v668
  %1065 = vmatpush.bf16.msra.mxu0 %v665
  %1066 = vmatpush.bf16.msra.mxu0 %v662
  %1067 = vmatpush.bf16.msra.mxu0 %v659
  %1068 = vmatpush.bf16.msra.mxu0 %v656
  %1069 = vmatmul.bf16.gmra.mxu0 %v1047
  %v1070 = vpop.f32.mrf.mxu0
  %v1071 = vadd.f32 0.0, %v1070
  %v1072 = vpop.f32.mrf.mxu0
  %1073 = vdwg.mxu0
  %1074 = vmatpush.bf16.msra.mxu0 %v678
  %1075 = vmatpush.bf16.msra.mxu0 %v675
  %1076 = vmatpush.bf16.msra.mxu0 %v672
  %1077 = vmatpush.bf16.msra.mxu0 %v669
  %1078 = vmatpush.bf16.msra.mxu0 %v666
  %1079 = vmatpush.bf16.msra.mxu0 %v663
  %1080 = vmatpush.bf16.msra.mxu0 %v660
  %1081 = vmatpush.bf16.msra.mxu0 %v657
  %1082 = vmatmul.bf16.gmra.mxu0 %v1047
  %v1083 = vpop.f32.mrf.mxu0
  %v1084 = vadd.f32 0.0, %v1083
  %v1085 = vpop.f32.mrf.mxu0
  %1086 = vdwg.mxu0
  %v1087 = vpack.c.bf16 %v1017, %v1017
  %v1089 = vrot.slane %v1087, 2
  %1091 = vmatpush.bf16.msra.mxu0 %v843
  %1092 = vmatpush.bf16.msra.mxu0 %v840
  %1093 = vmatpush.bf16.msra.mxu0 %v837
  %1094 = vmatpush.bf16.msra.mxu0 %v834
  %1095 = vmatpush.bf16.msra.mxu0 %v831
  %1096 = vmatpush.bf16.msra.mxu0 %v828
  %1097 = vmatpush.bf16.msra.mxu0 %v825
  %1098 = vmatpush.bf16.msra.mxu0 %v822
  %1099 = vmatmul.bf16.gmra.mxu0 %v1089
  %v1100 = vpop.f32.mrf.mxu0
  %v1101 = vadd.f32 0.0, %v1100
  %v1102 = vpop.f32.mrf.mxu0
  %1103 = vdwg.mxu0
  %1104 = vmatpush.bf16.msra.mxu0 %v844
  %1105 = vmatpush.bf16.msra.mxu0 %v841
  %1106 = vmatpush.bf16.msra.mxu0 %v838
  %1107 = vmatpush.bf16.msra.mxu0 %v835
  %1108 = vmatpush.bf16.msra.mxu0 %v832
  %1109 = vmatpush.bf16.msra.mxu0 %v829
  %1110 = vmatpush.bf16.msra.mxu0 %v826
  %1111 = vmatpush.bf16.msra.mxu0 %v823
  %1112 = vmatmul.bf16.gmra.mxu0 %v1089
  %v1113 = vpop.f32.mrf.mxu0
  %v1114 = vadd.f32 0.0, %v1113
  %v1115 = vpop.f32.mrf.mxu0
  %1116 = vdwg.mxu0
  %1117 = vmatpush.bf16.msra.mxu0 %v845
  %1118 = vmatpush.bf16.msra.mxu0 %v842
  %1119 = vmatpush.bf16.msra.mxu0 %v839
  %1120 = vmatpush.bf16.msra.mxu0 %v836
  %1121 = vmatpush.bf16.msra.mxu0 %v833
  %1122 = vmatpush.bf16.msra.mxu0 %v830
  %1123 = vmatpush.bf16.msra.mxu0 %v827
  %1124 = vmatpush.bf16.msra.mxu0 %v824
  %1125 = vmatmul.bf16.gmra.mxu0 %v1089
  %v1126 = vpop.f32.mrf.mxu0
  %v1127 = vadd.f32 0.0, %v1126
  %v1128 = vpop.f32.mrf.mxu0
  %1129 = vdwg.mxu0
  %v1132 = vrot.slane %v1058, 6
  %v1133 = vrot.slane %v1071, 6
  %v1136 = vadd.f32 %v1041, %v1132
  %v1137 = vadd.f32 %v1042, %v1133
  %v1138 = vxor.u32 %v1136, 2147483648
  %v1139 = vxor.u32 %v1137, 2147483648
  %v1140 = vmul.f32 %v1138, 1.442695
  %v1141 = vpow.pop %v1140
  %v1142 = vmul.f32 %v1139, 1.442695
  %v1143 = vpow.pop %v1142
  %v1144 = vadd.f32 %v1141, 1.0
  %v1145 = vadd.f32 %v1143, 1.0
  %v1146 = vrcp.pop %v1144
  %v1147 = vmul.f32 %v1144, %v1146
  %v1148 = vsub.f32 1.0, %v1147
  %v1149 = vmul.f32 %v1146, %v1148
  %v1150 = vadd.f32 %v1146, %v1149
  %vm1151 = vweird.f32 %v1144
  %vm1152 = vweird.f32 %v1146
  %vm1153 = vmor %vm1151, %vm1152
  %v1154 = vsel %vm1153, %v1146, %v1150
  %v1155 = vand.u32 2147483647, %v1144
  %vm1156 = vcmp.eq.f32.partialorder %v1155, 8.507059e+37
  %v1157 = vand.u32 %v1144, 2147483648
  %v1158 = vor.u32 1.1754944e-38, %v1157
  %v1159 = vsel %vm1156, %v1158, %v1154
  %v1160 = vmul.f32 1.0, %v1159
  %v1161 = vrcp.pop %v1145
  %v1162 = vmul.f32 %v1145, %v1161
  %v1163 = vsub.f32 1.0, %v1162
  %v1164 = vmul.f32 %v1161, %v1163
  %v1165 = vadd.f32 %v1161, %v1164
  %vm1166 = vweird.f32 %v1145
  %vm1167 = vweird.f32 %v1161
  %vm1168 = vmor %vm1166, %vm1167
  %v1169 = vsel %vm1168, %v1161, %v1165
  %v1170 = vand.u32 2147483647, %v1145
  %vm1171 = vcmp.eq.f32.partialorder %v1170, 8.507059e+37
  %v1172 = vand.u32 %v1145, 2147483648
  %v1173 = vor.u32 1.1754944e-38, %v1172
  %v1174 = vsel %vm1171, %v1173, %v1169
  %v1175 = vmul.f32 1.0, %v1174
  %v1178 = vrot.slane %v1101, 6
  %v1179 = vrot.slane %v1114, 6
  %v1182 = vadd.f32 %v1044, %v1178
  %v1183 = vadd.f32 %v1045, %v1179
  %v1184 = vxor.u32 %v1182, 2147483648
  %v1185 = vxor.u32 %v1183, 2147483648
  %v1186 = vmul.f32 %v1184, 1.442695
  %v1187 = vpow.pop %v1186
  %v1188 = vmul.f32 %v1185, 1.442695
  %v1189 = vpow.pop %v1188
  %v1190 = vadd.f32 %v1187, 1.0
  %v1191 = vadd.f32 %v1189, 1.0
  %v1192 = vrcp.pop %v1190
  %v1193 = vmul.f32 %v1190, %v1192
  %v1194 = vsub.f32 1.0, %v1193
  %v1195 = vmul.f32 %v1192, %v1194
  %v1196 = vadd.f32 %v1192, %v1195
  %vm1197 = vweird.f32 %v1190
  %vm1198 = vweird.f32 %v1192
  %vm1199 = vmor %vm1197, %vm1198
  %v1200 = vsel %vm1199, %v1192, %v1196
  %v1201 = vand.u32 2147483647, %v1190
  %vm1202 = vcmp.eq.f32.partialorder %v1201, 8.507059e+37
  %v1203 = vand.u32 %v1190, 2147483648
  %v1204 = vor.u32 1.1754944e-38, %v1203
  %v1205 = vsel %vm1202, %v1204, %v1200
  %v1206 = vmul.f32 1.0, %v1205
  %v1207 = vrcp.pop %v1191
  %v1208 = vmul.f32 %v1191, %v1207
  %v1209 = vsub.f32 1.0, %v1208
  %v1210 = vmul.f32 %v1207, %v1209
  %v1211 = vadd.f32 %v1207, %v1210
  %vm1212 = vweird.f32 %v1191
  %vm1213 = vweird.f32 %v1207
  %vm1214 = vmor %vm1212, %vm1213
  %v1215 = vsel %vm1214, %v1207, %v1211
  %v1216 = vand.u32 2147483647, %v1191
  %vm1217 = vcmp.eq.f32.partialorder %v1216, 8.507059e+37
  %v1218 = vand.u32 %v1191, 2147483648
  %v1219 = vor.u32 1.1754944e-38, %v1218
  %v1220 = vsel %vm1217, %v1219, %v1215
  %v1221 = vmul.f32 1.0, %v1220
  %v1222 = vadd.f32 %v1084, %v996
  %v1224 = vrot.slane %v1222, 6
  %v1226 = vmul.f32 %v1160, %v1224
  %v1227 = vadd.f32 %v1043, %v1226
  %v1228 = vtanh.pop %v1227
  %v1229 = vadd.f32 %v1127, %v1003
  %v1231 = vrot.slane %v1229, 6
  %v1233 = vmul.f32 %v1206, %v1231
  %v1234 = vadd.f32 %v1046, %v1233
  %v1235 = vtanh.pop %v1234
  %v1237 = vrot.slane %v1228, 2
  %v1239 = vsub.f32 %v1014, %v1237
  %v1241 = vrot.slane %v1239, 6
  %v1243 = vmul.f32 %v1175, %v1241
  %v1244 = vadd.f32 %v1228, %v1243
  %v1246 = vrot.slane %v1235, 6
  %v1248 = vsub.f32 %v1017, %v1246
  %v1250 = vrot.slane %v1248, 2
  %v1252 = vmul.f32 %v1221, %v1250
  %v1253 = vadd.f32 %v1235, %v1252
  %1254 = vst [vmem:[#allocation3] sm:$0xc] %v1244
  %1255 = vst [vmem:[#allocation3 + $0x38] sm:$0xc] %v1253
  %v1256 = vld [vmem:[%s6 + $0x2] sm:$0x3]
  %v1257 = vld [vmem:[%s6 + $0x1a] sm:$0x3]
  %vm1258 = vcmp.gt.f32.partialorder %v1256, 0.0
  %v1259 = vsel %vm1258, 1, 0
  %1260 = vset.pattern.permute.xlu0 0
  %1261 = vperm.xlu0 %1260, %v1259
  %v1262 = vpop.permute.xlu0 %1261
  %vm1263 = vcmp.eq.s32.totalorder %v1262, 1
  %v1265 = vrot.slane %v1244, 2
  %v1267 = vsel %vm1263, %v1265, -1e+30
  %v1268 = vmax.f32 %v1029, %v1267
  %vm1269 = vcmp.gt.f32.partialorder %v1257, 0.0
  %v1270 = vsel %vm1269, 1, 0
  %1271 = vset.pattern.permute.xlu0 0
  %1272 = vperm.xlu0 %1271, %v1270
  %v1273 = vpop.permute.xlu0 %1272
  %vm1274 = vcmp.eq.s32.totalorder %v1273, 1
  %v1276 = vrot.slane %v1253, 2
  %v1278 = vsel %vm1274, %v1276, -1e+30
  %v1279 = vmax.f32 %v1040, %v1278
  %v1280 = vld [vmem:[#allocation2] sm:$0x30]
  %v1281 = vld [vmem:[#allocation2 + $0x8] sm:$0x30]
  %v1282 = vld [vmem:[#allocation2 + $0x10] sm:$0x30]
  %v1283 = vld [vmem:[#allocation2 + $0xa8] sm:$0x3]
  %v1284 = vld [vmem:[#allocation2 + $0xb0] sm:$0x3]
  %v1285 = vld [vmem:[#allocation2 + $0xb8] sm:$0x3]
  %v1286 = vpack.c.bf16 %v1244, %v1244
  %v1288 = vrot.slane %v1286, 1
  %1290 = vmatpush.bf16.msra.mxu0 %v676
  %1291 = vmatpush.bf16.msra.mxu0 %v673
  %1292 = vmatpush.bf16.msra.mxu0 %v670
  %1293 = vmatpush.bf16.msra.mxu0 %v667
  %1294 = vmatpush.bf16.msra.mxu0 %v664
  %1295 = vmatpush.bf16.msra.mxu0 %v661
  %1296 = vmatpush.bf16.msra.mxu0 %v658
  %1297 = vmatpush.bf16.msra.mxu0 %v655
  %1298 = vmatmul.bf16.gmra.mxu0 %v1288
  %v1299 = vpop.f32.mrf.mxu0
  %v1300 = vadd.f32 0.0, %v1299
  %v1301 = vpop.f32.mrf.mxu0
  %1302 = vdwg.mxu0
  %1303 = vmatpush.bf16.msra.mxu0 %v677
  %1304 = vmatpush.bf16.msra.mxu0 %v674
  %1305 = vmatpush.bf16.msra.mxu0 %v671
  %1306 = vmatpush.bf16.msra.mxu0 %v668
  %1307 = vmatpush.bf16.msra.mxu0 %v665
  %1308 = vmatpush.bf16.msra.mxu0 %v662
  %1309 = vmatpush.bf16.msra.mxu0 %v659
  %1310 = vmatpush.bf16.msra.mxu0 %v656
  %1311 = vmatmul.bf16.gmra.mxu0 %v1288
  %v1312 = vpop.f32.mrf.mxu0
  %v1313 = vadd.f32 0.0, %v1312
  %v1314 = vpop.f32.mrf.mxu0
  %1315 = vdwg.mxu0
  %1316 = vmatpush.bf16.msra.mxu0 %v678
  %1317 = vmatpush.bf16.msra.mxu0 %v675
  %1318 = vmatpush.bf16.msra.mxu0 %v672
  %1319 = vmatpush.bf16.msra.mxu0 %v669
  %1320 = vmatpush.bf16.msra.mxu0 %v666
  %1321 = vmatpush.bf16.msra.mxu0 %v663
  %1322 = vmatpush.bf16.msra.mxu0 %v660
  %1323 = vmatpush.bf16.msra.mxu0 %v657
  %1324 = vmatmul.bf16.gmra.mxu0 %v1288
  %v1325 = vpop.f32.mrf.mxu0
  %v1326 = vadd.f32 0.0, %v1325
  %v1327 = vpop.f32.mrf.mxu0
  %1328 = vdwg.mxu0
  %v1329 = vpack.c.bf16 %v1253, %v1253
  %v1331 = vrot.slane %v1329, 1
  %1333 = vmatpush.bf16.msra.mxu0 %v843
  %1334 = vmatpush.bf16.msra.mxu0 %v840
  %1335 = vmatpush.bf16.msra.mxu0 %v837
  %1336 = vmatpush.bf16.msra.mxu0 %v834
  %1337 = vmatpush.bf16.msra.mxu0 %v831
  %1338 = vmatpush.bf16.msra.mxu0 %v828
  %1339 = vmatpush.bf16.msra.mxu0 %v825
  %1340 = vmatpush.bf16.msra.mxu0 %v822
  %1341 = vmatmul.bf16.gmra.mxu0 %v1331
  %v1342 = vpop.f32.mrf.mxu0
  %v1343 = vadd.f32 0.0, %v1342
  %v1344 = vpop.f32.mrf.mxu0
  %1345 = vdwg.mxu0
  %1346 = vmatpush.bf16.msra.mxu0 %v844
  %1347 = vmatpush.bf16.msra.mxu0 %v841
  %1348 = vmatpush.bf16.msra.mxu0 %v838
  %1349 = vmatpush.bf16.msra.mxu0 %v835
  %1350 = vmatpush.bf16.msra.mxu0 %v832
  %1351 = vmatpush.bf16.msra.mxu0 %v829
  %1352 = vmatpush.bf16.msra.mxu0 %v826
  %1353 = vmatpush.bf16.msra.mxu0 %v823
  %1354 = vmatmul.bf16.gmra.mxu0 %v1331
  %v1355 = vpop.f32.mrf.mxu0
  %v1356 = vadd.f32 0.0, %v1355
  %v1357 = vpop.f32.mrf.mxu0
  %1358 = vdwg.mxu0
  %1359 = vmatpush.bf16.msra.mxu0 %v845
  %1360 = vmatpush.bf16.msra.mxu0 %v842
  %1361 = vmatpush.bf16.msra.mxu0 %v839
  %1362 = vmatpush.bf16.msra.mxu0 %v836
  %1363 = vmatpush.bf16.msra.mxu0 %v833
  %1364 = vmatpush.bf16.msra.mxu0 %v830
  %1365 = vmatpush.bf16.msra.mxu0 %v827
  %1366 = vmatpush.bf16.msra.mxu0 %v824
  %1367 = vmatmul.bf16.gmra.mxu0 %v1331
  %v1368 = vpop.f32.mrf.mxu0
  %v1369 = vadd.f32 0.0, %v1368
  %v1370 = vpop.f32.mrf.mxu0
  %1371 = vdwg.mxu0
  %v1374 = vrot.slane %v1300, 4
  %v1375 = vrot.slane %v1313, 4
  %v1378 = vadd.f32 %v1280, %v1374
  %v1379 = vadd.f32 %v1281, %v1375
  %v1380 = vxor.u32 %v1378, 2147483648
  %v1381 = vxor.u32 %v1379, 2147483648
  %v1382 = vmul.f32 %v1380, 1.442695
  %v1383 = vpow.pop %v1382
  %v1384 = vmul.f32 %v1381, 1.442695
  %v1385 = vpow.pop %v1384
  %v1386 = vadd.f32 %v1383, 1.0
  %v1387 = vadd.f32 %v1385, 1.0
  %v1388 = vrcp.pop %v1386
  %v1389 = vmul.f32 %v1386, %v1388
  %v1390 = vsub.f32 1.0, %v1389
  %v1391 = vmul.f32 %v1388, %v1390
  %v1392 = vadd.f32 %v1388, %v1391
  %vm1393 = vweird.f32 %v1386
  %vm1394 = vweird.f32 %v1388
  %vm1395 = vmor %vm1393, %vm1394
  %v1396 = vsel %vm1395, %v1388, %v1392
  %v1397 = vand.u32 2147483647, %v1386
  %vm1398 = vcmp.eq.f32.partialorder %v1397, 8.507059e+37
  %v1399 = vand.u32 %v1386, 2147483648
  %v1400 = vor.u32 1.1754944e-38, %v1399
  %v1401 = vsel %vm1398, %v1400, %v1396
  %v1402 = vmul.f32 1.0, %v1401
  %v1403 = vrcp.pop %v1387
  %v1404 = vmul.f32 %v1387, %v1403
  %v1405 = vsub.f32 1.0, %v1404
  %v1406 = vmul.f32 %v1403, %v1405
  %v1407 = vadd.f32 %v1403, %v1406
  %vm1408 = vweird.f32 %v1387
  %vm1409 = vweird.f32 %v1403
  %vm1410 = vmor %vm1408, %vm1409
  %v1411 = vsel %vm1410, %v1403, %v1407
  %v1412 = vand.u32 2147483647, %v1387
  %vm1413 = vcmp.eq.f32.partialorder %v1412, 8.507059e+37
  %v1414 = vand.u32 %v1387, 2147483648
  %v1415 = vor.u32 1.1754944e-38, %v1414
  %v1416 = vsel %vm1413, %v1415, %v1411
  %v1417 = vmul.f32 1.0, %v1416
  %v1418 = vadd.f32 %v1283, %v1343
  %v1419 = vadd.f32 %v1284, %v1356
  %v1420 = vxor.u32 %v1418, 2147483648
  %v1421 = vxor.u32 %v1419, 2147483648
  %v1422 = vmul.f32 %v1420, 1.442695
  %v1423 = vpow.pop %v1422
  %v1424 = vmul.f32 %v1421, 1.442695
  %v1425 = vpow.pop %v1424
  %v1426 = vadd.f32 %v1423, 1.0
  %v1427 = vadd.f32 %v1425, 1.0
  %v1428 = vrcp.pop %v1426
  %v1429 = vmul.f32 %v1426, %v1428
  %v1430 = vsub.f32 1.0, %v1429
  %v1431 = vmul.f32 %v1428, %v1430
  %v1432 = vadd.f32 %v1428, %v1431
  %vm1433 = vweird.f32 %v1426
  %vm1434 = vweird.f32 %v1428
  %vm1435 = vmor %vm1433, %vm1434
  %v1436 = vsel %vm1435, %v1428, %v1432
  %v1437 = vand.u32 2147483647, %v1426
  %vm1438 = vcmp.eq.f32.partialorder %v1437, 8.507059e+37
  %v1439 = vand.u32 %v1426, 2147483648
  %v1440 = vor.u32 1.1754944e-38, %v1439
  %v1441 = vsel %vm1438, %v1440, %v1436
  %v1442 = vmul.f32 1.0, %v1441
  %v1443 = vrcp.pop %v1427
  %v1444 = vmul.f32 %v1427, %v1443
  %v1445 = vsub.f32 1.0, %v1444
  %v1446 = vmul.f32 %v1443, %v1445
  %v1447 = vadd.f32 %v1443, %v1446
  %vm1448 = vweird.f32 %v1427
  %vm1449 = vweird.f32 %v1443
  %vm1450 = vmor %vm1448, %vm1449
  %v1451 = vsel %vm1450, %v1443, %v1447
  %v1452 = vand.u32 2147483647, %v1427
  %vm1453 = vcmp.eq.f32.partialorder %v1452, 8.507059e+37
  %v1454 = vand.u32 %v1427, 2147483648
  %v1455 = vor.u32 1.1754944e-38, %v1454
  %v1456 = vsel %vm1453, %v1455, %v1451
  %v1457 = vmul.f32 1.0, %v1456
  %v1458 = vadd.f32 %v1326, %v996
  %v1460 = vrot.slane %v1458, 4
  %v1462 = vmul.f32 %v1402, %v1460
  %v1463 = vadd.f32 %v1282, %v1462
  %v1464 = vtanh.pop %v1463
  %v1465 = vadd.f32 %v1369, %v1003
  %v1466 = vmul.f32 %v1442, %v1465
  %v1467 = vadd.f32 %v1285, %v1466
  %v1468 = vtanh.pop %v1467
  %v1470 = vrot.slane %v1464, 2
  %v1472 = vsub.f32 %v1244, %v1470
  %v1474 = vrot.slane %v1472, 6
  %v1476 = vmul.f32 %v1417, %v1474
  %v1477 = vadd.f32 %v1464, %v1476
  %v1479 = vrot.slane %v1468, 6
  %v1481 = vsub.f32 %v1253, %v1479
  %v1483 = vrot.slane %v1481, 2
  %v1485 = vmul.f32 %v1457, %v1483
  %v1486 = vadd.f32 %v1468, %v1485
  %1487 = vst [vmem:[#allocation3] sm:$0x30] %v1477
  %1488 = vst [vmem:[#allocation3 + $0x38] sm:$0x3] %v1486
  %v1489 = vld [vmem:[%s6 + $0x4] sm:$0x3]
  %v1490 = vld [vmem:[%s6 + $0x18] sm:$0x3]
  %vm1491 = vcmp.gt.f32.partialorder %v1489, 0.0
  %v1492 = vsel %vm1491, 1, 0
  %1493 = vset.pattern.permute.xlu0 0
  %1494 = vperm.xlu0 %1493, %v1492
  %v1495 = vpop.permute.xlu0 %1494
  %vm1496 = vcmp.eq.s32.totalorder %v1495, 1
  %v1498 = vrot.slane %v1477, 4
  %v1500 = vsel %vm1496, %v1498, -1e+30
  %v1501 = vmax.f32 %v1268, %v1500
  %vm1502 = vcmp.gt.f32.partialorder %v1490, 0.0
  %v1503 = vsel %vm1502, 1, 0
  %1504 = vset.pattern.permute.xlu0 0
  %1505 = vperm.xlu0 %1504, %v1503
  %v1506 = vpop.permute.xlu0 %1505
  %vm1507 = vcmp.eq.s32.totalorder %v1506, 1
  %v1508 = vsel %vm1507, %v1486, -1e+30
  %v1509 = vmax.f32 %v1279, %v1508
  %v1510 = vld [vmem:[#allocation2] sm:$0xc0]
  %v1511 = vld [vmem:[#allocation2 + $0x8] sm:$0xc0]
  %v1512 = vld [vmem:[#allocation2 + $0x10] sm:$0xc0]
  %v1513 = vld [vmem:[#allocation2 + $0x78] sm:$0xc0]
  %v1514 = vld [vmem:[#allocation2 + $0x80] sm:$0xc0]
  %v1515 = vld [vmem:[#allocation2 + $0x88] sm:$0xc0]
  %v1516 = vpack.c.bf16 %v1477, %v1477
  %v1518 = vrot.slane %v1516, 2
  %1520 = vmatpush.bf16.msra.mxu0 %v676
  %1521 = vmatpush.bf16.msra.mxu0 %v673
  %1522 = vmatpush.bf16.msra.mxu0 %v670
  %1523 = vmatpush.bf16.msra.mxu0 %v667
  %1524 = vmatpush.bf16.msra.mxu0 %v664
  %1525 = vmatpush.bf16.msra.mxu0 %v661
  %1526 = vmatpush.bf16.msra.mxu0 %v658
  %1527 = vmatpush.bf16.msra.mxu0 %v655
  %1528 = vmatmul.bf16.gmra.mxu0 %v1518
  %v1529 = vpop.f32.mrf.mxu0
  %v1530 = vadd.f32 0.0, %v1529
  %v1531 = vpop.f32.mrf.mxu0
  %1532 = vdwg.mxu0
  %1533 = vmatpush.bf16.msra.mxu0 %v677
  %1534 = vmatpush.bf16.msra.mxu0 %v674
  %1535 = vmatpush.bf16.msra.mxu0 %v671
  %1536 = vmatpush.bf16.msra.mxu0 %v668
  %1537 = vmatpush.bf16.msra.mxu0 %v665
  %1538 = vmatpush.bf16.msra.mxu0 %v662
  %1539 = vmatpush.bf16.msra.mxu0 %v659
  %1540 = vmatpush.bf16.msra.mxu0 %v656
  %1541 = vmatmul.bf16.gmra.mxu0 %v1518
  %v1542 = vpop.f32.mrf.mxu0
  %v1543 = vadd.f32 0.0, %v1542
  %v1544 = vpop.f32.mrf.mxu0
  %1545 = vdwg.mxu0
  %1546 = vmatpush.bf16.msra.mxu0 %v678
  %1547 = vmatpush.bf16.msra.mxu0 %v675
  %1548 = vmatpush.bf16.msra.mxu0 %v672
  %1549 = vmatpush.bf16.msra.mxu0 %v669
  %1550 = vmatpush.bf16.msra.mxu0 %v666
  %1551 = vmatpush.bf16.msra.mxu0 %v663
  %1552 = vmatpush.bf16.msra.mxu0 %v660
  %1553 = vmatpush.bf16.msra.mxu0 %v657
  %1554 = vmatmul.bf16.gmra.mxu0 %v1518
  %v1555 = vpop.f32.mrf.mxu0
  %v1556 = vadd.f32 0.0, %v1555
  %v1557 = vpop.f32.mrf.mxu0
  %1558 = vdwg.mxu0
  %v1559 = vpack.c.bf16 %v1486, %v1486
  %1560 = vmatpush.bf16.msra.mxu0 %v843
  %1561 = vmatpush.bf16.msra.mxu0 %v840
  %1562 = vmatpush.bf16.msra.mxu0 %v837
  %1563 = vmatpush.bf16.msra.mxu0 %v834
  %1564 = vmatpush.bf16.msra.mxu0 %v831
  %1565 = vmatpush.bf16.msra.mxu0 %v828
  %1566 = vmatpush.bf16.msra.mxu0 %v825
  %1567 = vmatpush.bf16.msra.mxu0 %v822
  %1568 = vmatmul.bf16.gmra.mxu0 %v1559
  %v1569 = vpop.f32.mrf.mxu0
  %v1570 = vadd.f32 0.0, %v1569
  %v1571 = vpop.f32.mrf.mxu0
  %1572 = vdwg.mxu0
  %1573 = vmatpush.bf16.msra.mxu0 %v844
  %1574 = vmatpush.bf16.msra.mxu0 %v841
  %1575 = vmatpush.bf16.msra.mxu0 %v838
  %1576 = vmatpush.bf16.msra.mxu0 %v835
  %1577 = vmatpush.bf16.msra.mxu0 %v832
  %1578 = vmatpush.bf16.msra.mxu0 %v829
  %1579 = vmatpush.bf16.msra.mxu0 %v826
  %1580 = vmatpush.bf16.msra.mxu0 %v823
  %1581 = vmatmul.bf16.gmra.mxu0 %v1559
  %v1582 = vpop.f32.mrf.mxu0
  %v1583 = vadd.f32 0.0, %v1582
  %v1584 = vpop.f32.mrf.mxu0
  %1585 = vdwg.mxu0
  %1586 = vmatpush.bf16.msra.mxu0 %v845
  %1587 = vmatpush.bf16.msra.mxu0 %v842
  %1588 = vmatpush.bf16.msra.mxu0 %v839
  %1589 = vmatpush.bf16.msra.mxu0 %v836
  %1590 = vmatpush.bf16.msra.mxu0 %v833
  %1591 = vmatpush.bf16.msra.mxu0 %v830
  %1592 = vmatpush.bf16.msra.mxu0 %v827
  %1593 = vmatpush.bf16.msra.mxu0 %v824
  %1594 = vmatmul.bf16.gmra.mxu0 %v1559
  %v1595 = vpop.f32.mrf.mxu0
  %v1596 = vadd.f32 0.0, %v1595
  %v1597 = vpop.f32.mrf.mxu0
  %1598 = vdwg.mxu0
  %v1601 = vrot.slane %v1530, 2
  %v1602 = vrot.slane %v1543, 2
  %v1605 = vadd.f32 %v1510, %v1601
  %v1606 = vadd.f32 %v1511, %v1602
  %v1607 = vxor.u32 %v1605, 2147483648
  %v1608 = vxor.u32 %v1606, 2147483648
  %v1609 = vmul.f32 %v1607, 1.442695
  %v1610 = vpow.pop %v1609
  %v1611 = vmul.f32 %v1608, 1.442695
  %v1612 = vpow.pop %v1611
  %v1613 = vadd.f32 %v1610, 1.0
  %v1614 = vadd.f32 %v1612, 1.0
  %v1615 = vrcp.pop %v1613
  %v1616 = vmul.f32 %v1613, %v1615
  %v1617 = vsub.f32 1.0, %v1616
  %v1618 = vmul.f32 %v1615, %v1617
  %v1619 = vadd.f32 %v1615, %v1618
  %vm1620 = vweird.f32 %v1613
  %vm1621 = vweird.f32 %v1615
  %vm1622 = vmor %vm1620, %vm1621
  %v1623 = vsel %vm1622, %v1615, %v1619
  %v1624 = vand.u32 2147483647, %v1613
  %vm1625 = vcmp.eq.f32.partialorder %v1624, 8.507059e+37
  %v1626 = vand.u32 %v1613, 2147483648
  %v1627 = vor.u32 1.1754944e-38, %v1626
  %v1628 = vsel %vm1625, %v1627, %v1623
  %v1629 = vmul.f32 1.0, %v1628
  %v1630 = vrcp.pop %v1614
  %v1631 = vmul.f32 %v1614, %v1630
  %v1632 = vsub.f32 1.0, %v1631
  %v1633 = vmul.f32 %v1630, %v1632
  %v1634 = vadd.f32 %v1630, %v1633
  %vm1635 = vweird.f32 %v1614
  %vm1636 = vweird.f32 %v1630
  %vm1637 = vmor %vm1635, %vm1636
  %v1638 = vsel %vm1637, %v1630, %v1634
  %v1639 = vand.u32 2147483647, %v1614
  %vm1640 = vcmp.eq.f32.partialorder %v1639, 8.507059e+37
  %v1641 = vand.u32 %v1614, 2147483648
  %v1642 = vor.u32 1.1754944e-38, %v1641
  %v1643 = vsel %vm1640, %v1642, %v1638
  %v1644 = vmul.f32 1.0, %v1643
  %v1647 = vrot.slane %v1570, 2
  %v1648 = vrot.slane %v1583, 2
  %v1651 = vadd.f32 %v1513, %v1647
  %v1652 = vadd.f32 %v1514, %v1648
  %v1653 = vxor.u32 %v1651, 2147483648
  %v1654 = vxor.u32 %v1652, 2147483648
  %v1655 = vmul.f32 %v1653, 1.442695
  %v1656 = vpow.pop %v1655
  %v1657 = vmul.f32 %v1654, 1.442695
  %v1658 = vpow.pop %v1657
  %v1659 = vadd.f32 %v1656, 1.0
  %v1660 = vadd.f32 %v1658, 1.0
  %v1661 = vrcp.pop %v1659
  %v1662 = vmul.f32 %v1659, %v1661
  %v1663 = vsub.f32 1.0, %v1662
  %v1664 = vmul.f32 %v1661, %v1663
  %v1665 = vadd.f32 %v1661, %v1664
  %vm1666 = vweird.f32 %v1659
  %vm1667 = vweird.f32 %v1661
  %vm1668 = vmor %vm1666, %vm1667
  %v1669 = vsel %vm1668, %v1661, %v1665
  %v1670 = vand.u32 2147483647, %v1659
  %vm1671 = vcmp.eq.f32.partialorder %v1670, 8.507059e+37
  %v1672 = vand.u32 %v1659, 2147483648
  %v1673 = vor.u32 1.1754944e-38, %v1672
  %v1674 = vsel %vm1671, %v1673, %v1669
  %v1675 = vmul.f32 1.0, %v1674
  %v1676 = vrcp.pop %v1660
  %v1677 = vmul.f32 %v1660, %v1676
  %v1678 = vsub.f32 1.0, %v1677
  %v1679 = vmul.f32 %v1676, %v1678
  %v1680 = vadd.f32 %v1676, %v1679
  %vm1681 = vweird.f32 %v1660
  %vm1682 = vweird.f32 %v1676
  %vm1683 = vmor %vm1681, %vm1682
  %v1684 = vsel %vm1683, %v1676, %v1680
  %v1685 = vand.u32 2147483647, %v1660
  %vm1686 = vcmp.eq.f32.partialorder %v1685, 8.507059e+37
  %v1687 = vand.u32 %v1660, 2147483648
  %v1688 = vor.u32 1.1754944e-38, %v1687
  %v1689 = vsel %vm1686, %v1688, %v1684
  %v1690 = vmul.f32 1.0, %v1689
  %v1691 = vadd.f32 %v1556, %v996
  %v1693 = vrot.slane %v1691, 2
  %v1695 = vmul.f32 %v1629, %v1693
  %v1696 = vadd.f32 %v1512, %v1695
  %v1697 = vtanh.pop %v1696
  %v1698 = vadd.f32 %v1596, %v1003
  %v1700 = vrot.slane %v1698, 2
  %v1702 = vmul.f32 %v1675, %v1700
  %v1703 = vadd.f32 %v1515, %v1702
  %v1704 = vtanh.pop %v1703
  %v1706 = vrot.slane %v1697, 2
  %v1708 = vsub.f32 %v1477, %v1706
  %v1710 = vrot.slane %v1708, 6
  %v1712 = vmul.f32 %v1644, %v1710
  %v1713 = vadd.f32 %v1697, %v1712
  %v1715 = vrot.slane %v1704, 6
  %v1717 = vsub.f32 %v1486, %v1715
  %v1719 = vrot.slane %v1717, 2
  %v1721 = vmul.f32 %v1690, %v1719
  %v1722 = vadd.f32 %v1704, %v1721
  %1723 = vst [vmem:[#allocation3] sm:$0xc0] %v1713
  %1724 = vst [vmem:[#allocation3 + $0x28] sm:$0xc0] %v1722
  %v1725 = vld [vmem:[%s6 + $0x6] sm:$0x3]
  %v1726 = vld [vmem:[%s6 + $0x16] sm:$0x3]
  %vm1727 = vcmp.gt.f32.partialorder %v1725, 0.0
  %v1728 = vsel %vm1727, 1, 0
  %1729 = vset.pattern.permute.xlu0 0
  %1730 = vperm.xlu0 %1729, %v1728
  %v1731 = vpop.permute.xlu0 %1730
  %vm1732 = vcmp.eq.s32.totalorder %v1731, 1
  %v1734 = vrot.slane %v1713, 6
  %v1736 = vsel %vm1732, %v1734, -1e+30
  %v1737 = vmax.f32 %v1501, %v1736
  %vm1738 = vcmp.gt.f32.partialorder %v1726, 0.0
  %v1739 = vsel %vm1738, 1, 0
  %1740 = vset.pattern.permute.xlu0 0
  %1741 = vperm.xlu0 %1740, %v1739
  %v1742 = vpop.permute.xlu0 %1741
  %vm1743 = vcmp.eq.s32.totalorder %v1742, 1
  %v1745 = vrot.slane %v1722, 6
  %v1747 = vsel %vm1743, %v1745, -1e+30
  %v1748 = vmax.f32 %v1509, %v1747
  %v1749 = vld [vmem:[#allocation2 + $0x30] sm:$0x3]
  %v1750 = vld [vmem:[#allocation2 + $0x38] sm:$0x3]
  %v1751 = vld [vmem:[#allocation2 + $0x40] sm:$0x3]
  %v1752 = vld [vmem:[#allocation2 + $0x78] sm:$0x30]
  %v1753 = vld [vmem:[#allocation2 + $0x80] sm:$0x30]
  %v1754 = vld [vmem:[#allocation2 + $0x88] sm:$0x30]
  %v1755 = vpack.c.bf16 %v1713, %v1713
  %v1757 = vrot.slane %v1755, 3
  %1759 = vmatpush.bf16.msra.mxu0 %v676
  %1760 = vmatpush.bf16.msra.mxu0 %v673
  %1761 = vmatpush.bf16.msra.mxu0 %v670
  %1762 = vmatpush.bf16.msra.mxu0 %v667
  %1763 = vmatpush.bf16.msra.mxu0 %v664
  %1764 = vmatpush.bf16.msra.mxu0 %v661
  %1765 = vmatpush.bf16.msra.mxu0 %v658
  %1766 = vmatpush.bf16.msra.mxu0 %v655
  %1767 = vmatmul.bf16.gmra.mxu0 %v1757
  %v1768 = vpop.f32.mrf.mxu0
  %v1769 = vadd.f32 0.0, %v1768
  %v1770 = vpop.f32.mrf.mxu0
  %1771 = vdwg.mxu0
  %1772 = vmatpush.bf16.msra.mxu0 %v677
  %1773 = vmatpush.bf16.msra.mxu0 %v674
  %1774 = vmatpush.bf16.msra.mxu0 %v671
  %1775 = vmatpush.bf16.msra.mxu0 %v668
  %1776 = vmatpush.bf16.msra.mxu0 %v665
  %1777 = vmatpush.bf16.msra.mxu0 %v662
  %1778 = vmatpush.bf16.msra.mxu0 %v659
  %1779 = vmatpush.bf16.msra.mxu0 %v656
  %1780 = vmatmul.bf16.gmra.mxu0 %v1757
  %v1781 = vpop.f32.mrf.mxu0
  %v1782 = vadd.f32 0.0, %v1781
  %v1783 = vpop.f32.mrf.mxu0
  %1784 = vdwg.mxu0
  %1785 = vmatpush.bf16.msra.mxu0 %v678
  %1786 = vmatpush.bf16.msra.mxu0 %v675
  %1787 = vmatpush.bf16.msra.mxu0 %v672
  %1788 = vmatpush.bf16.msra.mxu0 %v669
  %1789 = vmatpush.bf16.msra.mxu0 %v666
  %1790 = vmatpush.bf16.msra.mxu0 %v663
  %1791 = vmatpush.bf16.msra.mxu0 %v660
  %1792 = vmatpush.bf16.msra.mxu0 %v657
  %1793 = vmatmul.bf16.gmra.mxu0 %v1757
  %v1794 = vpop.f32.mrf.mxu0
  %v1795 = vadd.f32 0.0, %v1794
  %v1796 = vpop.f32.mrf.mxu0
  %1797 = vdwg.mxu0
  %v1798 = vpack.c.bf16 %v1722, %v1722
  %v1800 = vrot.slane %v1798, 3
  %1802 = vmatpush.bf16.msra.mxu0 %v843
  %1803 = vmatpush.bf16.msra.mxu0 %v840
  %1804 = vmatpush.bf16.msra.mxu0 %v837
  %1805 = vmatpush.bf16.msra.mxu0 %v834
  %1806 = vmatpush.bf16.msra.mxu0 %v831
  %1807 = vmatpush.bf16.msra.mxu0 %v828
  %1808 = vmatpush.bf16.msra.mxu0 %v825
  %1809 = vmatpush.bf16.msra.mxu0 %v822
  %1810 = vmatmul.bf16.gmra.mxu0 %v1800
  %v1811 = vpop.f32.mrf.mxu0
  %v1812 = vadd.f32 0.0, %v1811
  %v1813 = vpop.f32.mrf.mxu0
  %1814 = vdwg.mxu0
  %1815 = vmatpush.bf16.msra.mxu0 %v844
  %1816 = vmatpush.bf16.msra.mxu0 %v841
  %1817 = vmatpush.bf16.msra.mxu0 %v838
  %1818 = vmatpush.bf16.msra.mxu0 %v835
  %1819 = vmatpush.bf16.msra.mxu0 %v832
  %1820 = vmatpush.bf16.msra.mxu0 %v829
  %1821 = vmatpush.bf16.msra.mxu0 %v826
  %1822 = vmatpush.bf16.msra.mxu0 %v823
  %1823 = vmatmul.bf16.gmra.mxu0 %v1800
  %v1824 = vpop.f32.mrf.mxu0
  %v1825 = vadd.f32 0.0, %v1824
  %v1826 = vpop.f32.mrf.mxu0
  %1827 = vdwg.mxu0
  %1828 = vmatpush.bf16.msra.mxu0 %v845
  %1829 = vmatpush.bf16.msra.mxu0 %v842
  %1830 = vmatpush.bf16.msra.mxu0 %v839
  %1831 = vmatpush.bf16.msra.mxu0 %v836
  %1832 = vmatpush.bf16.msra.mxu0 %v833
  %1833 = vmatpush.bf16.msra.mxu0 %v830
  %1834 = vmatpush.bf16.msra.mxu0 %v827
  %1835 = vmatpush.bf16.msra.mxu0 %v824
  %1836 = vmatmul.bf16.gmra.mxu0 %v1800
  %v1837 = vpop.f32.mrf.mxu0
  %v1838 = vadd.f32 0.0, %v1837
  %v1839 = vpop.f32.mrf.mxu0
  %1840 = vdwg.mxu0
  %v1841 = vadd.f32 %v1749, %v1769
  %v1842 = vadd.f32 %v1750, %v1782
  %v1843 = vxor.u32 %v1841, 2147483648
  %v1844 = vxor.u32 %v1842, 2147483648
  %v1845 = vmul.f32 %v1843, 1.442695
  %v1846 = vpow.pop %v1845
  %v1847 = vmul.f32 %v1844, 1.442695
  %v1848 = vpow.pop %v1847
  %v1849 = vadd.f32 %v1846, 1.0
  %v1850 = vadd.f32 %v1848, 1.0
  %v1851 = vrcp.pop %v1849
  %v1852 = vmul.f32 %v1849, %v1851
  %v1853 = vsub.f32 1.0, %v1852
  %v1854 = vmul.f32 %v1851, %v1853
  %v1855 = vadd.f32 %v1851, %v1854
  %vm1856 = vweird.f32 %v1849
  %vm1857 = vweird.f32 %v1851
  %vm1858 = vmor %vm1856, %vm1857
  %v1859 = vsel %vm1858, %v1851, %v1855
  %v1860 = vand.u32 2147483647, %v1849
  %vm1861 = vcmp.eq.f32.partialorder %v1860, 8.507059e+37
  %v1862 = vand.u32 %v1849, 2147483648
  %v1863 = vor.u32 1.1754944e-38, %v1862
  %v1864 = vsel %vm1861, %v1863, %v1859
  %v1865 = vmul.f32 1.0, %v1864
  %v1866 = vrcp.pop %v1850
  %v1867 = vmul.f32 %v1850, %v1866
  %v1868 = vsub.f32 1.0, %v1867
  %v1869 = vmul.f32 %v1866, %v1868
  %v1870 = vadd.f32 %v1866, %v1869
  %vm1871 = vweird.f32 %v1850
  %vm1872 = vweird.f32 %v1866
  %vm1873 = vmor %vm1871, %vm1872
  %v1874 = vsel %vm1873, %v1866, %v1870
  %v1875 = vand.u32 2147483647, %v1850
  %vm1876 = vcmp.eq.f32.partialorder %v1875, 8.507059e+37
  %v1877 = vand.u32 %v1850, 2147483648
  %v1878 = vor.u32 1.1754944e-38, %v1877
  %v1879 = vsel %vm1876, %v1878, %v1874
  %v1880 = vmul.f32 1.0, %v1879
  %v1883 = vrot.slane %v1812, 4
  %v1884 = vrot.slane %v1825, 4
  %v1887 = vadd.f32 %v1752, %v1883
  %v1888 = vadd.f32 %v1753, %v1884
  %v1889 = vxor.u32 %v1887, 2147483648
  %v1890 = vxor.u32 %v1888, 2147483648
  %v1891 = vmul.f32 %v1889, 1.442695
  %v1892 = vpow.pop %v1891
  %v1893 = vmul.f32 %v1890, 1.442695
  %v1894 = vpow.pop %v1893
  %v1895 = vadd.f32 %v1892, 1.0
  %v1896 = vadd.f32 %v1894, 1.0
  %v1897 = vrcp.pop %v1895
  %v1898 = vmul.f32 %v1895, %v1897
  %v1899 = vsub.f32 1.0, %v1898
  %v1900 = vmul.f32 %v1897, %v1899
  %v1901 = vadd.f32 %v1897, %v1900
  %vm1902 = vweird.f32 %v1895
  %vm1903 = vweird.f32 %v1897
  %vm1904 = vmor %vm1902, %vm1903
  %v1905 = vsel %vm1904, %v1897, %v1901
  %v1906 = vand.u32 2147483647, %v1895
  %vm1907 = vcmp.eq.f32.partialorder %v1906, 8.507059e+37
  %v1908 = vand.u32 %v1895, 2147483648
  %v1909 = vor.u32 1.1754944e-38, %v1908
  %v1910 = vsel %vm1907, %v1909, %v1905
  %v1911 = vmul.f32 1.0, %v1910
  %v1912 = vrcp.pop %v1896
  %v1913 = vmul.f32 %v1896, %v1912
  %v1914 = vsub.f32 1.0, %v1913
  %v1915 = vmul.f32 %v1912, %v1914
  %v1916 = vadd.f32 %v1912, %v1915
  %vm1917 = vweird.f32 %v1896
  %vm1918 = vweird.f32 %v1912
  %vm1919 = vmor %vm1917, %vm1918
  %v1920 = vsel %vm1919, %v1912, %v1916
  %v1921 = vand.u32 2147483647, %v1896
  %vm1922 = vcmp.eq.f32.partialorder %v1921, 8.507059e+37
  %v1923 = vand.u32 %v1896, 2147483648
  %v1924 = vor.u32 1.1754944e-38, %v1923
  %v1925 = vsel %vm1922, %v1924, %v1920
  %v1926 = vmul.f32 1.0, %v1925
  %v1927 = vadd.f32 %v1795, %v996
  %v1928 = vmul.f32 %v1865, %v1927
  %v1929 = vadd.f32 %v1751, %v1928
  %v1930 = vtanh.pop %v1929
  %v1931 = vadd.f32 %v1838, %v1003
  %v1933 = vrot.slane %v1931, 4
  %v1935 = vmul.f32 %v1911, %v1933
  %v1936 = vadd.f32 %v1754, %v1935
  %v1937 = vtanh.pop %v1936
  %v1939 = vrot.slane %v1930, 2
  %v1941 = vsub.f32 %v1713, %v1939
  %v1943 = vrot.slane %v1941, 6
  %v1945 = vmul.f32 %v1880, %v1943
  %v1946 = vadd.f32 %v1930, %v1945
  %v1948 = vrot.slane %v1937, 6
  %v1950 = vsub.f32 %v1722, %v1948
  %v1952 = vrot.slane %v1950, 2
  %v1954 = vmul.f32 %v1926, %v1952
  %v1955 = vadd.f32 %v1937, %v1954
  %1956 = vst [vmem:[#allocation3 + $0x10] sm:$0x3] %v1946
  %1957 = vst [vmem:[#allocation3 + $0x28] sm:$0x30] %v1955
  %v1958 = vld [vmem:[%s6 + $0x8] sm:$0x3]
  %v1959 = vld [vmem:[%s6 + $0x14] sm:$0x3]
  %vm1960 = vcmp.gt.f32.partialorder %v1958, 0.0
  %v1961 = vsel %vm1960, 1, 0
  %1962 = vset.pattern.permute.xlu0 0
  %1963 = vperm.xlu0 %1962, %v1961
  %v1964 = vpop.permute.xlu0 %1963
  %vm1965 = vcmp.eq.s32.totalorder %v1964, 1
  %v1966 = vsel %vm1965, %v1946, -1e+30
  %v1967 = vmax.f32 %v1737, %v1966
  %vm1968 = vcmp.gt.f32.partialorder %v1959, 0.0
  %v1969 = vsel %vm1968, 1, 0
  %1970 = vset.pattern.permute.xlu0 0
  %1971 = vperm.xlu0 %1970, %v1969
  %v1972 = vpop.permute.xlu0 %1971
  %vm1973 = vcmp.eq.s32.totalorder %v1972, 1
  %v1975 = vrot.slane %v1955, 4
  %v1977 = vsel %vm1973, %v1975, -1e+30
  %v1978 = vmax.f32 %v1748, %v1977
  %v1979 = vld [vmem:[#allocation2 + $0x30] sm:$0xc]
  %v1980 = vld [vmem:[#allocation2 + $0x38] sm:$0xc]
  %v1981 = vld [vmem:[#allocation2 + $0x40] sm:$0xc]
  %v1982 = vld [vmem:[#allocation2 + $0x78] sm:$0xc]
  %v1983 = vld [vmem:[#allocation2 + $0x80] sm:$0xc]
  %v1984 = vld [vmem:[#allocation2 + $0x88] sm:$0xc]
  %v1985 = vpack.c.bf16 %v1946, %v1946
  %1986 = vmatpush.bf16.msra.mxu0 %v676
  %1987 = vmatpush.bf16.msra.mxu0 %v673
  %1988 = vmatpush.bf16.msra.mxu0 %v670
  %1989 = vmatpush.bf16.msra.mxu0 %v667
  %1990 = vmatpush.bf16.msra.mxu0 %v664
  %1991 = vmatpush.bf16.msra.mxu0 %v661
  %1992 = vmatpush.bf16.msra.mxu0 %v658
  %1993 = vmatpush.bf16.msra.mxu0 %v655
  %1994 = vmatmul.bf16.gmra.mxu0 %v1985
  %v1995 = vpop.f32.mrf.mxu0
  %v1996 = vadd.f32 0.0, %v1995
  %v1997 = vpop.f32.mrf.mxu0
  %1998 = vdwg.mxu0
  %1999 = vmatpush.bf16.msra.mxu0 %v677
  %2000 = vmatpush.bf16.msra.mxu0 %v674
  %2001 = vmatpush.bf16.msra.mxu0 %v671
  %2002 = vmatpush.bf16.msra.mxu0 %v668
  %2003 = vmatpush.bf16.msra.mxu0 %v665
  %2004 = vmatpush.bf16.msra.mxu0 %v662
  %2005 = vmatpush.bf16.msra.mxu0 %v659
  %2006 = vmatpush.bf16.msra.mxu0 %v656
  %2007 = vmatmul.bf16.gmra.mxu0 %v1985
  %v2008 = vpop.f32.mrf.mxu0
  %v2009 = vadd.f32 0.0, %v2008
  %v2010 = vpop.f32.mrf.mxu0
  %2011 = vdwg.mxu0
  %2012 = vmatpush.bf16.msra.mxu0 %v678
  %2013 = vmatpush.bf16.msra.mxu0 %v675
  %2014 = vmatpush.bf16.msra.mxu0 %v672
  %2015 = vmatpush.bf16.msra.mxu0 %v669
  %2016 = vmatpush.bf16.msra.mxu0 %v666
  %2017 = vmatpush.bf16.msra.mxu0 %v663
  %2018 = vmatpush.bf16.msra.mxu0 %v660
  %2019 = vmatpush.bf16.msra.mxu0 %v657
  %2020 = vmatmul.bf16.gmra.mxu0 %v1985
  %v2021 = vpop.f32.mrf.mxu0
  %v2022 = vadd.f32 0.0, %v2021
  %v2023 = vpop.f32.mrf.mxu0
  %2024 = vdwg.mxu0
  %v2025 = vpack.c.bf16 %v1955, %v1955
  %v2027 = vrot.slane %v2025, 2
  %2029 = vmatpush.bf16.msra.mxu0 %v843
  %2030 = vmatpush.bf16.msra.mxu0 %v840
  %2031 = vmatpush.bf16.msra.mxu0 %v837
  %2032 = vmatpush.bf16.msra.mxu0 %v834
  %2033 = vmatpush.bf16.msra.mxu0 %v831
  %2034 = vmatpush.bf16.msra.mxu0 %v828
  %2035 = vmatpush.bf16.msra.mxu0 %v825
  %2036 = vmatpush.bf16.msra.mxu0 %v822
  %2037 = vmatmul.bf16.gmra.mxu0 %v2027
  %v2038 = vpop.f32.mrf.mxu0
  %v2039 = vadd.f32 0.0, %v2038
  %v2040 = vpop.f32.mrf.mxu0
  %2041 = vdwg.mxu0
  %2042 = vmatpush.bf16.msra.mxu0 %v844
  %2043 = vmatpush.bf16.msra.mxu0 %v841
  %2044 = vmatpush.bf16.msra.mxu0 %v838
  %2045 = vmatpush.bf16.msra.mxu0 %v835
  %2046 = vmatpush.bf16.msra.mxu0 %v832
  %2047 = vmatpush.bf16.msra.mxu0 %v829
  %2048 = vmatpush.bf16.msra.mxu0 %v826
  %2049 = vmatpush.bf16.msra.mxu0 %v823
  %2050 = vmatmul.bf16.gmra.mxu0 %v2027
  %v2051 = vpop.f32.mrf.mxu0
  %v2052 = vadd.f32 0.0, %v2051
  %v2053 = vpop.f32.mrf.mxu0
  %2054 = vdwg.mxu0
  %2055 = vmatpush.bf16.msra.mxu0 %v845
  %2056 = vmatpush.bf16.msra.mxu0 %v842
  %2057 = vmatpush.bf16.msra.mxu0 %v839
  %2058 = vmatpush.bf16.msra.mxu0 %v836
  %2059 = vmatpush.bf16.msra.mxu0 %v833
  %2060 = vmatpush.bf16.msra.mxu0 %v830
  %2061 = vmatpush.bf16.msra.mxu0 %v827
  %2062 = vmatpush.bf16.msra.mxu0 %v824
  %2063 = vmatmul.bf16.gmra.mxu0 %v2027
  %v2064 = vpop.f32.mrf.mxu0
  %v2065 = vadd.f32 0.0, %v2064
  %v2066 = vpop.f32.mrf.mxu0
  %2067 = vdwg.mxu0
  %v2070 = vrot.slane %v1996, 6
  %v2071 = vrot.slane %v2009, 6
  %v2074 = vadd.f32 %v1979, %v2070
  %v2075 = vadd.f32 %v1980, %v2071
  %v2076 = vxor.u32 %v2074, 2147483648
  %v2077 = vxor.u32 %v2075, 2147483648
  %v2078 = vmul.f32 %v2076, 1.442695
  %v2079 = vpow.pop %v2078
  %v2080 = vmul.f32 %v2077, 1.442695
  %v2081 = vpow.pop %v2080
  %v2082 = vadd.f32 %v2079, 1.0
  %v2083 = vadd.f32 %v2081, 1.0
  %v2084 = vrcp.pop %v2082
  %v2085 = vmul.f32 %v2082, %v2084
  %v2086 = vsub.f32 1.0, %v2085
  %v2087 = vmul.f32 %v2084, %v2086
  %v2088 = vadd.f32 %v2084, %v2087
  %vm2089 = vweird.f32 %v2082
  %vm2090 = vweird.f32 %v2084
  %vm2091 = vmor %vm2089, %vm2090
  %v2092 = vsel %vm2091, %v2084, %v2088
  %v2093 = vand.u32 2147483647, %v2082
  %vm2094 = vcmp.eq.f32.partialorder %v2093, 8.507059e+37
  %v2095 = vand.u32 %v2082, 2147483648
  %v2096 = vor.u32 1.1754944e-38, %v2095
  %v2097 = vsel %vm2094, %v2096, %v2092
  %v2098 = vmul.f32 1.0, %v2097
  %v2099 = vrcp.pop %v2083
  %v2100 = vmul.f32 %v2083, %v2099
  %v2101 = vsub.f32 1.0, %v2100
  %v2102 = vmul.f32 %v2099, %v2101
  %v2103 = vadd.f32 %v2099, %v2102
  %vm2104 = vweird.f32 %v2083
  %vm2105 = vweird.f32 %v2099
  %vm2106 = vmor %vm2104, %vm2105
  %v2107 = vsel %vm2106, %v2099, %v2103
  %v2108 = vand.u32 2147483647, %v2083
  %vm2109 = vcmp.eq.f32.partialorder %v2108, 8.507059e+37
  %v2110 = vand.u32 %v2083, 2147483648
  %v2111 = vor.u32 1.1754944e-38, %v2110
  %v2112 = vsel %vm2109, %v2111, %v2107
  %v2113 = vmul.f32 1.0, %v2112
  %v2116 = vrot.slane %v2039, 6
  %v2117 = vrot.slane %v2052, 6
  %v2120 = vadd.f32 %v1982, %v2116
  %v2121 = vadd.f32 %v1983, %v2117
  %v2122 = vxor.u32 %v2120, 2147483648
  %v2123 = vxor.u32 %v2121, 2147483648
  %v2124 = vmul.f32 %v2122, 1.442695
  %v2125 = vpow.pop %v2124
  %v2126 = vmul.f32 %v2123, 1.442695
  %v2127 = vpow.pop %v2126
  %v2128 = vadd.f32 %v2125, 1.0
  %v2129 = vadd.f32 %v2127, 1.0
  %v2130 = vrcp.pop %v2128
  %v2131 = vmul.f32 %v2128, %v2130
  %v2132 = vsub.f32 1.0, %v2131
  %v2133 = vmul.f32 %v2130, %v2132
  %v2134 = vadd.f32 %v2130, %v2133
  %vm2135 = vweird.f32 %v2128
  %vm2136 = vweird.f32 %v2130
  %vm2137 = vmor %vm2135, %vm2136
  %v2138 = vsel %vm2137, %v2130, %v2134
  %v2139 = vand.u32 2147483647, %v2128
  %vm2140 = vcmp.eq.f32.partialorder %v2139, 8.507059e+37
  %v2141 = vand.u32 %v2128, 2147483648
  %v2142 = vor.u32 1.1754944e-38, %v2141
  %v2143 = vsel %vm2140, %v2142, %v2138
  %v2144 = vmul.f32 1.0, %v2143
  %v2145 = vrcp.pop %v2129
  %v2146 = vmul.f32 %v2129, %v2145
  %v2147 = vsub.f32 1.0, %v2146
  %v2148 = vmul.f32 %v2145, %v2147
  %v2149 = vadd.f32 %v2145, %v2148
  %vm2150 = vweird.f32 %v2129
  %vm2151 = vweird.f32 %v2145
  %vm2152 = vmor %vm2150, %vm2151
  %v2153 = vsel %vm2152, %v2145, %v2149
  %v2154 = vand.u32 2147483647, %v2129
  %vm2155 = vcmp.eq.f32.partialorder %v2154, 8.507059e+37
  %v2156 = vand.u32 %v2129, 2147483648
  %v2157 = vor.u32 1.1754944e-38, %v2156
  %v2158 = vsel %vm2155, %v2157, %v2153
  %v2159 = vmul.f32 1.0, %v2158
  %v2160 = vadd.f32 %v2022, %v996
  %v2162 = vrot.slane %v2160, 6
  %v2164 = vmul.f32 %v2098, %v2162
  %v2165 = vadd.f32 %v1981, %v2164
  %v2166 = vtanh.pop %v2165
  %v2167 = vadd.f32 %v2065, %v1003
  %v2169 = vrot.slane %v2167, 6
  %v2171 = vmul.f32 %v2144, %v2169
  %v2172 = vadd.f32 %v1984, %v2171
  %v2173 = vtanh.pop %v2172
  %v2175 = vrot.slane %v2166, 2
  %v2177 = vsub.f32 %v1946, %v2175
  %v2179 = vrot.slane %v2177, 6
  %v2181 = vmul.f32 %v2113, %v2179
  %v2182 = vadd.f32 %v2166, %v2181
  %v2184 = vrot.slane %v2173, 6
  %v2186 = vsub.f32 %v1955, %v2184
  %v2188 = vrot.slane %v2186, 2
  %v2190 = vmul.f32 %v2159, %v2188
  %v2191 = vadd.f32 %v2173, %v2190
  %2192 = vst [vmem:[#allocation3 + $0x10] sm:$0xc] %v2182
  %2193 = vst [vmem:[#allocation3 + $0x28] sm:$0xc] %v2191
  %v2194 = vld [vmem:[%s6 + $0xa] sm:$0x3]
  %v2195 = vld [vmem:[%s6 + $0x12] sm:$0x3]
  %vm2196 = vcmp.gt.f32.partialorder %v2194, 0.0
  %v2197 = vsel %vm2196, 1, 0
  %2198 = vset.pattern.permute.xlu0 0
  %2199 = vperm.xlu0 %2198, %v2197
  %v2200 = vpop.permute.xlu0 %2199
  %vm2201 = vcmp.eq.s32.totalorder %v2200, 1
  %v2203 = vrot.slane %v2182, 2
  %v2205 = vsel %vm2201, %v2203, -1e+30
  %v2206 = vmax.f32 %v1967, %v2205
  %vm2207 = vcmp.gt.f32.partialorder %v2195, 0.0
  %v2208 = vsel %vm2207, 1, 0
  %2209 = vset.pattern.permute.xlu0 0
  %2210 = vperm.xlu0 %2209, %v2208
  %v2211 = vpop.permute.xlu0 %2210
  %vm2212 = vcmp.eq.s32.totalorder %v2211, 1
  %v2214 = vrot.slane %v2191, 2
  %v2216 = vsel %vm2212, %v2214, -1e+30
  %v2217 = vmax.f32 %v1978, %v2216
  %v2218 = vld [vmem:[#allocation2 + $0x30] sm:$0x30]
  %v2219 = vld [vmem:[#allocation2 + $0x38] sm:$0x30]
  %v2220 = vld [vmem:[#allocation2 + $0x40] sm:$0x30]
  %v2221 = vld [vmem:[#allocation2 + $0x78] sm:$0x3]
  %v2222 = vld [vmem:[#allocation2 + $0x80] sm:$0x3]
  %v2223 = vld [vmem:[#allocation2 + $0x88] sm:$0x3]
  %v2224 = vpack.c.bf16 %v2182, %v2182
  %v2226 = vrot.slane %v2224, 1
  %2228 = vmatpush.bf16.msra.mxu0 %v676
  %2229 = vmatpush.bf16.msra.mxu0 %v673
  %2230 = vmatpush.bf16.msra.mxu0 %v670
  %2231 = vmatpush.bf16.msra.mxu0 %v667
  %2232 = vmatpush.bf16.msra.mxu0 %v664
  %2233 = vmatpush.bf16.msra.mxu0 %v661
  %2234 = vmatpush.bf16.msra.mxu0 %v658
  %2235 = vmatpush.bf16.msra.mxu0 %v655
  %2236 = vmatmul.bf16.gmra.mxu0 %v2226
  %v2237 = vpop.f32.mrf.mxu0
  %v2238 = vadd.f32 0.0, %v2237
  %v2239 = vpop.f32.mrf.mxu0
  %2240 = vdwg.mxu0
  %2241 = vmatpush.bf16.msra.mxu0 %v677
  %2242 = vmatpush.bf16.msra.mxu0 %v674
  %2243 = vmatpush.bf16.msra.mxu0 %v671
  %2244 = vmatpush.bf16.msra.mxu0 %v668
  %2245 = vmatpush.bf16.msra.mxu0 %v665
  %2246 = vmatpush.bf16.msra.mxu0 %v662
  %2247 = vmatpush.bf16.msra.mxu0 %v659
  %2248 = vmatpush.bf16.msra.mxu0 %v656
  %2249 = vmatmul.bf16.gmra.mxu0 %v2226
  %v2250 = vpop.f32.mrf.mxu0
  %v2251 = vadd.f32 0.0, %v2250
  %v2252 = vpop.f32.mrf.mxu0
  %2253 = vdwg.mxu0
  %2254 = vmatpush.bf16.msra.mxu0 %v678
  %2255 = vmatpush.bf16.msra.mxu0 %v675
  %2256 = vmatpush.bf16.msra.mxu0 %v672
  %2257 = vmatpush.bf16.msra.mxu0 %v669
  %2258 = vmatpush.bf16.msra.mxu0 %v666
  %2259 = vmatpush.bf16.msra.mxu0 %v663
  %2260 = vmatpush.bf16.msra.mxu0 %v660
  %2261 = vmatpush.bf16.msra.mxu0 %v657
  %2262 = vmatmul.bf16.gmra.mxu0 %v2226
  %v2263 = vpop.f32.mrf.mxu0
  %v2264 = vadd.f32 0.0, %v2263
  %v2265 = vpop.f32.mrf.mxu0
  %2266 = vdwg.mxu0
  %v2267 = vpack.c.bf16 %v2191, %v2191
  %v2269 = vrot.slane %v2267, 1
  %2271 = vmatpush.bf16.msra.mxu0 %v843
  %2272 = vmatpush.bf16.msra.mxu0 %v840
  %2273 = vmatpush.bf16.msra.mxu0 %v837
  %2274 = vmatpush.bf16.msra.mxu0 %v834
  %2275 = vmatpush.bf16.msra.mxu0 %v831
  %2276 = vmatpush.bf16.msra.mxu0 %v828
  %2277 = vmatpush.bf16.msra.mxu0 %v825
  %2278 = vmatpush.bf16.msra.mxu0 %v822
  %2279 = vmatmul.bf16.gmra.mxu0 %v2269
  %v2280 = vpop.f32.mrf.mxu0
  %v2281 = vadd.f32 0.0, %v2280
  %v2282 = vpop.f32.mrf.mxu0
  %2283 = vdwg.mxu0
  %2284 = vmatpush.bf16.msra.mxu0 %v844
  %2285 = vmatpush.bf16.msra.mxu0 %v841
  %2286 = vmatpush.bf16.msra.mxu0 %v838
  %2287 = vmatpush.bf16.msra.mxu0 %v835
  %2288 = vmatpush.bf16.msra.mxu0 %v832
  %2289 = vmatpush.bf16.msra.mxu0 %v829
  %2290 = vmatpush.bf16.msra.mxu0 %v826
  %2291 = vmatpush.bf16.msra.mxu0 %v823
  %2292 = vmatmul.bf16.gmra.mxu0 %v2269
  %v2293 = vpop.f32.mrf.mxu0
  %v2294 = vadd.f32 0.0, %v2293
  %v2295 = vpop.f32.mrf.mxu0
  %2296 = vdwg.mxu0
  %2297 = vmatpush.bf16.msra.mxu0 %v845
  %2298 = vmatpush.bf16.msra.mxu0 %v842
  %2299 = vmatpush.bf16.msra.mxu0 %v839
  %2300 = vmatpush.bf16.msra.mxu0 %v836
  %2301 = vmatpush.bf16.msra.mxu0 %v833
  %2302 = vmatpush.bf16.msra.mxu0 %v830
  %2303 = vmatpush.bf16.msra.mxu0 %v827
  %2304 = vmatpush.bf16.msra.mxu0 %v824
  %2305 = vmatmul.bf16.gmra.mxu0 %v2269
  %v2306 = vpop.f32.mrf.mxu0
  %v2307 = vadd.f32 0.0, %v2306
  %v2308 = vpop.f32.mrf.mxu0
  %2309 = vdwg.mxu0
  %v2312 = vrot.slane %v2238, 4
  %v2313 = vrot.slane %v2251, 4
  %v2316 = vadd.f32 %v2218, %v2312
  %v2317 = vadd.f32 %v2219, %v2313
  %v2318 = vxor.u32 %v2316, 2147483648
  %v2319 = vxor.u32 %v2317, 2147483648
  %v2320 = vmul.f32 %v2318, 1.442695
  %v2321 = vpow.pop %v2320
  %v2322 = vmul.f32 %v2319, 1.442695
  %v2323 = vpow.pop %v2322
  %v2324 = vadd.f32 %v2321, 1.0
  %v2325 = vadd.f32 %v2323, 1.0
  %v2326 = vrcp.pop %v2324
  %v2327 = vmul.f32 %v2324, %v2326
  %v2328 = vsub.f32 1.0, %v2327
  %v2329 = vmul.f32 %v2326, %v2328
  %v2330 = vadd.f32 %v2326, %v2329
  %vm2331 = vweird.f32 %v2324
  %vm2332 = vweird.f32 %v2326
  %vm2333 = vmor %vm2331, %vm2332
  %v2334 = vsel %vm2333, %v2326, %v2330
  %v2335 = vand.u32 2147483647, %v2324
  %vm2336 = vcmp.eq.f32.partialorder %v2335, 8.507059e+37
  %v2337 = vand.u32 %v2324, 2147483648
  %v2338 = vor.u32 1.1754944e-38, %v2337
  %v2339 = vsel %vm2336, %v2338, %v2334
  %v2340 = vmul.f32 1.0, %v2339
  %v2341 = vrcp.pop %v2325
  %v2342 = vmul.f32 %v2325, %v2341
  %v2343 = vsub.f32 1.0, %v2342
  %v2344 = vmul.f32 %v2341, %v2343
  %v2345 = vadd.f32 %v2341, %v2344
  %vm2346 = vweird.f32 %v2325
  %vm2347 = vweird.f32 %v2341
  %vm2348 = vmor %vm2346, %vm2347
  %v2349 = vsel %vm2348, %v2341, %v2345
  %v2350 = vand.u32 2147483647, %v2325
  %vm2351 = vcmp.eq.f32.partialorder %v2350, 8.507059e+37
  %v2352 = vand.u32 %v2325, 2147483648
  %v2353 = vor.u32 1.1754944e-38, %v2352
  %v2354 = vsel %vm2351, %v2353, %v2349
  %v2355 = vmul.f32 1.0, %v2354
  %v2356 = vadd.f32 %v2221, %v2281
  %v2357 = vadd.f32 %v2222, %v2294
  %v2358 = vxor.u32 %v2356, 2147483648
  %v2359 = vxor.u32 %v2357, 2147483648
  %v2360 = vmul.f32 %v2358, 1.442695
  %v2361 = vpow.pop %v2360
  %v2362 = vmul.f32 %v2359, 1.442695
  %v2363 = vpow.pop %v2362
  %v2364 = vadd.f32 %v2361, 1.0
  %v2365 = vadd.f32 %v2363, 1.0
  %v2366 = vrcp.pop %v2364
  %v2367 = vmul.f32 %v2364, %v2366
  %v2368 = vsub.f32 1.0, %v2367
  %v2369 = vmul.f32 %v2366, %v2368
  %v2370 = vadd.f32 %v2366, %v2369
  %vm2371 = vweird.f32 %v2364
  %vm2372 = vweird.f32 %v2366
  %vm2373 = vmor %vm2371, %vm2372
  %v2374 = vsel %vm2373, %v2366, %v2370
  %v2375 = vand.u32 2147483647, %v2364
  %vm2376 = vcmp.eq.f32.partialorder %v2375, 8.507059e+37
  %v2377 = vand.u32 %v2364, 2147483648
  %v2378 = vor.u32 1.1754944e-38, %v2377
  %v2379 = vsel %vm2376, %v2378, %v2374
  %v2380 = vmul.f32 1.0, %v2379
  %v2381 = vrcp.pop %v2365
  %v2382 = vmul.f32 %v2365, %v2381
  %v2383 = vsub.f32 1.0, %v2382
  %v2384 = vmul.f32 %v2381, %v2383
  %v2385 = vadd.f32 %v2381, %v2384
  %vm2386 = vweird.f32 %v2365
  %vm2387 = vweird.f32 %v2381
  %vm2388 = vmor %vm2386, %vm2387
  %v2389 = vsel %vm2388, %v2381, %v2385
  %v2390 = vand.u32 2147483647, %v2365
  %vm2391 = vcmp.eq.f32.partialorder %v2390, 8.507059e+37
  %v2392 = vand.u32 %v2365, 2147483648
  %v2393 = vor.u32 1.1754944e-38, %v2392
  %v2394 = vsel %vm2391, %v2393, %v2389
  %v2395 = vmul.f32 1.0, %v2394
  %v2396 = vadd.f32 %v2264, %v996
  %v2398 = vrot.slane %v2396, 4
  %v2400 = vmul.f32 %v2340, %v2398
  %v2401 = vadd.f32 %v2220, %v2400
  %v2402 = vtanh.pop %v2401
  %v2403 = vadd.f32 %v2307, %v1003
  %v2404 = vmul.f32 %v2380, %v2403
  %v2405 = vadd.f32 %v2223, %v2404
  %v2406 = vtanh.pop %v2405
  %v2408 = vrot.slane %v2402, 2
  %v2410 = vsub.f32 %v2182, %v2408
  %v2412 = vrot.slane %v2410, 6
  %v2414 = vmul.f32 %v2355, %v2412
  %v2415 = vadd.f32 %v2402, %v2414
  %v2417 = vrot.slane %v2406, 6
  %v2419 = vsub.f32 %v2191, %v2417
  %v2421 = vrot.slane %v2419, 2
  %v2423 = vmul.f32 %v2395, %v2421
  %v2424 = vadd.f32 %v2406, %v2423
  %2425 = vst [vmem:[#allocation3 + $0x10] sm:$0x30] %v2415
  %2426 = vst [vmem:[#allocation3 + $0x28] sm:$0x3] %v2424
  %v2427 = vld [vmem:[%s6 + $0xc] sm:$0x3]
  %v2428 = vld [vmem:[%s6 + $0x10] sm:$0x3]
  %vm2429 = vcmp.gt.f32.partialorder %v2427, 0.0
  %v2430 = vsel %vm2429, 1, 0
  %2431 = vset.pattern.permute.xlu0 0
  %2432 = vperm.xlu0 %2431, %v2430
  %v2433 = vpop.permute.xlu0 %2432
  %vm2434 = vcmp.eq.s32.totalorder %v2433, 1
  %v2436 = vrot.slane %v2415, 4
  %v2438 = vsel %vm2434, %v2436, -1e+30
  %v2439 = vmax.f32 %v2206, %v2438
  %vm2440 = vcmp.gt.f32.partialorder %v2428, 0.0
  %v2441 = vsel %vm2440, 1, 0
  %2442 = vset.pattern.permute.xlu0 0
  %2443 = vperm.xlu0 %2442, %v2441
  %v2444 = vpop.permute.xlu0 %2443
  %vm2445 = vcmp.eq.s32.totalorder %v2444, 1
  %v2446 = vsel %vm2445, %v2424, -1e+30
  %v2447 = vmax.f32 %v2217, %v2446
  %v2448 = vld [vmem:[#allocation2 + $0x30] sm:$0xc0]
  %v2449 = vld [vmem:[#allocation2 + $0x38] sm:$0xc0]
  %v2450 = vld [vmem:[#allocation2 + $0x40] sm:$0xc0]
  %v2451 = vld [vmem:[#allocation2 + $0x48] sm:$0xc0]
  %v2452 = vld [vmem:[#allocation2 + $0x50] sm:$0xc0]
  %v2453 = vld [vmem:[#allocation2 + $0x58] sm:$0xc0]
  %v2454 = vpack.c.bf16 %v2415, %v2415
  %v2456 = vrot.slane %v2454, 2
  %2458 = vmatpush.bf16.msra.mxu0 %v676
  %2459 = vmatpush.bf16.msra.mxu0 %v673
  %2460 = vmatpush.bf16.msra.mxu0 %v670
  %2461 = vmatpush.bf16.msra.mxu0 %v667
  %2462 = vmatpush.bf16.msra.mxu0 %v664
  %2463 = vmatpush.bf16.msra.mxu0 %v661
  %2464 = vmatpush.bf16.msra.mxu0 %v658
  %2465 = vmatpush.bf16.msra.mxu0 %v655
  %2466 = vmatmul.bf16.gmra.mxu0 %v2456
  %v2467 = vpop.f32.mrf.mxu0
  %v2468 = vadd.f32 0.0, %v2467
  %v2469 = vpop.f32.mrf.mxu0
  %2470 = vdwg.mxu0
  %2471 = vmatpush.bf16.msra.mxu0 %v677
  %2472 = vmatpush.bf16.msra.mxu0 %v674
  %2473 = vmatpush.bf16.msra.mxu0 %v671
  %2474 = vmatpush.bf16.msra.mxu0 %v668
  %2475 = vmatpush.bf16.msra.mxu0 %v665
  %2476 = vmatpush.bf16.msra.mxu0 %v662
  %2477 = vmatpush.bf16.msra.mxu0 %v659
  %2478 = vmatpush.bf16.msra.mxu0 %v656
  %2479 = vmatmul.bf16.gmra.mxu0 %v2456
  %v2480 = vpop.f32.mrf.mxu0
  %v2481 = vadd.f32 0.0, %v2480
  %v2482 = vpop.f32.mrf.mxu0
  %2483 = vdwg.mxu0
  %2484 = vmatpush.bf16.msra.mxu0 %v678
  %2485 = vmatpush.bf16.msra.mxu0 %v675
  %2486 = vmatpush.bf16.msra.mxu0 %v672
  %2487 = vmatpush.bf16.msra.mxu0 %v669
  %2488 = vmatpush.bf16.msra.mxu0 %v666
  %2489 = vmatpush.bf16.msra.mxu0 %v663
  %2490 = vmatpush.bf16.msra.mxu0 %v660
  %2491 = vmatpush.bf16.msra.mxu0 %v657
  %2492 = vmatmul.bf16.gmra.mxu0 %v2456
  %v2493 = vpop.f32.mrf.mxu0
  %v2494 = vadd.f32 0.0, %v2493
  %v2495 = vpop.f32.mrf.mxu0
  %2496 = vdwg.mxu0
  %v2497 = vpack.c.bf16 %v2424, %v2424
  %2498 = vmatpush.bf16.msra.mxu0 %v843
  %2499 = vmatpush.bf16.msra.mxu0 %v840
  %2500 = vmatpush.bf16.msra.mxu0 %v837
  %2501 = vmatpush.bf16.msra.mxu0 %v834
  %2502 = vmatpush.bf16.msra.mxu0 %v831
  %2503 = vmatpush.bf16.msra.mxu0 %v828
  %2504 = vmatpush.bf16.msra.mxu0 %v825
  %2505 = vmatpush.bf16.msra.mxu0 %v822
  %2506 = vmatmul.bf16.gmra.mxu0 %v2497
  %v2507 = vpop.f32.mrf.mxu0
  %v2508 = vadd.f32 0.0, %v2507
  %v2509 = vpop.f32.mrf.mxu0
  %2510 = vdwg.mxu0
  %2511 = vmatpush.bf16.msra.mxu0 %v844
  %2512 = vmatpush.bf16.msra.mxu0 %v841
  %2513 = vmatpush.bf16.msra.mxu0 %v838
  %2514 = vmatpush.bf16.msra.mxu0 %v835
  %2515 = vmatpush.bf16.msra.mxu0 %v832
  %2516 = vmatpush.bf16.msra.mxu0 %v829
  %2517 = vmatpush.bf16.msra.mxu0 %v826
  %2518 = vmatpush.bf16.msra.mxu0 %v823
  %2519 = vmatmul.bf16.gmra.mxu0 %v2497
  %v2520 = vpop.f32.mrf.mxu0
  %v2521 = vadd.f32 0.0, %v2520
  %v2522 = vpop.f32.mrf.mxu0
  %2523 = vdwg.mxu0
  %2524 = vmatpush.bf16.msra.mxu0 %v845
  %2525 = vmatpush.bf16.msra.mxu0 %v842
  %2526 = vmatpush.bf16.msra.mxu0 %v839
  %2527 = vmatpush.bf16.msra.mxu0 %v836
  %2528 = vmatpush.bf16.msra.mxu0 %v833
  %2529 = vmatpush.bf16.msra.mxu0 %v830
  %2530 = vmatpush.bf16.msra.mxu0 %v827
  %2531 = vmatpush.bf16.msra.mxu0 %v824
  %2532 = vmatmul.bf16.gmra.mxu0 %v2497
  %v2533 = vpop.f32.mrf.mxu0
  %v2534 = vadd.f32 0.0, %v2533
  %v2535 = vpop.f32.mrf.mxu0
  %2536 = vdwg.mxu0
  %v2539 = vrot.slane %v2468, 2
  %v2540 = vrot.slane %v2481, 2
  %v2543 = vadd.f32 %v2448, %v2539
  %v2544 = vadd.f32 %v2449, %v2540
  %v2545 = vxor.u32 %v2543, 2147483648
  %v2546 = vxor.u32 %v2544, 2147483648
  %v2547 = vmul.f32 %v2545, 1.442695
  %v2548 = vpow.pop %v2547
  %v2549 = vmul.f32 %v2546, 1.442695
  %v2550 = vpow.pop %v2549
  %v2551 = vadd.f32 %v2548, 1.0
  %v2552 = vadd.f32 %v2550, 1.0
  %v2553 = vrcp.pop %v2551
  %v2554 = vmul.f32 %v2551, %v2553
  %v2555 = vsub.f32 1.0, %v2554
  %v2556 = vmul.f32 %v2553, %v2555
  %v2557 = vadd.f32 %v2553, %v2556
  %vm2558 = vweird.f32 %v2551
  %vm2559 = vweird.f32 %v2553
  %vm2560 = vmor %vm2558, %vm2559
  %v2561 = vsel %vm2560, %v2553, %v2557
  %v2562 = vand.u32 2147483647, %v2551
  %vm2563 = vcmp.eq.f32.partialorder %v2562, 8.507059e+37
  %v2564 = vand.u32 %v2551, 2147483648
  %v2565 = vor.u32 1.1754944e-38, %v2564
  %v2566 = vsel %vm2563, %v2565, %v2561
  %v2567 = vmul.f32 1.0, %v2566
  %v2568 = vrcp.pop %v2552
  %v2569 = vmul.f32 %v2552, %v2568
  %v2570 = vsub.f32 1.0, %v2569
  %v2571 = vmul.f32 %v2568, %v2570
  %v2572 = vadd.f32 %v2568, %v2571
  %vm2573 = vweird.f32 %v2552
  %vm2574 = vweird.f32 %v2568
  %vm2575 = vmor %vm2573, %vm2574
  %v2576 = vsel %vm2575, %v2568, %v2572
  %v2577 = vand.u32 2147483647, %v2552
  %vm2578 = vcmp.eq.f32.partialorder %v2577, 8.507059e+37
  %v2579 = vand.u32 %v2552, 2147483648
  %v2580 = vor.u32 1.1754944e-38, %v2579
  %v2581 = vsel %vm2578, %v2580, %v2576
  %v2582 = vmul.f32 1.0, %v2581
  %v2585 = vrot.slane %v2508, 2
  %v2586 = vrot.slane %v2521, 2
  %v2589 = vadd.f32 %v2451, %v2585
  %v2590 = vadd.f32 %v2452, %v2586
  %v2591 = vxor.u32 %v2589, 2147483648
  %v2592 = vxor.u32 %v2590, 2147483648
  %v2593 = vmul.f32 %v2591, 1.442695
  %v2594 = vpow.pop %v2593
  %v2595 = vmul.f32 %v2592, 1.442695
  %v2596 = vpow.pop %v2595
  %v2597 = vadd.f32 %v2594, 1.0
  %v2598 = vadd.f32 %v2596, 1.0
  %v2599 = vrcp.pop %v2597
  %v2600 = vmul.f32 %v2597, %v2599
  %v2601 = vsub.f32 1.0, %v2600
  %v2602 = vmul.f32 %v2599, %v2601
  %v2603 = vadd.f32 %v2599, %v2602
  %vm2604 = vweird.f32 %v2597
  %vm2605 = vweird.f32 %v2599
  %vm2606 = vmor %vm2604, %vm2605
  %v2607 = vsel %vm2606, %v2599, %v2603
  %v2608 = vand.u32 2147483647, %v2597
  %vm2609 = vcmp.eq.f32.partialorder %v2608, 8.507059e+37
  %v2610 = vand.u32 %v2597, 2147483648
  %v2611 = vor.u32 1.1754944e-38, %v2610
  %v2612 = vsel %vm2609, %v2611, %v2607
  %v2613 = vmul.f32 1.0, %v2612
  %v2614 = vrcp.pop %v2598
  %v2615 = vmul.f32 %v2598, %v2614
  %v2616 = vsub.f32 1.0, %v2615
  %v2617 = vmul.f32 %v2614, %v2616
  %v2618 = vadd.f32 %v2614, %v2617
  %vm2619 = vweird.f32 %v2598
  %vm2620 = vweird.f32 %v2614
  %vm2621 = vmor %vm2619, %vm2620
  %v2622 = vsel %vm2621, %v2614, %v2618
  %v2623 = vand.u32 2147483647, %v2598
  %vm2624 = vcmp.eq.f32.partialorder %v2623, 8.507059e+37
  %v2625 = vand.u32 %v2598, 2147483648
  %v2626 = vor.u32 1.1754944e-38, %v2625
  %v2627 = vsel %vm2624, %v2626, %v2622
  %v2628 = vmul.f32 1.0, %v2627
  %v2629 = vadd.f32 %v2494, %v996
  %v2631 = vrot.slane %v2629, 2
  %v2633 = vmul.f32 %v2567, %v2631
  %v2634 = vadd.f32 %v2450, %v2633
  %v2635 = vtanh.pop %v2634
  %v2636 = vadd.f32 %v2534, %v1003
  %v2638 = vrot.slane %v2636, 2
  %v2640 = vmul.f32 %v2613, %v2638
  %v2641 = vadd.f32 %v2453, %v2640
  %v2642 = vtanh.pop %v2641
  %v2644 = vrot.slane %v2635, 2
  %v2646 = vsub.f32 %v2415, %v2644
  %v2648 = vrot.slane %v2646, 6
  %v2650 = vmul.f32 %v2582, %v2648
  %v2651 = vadd.f32 %v2635, %v2650
  %v2653 = vrot.slane %v2642, 6
  %v2655 = vsub.f32 %v2424, %v2653
  %v2657 = vrot.slane %v2655, 2
  %v2659 = vmul.f32 %v2628, %v2657
  %v2660 = vadd.f32 %v2642, %v2659
  %2661 = vst [vmem:[#allocation3 + $0x10] sm:$0xc0] %v2651
  %2662 = vst [vmem:[#allocation3 + $0x18] sm:$0xc0] %v2660
  %v2663 = vld [vmem:[%s6 + $0xe] sm:$0x3]
  %vm2664 = vcmp.gt.f32.partialorder %v2663, 0.0
  %v2665 = vsel %vm2664, 1, 0
  %2666 = vset.pattern.permute.xlu0 0
  %2667 = vperm.xlu0 %2666, %v2665
  %v2668 = vpop.permute.xlu0 %2667
  %vm2669 = vcmp.eq.s32.totalorder %v2668, 1
  %v2671 = vrot.slane %v2651, 6
  %v2673 = vsel %vm2669, %v2671, -1e+30
  %v2674 = vmax.f32 %v2439, %v2673
  %v2676 = vrot.slane %v2660, 6
  %v2678 = vsel %vm2669, %v2676, -1e+30
  %v2679 = vmax.f32 %v2447, %v2678
  %v2680 = vld [vmem:[#allocation2 + $0x60] sm:$0x3]
  %v2681 = vld [vmem:[#allocation2 + $0x68] sm:$0x3]
  %v2682 = vld [vmem:[#allocation2 + $0x70] sm:$0x3]
  %v2683 = vld [vmem:[#allocation2 + $0x48] sm:$0x30]
  %v2684 = vld [vmem:[#allocation2 + $0x50] sm:$0x30]
  %v2685 = vld [vmem:[#allocation2 + $0x58] sm:$0x30]
  %v2686 = vpack.c.bf16 %v2651, %v2651
  %v2688 = vrot.slane %v2686, 3
  %2690 = vmatpush.bf16.msra.mxu0 %v676
  %2691 = vmatpush.bf16.msra.mxu0 %v673
  %2692 = vmatpush.bf16.msra.mxu0 %v670
  %2693 = vmatpush.bf16.msra.mxu0 %v667
  %2694 = vmatpush.bf16.msra.mxu0 %v664
  %2695 = vmatpush.bf16.msra.mxu0 %v661
  %2696 = vmatpush.bf16.msra.mxu0 %v658
  %2697 = vmatpush.bf16.msra.mxu0 %v655
  %2698 = vmatmul.bf16.gmra.mxu0 %v2688
  %v2699 = vpop.f32.mrf.mxu0
  %v2700 = vadd.f32 0.0, %v2699
  %v2701 = vpop.f32.mrf.mxu0
  %2702 = vdwg.mxu0
  %2703 = vmatpush.bf16.msra.mxu0 %v677
  %2704 = vmatpush.bf16.msra.mxu0 %v674
  %2705 = vmatpush.bf16.msra.mxu0 %v671
  %2706 = vmatpush.bf16.msra.mxu0 %v668
  %2707 = vmatpush.bf16.msra.mxu0 %v665
  %2708 = vmatpush.bf16.msra.mxu0 %v662
  %2709 = vmatpush.bf16.msra.mxu0 %v659
  %2710 = vmatpush.bf16.msra.mxu0 %v656
  %2711 = vmatmul.bf16.gmra.mxu0 %v2688
  %v2712 = vpop.f32.mrf.mxu0
  %v2713 = vadd.f32 0.0, %v2712
  %v2714 = vpop.f32.mrf.mxu0
  %2715 = vdwg.mxu0
  %2716 = vmatpush.bf16.msra.mxu0 %v678
  %2717 = vmatpush.bf16.msra.mxu0 %v675
  %2718 = vmatpush.bf16.msra.mxu0 %v672
  %2719 = vmatpush.bf16.msra.mxu0 %v669
  %2720 = vmatpush.bf16.msra.mxu0 %v666
  %2721 = vmatpush.bf16.msra.mxu0 %v663
  %2722 = vmatpush.bf16.msra.mxu0 %v660
  %2723 = vmatpush.bf16.msra.mxu0 %v657
  %2724 = vmatmul.bf16.gmra.mxu0 %v2688
  %v2725 = vpop.f32.mrf.mxu0
  %v2726 = vadd.f32 0.0, %v2725
  %v2727 = vpop.f32.mrf.mxu0
  %2728 = vdwg.mxu0
  %v2729 = vpack.c.bf16 %v2660, %v2660
  %v2731 = vrot.slane %v2729, 3
  %2733 = vmatpush.bf16.msra.mxu0 %v843
  %2734 = vmatpush.bf16.msra.mxu0 %v840
  %2735 = vmatpush.bf16.msra.mxu0 %v837
  %2736 = vmatpush.bf16.msra.mxu0 %v834
  %2737 = vmatpush.bf16.msra.mxu0 %v831
  %2738 = vmatpush.bf16.msra.mxu0 %v828
  %2739 = vmatpush.bf16.msra.mxu0 %v825
  %2740 = vmatpush.bf16.msra.mxu0 %v822
  %2741 = vmatmul.bf16.gmra.mxu0 %v2731
  %v2742 = vpop.f32.mrf.mxu0
  %v2743 = vadd.f32 0.0, %v2742
  %v2744 = vpop.f32.mrf.mxu0
  %2745 = vdwg.mxu0
  %2746 = vmatpush.bf16.msra.mxu0 %v844
  %2747 = vmatpush.bf16.msra.mxu0 %v841
  %2748 = vmatpush.bf16.msra.mxu0 %v838
  %2749 = vmatpush.bf16.msra.mxu0 %v835
  %2750 = vmatpush.bf16.msra.mxu0 %v832
  %2751 = vmatpush.bf16.msra.mxu0 %v829
  %2752 = vmatpush.bf16.msra.mxu0 %v826
  %2753 = vmatpush.bf16.msra.mxu0 %v823
  %2754 = vmatmul.bf16.gmra.mxu0 %v2731
  %v2755 = vpop.f32.mrf.mxu0
  %v2756 = vadd.f32 0.0, %v2755
  %v2757 = vpop.f32.mrf.mxu0
  %2758 = vdwg.mxu0
  %2759 = vmatpush.bf16.msra.mxu0 %v845
  %2760 = vmatpush.bf16.msra.mxu0 %v842
  %2761 = vmatpush.bf16.msra.mxu0 %v839
  %2762 = vmatpush.bf16.msra.mxu0 %v836
  %2763 = vmatpush.bf16.msra.mxu0 %v833
  %2764 = vmatpush.bf16.msra.mxu0 %v830
  %2765 = vmatpush.bf16.msra.mxu0 %v827
  %2766 = vmatpush.bf16.msra.mxu0 %v824
  %2767 = vmatmul.bf16.gmra.mxu0 %v2731
  %v2768 = vpop.f32.mrf.mxu0
  %v2769 = vadd.f32 0.0, %v2768
  %v2770 = vpop.f32.mrf.mxu0
  %2771 = vdwg.mxu0
  %v2772 = vadd.f32 %v2680, %v2700
  %v2773 = vadd.f32 %v2681, %v2713
  %v2774 = vxor.u32 %v2772, 2147483648
  %v2775 = vxor.u32 %v2773, 2147483648
  %v2776 = vmul.f32 %v2774, 1.442695
  %v2777 = vpow.pop %v2776
  %v2778 = vmul.f32 %v2775, 1.442695
  %v2779 = vpow.pop %v2778
  %v2780 = vadd.f32 %v2777, 1.0
  %v2781 = vadd.f32 %v2779, 1.0
  %v2782 = vrcp.pop %v2780
  %v2783 = vmul.f32 %v2780, %v2782
  %v2784 = vsub.f32 1.0, %v2783
  %v2785 = vmul.f32 %v2782, %v2784
  %v2786 = vadd.f32 %v2782, %v2785
  %vm2787 = vweird.f32 %v2780
  %vm2788 = vweird.f32 %v2782
  %vm2789 = vmor %vm2787, %vm2788
  %v2790 = vsel %vm2789, %v2782, %v2786
  %v2791 = vand.u32 2147483647, %v2780
  %vm2792 = vcmp.eq.f32.partialorder %v2791, 8.507059e+37
  %v2793 = vand.u32 %v2780, 2147483648
  %v2794 = vor.u32 1.1754944e-38, %v2793
  %v2795 = vsel %vm2792, %v2794, %v2790
  %v2796 = vmul.f32 1.0, %v2795
  %v2797 = vrcp.pop %v2781
  %v2798 = vmul.f32 %v2781, %v2797
  %v2799 = vsub.f32 1.0, %v2798
  %v2800 = vmul.f32 %v2797, %v2799
  %v2801 = vadd.f32 %v2797, %v2800
  %vm2802 = vweird.f32 %v2781
  %vm2803 = vweird.f32 %v2797
  %vm2804 = vmor %vm2802, %vm2803
  %v2805 = vsel %vm2804, %v2797, %v2801
  %v2806 = vand.u32 2147483647, %v2781
  %vm2807 = vcmp.eq.f32.partialorder %v2806, 8.507059e+37
  %v2808 = vand.u32 %v2781, 2147483648
  %v2809 = vor.u32 1.1754944e-38, %v2808
  %v2810 = vsel %vm2807, %v2809, %v2805
  %v2811 = vmul.f32 1.0, %v2810
  %v2814 = vrot.slane %v2743, 4
  %v2815 = vrot.slane %v2756, 4
  %v2818 = vadd.f32 %v2683, %v2814
  %v2819 = vadd.f32 %v2684, %v2815
  %v2820 = vxor.u32 %v2818, 2147483648
  %v2821 = vxor.u32 %v2819, 2147483648
  %v2822 = vmul.f32 %v2820, 1.442695
  %v2823 = vpow.pop %v2822
  %v2824 = vmul.f32 %v2821, 1.442695
  %v2825 = vpow.pop %v2824
  %v2826 = vadd.f32 %v2823, 1.0
  %v2827 = vadd.f32 %v2825, 1.0
  %v2828 = vrcp.pop %v2826
  %v2829 = vmul.f32 %v2826, %v2828
  %v2830 = vsub.f32 1.0, %v2829
  %v2831 = vmul.f32 %v2828, %v2830
  %v2832 = vadd.f32 %v2828, %v2831
  %vm2833 = vweird.f32 %v2826
  %vm2834 = vweird.f32 %v2828
  %vm2835 = vmor %vm2833, %vm2834
  %v2836 = vsel %vm2835, %v2828, %v2832
  %v2837 = vand.u32 2147483647, %v2826
  %vm2838 = vcmp.eq.f32.partialorder %v2837, 8.507059e+37
  %v2839 = vand.u32 %v2826, 2147483648
  %v2840 = vor.u32 1.1754944e-38, %v2839
  %v2841 = vsel %vm2838, %v2840, %v2836
  %v2842 = vmul.f32 1.0, %v2841
  %v2843 = vrcp.pop %v2827
  %v2844 = vmul.f32 %v2827, %v2843
  %v2845 = vsub.f32 1.0, %v2844
  %v2846 = vmul.f32 %v2843, %v2845
  %v2847 = vadd.f32 %v2843, %v2846
  %vm2848 = vweird.f32 %v2827
  %vm2849 = vweird.f32 %v2843
  %vm2850 = vmor %vm2848, %vm2849
  %v2851 = vsel %vm2850, %v2843, %v2847
  %v2852 = vand.u32 2147483647, %v2827
  %vm2853 = vcmp.eq.f32.partialorder %v2852, 8.507059e+37
  %v2854 = vand.u32 %v2827, 2147483648
  %v2855 = vor.u32 1.1754944e-38, %v2854
  %v2856 = vsel %vm2853, %v2855, %v2851
  %v2857 = vmul.f32 1.0, %v2856
  %v2858 = vadd.f32 %v2726, %v996
  %v2859 = vmul.f32 %v2796, %v2858
  %v2860 = vadd.f32 %v2682, %v2859
  %v2861 = vtanh.pop %v2860
  %v2862 = vadd.f32 %v2769, %v1003
  %v2864 = vrot.slane %v2862, 4
  %v2866 = vmul.f32 %v2842, %v2864
  %v2867 = vadd.f32 %v2685, %v2866
  %v2868 = vtanh.pop %v2867
  %v2870 = vrot.slane %v2861, 2
  %v2872 = vsub.f32 %v2651, %v2870
  %v2874 = vrot.slane %v2872, 6
  %v2876 = vmul.f32 %v2811, %v2874
  %v2877 = vadd.f32 %v2861, %v2876
  %v2879 = vrot.slane %v2868, 6
  %v2881 = vsub.f32 %v2660, %v2879
  %v2883 = vrot.slane %v2881, 2
  %v2885 = vmul.f32 %v2857, %v2883
  %v2886 = vadd.f32 %v2868, %v2885
  %2887 = vst [vmem:[#allocation3 + $0x20] sm:$0x3] %v2877
  %2888 = vst [vmem:[#allocation3 + $0x18] sm:$0x30] %v2886
  %v2889 = vld [vmem:[%s6 + $0x10] sm:$0x3]
  %v2890 = vld [vmem:[%s6 + $0xc] sm:$0x3]
  %vm2891 = vcmp.gt.f32.partialorder %v2889, 0.0
  %v2892 = vsel %vm2891, 1, 0
  %2893 = vset.pattern.permute.xlu0 0
  %2894 = vperm.xlu0 %2893, %v2892
  %v2895 = vpop.permute.xlu0 %2894
  %vm2896 = vcmp.eq.s32.totalorder %v2895, 1
  %v2897 = vsel %vm2896, %v2877, -1e+30
  %v2898 = vmax.f32 %v2674, %v2897
  %vm2899 = vcmp.gt.f32.partialorder %v2890, 0.0
  %v2900 = vsel %vm2899, 1, 0
  %2901 = vset.pattern.permute.xlu0 0
  %2902 = vperm.xlu0 %2901, %v2900
  %v2903 = vpop.permute.xlu0 %2902
  %vm2904 = vcmp.eq.s32.totalorder %v2903, 1
  %v2906 = vrot.slane %v2886, 4
  %v2908 = vsel %vm2904, %v2906, -1e+30
  %v2909 = vmax.f32 %v2679, %v2908
  %v2910 = vld [vmem:[#allocation2 + $0x60] sm:$0xc]
  %v2911 = vld [vmem:[#allocation2 + $0x68] sm:$0xc]
  %v2912 = vld [vmem:[#allocation2 + $0x70] sm:$0xc]
  %v2913 = vld [vmem:[#allocation2 + $0x48] sm:$0xc]
  %v2914 = vld [vmem:[#allocation2 + $0x50] sm:$0xc]
  %v2915 = vld [vmem:[#allocation2 + $0x58] sm:$0xc]
  %v2916 = vpack.c.bf16 %v2877, %v2877
  %2917 = vmatpush.bf16.msra.mxu0 %v676
  %2918 = vmatpush.bf16.msra.mxu0 %v673
  %2919 = vmatpush.bf16.msra.mxu0 %v670
  %2920 = vmatpush.bf16.msra.mxu0 %v667
  %2921 = vmatpush.bf16.msra.mxu0 %v664
  %2922 = vmatpush.bf16.msra.mxu0 %v661
  %2923 = vmatpush.bf16.msra.mxu0 %v658
  %2924 = vmatpush.bf16.msra.mxu0 %v655
  %2925 = vmatmul.bf16.gmra.mxu0 %v2916
  %v2926 = vpop.f32.mrf.mxu0
  %v2927 = vadd.f32 0.0, %v2926
  %v2928 = vpop.f32.mrf.mxu0
  %2929 = vdwg.mxu0
  %2930 = vmatpush.bf16.msra.mxu0 %v677
  %2931 = vmatpush.bf16.msra.mxu0 %v674
  %2932 = vmatpush.bf16.msra.mxu0 %v671
  %2933 = vmatpush.bf16.msra.mxu0 %v668
  %2934 = vmatpush.bf16.msra.mxu0 %v665
  %2935 = vmatpush.bf16.msra.mxu0 %v662
  %2936 = vmatpush.bf16.msra.mxu0 %v659
  %2937 = vmatpush.bf16.msra.mxu0 %v656
  %2938 = vmatmul.bf16.gmra.mxu0 %v2916
  %v2939 = vpop.f32.mrf.mxu0
  %v2940 = vadd.f32 0.0, %v2939
  %v2941 = vpop.f32.mrf.mxu0
  %2942 = vdwg.mxu0
  %2943 = vmatpush.bf16.msra.mxu0 %v678
  %2944 = vmatpush.bf16.msra.mxu0 %v675
  %2945 = vmatpush.bf16.msra.mxu0 %v672
  %2946 = vmatpush.bf16.msra.mxu0 %v669
  %2947 = vmatpush.bf16.msra.mxu0 %v666
  %2948 = vmatpush.bf16.msra.mxu0 %v663
  %2949 = vmatpush.bf16.msra.mxu0 %v660
  %2950 = vmatpush.bf16.msra.mxu0 %v657
  %2951 = vmatmul.bf16.gmra.mxu0 %v2916
  %v2952 = vpop.f32.mrf.mxu0
  %v2953 = vadd.f32 0.0, %v2952
  %v2954 = vpop.f32.mrf.mxu0
  %2955 = vdwg.mxu0
  %v2956 = vpack.c.bf16 %v2886, %v2886
  %v2958 = vrot.slane %v2956, 2
  %2960 = vmatpush.bf16.msra.mxu0 %v843
  %2961 = vmatpush.bf16.msra.mxu0 %v840
  %2962 = vmatpush.bf16.msra.mxu0 %v837
  %2963 = vmatpush.bf16.msra.mxu0 %v834
  %2964 = vmatpush.bf16.msra.mxu0 %v831
  %2965 = vmatpush.bf16.msra.mxu0 %v828
  %2966 = vmatpush.bf16.msra.mxu0 %v825
  %2967 = vmatpush.bf16.msra.mxu0 %v822
  %2968 = vmatmul.bf16.gmra.mxu0 %v2958
  %v2969 = vpop.f32.mrf.mxu0
  %v2970 = vadd.f32 0.0, %v2969
  %v2971 = vpop.f32.mrf.mxu0
  %2972 = vdwg.mxu0
  %2973 = vmatpush.bf16.msra.mxu0 %v844
  %2974 = vmatpush.bf16.msra.mxu0 %v841
  %2975 = vmatpush.bf16.msra.mxu0 %v838
  %2976 = vmatpush.bf16.msra.mxu0 %v835
  %2977 = vmatpush.bf16.msra.mxu0 %v832
  %2978 = vmatpush.bf16.msra.mxu0 %v829
  %2979 = vmatpush.bf16.msra.mxu0 %v826
  %2980 = vmatpush.bf16.msra.mxu0 %v823
  %2981 = vmatmul.bf16.gmra.mxu0 %v2958
  %v2982 = vpop.f32.mrf.mxu0
  %v2983 = vadd.f32 0.0, %v2982
  %v2984 = vpop.f32.mrf.mxu0
  %2985 = vdwg.mxu0
  %2986 = vmatpush.bf16.msra.mxu0 %v845
  %2987 = vmatpush.bf16.msra.mxu0 %v842
  %2988 = vmatpush.bf16.msra.mxu0 %v839
  %2989 = vmatpush.bf16.msra.mxu0 %v836
  %2990 = vmatpush.bf16.msra.mxu0 %v833
  %2991 = vmatpush.bf16.msra.mxu0 %v830
  %2992 = vmatpush.bf16.msra.mxu0 %v827
  %2993 = vmatpush.bf16.msra.mxu0 %v824
  %2994 = vmatmul.bf16.gmra.mxu0 %v2958
  %v2995 = vpop.f32.mrf.mxu0
  %v2996 = vadd.f32 0.0, %v2995
  %v2997 = vpop.f32.mrf.mxu0
  %2998 = vdwg.mxu0
  %v3001 = vrot.slane %v2927, 6
  %v3002 = vrot.slane %v2940, 6
  %v3005 = vadd.f32 %v2910, %v3001
  %v3006 = vadd.f32 %v2911, %v3002
  %v3007 = vxor.u32 %v3005, 2147483648
  %v3008 = vxor.u32 %v3006, 2147483648
  %v3009 = vmul.f32 %v3007, 1.442695
  %v3010 = vpow.pop %v3009
  %v3011 = vmul.f32 %v3008, 1.442695
  %v3012 = vpow.pop %v3011
  %v3013 = vadd.f32 %v3010, 1.0
  %v3014 = vadd.f32 %v3012, 1.0
  %v3015 = vrcp.pop %v3013
  %v3016 = vmul.f32 %v3013, %v3015
  %v3017 = vsub.f32 1.0, %v3016
  %v3018 = vmul.f32 %v3015, %v3017
  %v3019 = vadd.f32 %v3015, %v3018
  %vm3020 = vweird.f32 %v3013
  %vm3021 = vweird.f32 %v3015
  %vm3022 = vmor %vm3020, %vm3021
  %v3023 = vsel %vm3022, %v3015, %v3019
  %v3024 = vand.u32 2147483647, %v3013
  %vm3025 = vcmp.eq.f32.partialorder %v3024, 8.507059e+37
  %v3026 = vand.u32 %v3013, 2147483648
  %v3027 = vor.u32 1.1754944e-38, %v3026
  %v3028 = vsel %vm3025, %v3027, %v3023
  %v3029 = vmul.f32 1.0, %v3028
  %v3030 = vrcp.pop %v3014
  %v3031 = vmul.f32 %v3014, %v3030
  %v3032 = vsub.f32 1.0, %v3031
  %v3033 = vmul.f32 %v3030, %v3032
  %v3034 = vadd.f32 %v3030, %v3033
  %vm3035 = vweird.f32 %v3014
  %vm3036 = vweird.f32 %v3030
  %vm3037 = vmor %vm3035, %vm3036
  %v3038 = vsel %vm3037, %v3030, %v3034
  %v3039 = vand.u32 2147483647, %v3014
  %vm3040 = vcmp.eq.f32.partialorder %v3039, 8.507059e+37
  %v3041 = vand.u32 %v3014, 2147483648
  %v3042 = vor.u32 1.1754944e-38, %v3041
  %v3043 = vsel %vm3040, %v3042, %v3038
  %v3044 = vmul.f32 1.0, %v3043
  %v3047 = vrot.slane %v2970, 6
  %v3048 = vrot.slane %v2983, 6
  %v3051 = vadd.f32 %v2913, %v3047
  %v3052 = vadd.f32 %v2914, %v3048
  %v3053 = vxor.u32 %v3051, 2147483648
  %v3054 = vxor.u32 %v3052, 2147483648
  %v3055 = vmul.f32 %v3053, 1.442695
  %v3056 = vpow.pop %v3055
  %v3057 = vmul.f32 %v3054, 1.442695
  %v3058 = vpow.pop %v3057
  %v3059 = vadd.f32 %v3056, 1.0
  %v3060 = vadd.f32 %v3058, 1.0
  %v3061 = vrcp.pop %v3059
  %v3062 = vmul.f32 %v3059, %v3061
  %v3063 = vsub.f32 1.0, %v3062
  %v3064 = vmul.f32 %v3061, %v3063
  %v3065 = vadd.f32 %v3061, %v3064
  %vm3066 = vweird.f32 %v3059
  %vm3067 = vweird.f32 %v3061
  %vm3068 = vmor %vm3066, %vm3067
  %v3069 = vsel %vm3068, %v3061, %v3065
  %v3070 = vand.u32 2147483647, %v3059
  %vm3071 = vcmp.eq.f32.partialorder %v3070, 8.507059e+37
  %v3072 = vand.u32 %v3059, 2147483648
  %v3073 = vor.u32 1.1754944e-38, %v3072
  %v3074 = vsel %vm3071, %v3073, %v3069
  %v3075 = vmul.f32 1.0, %v3074
  %v3076 = vrcp.pop %v3060
  %v3077 = vmul.f32 %v3060, %v3076
  %v3078 = vsub.f32 1.0, %v3077
  %v3079 = vmul.f32 %v3076, %v3078
  %v3080 = vadd.f32 %v3076, %v3079
  %vm3081 = vweird.f32 %v3060
  %vm3082 = vweird.f32 %v3076
  %vm3083 = vmor %vm3081, %vm3082
  %v3084 = vsel %vm3083, %v3076, %v3080
  %v3085 = vand.u32 2147483647, %v3060
  %vm3086 = vcmp.eq.f32.partialorder %v3085, 8.507059e+37
  %v3087 = vand.u32 %v3060, 2147483648
  %v3088 = vor.u32 1.1754944e-38, %v3087
  %v3089 = vsel %vm3086, %v3088, %v3084
  %v3090 = vmul.f32 1.0, %v3089
  %v3091 = vadd.f32 %v2953, %v996
  %v3093 = vrot.slane %v3091, 6
  %v3095 = vmul.f32 %v3029, %v3093
  %v3096 = vadd.f32 %v2912, %v3095
  %v3097 = vtanh.pop %v3096
  %v3098 = vadd.f32 %v2996, %v1003
  %v3100 = vrot.slane %v3098, 6
  %v3102 = vmul.f32 %v3075, %v3100
  %v3103 = vadd.f32 %v2915, %v3102
  %v3104 = vtanh.pop %v3103
  %v3106 = vrot.slane %v3097, 2
  %v3108 = vsub.f32 %v2877, %v3106
  %v3110 = vrot.slane %v3108, 6
  %v3112 = vmul.f32 %v3044, %v3110
  %v3113 = vadd.f32 %v3097, %v3112
  %v3115 = vrot.slane %v3104, 6
  %v3117 = vsub.f32 %v2886, %v3115
  %v3119 = vrot.slane %v3117, 2
  %v3121 = vmul.f32 %v3090, %v3119
  %v3122 = vadd.f32 %v3104, %v3121
  %3123 = vst [vmem:[#allocation3 + $0x20] sm:$0xc] %v3113
  %3124 = vst [vmem:[#allocation3 + $0x18] sm:$0xc] %v3122
  %v3125 = vld [vmem:[%s6 + $0x12] sm:$0x3]
  %v3126 = vld [vmem:[%s6 + $0xa] sm:$0x3]
  %vm3127 = vcmp.gt.f32.partialorder %v3125, 0.0
  %v3128 = vsel %vm3127, 1, 0
  %3129 = vset.pattern.permute.xlu0 0
  %3130 = vperm.xlu0 %3129, %v3128
  %v3131 = vpop.permute.xlu0 %3130
  %vm3132 = vcmp.eq.s32.totalorder %v3131, 1
  %v3134 = vrot.slane %v3113, 2
  %v3136 = vsel %vm3132, %v3134, -1e+30
  %v3137 = vmax.f32 %v2898, %v3136
  %vm3138 = vcmp.gt.f32.partialorder %v3126, 0.0
  %v3139 = vsel %vm3138, 1, 0
  %3140 = vset.pattern.permute.xlu0 0
  %3141 = vperm.xlu0 %3140, %v3139
  %v3142 = vpop.permute.xlu0 %3141
  %vm3143 = vcmp.eq.s32.totalorder %v3142, 1
  %v3145 = vrot.slane %v3122, 2
  %v3147 = vsel %vm3143, %v3145, -1e+30
  %v3148 = vmax.f32 %v2909, %v3147
  %v3149 = vld [vmem:[#allocation2 + $0x60] sm:$0x30]
  %v3150 = vld [vmem:[#allocation2 + $0x68] sm:$0x30]
  %v3151 = vld [vmem:[#allocation2 + $0x70] sm:$0x30]
  %v3152 = vld [vmem:[#allocation2 + $0x48] sm:$0x3]
  %v3153 = vld [vmem:[#allocation2 + $0x50] sm:$0x3]
  %v3154 = vld [vmem:[#allocation2 + $0x58] sm:$0x3]
  %v3155 = vpack.c.bf16 %v3113, %v3113
  %v3157 = vrot.slane %v3155, 1
  %3159 = vmatpush.bf16.msra.mxu0 %v676
  %3160 = vmatpush.bf16.msra.mxu0 %v673
  %3161 = vmatpush.bf16.msra.mxu0 %v670
  %3162 = vmatpush.bf16.msra.mxu0 %v667
  %3163 = vmatpush.bf16.msra.mxu0 %v664
  %3164 = vmatpush.bf16.msra.mxu0 %v661
  %3165 = vmatpush.bf16.msra.mxu0 %v658
  %3166 = vmatpush.bf16.msra.mxu0 %v655
  %3167 = vmatmul.bf16.gmra.mxu0 %v3157
  %v3168 = vpop.f32.mrf.mxu0
  %v3169 = vadd.f32 0.0, %v3168
  %v3170 = vpop.f32.mrf.mxu0
  %3171 = vdwg.mxu0
  %3172 = vmatpush.bf16.msra.mxu0 %v677
  %3173 = vmatpush.bf16.msra.mxu0 %v674
  %3174 = vmatpush.bf16.msra.mxu0 %v671
  %3175 = vmatpush.bf16.msra.mxu0 %v668
  %3176 = vmatpush.bf16.msra.mxu0 %v665
  %3177 = vmatpush.bf16.msra.mxu0 %v662
  %3178 = vmatpush.bf16.msra.mxu0 %v659
  %3179 = vmatpush.bf16.msra.mxu0 %v656
  %3180 = vmatmul.bf16.gmra.mxu0 %v3157
  %v3181 = vpop.f32.mrf.mxu0
  %v3182 = vadd.f32 0.0, %v3181
  %v3183 = vpop.f32.mrf.mxu0
  %3184 = vdwg.mxu0
  %3185 = vmatpush.bf16.msra.mxu0 %v678
  %3186 = vmatpush.bf16.msra.mxu0 %v675
  %3187 = vmatpush.bf16.msra.mxu0 %v672
  %3188 = vmatpush.bf16.msra.mxu0 %v669
  %3189 = vmatpush.bf16.msra.mxu0 %v666
  %3190 = vmatpush.bf16.msra.mxu0 %v663
  %3191 = vmatpush.bf16.msra.mxu0 %v660
  %3192 = vmatpush.bf16.msra.mxu0 %v657
  %3193 = vmatmul.bf16.gmra.mxu0 %v3157
  %v3194 = vpop.f32.mrf.mxu0
  %v3195 = vadd.f32 0.0, %v3194
  %v3196 = vpop.f32.mrf.mxu0
  %3197 = vdwg.mxu0
  %v3198 = vpack.c.bf16 %v3122, %v3122
  %v3200 = vrot.slane %v3198, 1
  %3202 = vmatpush.bf16.msra.mxu0 %v843
  %3203 = vmatpush.bf16.msra.mxu0 %v840
  %3204 = vmatpush.bf16.msra.mxu0 %v837
  %3205 = vmatpush.bf16.msra.mxu0 %v834
  %3206 = vmatpush.bf16.msra.mxu0 %v831
  %3207 = vmatpush.bf16.msra.mxu0 %v828
  %3208 = vmatpush.bf16.msra.mxu0 %v825
  %3209 = vmatpush.bf16.msra.mxu0 %v822
  %3210 = vmatmul.bf16.gmra.mxu0 %v3200
  %v3211 = vpop.f32.mrf.mxu0
  %v3212 = vadd.f32 0.0, %v3211
  %v3213 = vpop.f32.mrf.mxu0
  %3214 = vdwg.mxu0
  %3215 = vmatpush.bf16.msra.mxu0 %v844
  %3216 = vmatpush.bf16.msra.mxu0 %v841
  %3217 = vmatpush.bf16.msra.mxu0 %v838
  %3218 = vmatpush.bf16.msra.mxu0 %v835
  %3219 = vmatpush.bf16.msra.mxu0 %v832
  %3220 = vmatpush.bf16.msra.mxu0 %v829
  %3221 = vmatpush.bf16.msra.mxu0 %v826
  %3222 = vmatpush.bf16.msra.mxu0 %v823
  %3223 = vmatmul.bf16.gmra.mxu0 %v3200
  %v3224 = vpop.f32.mrf.mxu0
  %v3225 = vadd.f32 0.0, %v3224
  %v3226 = vpop.f32.mrf.mxu0
  %3227 = vdwg.mxu0
  %3228 = vmatpush.bf16.msra.mxu0 %v845
  %3229 = vmatpush.bf16.msra.mxu0 %v842
  %3230 = vmatpush.bf16.msra.mxu0 %v839
  %3231 = vmatpush.bf16.msra.mxu0 %v836
  %3232 = vmatpush.bf16.msra.mxu0 %v833
  %3233 = vmatpush.bf16.msra.mxu0 %v830
  %3234 = vmatpush.bf16.msra.mxu0 %v827
  %3235 = vmatpush.bf16.msra.mxu0 %v824
  %3236 = vmatmul.bf16.gmra.mxu0 %v3200
  %v3237 = vpop.f32.mrf.mxu0
  %v3238 = vadd.f32 0.0, %v3237
  %v3239 = vpop.f32.mrf.mxu0
  %3240 = vdwg.mxu0
  %v3243 = vrot.slane %v3169, 4
  %v3244 = vrot.slane %v3182, 4
  %v3247 = vadd.f32 %v3149, %v3243
  %v3248 = vadd.f32 %v3150, %v3244
  %v3249 = vxor.u32 %v3247, 2147483648
  %v3250 = vxor.u32 %v3248, 2147483648
  %v3251 = vmul.f32 %v3249, 1.442695
  %v3252 = vpow.pop %v3251
  %v3253 = vmul.f32 %v3250, 1.442695
  %v3254 = vpow.pop %v3253
  %v3255 = vadd.f32 %v3252, 1.0
  %v3256 = vadd.f32 %v3254, 1.0
  %v3257 = vrcp.pop %v3255
  %v3258 = vmul.f32 %v3255, %v3257
  %v3259 = vsub.f32 1.0, %v3258
  %v3260 = vmul.f32 %v3257, %v3259
  %v3261 = vadd.f32 %v3257, %v3260
  %vm3262 = vweird.f32 %v3255
  %vm3263 = vweird.f32 %v3257
  %vm3264 = vmor %vm3262, %vm3263
  %v3265 = vsel %vm3264, %v3257, %v3261
  %v3266 = vand.u32 2147483647, %v3255
  %vm3267 = vcmp.eq.f32.partialorder %v3266, 8.507059e+37
  %v3268 = vand.u32 %v3255, 2147483648
  %v3269 = vor.u32 1.1754944e-38, %v3268
  %v3270 = vsel %vm3267, %v3269, %v3265
  %v3271 = vmul.f32 1.0, %v3270
  %v3272 = vrcp.pop %v3256
  %v3273 = vmul.f32 %v3256, %v3272
  %v3274 = vsub.f32 1.0, %v3273
  %v3275 = vmul.f32 %v3272, %v3274
  %v3276 = vadd.f32 %v3272, %v3275
  %vm3277 = vweird.f32 %v3256
  %vm3278 = vweird.f32 %v3272
  %vm3279 = vmor %vm3277, %vm3278
  %v3280 = vsel %vm3279, %v3272, %v3276
  %v3281 = vand.u32 2147483647, %v3256
  %vm3282 = vcmp.eq.f32.partialorder %v3281, 8.507059e+37
  %v3283 = vand.u32 %v3256, 2147483648
  %v3284 = vor.u32 1.1754944e-38, %v3283
  %v3285 = vsel %vm3282, %v3284, %v3280
  %v3286 = vmul.f32 1.0, %v3285
  %v3287 = vadd.f32 %v3152, %v3212
  %v3288 = vadd.f32 %v3153, %v3225
  %v3289 = vxor.u32 %v3287, 2147483648
  %v3290 = vxor.u32 %v3288, 2147483648
  %v3291 = vmul.f32 %v3289, 1.442695
  %v3292 = vpow.pop %v3291
  %v3293 = vmul.f32 %v3290, 1.442695
  %v3294 = vpow.pop %v3293
  %v3295 = vadd.f32 %v3292, 1.0
  %v3296 = vadd.f32 %v3294, 1.0
  %v3297 = vrcp.pop %v3295
  %v3298 = vmul.f32 %v3295, %v3297
  %v3299 = vsub.f32 1.0, %v3298
  %v3300 = vmul.f32 %v3297, %v3299
  %v3301 = vadd.f32 %v3297, %v3300
  %vm3302 = vweird.f32 %v3295
  %vm3303 = vweird.f32 %v3297
  %vm3304 = vmor %vm3302, %vm3303
  %v3305 = vsel %vm3304, %v3297, %v3301
  %v3306 = vand.u32 2147483647, %v3295
  %vm3307 = vcmp.eq.f32.partialorder %v3306, 8.507059e+37
  %v3308 = vand.u32 %v3295, 2147483648
  %v3309 = vor.u32 1.1754944e-38, %v3308
  %v3310 = vsel %vm3307, %v3309, %v3305
  %v3311 = vmul.f32 1.0, %v3310
  %v3312 = vrcp.pop %v3296
  %v3313 = vmul.f32 %v3296, %v3312
  %v3314 = vsub.f32 1.0, %v3313
  %v3315 = vmul.f32 %v3312, %v3314
  %v3316 = vadd.f32 %v3312, %v3315
  %vm3317 = vweird.f32 %v3296
  %vm3318 = vweird.f32 %v3312
  %vm3319 = vmor %vm3317, %vm3318
  %v3320 = vsel %vm3319, %v3312, %v3316
  %v3321 = vand.u32 2147483647, %v3296
  %vm3322 = vcmp.eq.f32.partialorder %v3321, 8.507059e+37
  %v3323 = vand.u32 %v3296, 2147483648
  %v3324 = vor.u32 1.1754944e-38, %v3323
  %v3325 = vsel %vm3322, %v3324, %v3320
  %v3326 = vmul.f32 1.0, %v3325
  %v3327 = vadd.f32 %v3195, %v996
  %v3329 = vrot.slane %v3327, 4
  %v3331 = vmul.f32 %v3271, %v3329
  %v3332 = vadd.f32 %v3151, %v3331
  %v3333 = vtanh.pop %v3332
  %v3334 = vadd.f32 %v3238, %v1003
  %v3335 = vmul.f32 %v3311, %v3334
  %v3336 = vadd.f32 %v3154, %v3335
  %v3337 = vtanh.pop %v3336
  %v3339 = vrot.slane %v3333, 2
  %v3341 = vsub.f32 %v3113, %v3339
  %v3343 = vrot.slane %v3341, 6
  %v3345 = vmul.f32 %v3286, %v3343
  %v3346 = vadd.f32 %v3333, %v3345
  %v3348 = vrot.slane %v3337, 6
  %v3350 = vsub.f32 %v3122, %v3348
  %v3352 = vrot.slane %v3350, 2
  %v3354 = vmul.f32 %v3326, %v3352
  %v3355 = vadd.f32 %v3337, %v3354
  %3356 = vst [vmem:[#allocation3 + $0x20] sm:$0x30] %v3346
  %3357 = vst [vmem:[#allocation3 + $0x18] sm:$0x3] %v3355
  %v3358 = vld [vmem:[%s6 + $0x14] sm:$0x3]
  %v3359 = vld [vmem:[%s6 + $0x8] sm:$0x3]
  %vm3360 = vcmp.gt.f32.partialorder %v3358, 0.0
  %v3361 = vsel %vm3360, 1, 0
  %3362 = vset.pattern.permute.xlu0 0
  %3363 = vperm.xlu0 %3362, %v3361
  %v3364 = vpop.permute.xlu0 %3363
  %vm3365 = vcmp.eq.s32.totalorder %v3364, 1
  %v3367 = vrot.slane %v3346, 4
  %v3369 = vsel %vm3365, %v3367, -1e+30
  %v3370 = vmax.f32 %v3137, %v3369
  %vm3371 = vcmp.gt.f32.partialorder %v3359, 0.0
  %v3372 = vsel %vm3371, 1, 0
  %3373 = vset.pattern.permute.xlu0 0
  %3374 = vperm.xlu0 %3373, %v3372
  %v3375 = vpop.permute.xlu0 %3374
  %vm3376 = vcmp.eq.s32.totalorder %v3375, 1
  %v3377 = vsel %vm3376, %v3355, -1e+30
  %v3378 = vmax.f32 %v3148, %v3377
  %v3379 = vld [vmem:[#allocation2 + $0x60] sm:$0xc0]
  %v3380 = vld [vmem:[#allocation2 + $0x68] sm:$0xc0]
  %v3381 = vld [vmem:[#allocation2 + $0x70] sm:$0xc0]
  %v3382 = vld [vmem:[#allocation2 + $0x18] sm:$0xc0]
  %v3383 = vld [vmem:[#allocation2 + $0x20] sm:$0xc0]
  %v3384 = vld [vmem:[#allocation2 + $0x28] sm:$0xc0]
  %v3385 = vpack.c.bf16 %v3346, %v3346
  %v3387 = vrot.slane %v3385, 2
  %3389 = vmatpush.bf16.msra.mxu0 %v676
  %3390 = vmatpush.bf16.msra.mxu0 %v673
  %3391 = vmatpush.bf16.msra.mxu0 %v670
  %3392 = vmatpush.bf16.msra.mxu0 %v667
  %3393 = vmatpush.bf16.msra.mxu0 %v664
  %3394 = vmatpush.bf16.msra.mxu0 %v661
  %3395 = vmatpush.bf16.msra.mxu0 %v658
  %3396 = vmatpush.bf16.msra.mxu0 %v655
  %3397 = vmatmul.bf16.gmra.mxu0 %v3387
  %v3398 = vpop.f32.mrf.mxu0
  %v3399 = vadd.f32 0.0, %v3398
  %v3400 = vpop.f32.mrf.mxu0
  %3401 = vdwg.mxu0
  %3402 = vmatpush.bf16.msra.mxu0 %v677
  %3403 = vmatpush.bf16.msra.mxu0 %v674
  %3404 = vmatpush.bf16.msra.mxu0 %v671
  %3405 = vmatpush.bf16.msra.mxu0 %v668
  %3406 = vmatpush.bf16.msra.mxu0 %v665
  %3407 = vmatpush.bf16.msra.mxu0 %v662
  %3408 = vmatpush.bf16.msra.mxu0 %v659
  %3409 = vmatpush.bf16.msra.mxu0 %v656
  %3410 = vmatmul.bf16.gmra.mxu0 %v3387
  %v3411 = vpop.f32.mrf.mxu0
  %v3412 = vadd.f32 0.0, %v3411
  %v3413 = vpop.f32.mrf.mxu0
  %3414 = vdwg.mxu0
  %3415 = vmatpush.bf16.msra.mxu0 %v678
  %3416 = vmatpush.bf16.msra.mxu0 %v675
  %3417 = vmatpush.bf16.msra.mxu0 %v672
  %3418 = vmatpush.bf16.msra.mxu0 %v669
  %3419 = vmatpush.bf16.msra.mxu0 %v666
  %3420 = vmatpush.bf16.msra.mxu0 %v663
  %3421 = vmatpush.bf16.msra.mxu0 %v660
  %3422 = vmatpush.bf16.msra.mxu0 %v657
  %3423 = vmatmul.bf16.gmra.mxu0 %v3387
  %v3424 = vpop.f32.mrf.mxu0
  %v3425 = vadd.f32 0.0, %v3424
  %v3426 = vpop.f32.mrf.mxu0
  %3427 = vdwg.mxu0
  %v3428 = vpack.c.bf16 %v3355, %v3355
  %3429 = vmatpush.bf16.msra.mxu0 %v843
  %3430 = vmatpush.bf16.msra.mxu0 %v840
  %3431 = vmatpush.bf16.msra.mxu0 %v837
  %3432 = vmatpush.bf16.msra.mxu0 %v834
  %3433 = vmatpush.bf16.msra.mxu0 %v831
  %3434 = vmatpush.bf16.msra.mxu0 %v828
  %3435 = vmatpush.bf16.msra.mxu0 %v825
  %3436 = vmatpush.bf16.msra.mxu0 %v822
  %3437 = vmatmul.bf16.gmra.mxu0 %v3428
  %v3438 = vpop.f32.mrf.mxu0
  %v3439 = vadd.f32 0.0, %v3438
  %v3440 = vpop.f32.mrf.mxu0
  %3441 = vdwg.mxu0
  %3442 = vmatpush.bf16.msra.mxu0 %v844
  %3443 = vmatpush.bf16.msra.mxu0 %v841
  %3444 = vmatpush.bf16.msra.mxu0 %v838
  %3445 = vmatpush.bf16.msra.mxu0 %v835
  %3446 = vmatpush.bf16.msra.mxu0 %v832
  %3447 = vmatpush.bf16.msra.mxu0 %v829
  %3448 = vmatpush.bf16.msra.mxu0 %v826
  %3449 = vmatpush.bf16.msra.mxu0 %v823
  %3450 = vmatmul.bf16.gmra.mxu0 %v3428
  %v3451 = vpop.f32.mrf.mxu0
  %v3452 = vadd.f32 0.0, %v3451
  %v3453 = vpop.f32.mrf.mxu0
  %3454 = vdwg.mxu0
  %3455 = vmatpush.bf16.msra.mxu0 %v845
  %3456 = vmatpush.bf16.msra.mxu0 %v842
  %3457 = vmatpush.bf16.msra.mxu0 %v839
  %3458 = vmatpush.bf16.msra.mxu0 %v836
  %3459 = vmatpush.bf16.msra.mxu0 %v833
  %3460 = vmatpush.bf16.msra.mxu0 %v830
  %3461 = vmatpush.bf16.msra.mxu0 %v827
  %3462 = vmatpush.bf16.msra.mxu0 %v824
  %3463 = vmatmul.bf16.gmra.mxu0 %v3428
  %v3464 = vpop.f32.mrf.mxu0
  %v3465 = vadd.f32 0.0, %v3464
  %v3466 = vpop.f32.mrf.mxu0
  %3467 = vdwg.mxu0
  %v3470 = vrot.slane %v3399, 2
  %v3471 = vrot.slane %v3412, 2
  %v3474 = vadd.f32 %v3379, %v3470
  %v3475 = vadd.f32 %v3380, %v3471
  %v3476 = vxor.u32 %v3474, 2147483648
  %v3477 = vxor.u32 %v3475, 2147483648
  %v3478 = vmul.f32 %v3476, 1.442695
  %v3479 = vpow.pop %v3478
  %v3480 = vmul.f32 %v3477, 1.442695
  %v3481 = vpow.pop %v3480
  %v3482 = vadd.f32 %v3479, 1.0
  %v3483 = vadd.f32 %v3481, 1.0
  %v3484 = vrcp.pop %v3482
  %v3485 = vmul.f32 %v3482, %v3484
  %v3486 = vsub.f32 1.0, %v3485
  %v3487 = vmul.f32 %v3484, %v3486
  %v3488 = vadd.f32 %v3484, %v3487
  %vm3489 = vweird.f32 %v3482
  %vm3490 = vweird.f32 %v3484
  %vm3491 = vmor %vm3489, %vm3490
  %v3492 = vsel %vm3491, %v3484, %v3488
  %v3493 = vand.u32 2147483647, %v3482
  %vm3494 = vcmp.eq.f32.partialorder %v3493, 8.507059e+37
  %v3495 = vand.u32 %v3482, 2147483648
  %v3496 = vor.u32 1.1754944e-38, %v3495
  %v3497 = vsel %vm3494, %v3496, %v3492
  %v3498 = vmul.f32 1.0, %v3497
  %v3499 = vrcp.pop %v3483
  %v3500 = vmul.f32 %v3483, %v3499
  %v3501 = vsub.f32 1.0, %v3500
  %v3502 = vmul.f32 %v3499, %v3501
  %v3503 = vadd.f32 %v3499, %v3502
  %vm3504 = vweird.f32 %v3483
  %vm3505 = vweird.f32 %v3499
  %vm3506 = vmor %vm3504, %vm3505
  %v3507 = vsel %vm3506, %v3499, %v3503
  %v3508 = vand.u32 2147483647, %v3483
  %vm3509 = vcmp.eq.f32.partialorder %v3508, 8.507059e+37
  %v3510 = vand.u32 %v3483, 2147483648
  %v3511 = vor.u32 1.1754944e-38, %v3510
  %v3512 = vsel %vm3509, %v3511, %v3507
  %v3513 = vmul.f32 1.0, %v3512
  %v3516 = vrot.slane %v3439, 2
  %v3517 = vrot.slane %v3452, 2
  %v3520 = vadd.f32 %v3382, %v3516
  %v3521 = vadd.f32 %v3383, %v3517
  %v3522 = vxor.u32 %v3520, 2147483648
  %v3523 = vxor.u32 %v3521, 2147483648
  %v3524 = vmul.f32 %v3522, 1.442695
  %v3525 = vpow.pop %v3524
  %v3526 = vmul.f32 %v3523, 1.442695
  %v3527 = vpow.pop %v3526
  %v3528 = vadd.f32 %v3525, 1.0
  %v3529 = vadd.f32 %v3527, 1.0
  %v3530 = vrcp.pop %v3528
  %v3531 = vmul.f32 %v3528, %v3530
  %v3532 = vsub.f32 1.0, %v3531
  %v3533 = vmul.f32 %v3530, %v3532
  %v3534 = vadd.f32 %v3530, %v3533
  %vm3535 = vweird.f32 %v3528
  %vm3536 = vweird.f32 %v3530
  %vm3537 = vmor %vm3535, %vm3536
  %v3538 = vsel %vm3537, %v3530, %v3534
  %v3539 = vand.u32 2147483647, %v3528
  %vm3540 = vcmp.eq.f32.partialorder %v3539, 8.507059e+37
  %v3541 = vand.u32 %v3528, 2147483648
  %v3542 = vor.u32 1.1754944e-38, %v3541
  %v3543 = vsel %vm3540, %v3542, %v3538
  %v3544 = vmul.f32 1.0, %v3543
  %v3545 = vrcp.pop %v3529
  %v3546 = vmul.f32 %v3529, %v3545
  %v3547 = vsub.f32 1.0, %v3546
  %v3548 = vmul.f32 %v3545, %v3547
  %v3549 = vadd.f32 %v3545, %v3548
  %vm3550 = vweird.f32 %v3529
  %vm3551 = vweird.f32 %v3545
  %vm3552 = vmor %vm3550, %vm3551
  %v3553 = vsel %vm3552, %v3545, %v3549
  %v3554 = vand.u32 2147483647, %v3529
  %vm3555 = vcmp.eq.f32.partialorder %v3554, 8.507059e+37
  %v3556 = vand.u32 %v3529, 2147483648
  %v3557 = vor.u32 1.1754944e-38, %v3556
  %v3558 = vsel %vm3555, %v3557, %v3553
  %v3559 = vmul.f32 1.0, %v3558
  %v3560 = vadd.f32 %v3425, %v996
  %v3562 = vrot.slane %v3560, 2
  %v3564 = vmul.f32 %v3498, %v3562
  %v3565 = vadd.f32 %v3381, %v3564
  %v3566 = vtanh.pop %v3565
  %v3567 = vadd.f32 %v3465, %v1003
  %v3569 = vrot.slane %v3567, 2
  %v3571 = vmul.f32 %v3544, %v3569
  %v3572 = vadd.f32 %v3384, %v3571
  %v3573 = vtanh.pop %v3572
  %v3575 = vrot.slane %v3566, 2
  %v3577 = vsub.f32 %v3346, %v3575
  %v3579 = vrot.slane %v3577, 6
  %v3581 = vmul.f32 %v3513, %v3579
  %v3582 = vadd.f32 %v3566, %v3581
  %v3584 = vrot.slane %v3573, 6
  %v3586 = vsub.f32 %v3355, %v3584
  %v3588 = vrot.slane %v3586, 2
  %v3590 = vmul.f32 %v3559, %v3588
  %v3591 = vadd.f32 %v3573, %v3590
  %3592 = vst [vmem:[#allocation3 + $0x20] sm:$0xc0] %v3582
  %3593 = vst [vmem:[#allocation3 + $0x8] sm:$0xc0] %v3591
  %v3594 = vld [vmem:[%s6 + $0x16] sm:$0x3]
  %v3595 = vld [vmem:[%s6 + $0x6] sm:$0x3]
  %vm3596 = vcmp.gt.f32.partialorder %v3594, 0.0
  %v3597 = vsel %vm3596, 1, 0
  %3598 = vset.pattern.permute.xlu0 0
  %3599 = vperm.xlu0 %3598, %v3597
  %v3600 = vpop.permute.xlu0 %3599
  %vm3601 = vcmp.eq.s32.totalorder %v3600, 1
  %v3603 = vrot.slane %v3582, 6
  %v3605 = vsel %vm3601, %v3603, -1e+30
  %v3606 = vmax.f32 %v3370, %v3605
  %vm3607 = vcmp.gt.f32.partialorder %v3595, 0.0
  %v3608 = vsel %vm3607, 1, 0
  %3609 = vset.pattern.permute.xlu0 0
  %3610 = vperm.xlu0 %3609, %v3608
  %v3611 = vpop.permute.xlu0 %3610
  %vm3612 = vcmp.eq.s32.totalorder %v3611, 1
  %v3614 = vrot.slane %v3591, 6
  %v3616 = vsel %vm3612, %v3614, -1e+30
  %v3617 = vmax.f32 %v3378, %v3616
  %v3618 = vld [vmem:[#allocation2 + $0x90] sm:$0x3]
  %v3619 = vld [vmem:[#allocation2 + $0x98] sm:$0x3]
  %v3620 = vld [vmem:[#allocation2 + $0xa0] sm:$0x3]
  %v3621 = vld [vmem:[#allocation2 + $0x18] sm:$0x30]
  %v3622 = vld [vmem:[#allocation2 + $0x20] sm:$0x30]
  %v3623 = vld [vmem:[#allocation2 + $0x28] sm:$0x30]
  %v3624 = vpack.c.bf16 %v3582, %v3582
  %v3626 = vrot.slane %v3624, 3
  %3628 = vmatpush.bf16.msra.mxu0 %v676
  %3629 = vmatpush.bf16.msra.mxu0 %v673
  %3630 = vmatpush.bf16.msra.mxu0 %v670
  %3631 = vmatpush.bf16.msra.mxu0 %v667
  %3632 = vmatpush.bf16.msra.mxu0 %v664
  %3633 = vmatpush.bf16.msra.mxu0 %v661
  %3634 = vmatpush.bf16.msra.mxu0 %v658
  %3635 = vmatpush.bf16.msra.mxu0 %v655
  %3636 = vmatmul.bf16.gmra.mxu0 %v3626
  %v3637 = vpop.f32.mrf.mxu0
  %v3638 = vadd.f32 0.0, %v3637
  %v3639 = vpop.f32.mrf.mxu0
  %3640 = vdwg.mxu0
  %3641 = vmatpush.bf16.msra.mxu0 %v677
  %3642 = vmatpush.bf16.msra.mxu0 %v674
  %3643 = vmatpush.bf16.msra.mxu0 %v671
  %3644 = vmatpush.bf16.msra.mxu0 %v668
  %3645 = vmatpush.bf16.msra.mxu0 %v665
  %3646 = vmatpush.bf16.msra.mxu0 %v662
  %3647 = vmatpush.bf16.msra.mxu0 %v659
  %3648 = vmatpush.bf16.msra.mxu0 %v656
  %3649 = vmatmul.bf16.gmra.mxu0 %v3626
  %v3650 = vpop.f32.mrf.mxu0
  %v3651 = vadd.f32 0.0, %v3650
  %v3652 = vpop.f32.mrf.mxu0
  %3653 = vdwg.mxu0
  %3654 = vmatpush.bf16.msra.mxu0 %v678
  %3655 = vmatpush.bf16.msra.mxu0 %v675
  %3656 = vmatpush.bf16.msra.mxu0 %v672
  %3657 = vmatpush.bf16.msra.mxu0 %v669
  %3658 = vmatpush.bf16.msra.mxu0 %v666
  %3659 = vmatpush.bf16.msra.mxu0 %v663
  %3660 = vmatpush.bf16.msra.mxu0 %v660
  %3661 = vmatpush.bf16.msra.mxu0 %v657
  %3662 = vmatmul.bf16.gmra.mxu0 %v3626
  %v3663 = vpop.f32.mrf.mxu0
  %v3664 = vadd.f32 0.0, %v3663
  %v3665 = vpop.f32.mrf.mxu0
  %3666 = vdwg.mxu0
  %v3667 = vpack.c.bf16 %v3591, %v3591
  %v3669 = vrot.slane %v3667, 3
  %3671 = vmatpush.bf16.msra.mxu0 %v843
  %3672 = vmatpush.bf16.msra.mxu0 %v840
  %3673 = vmatpush.bf16.msra.mxu0 %v837
  %3674 = vmatpush.bf16.msra.mxu0 %v834
  %3675 = vmatpush.bf16.msra.mxu0 %v831
  %3676 = vmatpush.bf16.msra.mxu0 %v828
  %3677 = vmatpush.bf16.msra.mxu0 %v825
  %3678 = vmatpush.bf16.msra.mxu0 %v822
  %3679 = vmatmul.bf16.gmra.mxu0 %v3669
  %v3680 = vpop.f32.mrf.mxu0
  %v3681 = vadd.f32 0.0, %v3680
  %v3682 = vpop.f32.mrf.mxu0
  %3683 = vdwg.mxu0
  %3684 = vmatpush.bf16.msra.mxu0 %v844
  %3685 = vmatpush.bf16.msra.mxu0 %v841
  %3686 = vmatpush.bf16.msra.mxu0 %v838
  %3687 = vmatpush.bf16.msra.mxu0 %v835
  %3688 = vmatpush.bf16.msra.mxu0 %v832
  %3689 = vmatpush.bf16.msra.mxu0 %v829
  %3690 = vmatpush.bf16.msra.mxu0 %v826
  %3691 = vmatpush.bf16.msra.mxu0 %v823
  %3692 = vmatmul.bf16.gmra.mxu0 %v3669
  %v3693 = vpop.f32.mrf.mxu0
  %v3694 = vadd.f32 0.0, %v3693
  %v3695 = vpop.f32.mrf.mxu0
  %3696 = vdwg.mxu0
  %3697 = vmatpush.bf16.msra.mxu0 %v845
  %3698 = vmatpush.bf16.msra.mxu0 %v842
  %3699 = vmatpush.bf16.msra.mxu0 %v839
  %3700 = vmatpush.bf16.msra.mxu0 %v836
  %3701 = vmatpush.bf16.msra.mxu0 %v833
  %3702 = vmatpush.bf16.msra.mxu0 %v830
  %3703 = vmatpush.bf16.msra.mxu0 %v827
  %3704 = vmatpush.bf16.msra.mxu0 %v824
  %3705 = vmatmul.bf16.gmra.mxu0 %v3669
  %v3706 = vpop.f32.mrf.mxu0
  %v3707 = vadd.f32 0.0, %v3706
  %v3708 = vpop.f32.mrf.mxu0
  %3709 = vdwg.mxu0
  %v3710 = vadd.f32 %v3618, %v3638
  %v3711 = vadd.f32 %v3619, %v3651
  %v3712 = vxor.u32 %v3710, 2147483648
  %v3713 = vxor.u32 %v3711, 2147483648
  %v3714 = vmul.f32 %v3712, 1.442695
  %v3715 = vpow.pop %v3714
  %v3716 = vmul.f32 %v3713, 1.442695
  %v3717 = vpow.pop %v3716
  %v3718 = vadd.f32 %v3715, 1.0
  %v3719 = vadd.f32 %v3717, 1.0
  %v3720 = vrcp.pop %v3718
  %v3721 = vmul.f32 %v3718, %v3720
  %v3722 = vsub.f32 1.0, %v3721
  %v3723 = vmul.f32 %v3720, %v3722
  %v3724 = vadd.f32 %v3720, %v3723
  %vm3725 = vweird.f32 %v3718
  %vm3726 = vweird.f32 %v3720
  %vm3727 = vmor %vm3725, %vm3726
  %v3728 = vsel %vm3727, %v3720, %v3724
  %v3729 = vand.u32 2147483647, %v3718
  %vm3730 = vcmp.eq.f32.partialorder %v3729, 8.507059e+37
  %v3731 = vand.u32 %v3718, 2147483648
  %v3732 = vor.u32 1.1754944e-38, %v3731
  %v3733 = vsel %vm3730, %v3732, %v3728
  %v3734 = vmul.f32 1.0, %v3733
  %v3735 = vrcp.pop %v3719
  %v3736 = vmul.f32 %v3719, %v3735
  %v3737 = vsub.f32 1.0, %v3736
  %v3738 = vmul.f32 %v3735, %v3737
  %v3739 = vadd.f32 %v3735, %v3738
  %vm3740 = vweird.f32 %v3719
  %vm3741 = vweird.f32 %v3735
  %vm3742 = vmor %vm3740, %vm3741
  %v3743 = vsel %vm3742, %v3735, %v3739
  %v3744 = vand.u32 2147483647, %v3719
  %vm3745 = vcmp.eq.f32.partialorder %v3744, 8.507059e+37
  %v3746 = vand.u32 %v3719, 2147483648
  %v3747 = vor.u32 1.1754944e-38, %v3746
  %v3748 = vsel %vm3745, %v3747, %v3743
  %v3749 = vmul.f32 1.0, %v3748
  %v3752 = vrot.slane %v3681, 4
  %v3753 = vrot.slane %v3694, 4
  %v3756 = vadd.f32 %v3621, %v3752
  %v3757 = vadd.f32 %v3622, %v3753
  %v3758 = vxor.u32 %v3756, 2147483648
  %v3759 = vxor.u32 %v3757, 2147483648
  %v3760 = vmul.f32 %v3758, 1.442695
  %v3761 = vpow.pop %v3760
  %v3762 = vmul.f32 %v3759, 1.442695
  %v3763 = vpow.pop %v3762
  %v3764 = vadd.f32 %v3761, 1.0
  %v3765 = vadd.f32 %v3763, 1.0
  %v3766 = vrcp.pop %v3764
  %v3767 = vmul.f32 %v3764, %v3766
  %v3768 = vsub.f32 1.0, %v3767
  %v3769 = vmul.f32 %v3766, %v3768
  %v3770 = vadd.f32 %v3766, %v3769
  %vm3771 = vweird.f32 %v3764
  %vm3772 = vweird.f32 %v3766
  %vm3773 = vmor %vm3771, %vm3772
  %v3774 = vsel %vm3773, %v3766, %v3770
  %v3775 = vand.u32 2147483647, %v3764
  %vm3776 = vcmp.eq.f32.partialorder %v3775, 8.507059e+37
  %v3777 = vand.u32 %v3764, 2147483648
  %v3778 = vor.u32 1.1754944e-38, %v3777
  %v3779 = vsel %vm3776, %v3778, %v3774
  %v3780 = vmul.f32 1.0, %v3779
  %v3781 = vrcp.pop %v3765
  %v3782 = vmul.f32 %v3765, %v3781
  %v3783 = vsub.f32 1.0, %v3782
  %v3784 = vmul.f32 %v3781, %v3783
  %v3785 = vadd.f32 %v3781, %v3784
  %vm3786 = vweird.f32 %v3765
  %vm3787 = vweird.f32 %v3781
  %vm3788 = vmor %vm3786, %vm3787
  %v3789 = vsel %vm3788, %v3781, %v3785
  %v3790 = vand.u32 2147483647, %v3765
  %vm3791 = vcmp.eq.f32.partialorder %v3790, 8.507059e+37
  %v3792 = vand.u32 %v3765, 2147483648
  %v3793 = vor.u32 1.1754944e-38, %v3792
  %v3794 = vsel %vm3791, %v3793, %v3789
  %v3795 = vmul.f32 1.0, %v3794
  %v3796 = vadd.f32 %v3664, %v996
  %v3797 = vmul.f32 %v3734, %v3796
  %v3798 = vadd.f32 %v3620, %v3797
  %v3799 = vtanh.pop %v3798
  %v3800 = vadd.f32 %v3707, %v1003
  %v3802 = vrot.slane %v3800, 4
  %v3804 = vmul.f32 %v3780, %v3802
  %v3805 = vadd.f32 %v3623, %v3804
  %v3806 = vtanh.pop %v3805
  %v3808 = vrot.slane %v3799, 2
  %v3810 = vsub.f32 %v3582, %v3808
  %v3812 = vrot.slane %v3810, 6
  %v3814 = vmul.f32 %v3749, %v3812
  %v3815 = vadd.f32 %v3799, %v3814
  %v3817 = vrot.slane %v3806, 6
  %v3819 = vsub.f32 %v3591, %v3817
  %v3821 = vrot.slane %v3819, 2
  %v3823 = vmul.f32 %v3795, %v3821
  %v3824 = vadd.f32 %v3806, %v3823
  %3825 = vst [vmem:[#allocation3 + $0x30] sm:$0x3] %v3815
  %3826 = vst [vmem:[#allocation3 + $0x8] sm:$0x30] %v3824
  %v3827 = vld [vmem:[%s6 + $0x18] sm:$0x3]
  %v3828 = vld [vmem:[%s6 + $0x4] sm:$0x3]
  %vm3829 = vcmp.gt.f32.partialorder %v3827, 0.0
  %v3830 = vsel %vm3829, 1, 0
  %3831 = vset.pattern.permute.xlu0 0
  %3832 = vperm.xlu0 %3831, %v3830
  %v3833 = vpop.permute.xlu0 %3832
  %vm3834 = vcmp.eq.s32.totalorder %v3833, 1
  %v3835 = vsel %vm3834, %v3815, -1e+30
  %v3836 = vmax.f32 %v3606, %v3835
  %vm3837 = vcmp.gt.f32.partialorder %v3828, 0.0
  %v3838 = vsel %vm3837, 1, 0
  %3839 = vset.pattern.permute.xlu0 0
  %3840 = vperm.xlu0 %3839, %v3838
  %v3841 = vpop.permute.xlu0 %3840
  %vm3842 = vcmp.eq.s32.totalorder %v3841, 1
  %v3844 = vrot.slane %v3824, 4
  %v3846 = vsel %vm3842, %v3844, -1e+30
  %v3847 = vmax.f32 %v3617, %v3846
  %v3848 = vld [vmem:[#allocation2 + $0x90] sm:$0xc]
  %v3849 = vld [vmem:[#allocation2 + $0x98] sm:$0xc]
  %v3850 = vld [vmem:[#allocation2 + $0xa0] sm:$0xc]
  %v3851 = vld [vmem:[#allocation2 + $0x18] sm:$0xc]
  %v3852 = vld [vmem:[#allocation2 + $0x20] sm:$0xc]
  %v3853 = vld [vmem:[#allocation2 + $0x28] sm:$0xc]
  %v3854 = vpack.c.bf16 %v3815, %v3815
  %3855 = vmatpush.bf16.msra.mxu0 %v676
  %3856 = vmatpush.bf16.msra.mxu0 %v673
  %3857 = vmatpush.bf16.msra.mxu0 %v670
  %3858 = vmatpush.bf16.msra.mxu0 %v667
  %3859 = vmatpush.bf16.msra.mxu0 %v664
  %3860 = vmatpush.bf16.msra.mxu0 %v661
  %3861 = vmatpush.bf16.msra.mxu0 %v658
  %3862 = vmatpush.bf16.msra.mxu0 %v655
  %3863 = vmatmul.bf16.gmra.mxu0 %v3854
  %v3864 = vpop.f32.mrf.mxu0
  %v3865 = vadd.f32 0.0, %v3864
  %v3866 = vpop.f32.mrf.mxu0
  %3867 = vdwg.mxu0
  %3868 = vmatpush.bf16.msra.mxu0 %v677
  %3869 = vmatpush.bf16.msra.mxu0 %v674
  %3870 = vmatpush.bf16.msra.mxu0 %v671
  %3871 = vmatpush.bf16.msra.mxu0 %v668
  %3872 = vmatpush.bf16.msra.mxu0 %v665
  %3873 = vmatpush.bf16.msra.mxu0 %v662
  %3874 = vmatpush.bf16.msra.mxu0 %v659
  %3875 = vmatpush.bf16.msra.mxu0 %v656
  %3876 = vmatmul.bf16.gmra.mxu0 %v3854
  %v3877 = vpop.f32.mrf.mxu0
  %v3878 = vadd.f32 0.0, %v3877
  %v3879 = vpop.f32.mrf.mxu0
  %3880 = vdwg.mxu0
  %3881 = vmatpush.bf16.msra.mxu0 %v678
  %3882 = vmatpush.bf16.msra.mxu0 %v675
  %3883 = vmatpush.bf16.msra.mxu0 %v672
  %3884 = vmatpush.bf16.msra.mxu0 %v669
  %3885 = vmatpush.bf16.msra.mxu0 %v666
  %3886 = vmatpush.bf16.msra.mxu0 %v663
  %3887 = vmatpush.bf16.msra.mxu0 %v660
  %3888 = vmatpush.bf16.msra.mxu0 %v657
  %3889 = vmatmul.bf16.gmra.mxu0 %v3854
  %v3890 = vpop.f32.mrf.mxu0
  %v3891 = vadd.f32 0.0, %v3890
  %v3892 = vpop.f32.mrf.mxu0
  %3893 = vdwg.mxu0
  %v3894 = vpack.c.bf16 %v3824, %v3824
  %v3896 = vrot.slane %v3894, 2
  %3898 = vmatpush.bf16.msra.mxu0 %v843
  %3899 = vmatpush.bf16.msra.mxu0 %v840
  %3900 = vmatpush.bf16.msra.mxu0 %v837
  %3901 = vmatpush.bf16.msra.mxu0 %v834
  %3902 = vmatpush.bf16.msra.mxu0 %v831
  %3903 = vmatpush.bf16.msra.mxu0 %v828
  %3904 = vmatpush.bf16.msra.mxu0 %v825
  %3905 = vmatpush.bf16.msra.mxu0 %v822
  %3906 = vmatmul.bf16.gmra.mxu0 %v3896
  %v3907 = vpop.f32.mrf.mxu0
  %v3908 = vadd.f32 0.0, %v3907
  %v3909 = vpop.f32.mrf.mxu0
  %3910 = vdwg.mxu0
  %3911 = vmatpush.bf16.msra.mxu0 %v844
  %3912 = vmatpush.bf16.msra.mxu0 %v841
  %3913 = vmatpush.bf16.msra.mxu0 %v838
  %3914 = vmatpush.bf16.msra.mxu0 %v835
  %3915 = vmatpush.bf16.msra.mxu0 %v832
  %3916 = vmatpush.bf16.msra.mxu0 %v829
  %3917 = vmatpush.bf16.msra.mxu0 %v826
  %3918 = vmatpush.bf16.msra.mxu0 %v823
  %3919 = vmatmul.bf16.gmra.mxu0 %v3896
  %v3920 = vpop.f32.mrf.mxu0
  %v3921 = vadd.f32 0.0, %v3920
  %v3922 = vpop.f32.mrf.mxu0
  %3923 = vdwg.mxu0
  %3924 = vmatpush.bf16.msra.mxu0 %v845
  %3925 = vmatpush.bf16.msra.mxu0 %v842
  %3926 = vmatpush.bf16.msra.mxu0 %v839
  %3927 = vmatpush.bf16.msra.mxu0 %v836
  %3928 = vmatpush.bf16.msra.mxu0 %v833
  %3929 = vmatpush.bf16.msra.mxu0 %v830
  %3930 = vmatpush.bf16.msra.mxu0 %v827
  %3931 = vmatpush.bf16.msra.mxu0 %v824
  %3932 = vmatmul.bf16.gmra.mxu0 %v3896
  %v3933 = vpop.f32.mrf.mxu0
  %v3934 = vadd.f32 0.0, %v3933
  %v3935 = vpop.f32.mrf.mxu0
  %3936 = vdwg.mxu0
  %v3939 = vrot.slane %v3865, 6
  %v3940 = vrot.slane %v3878, 6
  %v3943 = vadd.f32 %v3848, %v3939
  %v3944 = vadd.f32 %v3849, %v3940
  %v3945 = vxor.u32 %v3943, 2147483648
  %v3946 = vxor.u32 %v3944, 2147483648
  %v3947 = vmul.f32 %v3945, 1.442695
  %v3948 = vpow.pop %v3947
  %v3949 = vmul.f32 %v3946, 1.442695
  %v3950 = vpow.pop %v3949
  %v3951 = vadd.f32 %v3948, 1.0
  %v3952 = vadd.f32 %v3950, 1.0
  %v3953 = vrcp.pop %v3951
  %v3954 = vmul.f32 %v3951, %v3953
  %v3955 = vsub.f32 1.0, %v3954
  %v3956 = vmul.f32 %v3953, %v3955
  %v3957 = vadd.f32 %v3953, %v3956
  %vm3958 = vweird.f32 %v3951
  %vm3959 = vweird.f32 %v3953
  %vm3960 = vmor %vm3958, %vm3959
  %v3961 = vsel %vm3960, %v3953, %v3957
  %v3962 = vand.u32 2147483647, %v3951
  %vm3963 = vcmp.eq.f32.partialorder %v3962, 8.507059e+37
  %v3964 = vand.u32 %v3951, 2147483648
  %v3965 = vor.u32 1.1754944e-38, %v3964
  %v3966 = vsel %vm3963, %v3965, %v3961
  %v3967 = vmul.f32 1.0, %v3966
  %v3968 = vrcp.pop %v3952
  %v3969 = vmul.f32 %v3952, %v3968
  %v3970 = vsub.f32 1.0, %v3969
  %v3971 = vmul.f32 %v3968, %v3970
  %v3972 = vadd.f32 %v3968, %v3971
  %vm3973 = vweird.f32 %v3952
  %vm3974 = vweird.f32 %v3968
  %vm3975 = vmor %vm3973, %vm3974
  %v3976 = vsel %vm3975, %v3968, %v3972
  %v3977 = vand.u32 2147483647, %v3952
  %vm3978 = vcmp.eq.f32.partialorder %v3977, 8.507059e+37
  %v3979 = vand.u32 %v3952, 2147483648
  %v3980 = vor.u32 1.1754944e-38, %v3979
  %v3981 = vsel %vm3978, %v3980, %v3976
  %v3982 = vmul.f32 1.0, %v3981
  %v3985 = vrot.slane %v3908, 6
  %v3986 = vrot.slane %v3921, 6
  %v3989 = vadd.f32 %v3851, %v3985
  %v3990 = vadd.f32 %v3852, %v3986
  %v3991 = vxor.u32 %v3989, 2147483648
  %v3992 = vxor.u32 %v3990, 2147483648
  %v3993 = vmul.f32 %v3991, 1.442695
  %v3994 = vpow.pop %v3993
  %v3995 = vmul.f32 %v3992, 1.442695
  %v3996 = vpow.pop %v3995
  %v3997 = vadd.f32 %v3994, 1.0
  %v3998 = vadd.f32 %v3996, 1.0
  %v3999 = vrcp.pop %v3997
  %v4000 = vmul.f32 %v3997, %v3999
  %v4001 = vsub.f32 1.0, %v4000
  %v4002 = vmul.f32 %v3999, %v4001
  %v4003 = vadd.f32 %v3999, %v4002
  %vm4004 = vweird.f32 %v3997
  %vm4005 = vweird.f32 %v3999
  %vm4006 = vmor %vm4004, %vm4005
  %v4007 = vsel %vm4006, %v3999, %v4003
  %v4008 = vand.u32 2147483647, %v3997
  %vm4009 = vcmp.eq.f32.partialorder %v4008, 8.507059e+37
  %v4010 = vand.u32 %v3997, 2147483648
  %v4011 = vor.u32 1.1754944e-38, %v4010
  %v4012 = vsel %vm4009, %v4011, %v4007
  %v4013 = vmul.f32 1.0, %v4012
  %v4014 = vrcp.pop %v3998
  %v4015 = vmul.f32 %v3998, %v4014
  %v4016 = vsub.f32 1.0, %v4015
  %v4017 = vmul.f32 %v4014, %v4016
  %v4018 = vadd.f32 %v4014, %v4017
  %vm4019 = vweird.f32 %v3998
  %vm4020 = vweird.f32 %v4014
  %vm4021 = vmor %vm4019, %vm4020
  %v4022 = vsel %vm4021, %v4014, %v4018
  %v4023 = vand.u32 2147483647, %v3998
  %vm4024 = vcmp.eq.f32.partialorder %v4023, 8.507059e+37
  %v4025 = vand.u32 %v3998, 2147483648
  %v4026 = vor.u32 1.1754944e-38, %v4025
  %v4027 = vsel %vm4024, %v4026, %v4022
  %v4028 = vmul.f32 1.0, %v4027
  %v4029 = vadd.f32 %v3891, %v996
  %v4031 = vrot.slane %v4029, 6
  %v4033 = vmul.f32 %v3967, %v4031
  %v4034 = vadd.f32 %v3850, %v4033
  %v4035 = vtanh.pop %v4034
  %v4036 = vadd.f32 %v3934, %v1003
  %v4038 = vrot.slane %v4036, 6
  %v4040 = vmul.f32 %v4013, %v4038
  %v4041 = vadd.f32 %v3853, %v4040
  %v4042 = vtanh.pop %v4041
  %v4044 = vrot.slane %v4035, 2
  %v4046 = vsub.f32 %v3815, %v4044
  %v4048 = vrot.slane %v4046, 6
  %v4050 = vmul.f32 %v3982, %v4048
  %v4051 = vadd.f32 %v4035, %v4050
  %v4053 = vrot.slane %v4042, 6
  %v4055 = vsub.f32 %v3824, %v4053
  %v4057 = vrot.slane %v4055, 2
  %v4059 = vmul.f32 %v4028, %v4057
  %v4060 = vadd.f32 %v4042, %v4059
  %4061 = vst [vmem:[#allocation3 + $0x30] sm:$0xc] %v4051
  %4062 = vst [vmem:[#allocation3 + $0x8] sm:$0xc] %v4060
  %v4063 = vld [vmem:[%s6 + $0x1a] sm:$0x3]
  %v4064 = vld [vmem:[%s6 + $0x2] sm:$0x3]
  %vm4065 = vcmp.gt.f32.partialorder %v4063, 0.0
  %v4066 = vsel %vm4065, 1, 0
  %4067 = vset.pattern.permute.xlu0 0
  %4068 = vperm.xlu0 %4067, %v4066
  %v4069 = vpop.permute.xlu0 %4068
  %vm4070 = vcmp.eq.s32.totalorder %v4069, 1
  %v4072 = vrot.slane %v4051, 2
  %v4074 = vsel %vm4070, %v4072, -1e+30
  %v4075 = vmax.f32 %v3836, %v4074
  %vm4076 = vcmp.gt.f32.partialorder %v4064, 0.0
  %v4077 = vsel %vm4076, 1, 0
  %4078 = vset.pattern.permute.xlu0 0
  %4079 = vperm.xlu0 %4078, %v4077
  %v4080 = vpop.permute.xlu0 %4079
  %vm4081 = vcmp.eq.s32.totalorder %v4080, 1
  %v4083 = vrot.slane %v4060, 2
  %v4085 = vsel %vm4081, %v4083, -1e+30
  %v4086 = vmax.f32 %v3847, %v4085
  %v4087 = vld [vmem:[#allocation2 + $0x90] sm:$0x30]
  %v4088 = vld [vmem:[#allocation2 + $0x98] sm:$0x30]
  %v4089 = vld [vmem:[#allocation2 + $0xa0] sm:$0x30]
  %v4090 = vld [vmem:[#allocation2 + $0x18] sm:$0x3]
  %v4091 = vld [vmem:[#allocation2 + $0x20] sm:$0x3]
  %v4092 = vld [vmem:[#allocation2 + $0x28] sm:$0x3]
  %v4093 = vpack.c.bf16 %v4051, %v4051
  %v4095 = vrot.slane %v4093, 1
  %4097 = vmatpush.bf16.msra.mxu0 %v676
  %4098 = vmatpush.bf16.msra.mxu0 %v673
  %4099 = vmatpush.bf16.msra.mxu0 %v670
  %4100 = vmatpush.bf16.msra.mxu0 %v667
  %4101 = vmatpush.bf16.msra.mxu0 %v664
  %4102 = vmatpush.bf16.msra.mxu0 %v661
  %4103 = vmatpush.bf16.msra.mxu0 %v658
  %4104 = vmatpush.bf16.msra.mxu0 %v655
  %4105 = vmatmul.bf16.gmra.mxu0 %v4095
  %v4106 = vpop.f32.mrf.mxu0
  %v4107 = vadd.f32 0.0, %v4106
  %v4108 = vpop.f32.mrf.mxu0
  %4109 = vdwg.mxu0
  %4110 = vmatpush.bf16.msra.mxu0 %v677
  %4111 = vmatpush.bf16.msra.mxu0 %v674
  %4112 = vmatpush.bf16.msra.mxu0 %v671
  %4113 = vmatpush.bf16.msra.mxu0 %v668
  %4114 = vmatpush.bf16.msra.mxu0 %v665
  %4115 = vmatpush.bf16.msra.mxu0 %v662
  %4116 = vmatpush.bf16.msra.mxu0 %v659
  %4117 = vmatpush.bf16.msra.mxu0 %v656
  %4118 = vmatmul.bf16.gmra.mxu0 %v4095
  %v4119 = vpop.f32.mrf.mxu0
  %v4120 = vadd.f32 0.0, %v4119
  %v4121 = vpop.f32.mrf.mxu0
  %4122 = vdwg.mxu0
  %4123 = vmatpush.bf16.msra.mxu0 %v678
  %4124 = vmatpush.bf16.msra.mxu0 %v675
  %4125 = vmatpush.bf16.msra.mxu0 %v672
  %4126 = vmatpush.bf16.msra.mxu0 %v669
  %4127 = vmatpush.bf16.msra.mxu0 %v666
  %4128 = vmatpush.bf16.msra.mxu0 %v663
  %4129 = vmatpush.bf16.msra.mxu0 %v660
  %4130 = vmatpush.bf16.msra.mxu0 %v657
  %4131 = vmatmul.bf16.gmra.mxu0 %v4095
  %v4132 = vpop.f32.mrf.mxu0
  %v4133 = vadd.f32 0.0, %v4132
  %v4134 = vpop.f32.mrf.mxu0
  %4135 = vdwg.mxu0
  %v4136 = vpack.c.bf16 %v4060, %v4060
  %v4138 = vrot.slane %v4136, 1
  %4140 = vmatpush.bf16.msra.mxu0 %v843
  %4141 = vmatpush.bf16.msra.mxu0 %v840
  %4142 = vmatpush.bf16.msra.mxu0 %v837
  %4143 = vmatpush.bf16.msra.mxu0 %v834
  %4144 = vmatpush.bf16.msra.mxu0 %v831
  %4145 = vmatpush.bf16.msra.mxu0 %v828
  %4146 = vmatpush.bf16.msra.mxu0 %v825
  %4147 = vmatpush.bf16.msra.mxu0 %v822
  %4148 = vmatmul.bf16.gmra.mxu0 %v4138
  %v4149 = vpop.f32.mrf.mxu0
  %v4150 = vadd.f32 0.0, %v4149
  %v4151 = vpop.f32.mrf.mxu0
  %4152 = vdwg.mxu0
  %4153 = vmatpush.bf16.msra.mxu0 %v844
  %4154 = vmatpush.bf16.msra.mxu0 %v841
  %4155 = vmatpush.bf16.msra.mxu0 %v838
  %4156 = vmatpush.bf16.msra.mxu0 %v835
  %4157 = vmatpush.bf16.msra.mxu0 %v832
  %4158 = vmatpush.bf16.msra.mxu0 %v829
  %4159 = vmatpush.bf16.msra.mxu0 %v826
  %4160 = vmatpush.bf16.msra.mxu0 %v823
  %4161 = vmatmul.bf16.gmra.mxu0 %v4138
  %v4162 = vpop.f32.mrf.mxu0
  %v4163 = vadd.f32 0.0, %v4162
  %v4164 = vpop.f32.mrf.mxu0
  %4165 = vdwg.mxu0
  %4166 = vmatpush.bf16.msra.mxu0 %v845
  %4167 = vmatpush.bf16.msra.mxu0 %v842
  %4168 = vmatpush.bf16.msra.mxu0 %v839
  %4169 = vmatpush.bf16.msra.mxu0 %v836
  %4170 = vmatpush.bf16.msra.mxu0 %v833
  %4171 = vmatpush.bf16.msra.mxu0 %v830
  %4172 = vmatpush.bf16.msra.mxu0 %v827
  %4173 = vmatpush.bf16.msra.mxu0 %v824
  %4174 = vmatmul.bf16.gmra.mxu0 %v4138
  %v4175 = vpop.f32.mrf.mxu0
  %v4176 = vadd.f32 0.0, %v4175
  %v4177 = vpop.f32.mrf.mxu0
  %4178 = vdwg.mxu0
  %v4181 = vrot.slane %v4107, 4
  %v4182 = vrot.slane %v4120, 4
  %v4185 = vadd.f32 %v4087, %v4181
  %v4186 = vadd.f32 %v4088, %v4182
  %v4187 = vxor.u32 %v4185, 2147483648
  %v4188 = vxor.u32 %v4186, 2147483648
  %v4189 = vmul.f32 %v4187, 1.442695
  %v4190 = vpow.pop %v4189
  %v4191 = vmul.f32 %v4188, 1.442695
  %v4192 = vpow.pop %v4191
  %v4193 = vadd.f32 %v4190, 1.0
  %v4194 = vadd.f32 %v4192, 1.0
  %v4195 = vrcp.pop %v4193
  %v4196 = vmul.f32 %v4193, %v4195
  %v4197 = vsub.f32 1.0, %v4196
  %v4198 = vmul.f32 %v4195, %v4197
  %v4199 = vadd.f32 %v4195, %v4198
  %vm4200 = vweird.f32 %v4193
  %vm4201 = vweird.f32 %v4195
  %vm4202 = vmor %vm4200, %vm4201
  %v4203 = vsel %vm4202, %v4195, %v4199
  %v4204 = vand.u32 2147483647, %v4193
  %vm4205 = vcmp.eq.f32.partialorder %v4204, 8.507059e+37
  %v4206 = vand.u32 %v4193, 2147483648
  %v4207 = vor.u32 1.1754944e-38, %v4206
  %v4208 = vsel %vm4205, %v4207, %v4203
  %v4209 = vmul.f32 1.0, %v4208
  %v4210 = vrcp.pop %v4194
  %v4211 = vmul.f32 %v4194, %v4210
  %v4212 = vsub.f32 1.0, %v4211
  %v4213 = vmul.f32 %v4210, %v4212
  %v4214 = vadd.f32 %v4210, %v4213
  %vm4215 = vweird.f32 %v4194
  %vm4216 = vweird.f32 %v4210
  %vm4217 = vmor %vm4215, %vm4216
  %v4218 = vsel %vm4217, %v4210, %v4214
  %v4219 = vand.u32 2147483647, %v4194
  %vm4220 = vcmp.eq.f32.partialorder %v4219, 8.507059e+37
  %v4221 = vand.u32 %v4194, 2147483648
  %v4222 = vor.u32 1.1754944e-38, %v4221
  %v4223 = vsel %vm4220, %v4222, %v4218
  %v4224 = vmul.f32 1.0, %v4223
  %v4225 = vadd.f32 %v4090, %v4150
  %v4226 = vadd.f32 %v4091, %v4163
  %v4227 = vxor.u32 %v4225, 2147483648
  %v4228 = vxor.u32 %v4226, 2147483648
  %v4229 = vmul.f32 %v4227, 1.442695
  %v4230 = vpow.pop %v4229
  %v4231 = vmul.f32 %v4228, 1.442695
  %v4232 = vpow.pop %v4231
  %v4233 = vadd.f32 %v4230, 1.0
  %v4234 = vadd.f32 %v4232, 1.0
  %v4235 = vrcp.pop %v4233
  %v4236 = vmul.f32 %v4233, %v4235
  %v4237 = vsub.f32 1.0, %v4236
  %v4238 = vmul.f32 %v4235, %v4237
  %v4239 = vadd.f32 %v4235, %v4238
  %vm4240 = vweird.f32 %v4233
  %vm4241 = vweird.f32 %v4235
  %vm4242 = vmor %vm4240, %vm4241
  %v4243 = vsel %vm4242, %v4235, %v4239
  %v4244 = vand.u32 2147483647, %v4233
  %vm4245 = vcmp.eq.f32.partialorder %v4244, 8.507059e+37
  %v4246 = vand.u32 %v4233, 2147483648
  %v4247 = vor.u32 1.1754944e-38, %v4246
  %v4248 = vsel %vm4245, %v4247, %v4243
  %v4249 = vmul.f32 1.0, %v4248
  %v4250 = vrcp.pop %v4234
  %v4251 = vmul.f32 %v4234, %v4250
  %v4252 = vsub.f32 1.0, %v4251
  %v4253 = vmul.f32 %v4250, %v4252
  %v4254 = vadd.f32 %v4250, %v4253
  %vm4255 = vweird.f32 %v4234
  %vm4256 = vweird.f32 %v4250
  %vm4257 = vmor %vm4255, %vm4256
  %v4258 = vsel %vm4257, %v4250, %v4254
  %v4259 = vand.u32 2147483647, %v4234
  %vm4260 = vcmp.eq.f32.partialorder %v4259, 8.507059e+37
  %v4261 = vand.u32 %v4234, 2147483648
  %v4262 = vor.u32 1.1754944e-38, %v4261
  %v4263 = vsel %vm4260, %v4262, %v4258
  %v4264 = vmul.f32 1.0, %v4263
  %v4265 = vadd.f32 %v4133, %v996
  %v4267 = vrot.slane %v4265, 4
  %v4269 = vmul.f32 %v4209, %v4267
  %v4270 = vadd.f32 %v4089, %v4269
  %v4271 = vtanh.pop %v4270
  %v4272 = vadd.f32 %v4176, %v1003
  %v4273 = vmul.f32 %v4249, %v4272
  %v4274 = vadd.f32 %v4092, %v4273
  %v4275 = vtanh.pop %v4274
  %v4277 = vrot.slane %v4271, 2
  %v4279 = vsub.f32 %v4051, %v4277
  %v4281 = vrot.slane %v4279, 6
  %v4283 = vmul.f32 %v4224, %v4281
  %v4284 = vadd.f32 %v4271, %v4283
  %v4286 = vrot.slane %v4275, 6
  %v4288 = vsub.f32 %v4060, %v4286
  %v4290 = vrot.slane %v4288, 2
  %v4292 = vmul.f32 %v4264, %v4290
  %v4293 = vadd.f32 %v4275, %v4292
  %4294 = vst [vmem:[#allocation3 + $0x30] sm:$0x30] %v4284
  %4295 = vst [vmem:[#allocation3 + $0x8] sm:$0x3] %v4293
  %v4296 = vld [vmem:[%s6 + $0x1c] sm:$0x3]
  %v4297 = vld [vmem:[%s6] sm:$0x3]
  %vm4298 = vcmp.gt.f32.partialorder %v4296, 0.0
  %v4299 = vsel %vm4298, 1, 0
  %4300 = vset.pattern.permute.xlu0 0
  %4301 = vperm.xlu0 %4300, %v4299
  %v4302 = vpop.permute.xlu0 %4301
  %vm4303 = vcmp.eq.s32.totalorder %v4302, 1
  %v4305 = vrot.slane %v4284, 4
  %v4307 = vsel %vm4303, %v4305, -1e+30
  %v4308 = vmax.f32 %v4075, %v4307
  %vm4309 = vcmp.gt.f32.partialorder %v4297, 0.0
  %v4310 = vsel %vm4309, 1, 0
  %4311 = vset.pattern.permute.xlu0 0
  %4312 = vperm.xlu0 %4311, %v4310
  %v4313 = vpop.permute.xlu0 %4312
  %vm4314 = vcmp.eq.s32.totalorder %v4313, 1
  %v4315 = vsel %vm4314, %v4293, -1e+30
  %v4316 = vmax.f32 %v4086, %v4315
  %v4317 = vld [vmem:[#allocation3] sm:$0xff]
  %v4318 = vld [vmem:[#allocation3 + $0x8] sm:$0xff]
  %v4319 = vld [vmem:[#allocation3 + $0x10] sm:$0xff]
  %v4320 = vld [vmem:[#allocation3 + $0x18] sm:$0xff]
  %v4321 = vld [vmem:[#allocation3 + $0x20] sm:$0xff]
  %v4322 = vld [vmem:[#allocation3 + $0x28] sm:$0xff]
  %v4323 = vld [vmem:[#allocation3 + $0x30] sm:$0x3f]
  %v4324 = vld [vmem:[#allocation3 + $0x38] sm:$0x3f]
  %v4325 = vpack.c.bf16 %v4319, %v4317
  %v4326 = vpack.c.bf16 %v4320, %v4318
  %v4327 = vpack.c.bf16 %v4323, %v4321
  %v4328 = vpack.c.bf16 %v4324, %v4322
  %v4329 = vld [vmem:[%s7] sm:$0xff]
  %v4330 = vld [vmem:[%s7 + $0x8] sm:$0xff]
  %v4331 = vld [vmem:[%s7 + $0x10] sm:$0xff]
  %v4332 = vld [vmem:[%s7 + $0x18] sm:$0xff]
  %v4333 = vld [vmem:[%s7 + $0x20] sm:$0xff]
  %v4334 = vld [vmem:[%s7 + $0x28] sm:$0xff]
  %v4335 = vld [vmem:[%s7 + $0x30] sm:$0xff]
  %v4336 = vld [vmem:[%s7 + $0x38] sm:$0xff]
  %v4337 = vld [vmem:[%s7 + $0x40] sm:$0xff]
  %v4338 = vld [vmem:[%s7 + $0x48] sm:$0xff]
  %v4339 = vld [vmem:[%s7 + $0x50] sm:$0xff]
  %v4340 = vld [vmem:[%s7 + $0x58] sm:$0xff]
  %v4341 = vld [vmem:[%s7 + $0x60] sm:$0xff]
  %v4342 = vld [vmem:[%s7 + $0x68] sm:$0xff]
  %v4343 = vld [vmem:[%s7 + $0x70] sm:$0xff]
  %v4344 = vld [vmem:[%s7 + $0x78] sm:$0xff]
  %v4345 = vld [vmem:[%s7 + $0x80] sm:$0xff]
  %v4346 = vld [vmem:[%s7 + $0x88] sm:$0xff]
  %v4347 = vld [vmem:[%s7 + $0x90] sm:$0xff]
  %v4348 = vld [vmem:[%s7 + $0x98] sm:$0xff]
  %v4349 = vld [vmem:[%s7 + $0xa0] sm:$0xff]
  %v4350 = vld [vmem:[%s7 + $0xa8] sm:$0xff]
  %v4351 = vld [vmem:[%s7 + $0xb0] sm:$0xff]
  %v4352 = vld [vmem:[%s7 + $0xb8] sm:$0xff]
  %v4353 = vld [vmem:[%s7 + $0xc0] sm:$0xff]
  %v4354 = vld [vmem:[%s7 + $0xc8] sm:$0xff]
  %v4355 = vld [vmem:[%s7 + $0xd0] sm:$0xff]
  %v4356 = vld [vmem:[%s7 + $0xd8] sm:$0xff]
  %v4357 = vld [vmem:[%s7 + $0xe0] sm:$0xff]
  %v4358 = vld [vmem:[%s7 + $0xe8] sm:$0xff]
  %v4359 = vld [vmem:[%s7 + $0xf0] sm:$0xff]
  %v4360 = vld [vmem:[%s7 + $0xf8] sm:$0xff]
  %v4361 = vld [vmem:[%s8] sm:$0x3]
  %v4363 = vperm.slane %v4361, 0
  %v4364 = vperm.slane %v4361, 1
  %v4399 = vunpack.c.l.b16 %v4329
  %v4400 = vunpack.c.h.b16 %v4329
  %v4401 = vunpack.c.l.b16 %v4330
  %v4402 = vunpack.c.h.b16 %v4330
  %v4403 = vunpack.c.l.b16 %v4331
  %v4404 = vunpack.c.h.b16 %v4331
  %v4405 = vunpack.c.l.b16 %v4332
  %v4406 = vunpack.c.h.b16 %v4332
  %v4407 = vunpack.c.l.b16 %v4333
  %v4408 = vunpack.c.h.b16 %v4333
  %v4409 = vunpack.c.l.b16 %v4334
  %v4410 = vunpack.c.h.b16 %v4334
  %v4411 = vunpack.c.l.b16 %v4335
  %v4412 = vunpack.c.h.b16 %v4335
  %v4413 = vunpack.c.l.b16 %v4336
  %v4414 = vunpack.c.h.b16 %v4336
  %v4415 = vunpack.c.l.b16 %v4337
  %v4416 = vunpack.c.h.b16 %v4337
  %v4417 = vunpack.c.l.b16 %v4338
  %v4418 = vunpack.c.h.b16 %v4338
  %v4419 = vunpack.c.l.b16 %v4339
  %v4420 = vunpack.c.h.b16 %v4339
  %v4421 = vunpack.c.l.b16 %v4340
  %v4422 = vunpack.c.h.b16 %v4340
  %v4423 = vunpack.c.l.b16 %v4341
  %v4424 = vunpack.c.h.b16 %v4341
  %v4425 = vunpack.c.l.b16 %v4342
  %v4426 = vunpack.c.h.b16 %v4342
  %v4427 = vunpack.c.l.b16 %v4343
  %v4428 = vunpack.c.h.b16 %v4343
  %v4429 = vunpack.c.l.b16 %v4344
  %v4430 = vunpack.c.h.b16 %v4344
  %v4431 = vunpack.c.l.b16 %v4345
  %v4432 = vunpack.c.h.b16 %v4345
  %v4433 = vunpack.c.l.b16 %v4346
  %v4434 = vunpack.c.h.b16 %v4346
  %v4435 = vunpack.c.l.b16 %v4347
  %v4436 = vunpack.c.h.b16 %v4347
  %v4437 = vunpack.c.l.b16 %v4348
  %v4438 = vunpack.c.h.b16 %v4348
  %v4439 = vunpack.c.l.b16 %v4349
  %v4440 = vunpack.c.h.b16 %v4349
  %v4441 = vunpack.c.l.b16 %v4350
  %v4442 = vunpack.c.h.b16 %v4350
  %v4443 = vunpack.c.l.b16 %v4351
  %v4444 = vunpack.c.h.b16 %v4351
  %v4445 = vunpack.c.l.b16 %v4352
  %v4446 = vunpack.c.h.b16 %v4352
  %v4447 = vunpack.c.l.b16 %v4353
  %v4448 = vunpack.c.h.b16 %v4353
  %v4449 = vunpack.c.l.b16 %v4354
  %v4450 = vunpack.c.h.b16 %v4354
  %v4451 = vunpack.c.l.b16 %v4355
  %v4452 = vunpack.c.h.b16 %v4355
  %v4453 = vunpack.c.l.b16 %v4356
  %v4454 = vunpack.c.h.b16 %v4356
  %v4455 = vunpack.c.l.b16 %v4357
  %v4456 = vunpack.c.h.b16 %v4357
  %v4457 = vunpack.c.l.b16 %v4358
  %v4458 = vunpack.c.h.b16 %v4358
  %v4459 = vunpack.c.l.b16 %v4359
  %v4460 = vunpack.c.h.b16 %v4359
  %v4461 = vunpack.c.l.b16 %v4360
  %v4462 = vunpack.c.h.b16 %v4360
  %v4463 = vpack.c.b16 %v4401, %v4399
  %v4464 = vpack.c.b16 %v4402, %v4400
  %v4465 = vpack.c.b16 %v4405, %v4403
  %v4466 = vpack.c.b16 %v4406, %v4404
  %v4467 = vpack.c.b16 %v4409, %v4407
  %v4468 = vpack.c.b16 %v4410, %v4408
  %v4469 = vpack.c.b16 %v4413, %v4411
  %v4470 = vpack.c.b16 %v4414, %v4412
  %v4471 = vpack.c.b16 %v4417, %v4415
  %v4472 = vpack.c.b16 %v4418, %v4416
  %v4473 = vpack.c.b16 %v4421, %v4419
  %v4474 = vpack.c.b16 %v4422, %v4420
  %v4475 = vpack.c.b16 %v4425, %v4423
  %v4476 = vpack.c.b16 %v4426, %v4424
  %v4477 = vpack.c.b16 %v4429, %v4427
  %v4478 = vpack.c.b16 %v4430, %v4428
  %v4479 = vpack.c.b16 %v4433, %v4431
  %v4480 = vpack.c.b16 %v4434, %v4432
  %v4481 = vpack.c.b16 %v4437, %v4435
  %v4482 = vpack.c.b16 %v4438, %v4436
  %v4483 = vpack.c.b16 %v4441, %v4439
  %v4484 = vpack.c.b16 %v4442, %v4440
  %v4485 = vpack.c.b16 %v4445, %v4443
  %v4486 = vpack.c.b16 %v4446, %v4444
  %v4487 = vpack.c.b16 %v4449, %v4447
  %v4488 = vpack.c.b16 %v4450, %v4448
  %v4489 = vpack.c.b16 %v4453, %v4451
  %v4490 = vpack.c.b16 %v4454, %v4452
  %v4491 = vpack.c.b16 %v4457, %v4455
  %v4492 = vpack.c.b16 %v4458, %v4456
  %v4493 = vpack.c.b16 %v4461, %v4459
  %v4494 = vpack.c.b16 %v4462, %v4460
  %4527 = vmatpush.bf16.msra.mxu0 %v4477
  %4528 = vmatpush.bf16.msra.mxu0 %v4475
  %4529 = vmatpush.bf16.msra.mxu0 %v4473
  %4530 = vmatpush.bf16.msra.mxu0 %v4471
  %4531 = vmatpush.bf16.msra.mxu0 %v4469
  %4532 = vmatpush.bf16.msra.mxu0 %v4467
  %4533 = vmatpush.bf16.msra.mxu0 %v4465
  %4534 = vmatpush.bf16.msra.mxu0 %v4463
  %4535 = vmatmul.bf16.gmra.mxu0 %v4325
  %v4536 = vpop.f32.mrf.mxu0
  %v4537 = vadd.f32 %v4363, %v4536
  %v4538 = vpop.f32.mrf.mxu0
  %v4539 = vadd.f32 %v4363, %v4538
  %4540 = vmatmul.bf16.gmra.mxu0 %v4327
  %v4541 = vpop.f32.mrf.mxu0
  %v4542 = vadd.f32 %v4363, %v4541
  %v4543 = vpop.f32.mrf.mxu0
  %v4544 = vadd.f32 %v4363, %v4543
  %4545 = vdwg.mxu0
  %4546 = vmatpush.bf16.msra.mxu0 %v4493
  %4547 = vmatpush.bf16.msra.mxu0 %v4491
  %4548 = vmatpush.bf16.msra.mxu0 %v4489
  %4549 = vmatpush.bf16.msra.mxu0 %v4487
  %4550 = vmatpush.bf16.msra.mxu0 %v4485
  %4551 = vmatpush.bf16.msra.mxu0 %v4483
  %4552 = vmatpush.bf16.msra.mxu0 %v4481
  %4553 = vmatpush.bf16.msra.mxu0 %v4479
  %4554 = vmatmul.bf16.gmra.mxu0 %v4326
  %v4555 = vpop.f32.mrf.mxu0
  %v4556 = vadd.f32 %v4537, %v4555
  %v4557 = vpop.f32.mrf.mxu0
  %v4558 = vadd.f32 %v4539, %v4557
  %4559 = vmatmul.bf16.gmra.mxu0 %v4328
  %v4560 = vpop.f32.mrf.mxu0
  %v4561 = vadd.f32 %v4542, %v4560
  %v4562 = vpop.f32.mrf.mxu0
  %v4563 = vadd.f32 %v4544, %v4562
  %4564 = vdwg.mxu0
  %4565 = vmatpush.bf16.msra.mxu0 %v4478
  %4566 = vmatpush.bf16.msra.mxu0 %v4476
  %4567 = vmatpush.bf16.msra.mxu0 %v4474
  %4568 = vmatpush.bf16.msra.mxu0 %v4472
  %4569 = vmatpush.bf16.msra.mxu0 %v4470
  %4570 = vmatpush.bf16.msra.mxu0 %v4468
  %4571 = vmatpush.bf16.msra.mxu0 %v4466
  %4572 = vmatpush.bf16.msra.mxu0 %v4464
  %4573 = vmatmul.bf16.gmra.mxu0 %v4325
  %v4574 = vpop.f32.mrf.mxu0
  %v4575 = vadd.f32 %v4364, %v4574
  %v4576 = vpop.f32.mrf.mxu0
  %v4577 = vadd.f32 %v4364, %v4576
  %4578 = vmatmul.bf16.gmra.mxu0 %v4327
  %v4579 = vpop.f32.mrf.mxu0
  %v4580 = vadd.f32 %v4364, %v4579
  %v4581 = vpop.f32.mrf.mxu0
  %v4582 = vadd.f32 %v4364, %v4581
  %4583 = vdwg.mxu0
  %4584 = vmatpush.bf16.msra.mxu0 %v4494
  %4585 = vmatpush.bf16.msra.mxu0 %v4492
  %4586 = vmatpush.bf16.msra.mxu0 %v4490
  %4587 = vmatpush.bf16.msra.mxu0 %v4488
  %4588 = vmatpush.bf16.msra.mxu0 %v4486
  %4589 = vmatpush.bf16.msra.mxu0 %v4484
  %4590 = vmatpush.bf16.msra.mxu0 %v4482
  %4591 = vmatpush.bf16.msra.mxu0 %v4480
  %4592 = vmatmul.bf16.gmra.mxu0 %v4326
  %v4593 = vpop.f32.mrf.mxu0
  %v4594 = vadd.f32 %v4575, %v4593
  %v4595 = vpop.f32.mrf.mxu0
  %v4596 = vadd.f32 %v4577, %v4595
  %4597 = vmatmul.bf16.gmra.mxu0 %v4328
  %v4598 = vpop.f32.mrf.mxu0
  %v4599 = vadd.f32 %v4580, %v4598
  %v4600 = vpop.f32.mrf.mxu0
  %v4601 = vadd.f32 %v4582, %v4600
  %4602 = vdwg.mxu0
  %v4603 = vtanh.pop %v4556
  %v4604 = vtanh.pop %v4594
  %v4605 = vtanh.pop %v4558
  %v4606 = vtanh.pop %v4596
  %v4607 = vtanh.pop %v4561
  %v4608 = vtanh.pop %v4599
  %v4609 = vtanh.pop %v4563
  %v4610 = vtanh.pop %v4601
  %4611 = vst [vmem:[#allocation4] sm:$0xff] %v4603
  %4612 = vst [vmem:[#allocation4 + $0x8] sm:$0xff] %v4604
  %4613 = vst [vmem:[#allocation4 + $0x10] sm:$0xff] %v4605
  %4614 = vst [vmem:[#allocation4 + $0x18] sm:$0xff] %v4606
  %4615 = vst [vmem:[#allocation4 + $0x20] sm:$0xff] %v4607
  %4616 = vst [vmem:[#allocation4 + $0x28] sm:$0xff] %v4608
  %4617 = vst [vmem:[#allocation4 + $0x30] sm:$0x3f] %v4609
  %4618 = vst [vmem:[#allocation4 + $0x38] sm:$0x3f] %v4610
  %v4619 = vpack.c.bf16 %v4308, %v4308
  %v4620 = vpack.c.bf16 %v4316, %v4316
  %v4621 = vld [vmem:[%s9] sm:$0xff]
  %v4622 = vld [vmem:[%s9 + $0x8] sm:$0xff]
  %v4623 = vld [vmem:[%s9 + $0x10] sm:$0xff]
  %v4624 = vld [vmem:[%s9 + $0x18] sm:$0xff]
  %v4625 = vld [vmem:[%s9 + $0x20] sm:$0xff]
  %v4626 = vld [vmem:[%s9 + $0x28] sm:$0xff]
  %v4627 = vld [vmem:[%s9 + $0x30] sm:$0xff]
  %v4628 = vld [vmem:[%s9 + $0x38] sm:$0xff]
  %v4629 = vld [vmem:[%s9 + $0x40] sm:$0xff]
  %v4630 = vld [vmem:[%s9 + $0x48] sm:$0xff]
  %v4631 = vld [vmem:[%s9 + $0x50] sm:$0xff]
  %v4632 = vld [vmem:[%s9 + $0x58] sm:$0xff]
  %v4633 = vld [vmem:[%s9 + $0x60] sm:$0xff]
  %v4634 = vld [vmem:[%s9 + $0x68] sm:$0xff]
  %v4635 = vld [vmem:[%s9 + $0x70] sm:$0xff]
  %v4636 = vld [vmem:[%s9 + $0x78] sm:$0xff]
  %v4637 = vld [vmem:[%s9 + $0x80] sm:$0xff]
  %v4638 = vld [vmem:[%s9 + $0x88] sm:$0xff]
  %v4639 = vld [vmem:[%s9 + $0x90] sm:$0xff]
  %v4640 = vld [vmem:[%s9 + $0x98] sm:$0xff]
  %v4641 = vld [vmem:[%s9 + $0xa0] sm:$0xff]
  %v4642 = vld [vmem:[%s9 + $0xa8] sm:$0xff]
  %v4643 = vld [vmem:[%s9 + $0xb0] sm:$0xff]
  %v4644 = vld [vmem:[%s9 + $0xb8] sm:$0xff]
  %v4645 = vld [vmem:[%s9 + $0xc0] sm:$0xff]
  %v4646 = vld [vmem:[%s9 + $0xc8] sm:$0xff]
  %v4647 = vld [vmem:[%s9 + $0xd0] sm:$0xff]
  %v4648 = vld [vmem:[%s9 + $0xd8] sm:$0xff]
  %v4649 = vld [vmem:[%s9 + $0xe0] sm:$0xff]
  %v4650 = vld [vmem:[%s9 + $0xe8] sm:$0xff]
  %v4651 = vld [vmem:[%s9 + $0xf0] sm:$0xff]
  %v4652 = vld [vmem:[%s9 + $0xf8] sm:$0xff]
  %v4653 = vld [vmem:[%s10] sm:$0x3]
  %v4655 = vperm.slane %v4653, 0
  %v4656 = vperm.slane %v4653, 1
  %v4691 = vunpack.c.l.b16 %v4621
  %v4692 = vunpack.c.h.b16 %v4621
  %v4693 = vunpack.c.l.b16 %v4622
  %v4694 = vunpack.c.h.b16 %v4622
  %v4695 = vunpack.c.l.b16 %v4623
  %v4696 = vunpack.c.h.b16 %v4623
  %v4697 = vunpack.c.l.b16 %v4624
  %v4698 = vunpack.c.h.b16 %v4624
  %v4699 = vunpack.c.l.b16 %v4625
  %v4700 = vunpack.c.h.b16 %v4625
  %v4701 = vunpack.c.l.b16 %v4626
  %v4702 = vunpack.c.h.b16 %v4626
  %v4703 = vunpack.c.l.b16 %v4627
  %v4704 = vunpack.c.h.b16 %v4627
  %v4705 = vunpack.c.l.b16 %v4628
  %v4706 = vunpack.c.h.b16 %v4628
  %v4707 = vunpack.c.l.b16 %v4629
  %v4708 = vunpack.c.h.b16 %v4629
  %v4709 = vunpack.c.l.b16 %v4630
  %v4710 = vunpack.c.h.b16 %v4630
  %v4711 = vunpack.c.l.b16 %v4631
  %v4712 = vunpack.c.h.b16 %v4631
  %v4713 = vunpack.c.l.b16 %v4632
  %v4714 = vunpack.c.h.b16 %v4632
  %v4715 = vunpack.c.l.b16 %v4633
  %v4716 = vunpack.c.h.b16 %v4633
  %v4717 = vunpack.c.l.b16 %v4634
  %v4718 = vunpack.c.h.b16 %v4634
  %v4719 = vunpack.c.l.b16 %v4635
  %v4720 = vunpack.c.h.b16 %v4635
  %v4721 = vunpack.c.l.b16 %v4636
  %v4722 = vunpack.c.h.b16 %v4636
  %v4723 = vunpack.c.l.b16 %v4637
  %v4724 = vunpack.c.h.b16 %v4637
  %v4725 = vunpack.c.l.b16 %v4638
  %v4726 = vunpack.c.h.b16 %v4638
  %v4727 = vunpack.c.l.b16 %v4639
  %v4728 = vunpack.c.h.b16 %v4639
  %v4729 = vunpack.c.l.b16 %v4640
  %v4730 = vunpack.c.h.b16 %v4640
  %v4731 = vunpack.c.l.b16 %v4641
  %v4732 = vunpack.c.h.b16 %v4641
  %v4733 = vunpack.c.l.b16 %v4642
  %v4734 = vunpack.c.h.b16 %v4642
  %v4735 = vunpack.c.l.b16 %v4643
  %v4736 = vunpack.c.h.b16 %v4643
  %v4737 = vunpack.c.l.b16 %v4644
  %v4738 = vunpack.c.h.b16 %v4644
  %v4739 = vunpack.c.l.b16 %v4645
  %v4740 = vunpack.c.h.b16 %v4645
  %v4741 = vunpack.c.l.b16 %v4646
  %v4742 = vunpack.c.h.b16 %v4646
  %v4743 = vunpack.c.l.b16 %v4647
  %v4744 = vunpack.c.h.b16 %v4647
  %v4745 = vunpack.c.l.b16 %v4648
  %v4746 = vunpack.c.h.b16 %v4648
  %v4747 = vunpack.c.l.b16 %v4649
  %v4748 = vunpack.c.h.b16 %v4649
  %v4749 = vunpack.c.l.b16 %v4650
  %v4750 = vunpack.c.h.b16 %v4650
  %v4751 = vunpack.c.l.b16 %v4651
  %v4752 = vunpack.c.h.b16 %v4651
  %v4753 = vunpack.c.l.b16 %v4652
  %v4754 = vunpack.c.h.b16 %v4652
  %v4755 = vpack.c.b16 %v4693, %v4691
  %v4756 = vpack.c.b16 %v4694, %v4692
  %v4757 = vpack.c.b16 %v4697, %v4695
  %v4758 = vpack.c.b16 %v4698, %v4696
  %v4759 = vpack.c.b16 %v4701, %v4699
  %v4760 = vpack.c.b16 %v4702, %v4700
  %v4761 = vpack.c.b16 %v4705, %v4703
  %v4762 = vpack.c.b16 %v4706, %v4704
  %v4763 = vpack.c.b16 %v4709, %v4707
  %v4764 = vpack.c.b16 %v4710, %v4708
  %v4765 = vpack.c.b16 %v4713, %v4711
  %v4766 = vpack.c.b16 %v4714, %v4712
  %v4767 = vpack.c.b16 %v4717, %v4715
  %v4768 = vpack.c.b16 %v4718, %v4716
  %v4769 = vpack.c.b16 %v4721, %v4719
  %v4770 = vpack.c.b16 %v4722, %v4720
  %v4771 = vpack.c.b16 %v4725, %v4723
  %v4772 = vpack.c.b16 %v4726, %v4724
  %v4773 = vpack.c.b16 %v4729, %v4727
  %v4774 = vpack.c.b16 %v4730, %v4728
  %v4775 = vpack.c.b16 %v4733, %v4731
  %v4776 = vpack.c.b16 %v4734, %v4732
  %v4777 = vpack.c.b16 %v4737, %v4735
  %v4778 = vpack.c.b16 %v4738, %v4736
  %v4779 = vpack.c.b16 %v4741, %v4739
  %v4780 = vpack.c.b16 %v4742, %v4740
  %v4781 = vpack.c.b16 %v4745, %v4743
  %v4782 = vpack.c.b16 %v4746, %v4744
  %v4783 = vpack.c.b16 %v4749, %v4747
  %v4784 = vpack.c.b16 %v4750, %v4748
  %v4785 = vpack.c.b16 %v4753, %v4751
  %v4786 = vpack.c.b16 %v4754, %v4752
  %4819 = vmatpush.bf16.msra.mxu0 %v4769
  %4820 = vmatpush.bf16.msra.mxu0 %v4767
  %4821 = vmatpush.bf16.msra.mxu0 %v4765
  %4822 = vmatpush.bf16.msra.mxu0 %v4763
  %4823 = vmatpush.bf16.msra.mxu0 %v4761
  %4824 = vmatpush.bf16.msra.mxu0 %v4759
  %4825 = vmatpush.bf16.msra.mxu0 %v4757
  %4826 = vmatpush.bf16.msra.mxu0 %v4755
  %4827 = vmatmul.bf16.gmra.mxu0 %v4619
  %v4828 = vpop.f32.mrf.mxu0
  %v4829 = vadd.f32 %v4655, %v4828
  %v4830 = vpop.f32.mrf.mxu0
  %4831 = vdwg.mxu0
  %4832 = vmatpush.bf16.msra.mxu0 %v4785
  %4833 = vmatpush.bf16.msra.mxu0 %v4783
  %4834 = vmatpush.bf16.msra.mxu0 %v4781
  %4835 = vmatpush.bf16.msra.mxu0 %v4779
  %4836 = vmatpush.bf16.msra.mxu0 %v4777
  %4837 = vmatpush.bf16.msra.mxu0 %v4775
  %4838 = vmatpush.bf16.msra.mxu0 %v4773
  %4839 = vmatpush.bf16.msra.mxu0 %v4771
  %4840 = vmatmul.bf16.gmra.mxu0 %v4620
  %v4841 = vpop.f32.mrf.mxu0
  %v4842 = vadd.f32 %v4829, %v4841
  %v4843 = vpop.f32.mrf.mxu0
  %4844 = vdwg.mxu0
  %4845 = vmatpush.bf16.msra.mxu0 %v4770
  %4846 = vmatpush.bf16.msra.mxu0 %v4768
  %4847 = vmatpush.bf16.msra.mxu0 %v4766
  %4848 = vmatpush.bf16.msra.mxu0 %v4764
  %4849 = vmatpush.bf16.msra.mxu0 %v4762
  %4850 = vmatpush.bf16.msra.mxu0 %v4760
  %4851 = vmatpush.bf16.msra.mxu0 %v4758
  %4852 = vmatpush.bf16.msra.mxu0 %v4756
  %4853 = vmatmul.bf16.gmra.mxu0 %v4619
  %v4854 = vpop.f32.mrf.mxu0
  %v4855 = vadd.f32 %v4656, %v4854
  %v4856 = vpop.f32.mrf.mxu0
  %4857 = vdwg.mxu0
  %4858 = vmatpush.bf16.msra.mxu0 %v4786
  %4859 = vmatpush.bf16.msra.mxu0 %v4784
  %4860 = vmatpush.bf16.msra.mxu0 %v4782
  %4861 = vmatpush.bf16.msra.mxu0 %v4780
  %4862 = vmatpush.bf16.msra.mxu0 %v4778
  %4863 = vmatpush.bf16.msra.mxu0 %v4776
  %4864 = vmatpush.bf16.msra.mxu0 %v4774
  %4865 = vmatpush.bf16.msra.mxu0 %v4772
  %4866 = vmatmul.bf16.gmra.mxu0 %v4620
  %v4867 = vpop.f32.mrf.mxu0
  %v4868 = vadd.f32 %v4855, %v4867
  %v4869 = vpop.f32.mrf.mxu0
  %4870 = vdwg.mxu0
  %v4871 = vtanh.pop %v4842
  %v4872 = vtanh.pop %v4868
  %v4873 = vld [vmem:[%s11] sm:$0x3]
  %v4875 = vperm.slane %v4873, 0
  %v4876 = vperm.slane %v4873, 1
  %v4879 = vmul.f32 %v4871, %v4875
  %v4880 = vmul.f32 %v4872, %v4876
  %v4881 = vld [vmem:[#allocation3] sm:$0x3]
  %v4882 = vld [vmem:[#allocation3 + $0x8] sm:$0x3]
  %v4883 = vld [vmem:[#allocation4] sm:$0x3]
  %v4884 = vld [vmem:[#allocation4 + $0x8] sm:$0x3]
  %v4885 = vmul.f32 %v4883, %v4879
  %v4886 = vmul.f32 %v4884, %v4880
  %vm4887 = vcmask 1041408
  %v4888 = vsel %vm4887, %v4885, 0.0
  %v4889 = vsel %vm4887, %v4886, 0.0
  %v4890 = vadd.f32 %v4888, %v4889
  %4891 = vadd.xlane.f32.xlu0 %v4890
  %v4892 = vpop.xlane.xlu0 %4891
  %v4893 = vld [vmem:[#allocation5] sm:$0x1]
  %v4895 = vperm.slane %v4893, 0
  %v4897 = vadd.f32 %v4892, %v4895
  %v4898 = vmax.f32 %v4897, -1e+30
  %v4899 = vsub.f32 -1e+30, %v4898
  %v4900 = vmul.f32 %v4899, 1.442695
  %v4901 = vpow.pop %v4900
  %v4902 = vsub.f32 %v4897, %v4898
  %v4903 = vmul.f32 %v4902, 1.442695
  %v4904 = vpow.pop %v4903
  %v4905 = vmul.f32 %v4901, 0.0
  %v4906 = vadd.f32 %v4905, %v4904
  %4908 = vset.pattern.permute.xlu0 0
  %4909 = vperm.xlu0 %4908, %v4901
  %v4910 = vpop.permute.xlu0 %4909
  %v4912 = vmul.f32 %v4910, 0.0
  %4914 = vset.pattern.permute.xlu0 0
  %4915 = vperm.xlu0 %4914, %v4904
  %v4916 = vpop.permute.xlu0 %4915
  %v4918 = vmul.f32 %v4916, %v4881
  %v4919 = vmul.f32 %v4916, %v4882
  %v4920 = vadd.f32 %v4912, %v4918
  %v4921 = vadd.f32 %v4912, %v4919
  %v4922 = vld [vmem:[#allocation3] sm:$0xc]
  %v4923 = vld [vmem:[#allocation3 + $0x8] sm:$0xc]
  %v4924 = vld [vmem:[#allocation4] sm:$0xc]
  %v4925 = vld [vmem:[#allocation4 + $0x8] sm:$0xc]
  %v4928 = vrot.slane %v4879, 6
  %v4929 = vrot.slane %v4880, 6
  %v4932 = vmul.f32 %v4924, %v4928
  %v4933 = vmul.f32 %v4925, %v4929
  %vm4934 = vcmask 1043458
  %v4935 = vsel %vm4934, %v4932, 0.0
  %v4936 = vsel %vm4934, %v4933, 0.0
  %v4937 = vadd.f32 %v4935, %v4936
  %4938 = vadd.xlane.f32.xlu0 %v4937
  %v4939 = vpop.xlane.xlu0 %4938
  %v4940 = vadd.f32 %v4939, %v4895
  %v4942 = vrot.slane %v4940, 2
  %v4944 = vmax.f32 %v4898, %v4942
  %v4945 = vsub.f32 %v4898, %v4944
  %v4946 = vmul.f32 %v4945, 1.442695
  %v4947 = vpow.pop %v4946
  %v4949 = vrot.slane %v4944, 6
  %v4951 = vsub.f32 %v4940, %v4949
  %v4952 = vmul.f32 %v4951, 1.442695
  %v4953 = vpow.pop %v4952
  %v4954 = vmul.f32 %v4947, %v4906
  %v4956 = vrot.slane %v4953, 2
  %v4958 = vadd.f32 %v4954, %v4956
  %4960 = vset.pattern.permute.xlu0 0
  %4961 = vperm.xlu0 %4960, %v4947
  %v4962 = vpop.permute.xlu0 %4961
  %v4964 = vmul.f32 %v4962, %v4920
  %v4965 = vmul.f32 %v4962, %v4921
  %4966 = vset.pattern.permute.xlu0 0
  %4967 = vperm.xlu0 %4966, %v4953
  %v4968 = vpop.permute.xlu0 %4967
  %v4970 = vmul.f32 %v4968, %v4922
  %v4971 = vmul.f32 %v4968, %v4923
  %v4974 = vrot.slane %v4970, 2
  %v4975 = vrot.slane %v4971, 2
  %v4978 = vadd.f32 %v4964, %v4974
  %v4979 = vadd.f32 %v4965, %v4975
  %v4980 = vld [vmem:[#allocation3] sm:$0x30]
  %v4981 = vld [vmem:[#allocation3 + $0x8] sm:$0x30]
  %v4982 = vld [vmem:[#allocation4] sm:$0x30]
  %v4983 = vld [vmem:[#allocation4 + $0x8] sm:$0x30]
  %v4984 = vrot.slane %v4879, 4
  %v4985 = vrot.slane %v4880, 4
  %v4988 = vmul.f32 %v4982, %v4984
  %v4989 = vmul.f32 %v4983, %v4985
  %vm4990 = vcmask 1045508
  %v4991 = vsel %vm4990, %v4988, 0.0
  %v4992 = vsel %vm4990, %v4989, 0.0
  %v4993 = vadd.f32 %v4991, %v4992
  %4994 = vadd.xlane.f32.xlu0 %v4993
  %v4995 = vpop.xlane.xlu0 %4994
  %v4996 = vadd.f32 %v4995, %v4895
  %v4998 = vrot.slane %v4996, 4
  %v5000 = vmax.f32 %v4944, %v4998
  %v5001 = vsub.f32 %v4944, %v5000
  %v5002 = vmul.f32 %v5001, 1.442695
  %v5003 = vpow.pop %v5002
  %v5005 = vrot.slane %v5000, 4
  %v5007 = vsub.f32 %v4996, %v5005
  %v5008 = vmul.f32 %v5007, 1.442695
  %v5009 = vpow.pop %v5008
  %v5010 = vmul.f32 %v5003, %v4958
  %v5012 = vrot.slane %v5009, 4
  %v5014 = vadd.f32 %v5010, %v5012
  %5016 = vset.pattern.permute.xlu0 0
  %5017 = vperm.xlu0 %5016, %v5003
  %v5018 = vpop.permute.xlu0 %5017
  %v5020 = vmul.f32 %v5018, %v4978
  %v5021 = vmul.f32 %v5018, %v4979
  %5022 = vset.pattern.permute.xlu0 0
  %5023 = vperm.xlu0 %5022, %v5009
  %v5024 = vpop.permute.xlu0 %5023
  %v5026 = vmul.f32 %v5024, %v4980
  %v5027 = vmul.f32 %v5024, %v4981
  %v5030 = vrot.slane %v5026, 4
  %v5031 = vrot.slane %v5027, 4
  %v5034 = vadd.f32 %v5020, %v5030
  %v5035 = vadd.f32 %v5021, %v5031
  %v5036 = vld [vmem:[#allocation3] sm:$0xc0]
  %v5037 = vld [vmem:[#allocation3 + $0x8] sm:$0xc0]
  %v5038 = vld [vmem:[#allocation4] sm:$0xc0]
  %v5039 = vld [vmem:[#allocation4 + $0x8] sm:$0xc0]
  %v5040 = vrot.slane %v4879, 2
  %v5041 = vrot.slane %v4880, 2
  %v5044 = vmul.f32 %v5038, %v5040
  %v5045 = vmul.f32 %v5039, %v5041
  %vm5046 = vcmask 1047558
  %v5047 = vsel %vm5046, %v5044, 0.0
  %v5048 = vsel %vm5046, %v5045, 0.0
  %v5049 = vadd.f32 %v5047, %v5048
  %5050 = vadd.xlane.f32.xlu0 %v5049
  %v5051 = vpop.xlane.xlu0 %5050
  %v5052 = vadd.f32 %v5051, %v4895
  %v5054 = vrot.slane %v5052, 6
  %v5056 = vmax.f32 %v5000, %v5054
  %v5057 = vsub.f32 %v5000, %v5056
  %v5058 = vmul.f32 %v5057, 1.442695
  %v5059 = vpow.pop %v5058
  %v5061 = vrot.slane %v5056, 2
  %v5063 = vsub.f32 %v5052, %v5061
  %v5064 = vmul.f32 %v5063, 1.442695
  %v5065 = vpow.pop %v5064
  %v5066 = vmul.f32 %v5059, %v5014
  %v5068 = vrot.slane %v5065, 6
  %v5070 = vadd.f32 %v5066, %v5068
  %5072 = vset.pattern.permute.xlu0 0
  %5073 = vperm.xlu0 %5072, %v5059
  %v5074 = vpop.permute.xlu0 %5073
  %v5076 = vmul.f32 %v5074, %v5034
  %v5077 = vmul.f32 %v5074, %v5035
  %5078 = vset.pattern.permute.xlu0 0
  %5079 = vperm.xlu0 %5078, %v5065
  %v5080 = vpop.permute.xlu0 %5079
  %v5082 = vmul.f32 %v5080, %v5036
  %v5083 = vmul.f32 %v5080, %v5037
  %v5086 = vrot.slane %v5082, 6
  %v5087 = vrot.slane %v5083, 6
  %v5090 = vadd.f32 %v5076, %v5086
  %v5091 = vadd.f32 %v5077, %v5087
  %v5092 = vld [vmem:[#allocation3 + $0x10] sm:$0x3]
  %v5093 = vld [vmem:[#allocation3 + $0x18] sm:$0x3]
  %v5094 = vld [vmem:[#allocation4 + $0x10] sm:$0x3]
  %v5095 = vld [vmem:[#allocation4 + $0x18] sm:$0x3]
  %v5096 = vmul.f32 %v5094, %v4879
  %v5097 = vmul.f32 %v5095, %v4880
  %v5098 = vsel %vm4887, %v5096, 0.0
  %v5099 = vsel %vm4887, %v5097, 0.0
  %v5100 = vadd.f32 %v5098, %v5099
  %5101 = vadd.xlane.f32.xlu0 %v5100
  %v5102 = vpop.xlane.xlu0 %5101
  %v5103 = vadd.f32 %v5102, %v4895
  %v5104 = vmax.f32 %v5056, %v5103
  %v5105 = vsub.f32 %v5056, %v5104
  %v5106 = vmul.f32 %v5105, 1.442695
  %v5107 = vpow.pop %v5106
  %v5108 = vsub.f32 %v5103, %v5104
  %v5109 = vmul.f32 %v5108, 1.442695
  %v5110 = vpow.pop %v5109
  %v5111 = vmul.f32 %v5107, %v5070
  %v5112 = vadd.f32 %v5111, %v5110
  %5114 = vset.pattern.permute.xlu0 0
  %5115 = vperm.xlu0 %5114, %v5107
  %v5116 = vpop.permute.xlu0 %5115
  %v5118 = vmul.f32 %v5116, %v5090
  %v5119 = vmul.f32 %v5116, %v5091
  %5121 = vset.pattern.permute.xlu0 0
  %5122 = vperm.xlu0 %5121, %v5110
  %v5123 = vpop.permute.xlu0 %5122
  %v5125 = vmul.f32 %v5123, %v5092
  %v5126 = vmul.f32 %v5123, %v5093
  %v5127 = vadd.f32 %v5118, %v5125
  %v5128 = vadd.f32 %v5119, %v5126
  %v5129 = vld [vmem:[#allocation3 + $0x10] sm:$0xc]
  %v5130 = vld [vmem:[#allocation3 + $0x18] sm:$0xc]
  %v5131 = vld [vmem:[#allocation4 + $0x10] sm:$0xc]
  %v5132 = vld [vmem:[#allocation4 + $0x18] sm:$0xc]
  %v5133 = vmul.f32 %v5131, %v4928
  %v5134 = vmul.f32 %v5132, %v4929
  %v5135 = vsel %vm4934, %v5133, 0.0
  %v5136 = vsel %vm4934, %v5134, 0.0
  %v5137 = vadd.f32 %v5135, %v5136
  %5138 = vadd.xlane.f32.xlu0 %v5137
  %v5139 = vpop.xlane.xlu0 %5138
  %v5140 = vadd.f32 %v5139, %v4895
  %v5142 = vrot.slane %v5140, 2
  %v5144 = vmax.f32 %v5104, %v5142
  %v5145 = vsub.f32 %v5104, %v5144
  %v5146 = vmul.f32 %v5145, 1.442695
  %v5147 = vpow.pop %v5146
  %v5149 = vrot.slane %v5144, 6
  %v5151 = vsub.f32 %v5140, %v5149
  %v5152 = vmul.f32 %v5151, 1.442695
  %v5153 = vpow.pop %v5152
  %v5154 = vmul.f32 %v5147, %v5112
  %v5156 = vrot.slane %v5153, 2
  %v5158 = vadd.f32 %v5154, %v5156
  %5160 = vset.pattern.permute.xlu0 0
  %5161 = vperm.xlu0 %5160, %v5147
  %v5162 = vpop.permute.xlu0 %5161
  %v5164 = vmul.f32 %v5162, %v5127
  %v5165 = vmul.f32 %v5162, %v5128
  %5166 = vset.pattern.permute.xlu0 0
  %5167 = vperm.xlu0 %5166, %v5153
  %v5168 = vpop.permute.xlu0 %5167
  %v5170 = vmul.f32 %v5168, %v5129
  %v5171 = vmul.f32 %v5168, %v5130
  %v5174 = vrot.slane %v5170, 2
  %v5175 = vrot.slane %v5171, 2
  %v5178 = vadd.f32 %v5164, %v5174
  %v5179 = vadd.f32 %v5165, %v5175
  %v5180 = vld [vmem:[#allocation3 + $0x10] sm:$0x30]
  %v5181 = vld [vmem:[#allocation3 + $0x18] sm:$0x30]
  %v5182 = vld [vmem:[#allocation4 + $0x10] sm:$0x30]
  %v5183 = vld [vmem:[#allocation4 + $0x18] sm:$0x30]
  %v5184 = vmul.f32 %v5182, %v4984
  %v5185 = vmul.f32 %v5183, %v4985
  %v5186 = vsel %vm4990, %v5184, 0.0
  %v5187 = vsel %vm4990, %v5185, 0.0
  %v5188 = vadd.f32 %v5186, %v5187
  %5189 = vadd.xlane.f32.xlu0 %v5188
  %v5190 = vpop.xlane.xlu0 %5189
  %v5191 = vadd.f32 %v5190, %v4895
  %v5193 = vrot.slane %v5191, 4
  %v5195 = vmax.f32 %v5144, %v5193
  %v5196 = vsub.f32 %v5144, %v5195
  %v5197 = vmul.f32 %v5196, 1.442695
  %v5198 = vpow.pop %v5197
  %v5200 = vrot.slane %v5195, 4
  %v5202 = vsub.f32 %v5191, %v5200
  %v5203 = vmul.f32 %v5202, 1.442695
  %v5204 = vpow.pop %v5203
  %v5205 = vmul.f32 %v5198, %v5158
  %v5207 = vrot.slane %v5204, 4
  %v5209 = vadd.f32 %v5205, %v5207
  %5211 = vset.pattern.permute.xlu0 0
  %5212 = vperm.xlu0 %5211, %v5198
  %v5213 = vpop.permute.xlu0 %5212
  %v5215 = vmul.f32 %v5213, %v5178
  %v5216 = vmul.f32 %v5213, %v5179
  %5217 = vset.pattern.permute.xlu0 0
  %5218 = vperm.xlu0 %5217, %v5204
  %v5219 = vpop.permute.xlu0 %5218
  %v5221 = vmul.f32 %v5219, %v5180
  %v5222 = vmul.f32 %v5219, %v5181
  %v5225 = vrot.slane %v5221, 4
  %v5226 = vrot.slane %v5222, 4
  %v5229 = vadd.f32 %v5215, %v5225
  %v5230 = vadd.f32 %v5216, %v5226
  %v5231 = vld [vmem:[#allocation3 + $0x10] sm:$0xc0]
  %v5232 = vld [vmem:[#allocation3 + $0x18] sm:$0xc0]
  %v5233 = vld [vmem:[#allocation4 + $0x10] sm:$0xc0]
  %v5234 = vld [vmem:[#allocation4 + $0x18] sm:$0xc0]
  %v5235 = vmul.f32 %v5233, %v5040
  %v5236 = vmul.f32 %v5234, %v5041
  %v5237 = vsel %vm5046, %v5235, 0.0
  %v5238 = vsel %vm5046, %v5236, 0.0
  %v5239 = vadd.f32 %v5237, %v5238
  %5240 = vadd.xlane.f32.xlu0 %v5239
  %v5241 = vpop.xlane.xlu0 %5240
  %v5242 = vadd.f32 %v5241, %v4895
  %v5244 = vrot.slane %v5242, 6
  %v5246 = vmax.f32 %v5195, %v5244
  %v5247 = vsub.f32 %v5195, %v5246
  %v5248 = vmul.f32 %v5247, 1.442695
  %v5249 = vpow.pop %v5248
  %v5251 = vrot.slane %v5246, 2
  %v5253 = vsub.f32 %v5242, %v5251
  %v5254 = vmul.f32 %v5253, 1.442695
  %v5255 = vpow.pop %v5254
  %v5256 = vmul.f32 %v5249, %v5209
  %v5258 = vrot.slane %v5255, 6
  %v5260 = vadd.f32 %v5256, %v5258
  %5262 = vset.pattern.permute.xlu0 0
  %5263 = vperm.xlu0 %5262, %v5249
  %v5264 = vpop.permute.xlu0 %5263
  %v5266 = vmul.f32 %v5264, %v5229
  %v5267 = vmul.f32 %v5264, %v5230
  %5268 = vset.pattern.permute.xlu0 0
  %5269 = vperm.xlu0 %5268, %v5255
  %v5270 = vpop.permute.xlu0 %5269
  %v5272 = vmul.f32 %v5270, %v5231
  %v5273 = vmul.f32 %v5270, %v5232
  %v5276 = vrot.slane %v5272, 6
  %v5277 = vrot.slane %v5273, 6
  %v5280 = vadd.f32 %v5266, %v5276
  %v5281 = vadd.f32 %v5267, %v5277
  %v5282 = vld [vmem:[#allocation3 + $0x20] sm:$0x3]
  %v5283 = vld [vmem:[#allocation3 + $0x28] sm:$0x3]
  %v5284 = vld [vmem:[#allocation4 + $0x20] sm:$0x3]
  %v5285 = vld [vmem:[#allocation4 + $0x28] sm:$0x3]
  %v5286 = vmul.f32 %v5284, %v4879
  %v5287 = vmul.f32 %v5285, %v4880
  %v5288 = vsel %vm4887, %v5286, 0.0
  %v5289 = vsel %vm4887, %v5287, 0.0
  %v5290 = vadd.f32 %v5288, %v5289
  %5291 = vadd.xlane.f32.xlu0 %v5290
  %v5292 = vpop.xlane.xlu0 %5291
  %v5293 = vadd.f32 %v5292, %v4895
  %v5294 = vmax.f32 %v5246, %v5293
  %v5295 = vsub.f32 %v5246, %v5294
  %v5296 = vmul.f32 %v5295, 1.442695
  %v5297 = vpow.pop %v5296
  %v5298 = vsub.f32 %v5293, %v5294
  %v5299 = vmul.f32 %v5298, 1.442695
  %v5300 = vpow.pop %v5299
  %v5301 = vmul.f32 %v5297, %v5260
  %v5302 = vadd.f32 %v5301, %v5300
  %5304 = vset.pattern.permute.xlu0 0
  %5305 = vperm.xlu0 %5304, %v5297
  %v5306 = vpop.permute.xlu0 %5305
  %v5308 = vmul.f32 %v5306, %v5280
  %v5309 = vmul.f32 %v5306, %v5281
  %5311 = vset.pattern.permute.xlu0 0
  %5312 = vperm.xlu0 %5311, %v5300
  %v5313 = vpop.permute.xlu0 %5312
  %v5315 = vmul.f32 %v5313, %v5282
  %v5316 = vmul.f32 %v5313, %v5283
  %v5317 = vadd.f32 %v5308, %v5315
  %v5318 = vadd.f32 %v5309, %v5316
  %v5319 = vld [vmem:[#allocation3 + $0x20] sm:$0xc]
  %v5320 = vld [vmem:[#allocation3 + $0x28] sm:$0xc]
  %v5321 = vld [vmem:[#allocation4 + $0x20] sm:$0xc]
  %v5322 = vld [vmem:[#allocation4 + $0x28] sm:$0xc]
  %v5323 = vmul.f32 %v5321, %v4928
  %v5324 = vmul.f32 %v5322, %v4929
  %v5325 = vsel %vm4934, %v5323, 0.0
  %v5326 = vsel %vm4934, %v5324, 0.0
  %v5327 = vadd.f32 %v5325, %v5326
  %5328 = vadd.xlane.f32.xlu0 %v5327
  %v5329 = vpop.xlane.xlu0 %5328
  %v5330 = vadd.f32 %v5329, %v4895
  %v5332 = vrot.slane %v5330, 2
  %v5334 = vmax.f32 %v5294, %v5332
  %v5335 = vsub.f32 %v5294, %v5334
  %v5336 = vmul.f32 %v5335, 1.442695
  %v5337 = vpow.pop %v5336
  %v5339 = vrot.slane %v5334, 6
  %v5341 = vsub.f32 %v5330, %v5339
  %v5342 = vmul.f32 %v5341, 1.442695
  %v5343 = vpow.pop %v5342
  %v5344 = vmul.f32 %v5337, %v5302
  %v5346 = vrot.slane %v5343, 2
  %v5348 = vadd.f32 %v5344, %v5346
  %5350 = vset.pattern.permute.xlu0 0
  %5351 = vperm.xlu0 %5350, %v5337
  %v5352 = vpop.permute.xlu0 %5351
  %v5354 = vmul.f32 %v5352, %v5317
  %v5355 = vmul.f32 %v5352, %v5318
  %5356 = vset.pattern.permute.xlu0 0
  %5357 = vperm.xlu0 %5356, %v5343
  %v5358 = vpop.permute.xlu0 %5357
  %v5360 = vmul.f32 %v5358, %v5319
  %v5361 = vmul.f32 %v5358, %v5320
  %v5364 = vrot.slane %v5360, 2
  %v5365 = vrot.slane %v5361, 2
  %v5368 = vadd.f32 %v5354, %v5364
  %v5369 = vadd.f32 %v5355, %v5365
  %v5370 = vld [vmem:[#allocation3 + $0x20] sm:$0x30]
  %v5371 = vld [vmem:[#allocation3 + $0x28] sm:$0x30]
  %v5372 = vld [vmem:[#allocation4 + $0x20] sm:$0x30]
  %v5373 = vld [vmem:[#allocation4 + $0x28] sm:$0x30]
  %v5374 = vmul.f32 %v5372, %v4984
  %v5375 = vmul.f32 %v5373, %v4985
  %v5376 = vsel %vm4990, %v5374, 0.0
  %v5377 = vsel %vm4990, %v5375, 0.0
  %v5378 = vadd.f32 %v5376, %v5377
  %5379 = vadd.xlane.f32.xlu0 %v5378
  %v5380 = vpop.xlane.xlu0 %5379
  %v5381 = vadd.f32 %v5380, %v4895
  %v5383 = vrot.slane %v5381, 4
  %v5385 = vmax.f32 %v5334, %v5383
  %v5386 = vsub.f32 %v5334, %v5385
  %v5387 = vmul.f32 %v5386, 1.442695
  %v5388 = vpow.pop %v5387
  %v5390 = vrot.slane %v5385, 4
  %v5392 = vsub.f32 %v5381, %v5390
  %v5393 = vmul.f32 %v5392, 1.442695
  %v5394 = vpow.pop %v5393
  %v5395 = vmul.f32 %v5388, %v5348
  %v5397 = vrot.slane %v5394, 4
  %v5399 = vadd.f32 %v5395, %v5397
  %5401 = vset.pattern.permute.xlu0 0
  %5402 = vperm.xlu0 %5401, %v5388
  %v5403 = vpop.permute.xlu0 %5402
  %v5405 = vmul.f32 %v5403, %v5368
  %v5406 = vmul.f32 %v5403, %v5369
  %5407 = vset.pattern.permute.xlu0 0
  %5408 = vperm.xlu0 %5407, %v5394
  %v5409 = vpop.permute.xlu0 %5408
  %v5411 = vmul.f32 %v5409, %v5370
  %v5412 = vmul.f32 %v5409, %v5371
  %v5415 = vrot.slane %v5411, 4
  %v5416 = vrot.slane %v5412, 4
  %v5419 = vadd.f32 %v5405, %v5415
  %v5420 = vadd.f32 %v5406, %v5416
  %v5421 = vld [vmem:[#allocation3 + $0x20] sm:$0xc0]
  %v5422 = vld [vmem:[#allocation3 + $0x28] sm:$0xc0]
  %v5423 = vld [vmem:[#allocation4 + $0x20] sm:$0xc0]
  %v5424 = vld [vmem:[#allocation4 + $0x28] sm:$0xc0]
  %v5425 = vmul.f32 %v5423, %v5040
  %v5426 = vmul.f32 %v5424, %v5041
  %v5427 = vsel %vm5046, %v5425, 0.0
  %v5428 = vsel %vm5046, %v5426, 0.0
  %v5429 = vadd.f32 %v5427, %v5428
  %5430 = vadd.xlane.f32.xlu0 %v5429
  %v5431 = vpop.xlane.xlu0 %5430
  %v5432 = vadd.f32 %v5431, %v4895
  %v5434 = vrot.slane %v5432, 6
  %v5436 = vmax.f32 %v5385, %v5434
  %v5437 = vsub.f32 %v5385, %v5436
  %v5438 = vmul.f32 %v5437, 1.442695
  %v5439 = vpow.pop %v5438
  %v5441 = vrot.slane %v5436, 2
  %v5443 = vsub.f32 %v5432, %v5441
  %v5444 = vmul.f32 %v5443, 1.442695
  %v5445 = vpow.pop %v5444
  %v5446 = vmul.f32 %v5439, %v5399
  %v5448 = vrot.slane %v5445, 6
  %v5450 = vadd.f32 %v5446, %v5448
  %5452 = vset.pattern.permute.xlu0 0
  %5453 = vperm.xlu0 %5452, %v5439
  %v5454 = vpop.permute.xlu0 %5453
  %v5456 = vmul.f32 %v5454, %v5419
  %v5457 = vmul.f32 %v5454, %v5420
  %5458 = vset.pattern.permute.xlu0 0
  %5459 = vperm.xlu0 %5458, %v5445
  %v5460 = vpop.permute.xlu0 %5459
  %v5462 = vmul.f32 %v5460, %v5421
  %v5463 = vmul.f32 %v5460, %v5422
  %v5466 = vrot.slane %v5462, 6
  %v5467 = vrot.slane %v5463, 6
  %v5470 = vadd.f32 %v5456, %v5466
  %v5471 = vadd.f32 %v5457, %v5467
  %v5472 = vld [vmem:[#allocation3 + $0x30] sm:$0x3]
  %v5473 = vld [vmem:[#allocation3 + $0x38] sm:$0x3]
  %v5474 = vld [vmem:[#allocation4 + $0x30] sm:$0x3]
  %v5475 = vld [vmem:[#allocation4 + $0x38] sm:$0x3]
  %v5476 = vmul.f32 %v5474, %v4879
  %v5477 = vmul.f32 %v5475, %v4880
  %v5478 = vsel %vm4887, %v5476, 0.0
  %v5479 = vsel %vm4887, %v5477, 0.0
  %v5480 = vadd.f32 %v5478, %v5479
  %5481 = vadd.xlane.f32.xlu0 %v5480
  %v5482 = vpop.xlane.xlu0 %5481
  %v5483 = vadd.f32 %v5482, %v4895
  %v5484 = vmax.f32 %v5436, %v5483
  %v5485 = vsub.f32 %v5436, %v5484
  %v5486 = vmul.f32 %v5485, 1.442695
  %v5487 = vpow.pop %v5486
  %v5488 = vsub.f32 %v5483, %v5484
  %v5489 = vmul.f32 %v5488, 1.442695
  %v5490 = vpow.pop %v5489
  %v5491 = vmul.f32 %v5487, %v5450
  %v5492 = vadd.f32 %v5491, %v5490
  %5494 = vset.pattern.permute.xlu0 0
  %5495 = vperm.xlu0 %5494, %v5487
  %v5496 = vpop.permute.xlu0 %5495
  %v5498 = vmul.f32 %v5496, %v5470
  %v5499 = vmul.f32 %v5496, %v5471
  %5501 = vset.pattern.permute.xlu0 0
  %5502 = vperm.xlu0 %5501, %v5490
  %v5503 = vpop.permute.xlu0 %5502
  %v5505 = vmul.f32 %v5503, %v5472
  %v5506 = vmul.f32 %v5503, %v5473
  %v5507 = vadd.f32 %v5498, %v5505
  %v5508 = vadd.f32 %v5499, %v5506
  %v5509 = vld [vmem:[#allocation3 + $0x30] sm:$0xc]
  %v5510 = vld [vmem:[#allocation3 + $0x38] sm:$0xc]
  %v5511 = vld [vmem:[#allocation4 + $0x30] sm:$0xc]
  %v5512 = vld [vmem:[#allocation4 + $0x38] sm:$0xc]
  %v5513 = vmul.f32 %v5511, %v4928
  %v5514 = vmul.f32 %v5512, %v4929
  %v5515 = vsel %vm4934, %v5513, 0.0
  %v5516 = vsel %vm4934, %v5514, 0.0
  %v5517 = vadd.f32 %v5515, %v5516
  %5518 = vadd.xlane.f32.xlu0 %v5517
  %v5519 = vpop.xlane.xlu0 %5518
  %v5520 = vadd.f32 %v5519, %v4895
  %v5522 = vrot.slane %v5520, 2
  %v5524 = vmax.f32 %v5484, %v5522
  %v5525 = vsub.f32 %v5484, %v5524
  %v5526 = vmul.f32 %v5525, 1.442695
  %v5527 = vpow.pop %v5526
  %v5529 = vrot.slane %v5524, 6
  %v5531 = vsub.f32 %v5520, %v5529
  %v5532 = vmul.f32 %v5531, 1.442695
  %v5533 = vpow.pop %v5532
  %v5534 = vmul.f32 %v5527, %v5492
  %v5536 = vrot.slane %v5533, 2
  %v5538 = vadd.f32 %v5534, %v5536
  %5540 = vset.pattern.permute.xlu0 0
  %5541 = vperm.xlu0 %5540, %v5527
  %v5542 = vpop.permute.xlu0 %5541
  %v5544 = vmul.f32 %v5542, %v5507
  %v5545 = vmul.f32 %v5542, %v5508
  %5546 = vset.pattern.permute.xlu0 0
  %5547 = vperm.xlu0 %5546, %v5533
  %v5548 = vpop.permute.xlu0 %5547
  %v5550 = vmul.f32 %v5548, %v5509
  %v5551 = vmul.f32 %v5548, %v5510
  %v5554 = vrot.slane %v5550, 2
  %v5555 = vrot.slane %v5551, 2
  %v5558 = vadd.f32 %v5544, %v5554
  %v5559 = vadd.f32 %v5545, %v5555
  %v5560 = vld [vmem:[#allocation3 + $0x30] sm:$0x30]
  %v5561 = vld [vmem:[#allocation3 + $0x38] sm:$0x30]
  %v5562 = vld [vmem:[#allocation4 + $0x30] sm:$0x30]
  %v5563 = vld [vmem:[#allocation4 + $0x38] sm:$0x30]
  %v5564 = vmul.f32 %v5562, %v4984
  %v5565 = vmul.f32 %v5563, %v4985
  %v5566 = vsel %vm4990, %v5564, 0.0
  %v5567 = vsel %vm4990, %v5565, 0.0
  %v5568 = vadd.f32 %v5566, %v5567
  %5569 = vadd.xlane.f32.xlu0 %v5568
  %v5570 = vpop.xlane.xlu0 %5569
  %v5571 = vadd.f32 %v5570, %v4895
  %v5573 = vrot.slane %v5571, 4
  %v5575 = vmax.f32 %v5524, %v5573
  %v5576 = vsub.f32 %v5524, %v5575
  %v5577 = vmul.f32 %v5576, 1.442695
  %v5578 = vpow.pop %v5577
  %v5580 = vrot.slane %v5575, 4
  %v5582 = vsub.f32 %v5571, %v5580
  %v5583 = vmul.f32 %v5582, 1.442695
  %v5584 = vpow.pop %v5583
  %v5585 = vmul.f32 %v5578, %v5538
  %v5587 = vrot.slane %v5584, 4
  %v5589 = vadd.f32 %v5585, %v5587
  %5591 = vset.pattern.permute.xlu0 0
  %5592 = vperm.xlu0 %5591, %v5578
  %v5593 = vpop.permute.xlu0 %5592
  %v5595 = vmul.f32 %v5593, %v5558
  %v5596 = vmul.f32 %v5593, %v5559
  %5597 = vset.pattern.permute.xlu0 0
  %5598 = vperm.xlu0 %5597, %v5584
  %v5599 = vpop.permute.xlu0 %5598
  %v5601 = vmul.f32 %v5599, %v5560
  %v5602 = vmul.f32 %v5599, %v5561
  %v5605 = vrot.slane %v5601, 4
  %v5606 = vrot.slane %v5602, 4
  %v5609 = vadd.f32 %v5595, %v5605
  %v5610 = vadd.f32 %v5596, %v5606
  %v5611 = vrcp.pop %v5589
  %5613 = vset.pattern.permute.xlu0 0
  %5614 = vperm.xlu0 %5613, %v5611
  %v5615 = vpop.permute.xlu0 %5614
  %v5617 = vmul.f32 %v5609, %v5615
  %v5618 = vmul.f32 %v5610, %v5615
  %v5621 = vrot.slane %v5618, 6
  %v5622 = vsel %vm4887, %v5617, %v5621
  %5624 = vst [vmem:[%s13] sm:$0xf] %v5622
  // Predicated region
  $region54: #{lstm_forward.1} parent=0 // pred_check
    _
  $region55: #{lstm_forward.1} parent=0 // pred_check_branch
    %5626 = sbr.rel (0) target = $region57
  $region56: #{lstm_forward.1} parent=0 // pred_region
    _
  $region57: #{lstm_forward.1} parent=0 // pred_fallthru
    _
  // Predicated region
  $region58: #{lstm_forward.1} parent=0 // pred_check
    _
  $region59: #{lstm_forward.1} parent=0 // pred_check_branch
    %5628 = sbr.rel (0) target = $region61
  $region60: #{lstm_forward.1} parent=0 // pred_region
    _
  $region61: #{lstm_forward.1} parent=0 // pred_fallthru
    _

</llo_original>
